<compile_context>
chip_gen: v7x
topology: tpu7x:2x2x1
jax: 0.10.0
libtpu: 0.0.40
codegen_flags: <defaults>
</compile_context>

<pallas_src>
import functools
import math

import jax
import jax.numpy as jnp
from jax import lax
from jax.experimental import pallas as pl
from jax.experimental.pallas import tpu as pltpu

BN_EPS = 1e-5
LEAKY = 0.1

SPECS = [
    # name,     cin, cout, stride, dilation
    ("conv1",     6,  24, 2, 1),
    ("conv2",    24,  48, 1, 1),
    ("conv3",    48,  96, 1, 1),
    ("conv3_1",  96,  96, 1, 1),
    ("conv4",    96, 192, 1, 1),
    ("conv4_1", 192, 192, 1, 4),
    ("conv5",   192, 192, 1, 1),
    ("conv5_1", 192, 192, 1, 1),
]

PREDICT_CIN = 192
PREDICT_COUT = 2
PREDICT_COUT_PAD = 128  # lane-dense final store; real 2 channels sliced in wrapper


def _leaky(x):
    # LeakyReLU(0.1) as a single VPU max.
    return jnp.maximum(x, LEAKY * x)


def _vmem_limit_bytes():
    # Generation-aware budget: ~96 MiB on v5e/v6e (128 MiB physical),
    # ~48 MiB on v7x (64 MiB physical).  Fallback keeps the old safe value.
    try:
        cap = pltpu.get_tpu_info().vmem_capacity_bytes
        return int(cap * 3 // 4)
    except Exception:
        return 32 * 1024 * 1024


# ------------------------------------------------------------ fused kernel ---
def _tinyflownet_kernel(xph_ref, *refs, H, W):
    """Whole-network forward for one image; all intermediates stay in VMEM.

    xph_ref : (4, H/2+1, W/2+1, 6) phase-decomposed zero-padded input, f32.
              phase p = 2*(kh%2)+(kw%2); P_p[i,j,:] = xpad[2i+(kh%2), 2j+(kw%2), :]
    refs    : dw_0, pw_0, ..., dw_7, pw_7, wpf, out, pad_1 .. pad_7, pad_pf
      dw_l  : (9, 1, 1, cin_l)  depthwise taps, BN scale folded (f32)
      pw_l  : (cin_l, cout_l)   pointwise weight, BN scale folded (bf16)
      wpf   : (9, 192, 128)     predict_flow taps, zero-padded columns (bf16)
      out   : (H/2 * W/2, 128)  lane-dense flow output (f32)
      pad_* : VMEM scratch zero-bordered slabs for the stride-1 layers
    """
    n_layers = len(SPECS)
    w_refs = refs[:2 * n_layers]
    wpf_ref = refs[2 * n_layers]
    out_ref = refs[2 * n_layers + 1]
    pad_refs = refs[2 * n_layers + 2:]

    h, w = H // 2, W // 2

    # ---- conv1 (stride 2): depthwise MAC directly at output resolution via
    #      the phase-decomposed input -> unit-stride taps, no wasted work. ----
    _, cin, cout, _, _ = SPECS[0]
    dw_w = w_refs[0]
    acc = None
    for kh in range(3):
        for kw in range(3):
            p = 2 * (kh % 2) + (kw % 2)
            tap = xph_ref[p, kh // 2:kh // 2 + h, kw // 2:kw // 2 + w, :]
            t = tap * dw_w[3 * kh + kw]
            acc = t if acc is None else acc + t
    dwv = _leaky(acc)                                          # (h, w, 6) f32
    lhs = dwv.reshape(h * w, cin).astype(jnp.bfloat16)
    cur = _leaky(jnp.dot(lhs, w_refs[1][...],
                         preferred_element_type=jnp.float32))
    cur = cur.reshape(h, w, cout)

    # ---- conv2 .. conv5_1 (stride 1): zero-bordered VMEM slab per layer ----
    for li in range(1, n_layers):
        _, cin, cout, _, d = SPECS[li]
        pad = pad_refs[li - 1]
        pad[...] = jnp.zeros_like(pad)          # zero border (whole slab: cheap)
        pad[d:d + h, d:d + w, :] = cur          # interior = previous activation
        dw_w = w_refs[2 * li]
        acc = None
        for k in range(9):                      # static unroll, shifted views
            kh, kw = divmod(k, 3)
            tap = pad[kh * d:kh * d + h, kw * d:kw * d + w, :]
            t = tap * dw_w[k]
            acc = t if acc is None else acc + t
        dwv = _leaky(acc)                                      # (h, w, cin)
        lhs = dwv.reshape(h * w, cin).astype(jnp.bfloat16)
        cur = _leaky(jnp.dot(lhs, w_refs[2 * li + 1][...],
                             preferred_element_type=jnp.float32))
        cur = cur.reshape(h, w, cout)

    # ---- predict_flow: 3x3 conv, pad 1, no BN / activation ----
    padp = pad_refs[-1]
    padp[...] = jnp.zeros_like(padp)
    padp[1:1 + h, 1:1 + w, :] = cur
    acc = jnp.zeros((h * w, PREDICT_COUT_PAD), jnp.float32)
    for k in range(9):                          # 9 tap-accumulated MXU matmuls
        kh, kw = divmod(k, 3)
        tap = padp[kh:kh + h, kw:kw + w, :]
        lhs = tap.reshape(h * w, PREDICT_CIN).astype(jnp.bfloat16)
        acc = acc + jnp.dot(lhs, wpf_ref[k], preferred_element_type=jnp.float32)
    out_ref[...] = acc                          # lane-dense (64, 128) store


# ------------------------------------------------------------- pallas glue ---
def tiny_flownet_forward(x_nchw, kparams):
    x = jnp.transpose(x_nchw, (0, 2, 3, 1)).astype(jnp.float32)   # NCHW -> NHWC
    N, H, W, C0 = x.shape
    assert H % 2 == 0 and W % 2 == 0 and C0 == SPECS[0][1]
    h, w = H // 2, W // 2

    # Phase-decompose the zero-padded input once (single tiny XLA prep on the
    # raw 6-channel image) so conv1's stride-2 is pure unit-stride in-kernel.
    xp = jnp.pad(x, ((0, 0), (1, 1), (1, 1), (0, 0)))              # (N,H+2,W+2,6)
    phases = jnp.stack([xp[:, a::2, b::2, :] for a in (0, 1) for b in (0, 1)],
                       axis=1)                                     # (N,4,h+1,w+1,6)
    phases = phases.reshape(N * 4, h + 1, w + 1, C0)

    in_specs = [pl.BlockSpec((4, h + 1, w + 1, C0), lambda n: (n, 0, 0, 0))]
    operands = [phases]
    for name, cin, cout, _, _ in SPECS:
        in_specs.append(pl.BlockSpec((9, 1, 1, cin), lambda n: (0, 0, 0, 0)))
        in_specs.append(pl.BlockSpec((cin, cout), lambda n: (0, 0)))
        operands += [kparams[name]["dw"], kparams[name]["pw"]]
    in_specs.append(
        pl.BlockSpec((9, PREDICT_CIN, PREDICT_COUT_PAD), lambda n: (0, 0, 0)))
    operands.append(kparams["predict"]["w"])

    # Zero-bordered padded-input slabs for the stride-1 layers + predict_flow.
    scratch = [pltpu.VMEM((h + 2 * d, w + 2 * d, cin), jnp.float32)
               for _, cin, _, _, d in SPECS[1:]]
    scratch.append(pltpu.VMEM((h + 2, w + 2, PREDICT_CIN), jnp.float32))

    out = pl.pallas_call(
        functools.partial(_tinyflownet_kernel, H=H, W=W),
        out_shape=jax.ShapeDtypeStruct((N, h * w, PREDICT_COUT_PAD), jnp.float32),
        grid=(N,),
        in_specs=in_specs,
        out_specs=pl.BlockSpec((None, h * w, PREDICT_COUT_PAD),
                               lambda n: (n, 0, 0)),
        scratch_shapes=scratch,
        compiler_params=pltpu.CompilerParams(
            dimension_semantics=("parallel",),      # batch across TCs on v7x
            vmem_limit_bytes=_vmem_limit_bytes()),
    )(*operands)

    flow = out[:, :, :PREDICT_COUT].reshape(N, h, w, PREDICT_COUT)
    return jnp.transpose(flow, (0, 3, 1, 2))                      # NHWC -> NCHW


# -------------------------------------------------------------- parameters ---
def _kaiming_std(fan_in, a=0.1):
    gain = math.sqrt(2.0 / (1.0 + a * a))
    return gain / math.sqrt(fan_in)


def init_params(key):
    params = {}
    keys = jax.random.split(key, 2 * len(SPECS) + 1)
    for i, (name, cin, cout, _, _) in enumerate(SPECS):
        dw_std = _kaiming_std(9.0)           # depthwise: fan_in = 1*3*3
        pw_std = _kaiming_std(float(cin))    # pointwise: fan_in = cin
        params[name] = {
            "dw": dw_std * jax.random.normal(keys[2 * i], (3, 3, cin), jnp.float32),
            "pw": pw_std * jax.random.normal(keys[2 * i + 1], (cin, cout), jnp.float32),
        }
    params["predict"] = {
        "w": _kaiming_std(PREDICT_CIN * 9.0)
        * jax.random.normal(keys[-1], (3, 3, PREDICT_CIN, PREDICT_COUT), jnp.float32),
    }
    return params


def prepare_kernel_params(params):
    """Fold eval-mode BN scale into the weights, cast MXU weights to bf16,
    lay out taps for the kernel, lane-pad the predict_flow output channels."""
    bn_scale = 1.0 / math.sqrt(1.0 + BN_EPS)
    prep = {}
    for name, cin, cout, _, _ in SPECS:
        p = params[name]
        prep[name] = {
            "dw": (p["dw"] * bn_scale).reshape(9, 1, 1, cin).astype(jnp.float32),
            "pw": (p["pw"] * bn_scale).astype(jnp.bfloat16),
        }
    wpf = params["predict"]["w"]                              # (3,3,192,2)
    wpf = jnp.pad(wpf, ((0, 0), (0, 0), (0, 0),
                        (0, PREDICT_COUT_PAD - PREDICT_COUT)))
    prep["predict"] = {
        "w": wpf.reshape(9, PREDICT_CIN, PREDICT_COUT_PAD).astype(jnp.bfloat16)}
    return prep


# ---------------------------------------------------------- pure-JAX check ---
def _bn_lrelu_ref(v):
    v = v / math.sqrt(1.0 + BN_EPS)
    return jnp.where(v >= 0.0, v, LEAKY * v)


def ref_forward(x_nchw, params):
    x = jnp.transpose(x_nchw, (0, 2, 3, 1))
    for name, _, _, stride, dilation in SPECS:
        p = params[name]
        C = x.shape[-1]
        x = lax.conv_general_dilated(
            x, p["dw"].reshape(3, 3, 1, C),
            window_strides=(stride, stride),
            padding=[(dilation, dilation), (dilation, dilation)],
            rhs_dilation=(dilation, dilation),
            dimension_numbers=("NHWC", "HWIO", "NHWC"),
            feature_group_count=C,
            precision=lax.Precision.HIGHEST)
        x = _bn_lrelu_ref(x)
        x = jnp.einsum("nhwc,co->nhwo", x, p["pw"],
                       precision=lax.Precision.HIGHEST)
        x = _bn_lrelu_ref(x)
    flow = lax.conv_general_dilated(
        x, params["predict"]["w"],
        window_strides=(1, 1), padding=[(1, 1), (1, 1)],
        dimension_numbers=("NHWC", "HWIO", "NHWC"),
        precision=lax.Precision.HIGHEST)
    return jnp.transpose(flow, (0, 3, 1, 2))


# --------------------------------------------------------------------- main --
if __name__ == "__main__":
    key = jax.random.PRNGKey(0)
    k_param, k_x = jax.random.split(key)
    params = init_params(k_param)
    kparams = prepare_kernel_params(params)
    # TinyFlowNet expects a 6-channel input (stacked image pair).
    x = jax.random.normal(k_x, (2, 6, 16, 16), jnp.float32)

    out = jax.block_until_ready(jax.jit(tiny_flownet_forward)(x, kparams))
    assert out.shape == (2, 2, 8, 8), out.shape

    ref = jax.block_until_ready(ref_forward(x, params))
    # Tolerance loosened vs the f32 reference because pointwise / predict
    # matmuls use bf16 MXU inputs (f32 accumulation) across 9 stacked layers.
    max_err = float(jnp.max(jnp.abs(out - ref)))
    assert jnp.allclose(out, ref, atol=5e-2, rtol=5e-2), max_err

    print("KERNEL_OK")
</pallas_src>

<mosaic_0001>
module attributes {stable_mosaic.version = 11 : i64} {
  func.func @_tinyflownet_kernel(%arg0: i32, %arg1: memref<4x9x9x6xf32, #tpu.memory_space<vmem>>, %arg2: memref<9x1x1x6xf32, #tpu.memory_space<vmem>>, %arg3: memref<6x24xbf16, #tpu.memory_space<vmem>>, %arg4: memref<9x1x1x24xf32, #tpu.memory_space<vmem>>, %arg5: memref<24x48xbf16, #tpu.memory_space<vmem>>, %arg6: memref<9x1x1x48xf32, #tpu.memory_space<vmem>>, %arg7: memref<48x96xbf16, #tpu.memory_space<vmem>>, %arg8: memref<9x1x1x96xf32, #tpu.memory_space<vmem>>, %arg9: memref<96x96xbf16, #tpu.memory_space<vmem>>, %arg10: memref<9x1x1x96xf32, #tpu.memory_space<vmem>>, %arg11: memref<96x192xbf16, #tpu.memory_space<vmem>>, %arg12: memref<9x1x1x192xf32, #tpu.memory_space<vmem>>, %arg13: memref<192x192xbf16, #tpu.memory_space<vmem>>, %arg14: memref<9x1x1x192xf32, #tpu.memory_space<vmem>>, %arg15: memref<192x192xbf16, #tpu.memory_space<vmem>>, %arg16: memref<9x1x1x192xf32, #tpu.memory_space<vmem>>, %arg17: memref<192x192xbf16, #tpu.memory_space<vmem>>, %arg18: memref<9x192x128xbf16, #tpu.memory_space<vmem>>, %arg19: memref<1x64x128xf32, #tpu.memory_space<vmem>>, %arg20: memref<10x10x24xf32, #tpu.memory_space<vmem>>, %arg21: memref<10x10x48xf32, #tpu.memory_space<vmem>>, %arg22: memref<10x10x96xf32, #tpu.memory_space<vmem>>, %arg23: memref<10x10x96xf32, #tpu.memory_space<vmem>>, %arg24: memref<16x16x192xf32, #tpu.memory_space<vmem>>, %arg25: memref<10x10x192xf32, #tpu.memory_space<vmem>>, %arg26: memref<10x10x192xf32, #tpu.memory_space<vmem>>, %arg27: memref<10x10x192xf32, #tpu.memory_space<vmem>>) attributes {dimension_semantics = [#tpu.dimension_semantics<parallel>], iteration_bounds = array<i64: 2>, scalar_prefetch = 0 : i64, scratch_operands = 8 : i64, tpu.core_type = #tpu.core_type<tc>, window_params = [{transform_indices = @transform_0, window_bounds = array<i64: 4, 9, 9, 6>}, {pipeline_mode = #tpu.pipeline_mode<synchronous>, transform_indices = @transform_1, window_bounds = array<i64: 9, 1, 1, 6>}, {pipeline_mode = #tpu.pipeline_mode<synchronous>, transform_indices = @transform_2, window_bounds = array<i64: 6, 24>}, {pipeline_mode = #tpu.pipeline_mode<synchronous>, transform_indices = @transform_3, window_bounds = array<i64: 9, 1, 1, 24>}, {pipeline_mode = #tpu.pipeline_mode<synchronous>, transform_indices = @transform_4, window_bounds = array<i64: 24, 48>}, {pipeline_mode = #tpu.pipeline_mode<synchronous>, transform_indices = @transform_5, window_bounds = array<i64: 9, 1, 1, 48>}, {pipeline_mode = #tpu.pipeline_mode<synchronous>, transform_indices = @transform_6, window_bounds = array<i64: 48, 96>}, {pipeline_mode = #tpu.pipeline_mode<synchronous>, transform_indices = @transform_7, window_bounds = array<i64: 9, 1, 1, 96>}, {pipeline_mode = #tpu.pipeline_mode<synchronous>, transform_indices = @transform_8, window_bounds = array<i64: 96, 96>}, {pipeline_mode = #tpu.pipeline_mode<synchronous>, transform_indices = @transform_9, window_bounds = array<i64: 9, 1, 1, 96>}, {pipeline_mode = #tpu.pipeline_mode<synchronous>, transform_indices = @transform_10, window_bounds = array<i64: 96, 192>}, {pipeline_mode = #tpu.pipeline_mode<synchronous>, transform_indices = @transform_11, window_bounds = array<i64: 9, 1, 1, 192>}, {pipeline_mode = #tpu.pipeline_mode<synchronous>, transform_indices = @transform_12, window_bounds = array<i64: 192, 192>}, {pipeline_mode = #tpu.pipeline_mode<synchronous>, transform_indices = @transform_13, window_bounds = array<i64: 9, 1, 1, 192>}, {pipeline_mode = #tpu.pipeline_mode<synchronous>, transform_indices = @transform_14, window_bounds = array<i64: 192, 192>}, {pipeline_mode = #tpu.pipeline_mode<synchronous>, transform_indices = @transform_15, window_bounds = array<i64: 9, 1, 1, 192>}, {pipeline_mode = #tpu.pipeline_mode<synchronous>, transform_indices = @transform_16, window_bounds = array<i64: 192, 192>}, {pipeline_mode = #tpu.pipeline_mode<synchronous>, transform_indices = @transform_17, window_bounds = array<i64: 9, 192, 128>}, {transform_indices = @transform_18, window_bounds = array<i64: 1, 64, 128>}]} {
    %c0 = arith.constant 0 : index
    %c0_0 = arith.constant 0 : index
    %c0_1 = arith.constant 0 : index
    %c0_2 = arith.constant 0 : index
    %0 = vector.load %arg1[%c0, %c0_0, %c0_1, %c0_2] : memref<4x9x9x6xf32, #tpu.memory_space<vmem>>, vector<1x8x8x6xf32>
    %1 = vector.shape_cast %0 : vector<1x8x8x6xf32> to vector<8x8x6xf32>
    %c0_3 = arith.constant 0 : index
    %c0_4 = arith.constant 0 : index
    %c0_5 = arith.constant 0 : index
    %c0_6 = arith.constant 0 : index
    %2 = vector.load %arg2[%c0_3, %c0_4, %c0_5, %c0_6] : memref<9x1x1x6xf32, #tpu.memory_space<vmem>>, vector<1x1x1x6xf32>
    %3 = vector.shape_cast %2 : vector<1x1x1x6xf32> to vector<1x1x6xf32>
    %4 = vector.broadcast %3 : vector<1x1x6xf32> to vector<8x8x6xf32>
    %5 = arith.mulf %1, %4 : vector<8x8x6xf32>
    %c1 = arith.constant 1 : index
    %c0_7 = arith.constant 0 : index
    %c0_8 = arith.constant 0 : index
    %c0_9 = arith.constant 0 : index
    %6 = vector.load %arg1[%c1, %c0_7, %c0_8, %c0_9] : memref<4x9x9x6xf32, #tpu.memory_space<vmem>>, vector<1x8x8x6xf32>
    %7 = vector.shape_cast %6 : vector<1x8x8x6xf32> to vector<8x8x6xf32>
    %c1_10 = arith.constant 1 : index
    %c0_11 = arith.constant 0 : index
    %c0_12 = arith.constant 0 : index
    %c0_13 = arith.constant 0 : index
    %8 = vector.load %arg2[%c1_10, %c0_11, %c0_12, %c0_13] : memref<9x1x1x6xf32, #tpu.memory_space<vmem>>, vector<1x1x1x6xf32>
    %9 = vector.shape_cast %8 : vector<1x1x1x6xf32> to vector<1x1x6xf32>
    %10 = vector.broadcast %9 : vector<1x1x6xf32> to vector<8x8x6xf32>
    %11 = arith.mulf %7, %10 : vector<8x8x6xf32>
    %12 = arith.addf %5, %11 : vector<8x8x6xf32>
    %c0_14 = arith.constant 0 : index
    %c0_15 = arith.constant 0 : index
    %c1_16 = arith.constant 1 : index
    %c0_17 = arith.constant 0 : index
    %13 = vector.load %arg1[%c0_14, %c0_15, %c1_16, %c0_17] : memref<4x9x9x6xf32, #tpu.memory_space<vmem>>, vector<1x8x8x6xf32>
    %14 = vector.shape_cast %13 : vector<1x8x8x6xf32> to vector<8x8x6xf32>
    %c2 = arith.constant 2 : index
    %c0_18 = arith.constant 0 : index
    %c0_19 = arith.constant 0 : index
    %c0_20 = arith.constant 0 : index
    %15 = vector.load %arg2[%c2, %c0_18, %c0_19, %c0_20] : memref<9x1x1x6xf32, #tpu.memory_space<vmem>>, vector<1x1x1x6xf32>
    %16 = vector.shape_cast %15 : vector<1x1x1x6xf32> to vector<1x1x6xf32>
    %17 = vector.broadcast %16 : vector<1x1x6xf32> to vector<8x8x6xf32>
    %18 = arith.mulf %14, %17 : vector<8x8x6xf32>
    %19 = arith.addf %12, %18 : vector<8x8x6xf32>
    %c2_21 = arith.constant 2 : index
    %c0_22 = arith.constant 0 : index
    %c0_23 = arith.constant 0 : index
    %c0_24 = arith.constant 0 : index
    %20 = vector.load %arg1[%c2_21, %c0_22, %c0_23, %c0_24] : memref<4x9x9x6xf32, #tpu.memory_space<vmem>>, vector<1x8x8x6xf32>
    %21 = vector.shape_cast %20 : vector<1x8x8x6xf32> to vector<8x8x6xf32>
    %c3 = arith.constant 3 : index
    %c0_25 = arith.constant 0 : index
    %c0_26 = arith.constant 0 : index
    %c0_27 = arith.constant 0 : index
    %22 = vector.load %arg2[%c3, %c0_25, %c0_26, %c0_27] : memref<9x1x1x6xf32, #tpu.memory_space<vmem>>, vector<1x1x1x6xf32>
    %23 = vector.shape_cast %22 : vector<1x1x1x6xf32> to vector<1x1x6xf32>
    %24 = vector.broadcast %23 : vector<1x1x6xf32> to vector<8x8x6xf32>
    %25 = arith.mulf %21, %24 : vector<8x8x6xf32>
    %26 = arith.addf %19, %25 : vector<8x8x6xf32>
    %c3_28 = arith.constant 3 : index
    %c0_29 = arith.constant 0 : index
    %c0_30 = arith.constant 0 : index
    %c0_31 = arith.constant 0 : index
    %27 = vector.load %arg1[%c3_28, %c0_29, %c0_30, %c0_31] : memref<4x9x9x6xf32, #tpu.memory_space<vmem>>, vector<1x8x8x6xf32>
    %28 = vector.shape_cast %27 : vector<1x8x8x6xf32> to vector<8x8x6xf32>
    %c4 = arith.constant 4 : index
    %c0_32 = arith.constant 0 : index
    %c0_33 = arith.constant 0 : index
    %c0_34 = arith.constant 0 : index
    %29 = vector.load %arg2[%c4, %c0_32, %c0_33, %c0_34] : memref<9x1x1x6xf32, #tpu.memory_space<vmem>>, vector<1x1x1x6xf32>
    %30 = vector.shape_cast %29 : vector<1x1x1x6xf32> to vector<1x1x6xf32>
    %31 = vector.broadcast %30 : vector<1x1x6xf32> to vector<8x8x6xf32>
    %32 = arith.mulf %28, %31 : vector<8x8x6xf32>
    %33 = arith.addf %26, %32 : vector<8x8x6xf32>
    %c2_35 = arith.constant 2 : index
    %c0_36 = arith.constant 0 : index
    %c1_37 = arith.constant 1 : index
    %c0_38 = arith.constant 0 : index
    %34 = vector.load %arg1[%c2_35, %c0_36, %c1_37, %c0_38] : memref<4x9x9x6xf32, #tpu.memory_space<vmem>>, vector<1x8x8x6xf32>
    %35 = vector.shape_cast %34 : vector<1x8x8x6xf32> to vector<8x8x6xf32>
    %c5 = arith.constant 5 : index
    %c0_39 = arith.constant 0 : index
    %c0_40 = arith.constant 0 : index
    %c0_41 = arith.constant 0 : index
    %36 = vector.load %arg2[%c5, %c0_39, %c0_40, %c0_41] : memref<9x1x1x6xf32, #tpu.memory_space<vmem>>, vector<1x1x1x6xf32>
    %37 = vector.shape_cast %36 : vector<1x1x1x6xf32> to vector<1x1x6xf32>
    %38 = vector.broadcast %37 : vector<1x1x6xf32> to vector<8x8x6xf32>
    %39 = arith.mulf %35, %38 : vector<8x8x6xf32>
    %40 = arith.addf %33, %39 : vector<8x8x6xf32>
    %c0_42 = arith.constant 0 : index
    %c1_43 = arith.constant 1 : index
    %c0_44 = arith.constant 0 : index
    %c0_45 = arith.constant 0 : index
    %41 = vector.load %arg1[%c0_42, %c1_43, %c0_44, %c0_45] : memref<4x9x9x6xf32, #tpu.memory_space<vmem>>, vector<1x8x8x6xf32>
    %42 = vector.shape_cast %41 : vector<1x8x8x6xf32> to vector<8x8x6xf32>
    %c6 = arith.constant 6 : index
    %c0_46 = arith.constant 0 : index
    %c0_47 = arith.constant 0 : index
    %c0_48 = arith.constant 0 : index
    %43 = vector.load %arg2[%c6, %c0_46, %c0_47, %c0_48] : memref<9x1x1x6xf32, #tpu.memory_space<vmem>>, vector<1x1x1x6xf32>
    %44 = vector.shape_cast %43 : vector<1x1x1x6xf32> to vector<1x1x6xf32>
    %45 = vector.broadcast %44 : vector<1x1x6xf32> to vector<8x8x6xf32>
    %46 = arith.mulf %42, %45 : vector<8x8x6xf32>
    %47 = arith.addf %40, %46 : vector<8x8x6xf32>
    %c1_49 = arith.constant 1 : index
    %c1_50 = arith.constant 1 : index
    %c0_51 = arith.constant 0 : index
    %c0_52 = arith.constant 0 : index
    %48 = vector.load %arg1[%c1_49, %c1_50, %c0_51, %c0_52] : memref<4x9x9x6xf32, #tpu.memory_space<vmem>>, vector<1x8x8x6xf32>
    %49 = vector.shape_cast %48 : vector<1x8x8x6xf32> to vector<8x8x6xf32>
    %c7 = arith.constant 7 : index
    %c0_53 = arith.constant 0 : index
    %c0_54 = arith.constant 0 : index
    %c0_55 = arith.constant 0 : index
    %50 = vector.load %arg2[%c7, %c0_53, %c0_54, %c0_55] : memref<9x1x1x6xf32, #tpu.memory_space<vmem>>, vector<1x1x1x6xf32>
    %51 = vector.shape_cast %50 : vector<1x1x1x6xf32> to vector<1x1x6xf32>
    %52 = vector.broadcast %51 : vector<1x1x6xf32> to vector<8x8x6xf32>
    %53 = arith.mulf %49, %52 : vector<8x8x6xf32>
    %54 = arith.addf %47, %53 : vector<8x8x6xf32>
    %c0_56 = arith.constant 0 : index
    %c1_57 = arith.constant 1 : index
    %c1_58 = arith.constant 1 : index
    %c0_59 = arith.constant 0 : index
    %55 = vector.load %arg1[%c0_56, %c1_57, %c1_58, %c0_59] : memref<4x9x9x6xf32, #tpu.memory_space<vmem>>, vector<1x8x8x6xf32>
    %56 = vector.shape_cast %55 : vector<1x8x8x6xf32> to vector<8x8x6xf32>
    %c8 = arith.constant 8 : index
    %c0_60 = arith.constant 0 : index
    %c0_61 = arith.constant 0 : index
    %c0_62 = arith.constant 0 : index
    %57 = vector.load %arg2[%c8, %c0_60, %c0_61, %c0_62] : memref<9x1x1x6xf32, #tpu.memory_space<vmem>>, vector<1x1x1x6xf32>
    %58 = vector.shape_cast %57 : vector<1x1x1x6xf32> to vector<1x1x6xf32>
    %59 = vector.broadcast %58 : vector<1x1x6xf32> to vector<8x8x6xf32>
    %60 = arith.mulf %56, %59 : vector<8x8x6xf32>
    %61 = arith.addf %54, %60 : vector<8x8x6xf32>
    %cst = arith.constant 1.000000e-01 : f32
    %62 = vector.broadcast %cst : f32 to vector<8x8x6xf32>
    %63 = arith.mulf %62, %61 : vector<8x8x6xf32>
    %64 = arith.maximumf %61, %63 : vector<8x8x6xf32>
    %65 = vector.shape_cast %64 : vector<8x8x6xf32> to vector<64x6xf32>
    %66 = arith.truncf %65 : vector<64x6xf32> to vector<64x6xbf16>
    %c0_63 = arith.constant 0 : index
    %c0_64 = arith.constant 0 : index
    %67 = vector.load %arg3[%c0_63, %c0_64] : memref<6x24xbf16, #tpu.memory_space<vmem>>, vector<6x24xbf16>
    %cst_65 = arith.constant dense<0.000000e+00> : vector<64x24xf32>
    %68 = tpu.matmul %66, %67, %cst_65 {dimension_numbers = #tpu.dot_dimension_numbers<[1], [0], [0], [1], [0, 0, 1, 1], [], []>} : vector<64x6xbf16>, vector<6x24xbf16>, vector<64x24xf32> -> vector<64x24xf32>
    %cst_66 = arith.constant 1.000000e-01 : f32
    %69 = vector.broadcast %cst_66 : f32 to vector<64x24xf32>
    %70 = arith.mulf %69, %68 : vector<64x24xf32>
    %71 = arith.maximumf %68, %70 : vector<64x24xf32>
    %72 = vector.shape_cast %71 : vector<64x24xf32> to vector<8x8x24xf32>
    %cst_67 = arith.constant 0.000000e+00 : f32
    %73 = vector.broadcast %cst_67 : f32 to vector<10x10x24xf32>
    %c0_68 = arith.constant 0 : index
    %c0_69 = arith.constant 0 : index
    %c0_70 = arith.constant 0 : index
    %74 = vector.load %arg20[%c0_68, %c0_69, %c0_70] : memref<10x10x24xf32, #tpu.memory_space<vmem>>, vector<10x10x24xf32>
    tpu.vector_store %arg20[%c0_68, %c0_69, %c0_70], %73 {strides = array<i32>} : memref<10x10x24xf32, #tpu.memory_space<vmem>>, vector<10x10x24xf32>,
    %c1_71 = arith.constant 1 : index
    %c1_72 = arith.constant 1 : index
    %c0_73 = arith.constant 0 : index
    %75 = vector.load %arg20[%c1_71, %c1_72, %c0_73] : memref<10x10x24xf32, #tpu.memory_space<vmem>>, vector<8x8x24xf32>
    tpu.vector_store %arg20[%c1_71, %c1_72, %c0_73], %72 {strides = array<i32>} : memref<10x10x24xf32, #tpu.memory_space<vmem>>, vector<8x8x24xf32>,
    %c0_74 = arith.constant 0 : index
    %c0_75 = arith.constant 0 : index
    %c0_76 = arith.constant 0 : index
    %76 = vector.load %arg20[%c0_74, %c0_75, %c0_76] : memref<10x10x24xf32, #tpu.memory_space<vmem>>, vector<8x8x24xf32>
    %c0_77 = arith.constant 0 : index
    %c0_78 = arith.constant 0 : index
    %c0_79 = arith.constant 0 : index
    %c0_80 = arith.constant 0 : index
    %77 = vector.load %arg4[%c0_77, %c0_78, %c0_79, %c0_80] : memref<9x1x1x24xf32, #tpu.memory_space<vmem>>, vector<1x1x1x24xf32>
    %78 = vector.shape_cast %77 : vector<1x1x1x24xf32> to vector<1x1x24xf32>
    %79 = vector.broadcast %78 : vector<1x1x24xf32> to vector<8x8x24xf32>
    %80 = arith.mulf %76, %79 : vector<8x8x24xf32>
    %c0_81 = arith.constant 0 : index
    %c1_82 = arith.constant 1 : index
    %c0_83 = arith.constant 0 : index
    %81 = vector.load %arg20[%c0_81, %c1_82, %c0_83] : memref<10x10x24xf32, #tpu.memory_space<vmem>>, vector<8x8x24xf32>
    %c1_84 = arith.constant 1 : index
    %c0_85 = arith.constant 0 : index
    %c0_86 = arith.constant 0 : index
    %c0_87 = arith.constant 0 : index
    %82 = vector.load %arg4[%c1_84, %c0_85, %c0_86, %c0_87] : memref<9x1x1x24xf32, #tpu.memory_space<vmem>>, vector<1x1x1x24xf32>
    %83 = vector.shape_cast %82 : vector<1x1x1x24xf32> to vector<1x1x24xf32>
    %84 = vector.broadcast %83 : vector<1x1x24xf32> to vector<8x8x24xf32>
    %85 = arith.mulf %81, %84 : vector<8x8x24xf32>
    %86 = arith.addf %80, %85 : vector<8x8x24xf32>
    %c0_88 = arith.constant 0 : index
    %c2_89 = arith.constant 2 : index
    %c0_90 = arith.constant 0 : index
    %87 = vector.load %arg20[%c0_88, %c2_89, %c0_90] : memref<10x10x24xf32, #tpu.memory_space<vmem>>, vector<8x8x24xf32>
    %c2_91 = arith.constant 2 : index
    %c0_92 = arith.constant 0 : index
    %c0_93 = arith.constant 0 : index
    %c0_94 = arith.constant 0 : index
    %88 = vector.load %arg4[%c2_91, %c0_92, %c0_93, %c0_94] : memref<9x1x1x24xf32, #tpu.memory_space<vmem>>, vector<1x1x1x24xf32>
    %89 = vector.shape_cast %88 : vector<1x1x1x24xf32> to vector<1x1x24xf32>
    %90 = vector.broadcast %89 : vector<1x1x24xf32> to vector<8x8x24xf32>
    %91 = arith.mulf %87, %90 : vector<8x8x24xf32>
    %92 = arith.addf %86, %91 : vector<8x8x24xf32>
    %c1_95 = arith.constant 1 : index
    %c0_96 = arith.constant 0 : index
    %c0_97 = arith.constant 0 : index
    %93 = vector.load %arg20[%c1_95, %c0_96, %c0_97] : memref<10x10x24xf32, #tpu.memory_space<vmem>>, vector<8x8x24xf32>
    %c3_98 = arith.constant 3 : index
    %c0_99 = arith.constant 0 : index
    %c0_100 = arith.constant 0 : index
    %c0_101 = arith.constant 0 : index
    %94 = vector.load %arg4[%c3_98, %c0_99, %c0_100, %c0_101] : memref<9x1x1x24xf32, #tpu.memory_space<vmem>>, vector<1x1x1x24xf32>
    %95 = vector.shape_cast %94 : vector<1x1x1x24xf32> to vector<1x1x24xf32>
    %96 = vector.broadcast %95 : vector<1x1x24xf32> to vector<8x8x24xf32>
    %97 = arith.mulf %93, %96 : vector<8x8x24xf32>
    %98 = arith.addf %92, %97 : vector<8x8x24xf32>
    %c1_102 = arith.constant 1 : index
    %c1_103 = arith.constant 1 : index
    %c0_104 = arith.constant 0 : index
    %99 = vector.load %arg20[%c1_102, %c1_103, %c0_104] : memref<10x10x24xf32, #tpu.memory_space<vmem>>, vector<8x8x24xf32>
    %c4_105 = arith.constant 4 : index
    %c0_106 = arith.constant 0 : index
    %c0_107 = arith.constant 0 : index
    %c0_108 = arith.constant 0 : index
    %100 = vector.load %arg4[%c4_105, %c0_106, %c0_107, %c0_108] : memref<9x1x1x24xf32, #tpu.memory_space<vmem>>, vector<1x1x1x24xf32>
    %101 = vector.shape_cast %100 : vector<1x1x1x24xf32> to vector<1x1x24xf32>
    %102 = vector.broadcast %101 : vector<1x1x24xf32> to vector<8x8x24xf32>
    %103 = arith.mulf %99, %102 : vector<8x8x24xf32>
    %104 = arith.addf %98, %103 : vector<8x8x24xf32>
    %c1_109 = arith.constant 1 : index
    %c2_110 = arith.constant 2 : index
    %c0_111 = arith.constant 0 : index
    %105 = vector.load %arg20[%c1_109, %c2_110, %c0_111] : memref<10x10x24xf32, #tpu.memory_space<vmem>>, vector<8x8x24xf32>
    %c5_112 = arith.constant 5 : index
    %c0_113 = arith.constant 0 : index
    %c0_114 = arith.constant 0 : index
    %c0_115 = arith.constant 0 : index
    %106 = vector.load %arg4[%c5_112, %c0_113, %c0_114, %c0_115] : memref<9x1x1x24xf32, #tpu.memory_space<vmem>>, vector<1x1x1x24xf32>
    %107 = vector.shape_cast %106 : vector<1x1x1x24xf32> to vector<1x1x24xf32>
    %108 = vector.broadcast %107 : vector<1x1x24xf32> to vector<8x8x24xf32>
    %109 = arith.mulf %105, %108 : vector<8x8x24xf32>
    %110 = arith.addf %104, %109 : vector<8x8x24xf32>
    %c2_116 = arith.constant 2 : index
    %c0_117 = arith.constant 0 : index
    %c0_118 = arith.constant 0 : index
    %111 = vector.load %arg20[%c2_116, %c0_117, %c0_118] : memref<10x10x24xf32, #tpu.memory_space<vmem>>, vector<8x8x24xf32>
    %c6_119 = arith.constant 6 : index
    %c0_120 = arith.constant 0 : index
    %c0_121 = arith.constant 0 : index
    %c0_122 = arith.constant 0 : index
    %112 = vector.load %arg4[%c6_119, %c0_120, %c0_121, %c0_122] : memref<9x1x1x24xf32, #tpu.memory_space<vmem>>, vector<1x1x1x24xf32>
    %113 = vector.shape_cast %112 : vector<1x1x1x24xf32> to vector<1x1x24xf32>
    %114 = vector.broadcast %113 : vector<1x1x24xf32> to vector<8x8x24xf32>
    %115 = arith.mulf %111, %114 : vector<8x8x24xf32>
    %116 = arith.addf %110, %115 : vector<8x8x24xf32>
    %c2_123 = arith.constant 2 : index
    %c1_124 = arith.constant 1 : index
    %c0_125 = arith.constant 0 : index
    %117 = vector.load %arg20[%c2_123, %c1_124, %c0_125] : memref<10x10x24xf32, #tpu.memory_space<vmem>>, vector<8x8x24xf32>
    %c7_126 = arith.constant 7 : index
    %c0_127 = arith.constant 0 : index
    %c0_128 = arith.constant 0 : index
    %c0_129 = arith.constant 0 : index
    %118 = vector.load %arg4[%c7_126, %c0_127, %c0_128, %c0_129] : memref<9x1x1x24xf32, #tpu.memory_space<vmem>>, vector<1x1x1x24xf32>
    %119 = vector.shape_cast %118 : vector<1x1x1x24xf32> to vector<1x1x24xf32>
    %120 = vector.broadcast %119 : vector<1x1x24xf32> to vector<8x8x24xf32>
    %121 = arith.mulf %117, %120 : vector<8x8x24xf32>
    %122 = arith.addf %116, %121 : vector<8x8x24xf32>
    %c2_130 = arith.constant 2 : index
    %c2_131 = arith.constant 2 : index
    %c0_132 = arith.constant 0 : index
    %123 = vector.load %arg20[%c2_130, %c2_131, %c0_132] : memref<10x10x24xf32, #tpu.memory_space<vmem>>, vector<8x8x24xf32>
    %c8_133 = arith.constant 8 : index
    %c0_134 = arith.constant 0 : index
    %c0_135 = arith.constant 0 : index
    %c0_136 = arith.constant 0 : index
    %124 = vector.load %arg4[%c8_133, %c0_134, %c0_135, %c0_136] : memref<9x1x1x24xf32, #tpu.memory_space<vmem>>, vector<1x1x1x24xf32>
    %125 = vector.shape_cast %124 : vector<1x1x1x24xf32> to vector<1x1x24xf32>
    %126 = vector.broadcast %125 : vector<1x1x24xf32> to vector<8x8x24xf32>
    %127 = arith.mulf %123, %126 : vector<8x8x24xf32>
    %128 = arith.addf %122, %127 : vector<8x8x24xf32>
    %cst_137 = arith.constant 1.000000e-01 : f32
    %129 = vector.broadcast %cst_137 : f32 to vector<8x8x24xf32>
    %130 = arith.mulf %129, %128 : vector<8x8x24xf32>
    %131 = arith.maximumf %128, %130 : vector<8x8x24xf32>
    %132 = vector.shape_cast %131 : vector<8x8x24xf32> to vector<64x24xf32>
    %133 = arith.truncf %132 : vector<64x24xf32> to vector<64x24xbf16>
    %c0_138 = arith.constant 0 : index
    %c0_139 = arith.constant 0 : index
    %134 = vector.load %arg5[%c0_138, %c0_139] : memref<24x48xbf16, #tpu.memory_space<vmem>>, vector<24x48xbf16>
    %cst_140 = arith.constant dense<0.000000e+00> : vector<64x48xf32>
    %135 = tpu.matmul %133, %134, %cst_140 {dimension_numbers = #tpu.dot_dimension_numbers<[1], [0], [0], [1], [0, 0, 1, 1], [], []>} : vector<64x24xbf16>, vector<24x48xbf16>, vector<64x48xf32> -> vector<64x48xf32>
    %cst_141 = arith.constant 1.000000e-01 : f32
    %136 = vector.broadcast %cst_141 : f32 to vector<64x48xf32>
    %137 = arith.mulf %136, %135 : vector<64x48xf32>
    %138 = arith.maximumf %135, %137 : vector<64x48xf32>
    %139 = vector.shape_cast %138 : vector<64x48xf32> to vector<8x8x48xf32>
    %cst_142 = arith.constant 0.000000e+00 : f32
    %140 = vector.broadcast %cst_142 : f32 to vector<10x10x48xf32>
    %c0_143 = arith.constant 0 : index
    %c0_144 = arith.constant 0 : index
    %c0_145 = arith.constant 0 : index
    %141 = vector.load %arg21[%c0_143, %c0_144, %c0_145] : memref<10x10x48xf32, #tpu.memory_space<vmem>>, vector<10x10x48xf32>
    tpu.vector_store %arg21[%c0_143, %c0_144, %c0_145], %140 {strides = array<i32>} : memref<10x10x48xf32, #tpu.memory_space<vmem>>, vector<10x10x48xf32>,
    %c1_146 = arith.constant 1 : index
    %c1_147 = arith.constant 1 : index
    %c0_148 = arith.constant 0 : index
    %142 = vector.load %arg21[%c1_146, %c1_147, %c0_148] : memref<10x10x48xf32, #tpu.memory_space<vmem>>, vector<8x8x48xf32>
    tpu.vector_store %arg21[%c1_146, %c1_147, %c0_148], %139 {strides = array<i32>} : memref<10x10x48xf32, #tpu.memory_space<vmem>>, vector<8x8x48xf32>,
    %c0_149 = arith.constant 0 : index
    %c0_150 = arith.constant 0 : index
    %c0_151 = arith.constant 0 : index
    %143 = vector.load %arg21[%c0_149, %c0_150, %c0_151] : memref<10x10x48xf32, #tpu.memory_space<vmem>>, vector<8x8x48xf32>
    %c0_152 = arith.constant 0 : index
    %c0_153 = arith.constant 0 : index
    %c0_154 = arith.constant 0 : index
    %c0_155 = arith.constant 0 : index
    %144 = vector.load %arg6[%c0_152, %c0_153, %c0_154, %c0_155] : memref<9x1x1x48xf32, #tpu.memory_space<vmem>>, vector<1x1x1x48xf32>
    %145 = vector.shape_cast %144 : vector<1x1x1x48xf32> to vector<1x1x48xf32>
    %146 = vector.broadcast %145 : vector<1x1x48xf32> to vector<8x8x48xf32>
    %147 = arith.mulf %143, %146 : vector<8x8x48xf32>
    %c0_156 = arith.constant 0 : index
    %c1_157 = arith.constant 1 : index
    %c0_158 = arith.constant 0 : index
    %148 = vector.load %arg21[%c0_156, %c1_157, %c0_158] : memref<10x10x48xf32, #tpu.memory_space<vmem>>, vector<8x8x48xf32>
    %c1_159 = arith.constant 1 : index
    %c0_160 = arith.constant 0 : index
    %c0_161 = arith.constant 0 : index
    %c0_162 = arith.constant 0 : index
    %149 = vector.load %arg6[%c1_159, %c0_160, %c0_161, %c0_162] : memref<9x1x1x48xf32, #tpu.memory_space<vmem>>, vector<1x1x1x48xf32>
    %150 = vector.shape_cast %149 : vector<1x1x1x48xf32> to vector<1x1x48xf32>
    %151 = vector.broadcast %150 : vector<1x1x48xf32> to vector<8x8x48xf32>
    %152 = arith.mulf %148, %151 : vector<8x8x48xf32>
    %153 = arith.addf %147, %152 : vector<8x8x48xf32>
    %c0_163 = arith.constant 0 : index
    %c2_164 = arith.constant 2 : index
    %c0_165 = arith.constant 0 : index
    %154 = vector.load %arg21[%c0_163, %c2_164, %c0_165] : memref<10x10x48xf32, #tpu.memory_space<vmem>>, vector<8x8x48xf32>
    %c2_166 = arith.constant 2 : index
    %c0_167 = arith.constant 0 : index
    %c0_168 = arith.constant 0 : index
    %c0_169 = arith.constant 0 : index
    %155 = vector.load %arg6[%c2_166, %c0_167, %c0_168, %c0_169] : memref<9x1x1x48xf32, #tpu.memory_space<vmem>>, vector<1x1x1x48xf32>
    %156 = vector.shape_cast %155 : vector<1x1x1x48xf32> to vector<1x1x48xf32>
    %157 = vector.broadcast %156 : vector<1x1x48xf32> to vector<8x8x48xf32>
    %158 = arith.mulf %154, %157 : vector<8x8x48xf32>
    %159 = arith.addf %153, %158 : vector<8x8x48xf32>
    %c1_170 = arith.constant 1 : index
    %c0_171 = arith.constant 0 : index
    %c0_172 = arith.constant 0 : index
    %160 = vector.load %arg21[%c1_170, %c0_171, %c0_172] : memref<10x10x48xf32, #tpu.memory_space<vmem>>, vector<8x8x48xf32>
    %c3_173 = arith.constant 3 : index
    %c0_174 = arith.constant 0 : index
    %c0_175 = arith.constant 0 : index
    %c0_176 = arith.constant 0 : index
    %161 = vector.load %arg6[%c3_173, %c0_174, %c0_175, %c0_176] : memref<9x1x1x48xf32, #tpu.memory_space<vmem>>, vector<1x1x1x48xf32>
    %162 = vector.shape_cast %161 : vector<1x1x1x48xf32> to vector<1x1x48xf32>
    %163 = vector.broadcast %162 : vector<1x1x48xf32> to vector<8x8x48xf32>
    %164 = arith.mulf %160, %163 : vector<8x8x48xf32>
    %165 = arith.addf %159, %164 : vector<8x8x48xf32>
    %c1_177 = arith.constant 1 : index
    %c1_178 = arith.constant 1 : index
    %c0_179 = arith.constant 0 : index
    %166 = vector.load %arg21[%c1_177, %c1_178, %c0_179] : memref<10x10x48xf32, #tpu.memory_space<vmem>>, vector<8x8x48xf32>
    %c4_180 = arith.constant 4 : index
    %c0_181 = arith.constant 0 : index
    %c0_182 = arith.constant 0 : index
    %c0_183 = arith.constant 0 : index
    %167 = vector.load %arg6[%c4_180, %c0_181, %c0_182, %c0_183] : memref<9x1x1x48xf32, #tpu.memory_space<vmem>>, vector<1x1x1x48xf32>
    %168 = vector.shape_cast %167 : vector<1x1x1x48xf32> to vector<1x1x48xf32>
    %169 = vector.broadcast %168 : vector<1x1x48xf32> to vector<8x8x48xf32>
    %170 = arith.mulf %166, %169 : vector<8x8x48xf32>
    %171 = arith.addf %165, %170 : vector<8x8x48xf32>
    %c1_184 = arith.constant 1 : index
    %c2_185 = arith.constant 2 : index
    %c0_186 = arith.constant 0 : index
    %172 = vector.load %arg21[%c1_184, %c2_185, %c0_186] : memref<10x10x48xf32, #tpu.memory_space<vmem>>, vector<8x8x48xf32>
    %c5_187 = arith.constant 5 : index
    %c0_188 = arith.constant 0 : index
    %c0_189 = arith.constant 0 : index
    %c0_190 = arith.constant 0 : index
    %173 = vector.load %arg6[%c5_187, %c0_188, %c0_189, %c0_190] : memref<9x1x1x48xf32, #tpu.memory_space<vmem>>, vector<1x1x1x48xf32>
    %174 = vector.shape_cast %173 : vector<1x1x1x48xf32> to vector<1x1x48xf32>
    %175 = vector.broadcast %174 : vector<1x1x48xf32> to vector<8x8x48xf32>
    %176 = arith.mulf %172, %175 : vector<8x8x48xf32>
    %177 = arith.addf %171, %176 : vector<8x8x48xf32>
    %c2_191 = arith.constant 2 : index
    %c0_192 = arith.constant 0 : index
    %c0_193 = arith.constant 0 : index
    %178 = vector.load %arg21[%c2_191, %c0_192, %c0_193] : memref<10x10x48xf32, #tpu.memory_space<vmem>>, vector<8x8x48xf32>
    %c6_194 = arith.constant 6 : index
    %c0_195 = arith.constant 0 : index
    %c0_196 = arith.constant 0 : index
    %c0_197 = arith.constant 0 : index
    %179 = vector.load %arg6[%c6_194, %c0_195, %c0_196, %c0_197] : memref<9x1x1x48xf32, #tpu.memory_space<vmem>>, vector<1x1x1x48xf32>
    %180 = vector.shape_cast %179 : vector<1x1x1x48xf32> to vector<1x1x48xf32>
    %181 = vector.broadcast %180 : vector<1x1x48xf32> to vector<8x8x48xf32>
    %182 = arith.mulf %178, %181 : vector<8x8x48xf32>
    %183 = arith.addf %177, %182 : vector<8x8x48xf32>
    %c2_198 = arith.constant 2 : index
    %c1_199 = arith.constant 1 : index
    %c0_200 = arith.constant 0 : index
    %184 = vector.load %arg21[%c2_198, %c1_199, %c0_200] : memref<10x10x48xf32, #tpu.memory_space<vmem>>, vector<8x8x48xf32>
    %c7_201 = arith.constant 7 : index
    %c0_202 = arith.constant 0 : index
    %c0_203 = arith.constant 0 : index
    %c0_204 = arith.constant 0 : index
    %185 = vector.load %arg6[%c7_201, %c0_202, %c0_203, %c0_204] : memref<9x1x1x48xf32, #tpu.memory_space<vmem>>, vector<1x1x1x48xf32>
    %186 = vector.shape_cast %185 : vector<1x1x1x48xf32> to vector<1x1x48xf32>
    %187 = vector.broadcast %186 : vector<1x1x48xf32> to vector<8x8x48xf32>
    %188 = arith.mulf %184, %187 : vector<8x8x48xf32>
    %189 = arith.addf %183, %188 : vector<8x8x48xf32>
    %c2_205 = arith.constant 2 : index
    %c2_206 = arith.constant 2 : index
    %c0_207 = arith.constant 0 : index
    %190 = vector.load %arg21[%c2_205, %c2_206, %c0_207] : memref<10x10x48xf32, #tpu.memory_space<vmem>>, vector<8x8x48xf32>
    %c8_208 = arith.constant 8 : index
    %c0_209 = arith.constant 0 : index
    %c0_210 = arith.constant 0 : index
    %c0_211 = arith.constant 0 : index
    %191 = vector.load %arg6[%c8_208, %c0_209, %c0_210, %c0_211] : memref<9x1x1x48xf32, #tpu.memory_space<vmem>>, vector<1x1x1x48xf32>
    %192 = vector.shape_cast %191 : vector<1x1x1x48xf32> to vector<1x1x48xf32>
    %193 = vector.broadcast %192 : vector<1x1x48xf32> to vector<8x8x48xf32>
    %194 = arith.mulf %190, %193 : vector<8x8x48xf32>
    %195 = arith.addf %189, %194 : vector<8x8x48xf32>
    %cst_212 = arith.constant 1.000000e-01 : f32
    %196 = vector.broadcast %cst_212 : f32 to vector<8x8x48xf32>
    %197 = arith.mulf %196, %195 : vector<8x8x48xf32>
    %198 = arith.maximumf %195, %197 : vector<8x8x48xf32>
    %199 = vector.shape_cast %198 : vector<8x8x48xf32> to vector<64x48xf32>
    %200 = arith.truncf %199 : vector<64x48xf32> to vector<64x48xbf16>
    %c0_213 = arith.constant 0 : index
    %c0_214 = arith.constant 0 : index
    %201 = vector.load %arg7[%c0_213, %c0_214] : memref<48x96xbf16, #tpu.memory_space<vmem>>, vector<48x96xbf16>
    %cst_215 = arith.constant dense<0.000000e+00> : vector<64x96xf32>
    %202 = tpu.matmul %200, %201, %cst_215 {dimension_numbers = #tpu.dot_dimension_numbers<[1], [0], [0], [1], [0, 0, 1, 1], [], []>} : vector<64x48xbf16>, vector<48x96xbf16>, vector<64x96xf32> -> vector<64x96xf32>
    %cst_216 = arith.constant 1.000000e-01 : f32
    %203 = vector.broadcast %cst_216 : f32 to vector<64x96xf32>
    %204 = arith.mulf %203, %202 : vector<64x96xf32>
    %205 = arith.maximumf %202, %204 : vector<64x96xf32>
    %206 = vector.shape_cast %205 : vector<64x96xf32> to vector<8x8x96xf32>
    %cst_217 = arith.constant 0.000000e+00 : f32
    %207 = vector.broadcast %cst_217 : f32 to vector<10x10x96xf32>
    %c0_218 = arith.constant 0 : index
    %c0_219 = arith.constant 0 : index
    %c0_220 = arith.constant 0 : index
    %208 = vector.load %arg22[%c0_218, %c0_219, %c0_220] : memref<10x10x96xf32, #tpu.memory_space<vmem>>, vector<10x10x96xf32>
    tpu.vector_store %arg22[%c0_218, %c0_219, %c0_220], %207 {strides = array<i32>} : memref<10x10x96xf32, #tpu.memory_space<vmem>>, vector<10x10x96xf32>,
    %c1_221 = arith.constant 1 : index
    %c1_222 = arith.constant 1 : index
    %c0_223 = arith.constant 0 : index
    %209 = vector.load %arg22[%c1_221, %c1_222, %c0_223] : memref<10x10x96xf32, #tpu.memory_space<vmem>>, vector<8x8x96xf32>
    tpu.vector_store %arg22[%c1_221, %c1_222, %c0_223], %206 {strides = array<i32>} : memref<10x10x96xf32, #tpu.memory_space<vmem>>, vector<8x8x96xf32>,
    %c0_224 = arith.constant 0 : index
    %c0_225 = arith.constant 0 : index
    %c0_226 = arith.constant 0 : index
    %210 = vector.load %arg22[%c0_224, %c0_225, %c0_226] : memref<10x10x96xf32, #tpu.memory_space<vmem>>, vector<8x8x96xf32>
    %c0_227 = arith.constant 0 : index
    %c0_228 = arith.constant 0 : index
    %c0_229 = arith.constant 0 : index
    %c0_230 = arith.constant 0 : index
    %211 = vector.load %arg8[%c0_227, %c0_228, %c0_229, %c0_230] : memref<9x1x1x96xf32, #tpu.memory_space<vmem>>, vector<1x1x1x96xf32>
    %212 = vector.shape_cast %211 : vector<1x1x1x96xf32> to vector<1x1x96xf32>
    %213 = vector.broadcast %212 : vector<1x1x96xf32> to vector<8x8x96xf32>
    %214 = arith.mulf %210, %213 : vector<8x8x96xf32>
    %c0_231 = arith.constant 0 : index
    %c1_232 = arith.constant 1 : index
    %c0_233 = arith.constant 0 : index
    %215 = vector.load %arg22[%c0_231, %c1_232, %c0_233] : memref<10x10x96xf32, #tpu.memory_space<vmem>>, vector<8x8x96xf32>
    %c1_234 = arith.constant 1 : index
    %c0_235 = arith.constant 0 : index
    %c0_236 = arith.constant 0 : index
    %c0_237 = arith.constant 0 : index
    %216 = vector.load %arg8[%c1_234, %c0_235, %c0_236, %c0_237] : memref<9x1x1x96xf32, #tpu.memory_space<vmem>>, vector<1x1x1x96xf32>
    %217 = vector.shape_cast %216 : vector<1x1x1x96xf32> to vector<1x1x96xf32>
    %218 = vector.broadcast %217 : vector<1x1x96xf32> to vector<8x8x96xf32>
    %219 = arith.mulf %215, %218 : vector<8x8x96xf32>
    %220 = arith.addf %214, %219 : vector<8x8x96xf32>
    %c0_238 = arith.constant 0 : index
    %c2_239 = arith.constant 2 : index
    %c0_240 = arith.constant 0 : index
    %221 = vector.load %arg22[%c0_238, %c2_239, %c0_240] : memref<10x10x96xf32, #tpu.memory_space<vmem>>, vector<8x8x96xf32>
    %c2_241 = arith.constant 2 : index
    %c0_242 = arith.constant 0 : index
    %c0_243 = arith.constant 0 : index
    %c0_244 = arith.constant 0 : index
    %222 = vector.load %arg8[%c2_241, %c0_242, %c0_243, %c0_244] : memref<9x1x1x96xf32, #tpu.memory_space<vmem>>, vector<1x1x1x96xf32>
    %223 = vector.shape_cast %222 : vector<1x1x1x96xf32> to vector<1x1x96xf32>
    %224 = vector.broadcast %223 : vector<1x1x96xf32> to vector<8x8x96xf32>
    %225 = arith.mulf %221, %224 : vector<8x8x96xf32>
    %226 = arith.addf %220, %225 : vector<8x8x96xf32>
    %c1_245 = arith.constant 1 : index
    %c0_246 = arith.constant 0 : index
    %c0_247 = arith.constant 0 : index
    %227 = vector.load %arg22[%c1_245, %c0_246, %c0_247] : memref<10x10x96xf32, #tpu.memory_space<vmem>>, vector<8x8x96xf32>
    %c3_248 = arith.constant 3 : index
    %c0_249 = arith.constant 0 : index
    %c0_250 = arith.constant 0 : index
    %c0_251 = arith.constant 0 : index
    %228 = vector.load %arg8[%c3_248, %c0_249, %c0_250, %c0_251] : memref<9x1x1x96xf32, #tpu.memory_space<vmem>>, vector<1x1x1x96xf32>
    %229 = vector.shape_cast %228 : vector<1x1x1x96xf32> to vector<1x1x96xf32>
    %230 = vector.broadcast %229 : vector<1x1x96xf32> to vector<8x8x96xf32>
    %231 = arith.mulf %227, %230 : vector<8x8x96xf32>
    %232 = arith.addf %226, %231 : vector<8x8x96xf32>
    %c1_252 = arith.constant 1 : index
    %c1_253 = arith.constant 1 : index
    %c0_254 = arith.constant 0 : index
    %233 = vector.load %arg22[%c1_252, %c1_253, %c0_254] : memref<10x10x96xf32, #tpu.memory_space<vmem>>, vector<8x8x96xf32>
    %c4_255 = arith.constant 4 : index
    %c0_256 = arith.constant 0 : index
    %c0_257 = arith.constant 0 : index
    %c0_258 = arith.constant 0 : index
    %234 = vector.load %arg8[%c4_255, %c0_256, %c0_257, %c0_258] : memref<9x1x1x96xf32, #tpu.memory_space<vmem>>, vector<1x1x1x96xf32>
    %235 = vector.shape_cast %234 : vector<1x1x1x96xf32> to vector<1x1x96xf32>
    %236 = vector.broadcast %235 : vector<1x1x96xf32> to vector<8x8x96xf32>
    %237 = arith.mulf %233, %236 : vector<8x8x96xf32>
    %238 = arith.addf %232, %237 : vector<8x8x96xf32>
    %c1_259 = arith.constant 1 : index
    %c2_260 = arith.constant 2 : index
    %c0_261 = arith.constant 0 : index
    %239 = vector.load %arg22[%c1_259, %c2_260, %c0_261] : memref<10x10x96xf32, #tpu.memory_space<vmem>>, vector<8x8x96xf32>
    %c5_262 = arith.constant 5 : index
    %c0_263 = arith.constant 0 : index
    %c0_264 = arith.constant 0 : index
    %c0_265 = arith.constant 0 : index
    %240 = vector.load %arg8[%c5_262, %c0_263, %c0_264, %c0_265] : memref<9x1x1x96xf32, #tpu.memory_space<vmem>>, vector<1x1x1x96xf32>
    %241 = vector.shape_cast %240 : vector<1x1x1x96xf32> to vector<1x1x96xf32>
    %242 = vector.broadcast %241 : vector<1x1x96xf32> to vector<8x8x96xf32>
    %243 = arith.mulf %239, %242 : vector<8x8x96xf32>
    %244 = arith.addf %238, %243 : vector<8x8x96xf32>
    %c2_266 = arith.constant 2 : index
    %c0_267 = arith.constant 0 : index
    %c0_268 = arith.constant 0 : index
    %245 = vector.load %arg22[%c2_266, %c0_267, %c0_268] : memref<10x10x96xf32, #tpu.memory_space<vmem>>, vector<8x8x96xf32>
    %c6_269 = arith.constant 6 : index
    %c0_270 = arith.constant 0 : index
    %c0_271 = arith.constant 0 : index
    %c0_272 = arith.constant 0 : index
    %246 = vector.load %arg8[%c6_269, %c0_270, %c0_271, %c0_272] : memref<9x1x1x96xf32, #tpu.memory_space<vmem>>, vector<1x1x1x96xf32>
    %247 = vector.shape_cast %246 : vector<1x1x1x96xf32> to vector<1x1x96xf32>
    %248 = vector.broadcast %247 : vector<1x1x96xf32> to vector<8x8x96xf32>
    %249 = arith.mulf %245, %248 : vector<8x8x96xf32>
    %250 = arith.addf %244, %249 : vector<8x8x96xf32>
    %c2_273 = arith.constant 2 : index
    %c1_274 = arith.constant 1 : index
    %c0_275 = arith.constant 0 : index
    %251 = vector.load %arg22[%c2_273, %c1_274, %c0_275] : memref<10x10x96xf32, #tpu.memory_space<vmem>>, vector<8x8x96xf32>
    %c7_276 = arith.constant 7 : index
    %c0_277 = arith.constant 0 : index
    %c0_278 = arith.constant 0 : index
    %c0_279 = arith.constant 0 : index
    %252 = vector.load %arg8[%c7_276, %c0_277, %c0_278, %c0_279] : memref<9x1x1x96xf32, #tpu.memory_space<vmem>>, vector<1x1x1x96xf32>
    %253 = vector.shape_cast %252 : vector<1x1x1x96xf32> to vector<1x1x96xf32>
    %254 = vector.broadcast %253 : vector<1x1x96xf32> to vector<8x8x96xf32>
    %255 = arith.mulf %251, %254 : vector<8x8x96xf32>
    %256 = arith.addf %250, %255 : vector<8x8x96xf32>
    %c2_280 = arith.constant 2 : index
    %c2_281 = arith.constant 2 : index
    %c0_282 = arith.constant 0 : index
    %257 = vector.load %arg22[%c2_280, %c2_281, %c0_282] : memref<10x10x96xf32, #tpu.memory_space<vmem>>, vector<8x8x96xf32>
    %c8_283 = arith.constant 8 : index
    %c0_284 = arith.constant 0 : index
    %c0_285 = arith.constant 0 : index
    %c0_286 = arith.constant 0 : index
    %258 = vector.load %arg8[%c8_283, %c0_284, %c0_285, %c0_286] : memref<9x1x1x96xf32, #tpu.memory_space<vmem>>, vector<1x1x1x96xf32>
    %259 = vector.shape_cast %258 : vector<1x1x1x96xf32> to vector<1x1x96xf32>
    %260 = vector.broadcast %259 : vector<1x1x96xf32> to vector<8x8x96xf32>
    %261 = arith.mulf %257, %260 : vector<8x8x96xf32>
    %262 = arith.addf %256, %261 : vector<8x8x96xf32>
    %cst_287 = arith.constant 1.000000e-01 : f32
    %263 = vector.broadcast %cst_287 : f32 to vector<8x8x96xf32>
    %264 = arith.mulf %263, %262 : vector<8x8x96xf32>
    %265 = arith.maximumf %262, %264 : vector<8x8x96xf32>
    %266 = vector.shape_cast %265 : vector<8x8x96xf32> to vector<64x96xf32>
    %267 = arith.truncf %266 : vector<64x96xf32> to vector<64x96xbf16>
    %c0_288 = arith.constant 0 : index
    %c0_289 = arith.constant 0 : index
    %268 = vector.load %arg9[%c0_288, %c0_289] : memref<96x96xbf16, #tpu.memory_space<vmem>>, vector<96x96xbf16>
    %cst_290 = arith.constant dense<0.000000e+00> : vector<64x96xf32>
    %269 = tpu.matmul %267, %268, %cst_290 {dimension_numbers = #tpu.dot_dimension_numbers<[1], [0], [0], [1], [0, 0, 1, 1], [], []>} : vector<64x96xbf16>, vector<96x96xbf16>, vector<64x96xf32> -> vector<64x96xf32>
    %cst_291 = arith.constant 1.000000e-01 : f32
    %270 = vector.broadcast %cst_291 : f32 to vector<64x96xf32>
    %271 = arith.mulf %270, %269 : vector<64x96xf32>
    %272 = arith.maximumf %269, %271 : vector<64x96xf32>
    %273 = vector.shape_cast %272 : vector<64x96xf32> to vector<8x8x96xf32>
    %cst_292 = arith.constant 0.000000e+00 : f32
    %274 = vector.broadcast %cst_292 : f32 to vector<10x10x96xf32>
    %c0_293 = arith.constant 0 : index
    %c0_294 = arith.constant 0 : index
    %c0_295 = arith.constant 0 : index
    %275 = vector.load %arg23[%c0_293, %c0_294, %c0_295] : memref<10x10x96xf32, #tpu.memory_space<vmem>>, vector<10x10x96xf32>
    tpu.vector_store %arg23[%c0_293, %c0_294, %c0_295], %274 {strides = array<i32>} : memref<10x10x96xf32, #tpu.memory_space<vmem>>, vector<10x10x96xf32>,
    %c1_296 = arith.constant 1 : index
    %c1_297 = arith.constant 1 : index
    %c0_298 = arith.constant 0 : index
    %276 = vector.load %arg23[%c1_296, %c1_297, %c0_298] : memref<10x10x96xf32, #tpu.memory_space<vmem>>, vector<8x8x96xf32>
    tpu.vector_store %arg23[%c1_296, %c1_297, %c0_298], %273 {strides = array<i32>} : memref<10x10x96xf32, #tpu.memory_space<vmem>>, vector<8x8x96xf32>,
    %c0_299 = arith.constant 0 : index
    %c0_300 = arith.constant 0 : index
    %c0_301 = arith.constant 0 : index
    %277 = vector.load %arg23[%c0_299, %c0_300, %c0_301] : memref<10x10x96xf32, #tpu.memory_space<vmem>>, vector<8x8x96xf32>
    %c0_302 = arith.constant 0 : index
    %c0_303 = arith.constant 0 : index
    %c0_304 = arith.constant 0 : index
    %c0_305 = arith.constant 0 : index
    %278 = vector.load %arg10[%c0_302, %c0_303, %c0_304, %c0_305] : memref<9x1x1x96xf32, #tpu.memory_space<vmem>>, vector<1x1x1x96xf32>
    %279 = vector.shape_cast %278 : vector<1x1x1x96xf32> to vector<1x1x96xf32>
    %280 = vector.broadcast %279 : vector<1x1x96xf32> to vector<8x8x96xf32>
    %281 = arith.mulf %277, %280 : vector<8x8x96xf32>
    %c0_306 = arith.constant 0 : index
    %c1_307 = arith.constant 1 : index
    %c0_308 = arith.constant 0 : index
    %282 = vector.load %arg23[%c0_306, %c1_307, %c0_308] : memref<10x10x96xf32, #tpu.memory_space<vmem>>, vector<8x8x96xf32>
    %c1_309 = arith.constant 1 : index
    %c0_310 = arith.constant 0 : index
    %c0_311 = arith.constant 0 : index
    %c0_312 = arith.constant 0 : index
    %283 = vector.load %arg10[%c1_309, %c0_310, %c0_311, %c0_312] : memref<9x1x1x96xf32, #tpu.memory_space<vmem>>, vector<1x1x1x96xf32>
    %284 = vector.shape_cast %283 : vector<1x1x1x96xf32> to vector<1x1x96xf32>
    %285 = vector.broadcast %284 : vector<1x1x96xf32> to vector<8x8x96xf32>
    %286 = arith.mulf %282, %285 : vector<8x8x96xf32>
    %287 = arith.addf %281, %286 : vector<8x8x96xf32>
    %c0_313 = arith.constant 0 : index
    %c2_314 = arith.constant 2 : index
    %c0_315 = arith.constant 0 : index
    %288 = vector.load %arg23[%c0_313, %c2_314, %c0_315] : memref<10x10x96xf32, #tpu.memory_space<vmem>>, vector<8x8x96xf32>
    %c2_316 = arith.constant 2 : index
    %c0_317 = arith.constant 0 : index
    %c0_318 = arith.constant 0 : index
    %c0_319 = arith.constant 0 : index
    %289 = vector.load %arg10[%c2_316, %c0_317, %c0_318, %c0_319] : memref<9x1x1x96xf32, #tpu.memory_space<vmem>>, vector<1x1x1x96xf32>
    %290 = vector.shape_cast %289 : vector<1x1x1x96xf32> to vector<1x1x96xf32>
    %291 = vector.broadcast %290 : vector<1x1x96xf32> to vector<8x8x96xf32>
    %292 = arith.mulf %288, %291 : vector<8x8x96xf32>
    %293 = arith.addf %287, %292 : vector<8x8x96xf32>
    %c1_320 = arith.constant 1 : index
    %c0_321 = arith.constant 0 : index
    %c0_322 = arith.constant 0 : index
    %294 = vector.load %arg23[%c1_320, %c0_321, %c0_322] : memref<10x10x96xf32, #tpu.memory_space<vmem>>, vector<8x8x96xf32>
    %c3_323 = arith.constant 3 : index
    %c0_324 = arith.constant 0 : index
    %c0_325 = arith.constant 0 : index
    %c0_326 = arith.constant 0 : index
    %295 = vector.load %arg10[%c3_323, %c0_324, %c0_325, %c0_326] : memref<9x1x1x96xf32, #tpu.memory_space<vmem>>, vector<1x1x1x96xf32>
    %296 = vector.shape_cast %295 : vector<1x1x1x96xf32> to vector<1x1x96xf32>
    %297 = vector.broadcast %296 : vector<1x1x96xf32> to vector<8x8x96xf32>
    %298 = arith.mulf %294, %297 : vector<8x8x96xf32>
    %299 = arith.addf %293, %298 : vector<8x8x96xf32>
    %c1_327 = arith.constant 1 : index
    %c1_328 = arith.constant 1 : index
    %c0_329 = arith.constant 0 : index
    %300 = vector.load %arg23[%c1_327, %c1_328, %c0_329] : memref<10x10x96xf32, #tpu.memory_space<vmem>>, vector<8x8x96xf32>
    %c4_330 = arith.constant 4 : index
    %c0_331 = arith.constant 0 : index
    %c0_332 = arith.constant 0 : index
    %c0_333 = arith.constant 0 : index
    %301 = vector.load %arg10[%c4_330, %c0_331, %c0_332, %c0_333] : memref<9x1x1x96xf32, #tpu.memory_space<vmem>>, vector<1x1x1x96xf32>
    %302 = vector.shape_cast %301 : vector<1x1x1x96xf32> to vector<1x1x96xf32>
    %303 = vector.broadcast %302 : vector<1x1x96xf32> to vector<8x8x96xf32>
    %304 = arith.mulf %300, %303 : vector<8x8x96xf32>
    %305 = arith.addf %299, %304 : vector<8x8x96xf32>
    %c1_334 = arith.constant 1 : index
    %c2_335 = arith.constant 2 : index
    %c0_336 = arith.constant 0 : index
    %306 = vector.load %arg23[%c1_334, %c2_335, %c0_336] : memref<10x10x96xf32, #tpu.memory_space<vmem>>, vector<8x8x96xf32>
    %c5_337 = arith.constant 5 : index
    %c0_338 = arith.constant 0 : index
    %c0_339 = arith.constant 0 : index
    %c0_340 = arith.constant 0 : index
    %307 = vector.load %arg10[%c5_337, %c0_338, %c0_339, %c0_340] : memref<9x1x1x96xf32, #tpu.memory_space<vmem>>, vector<1x1x1x96xf32>
    %308 = vector.shape_cast %307 : vector<1x1x1x96xf32> to vector<1x1x96xf32>
    %309 = vector.broadcast %308 : vector<1x1x96xf32> to vector<8x8x96xf32>
    %310 = arith.mulf %306, %309 : vector<8x8x96xf32>
    %311 = arith.addf %305, %310 : vector<8x8x96xf32>
    %c2_341 = arith.constant 2 : index
    %c0_342 = arith.constant 0 : index
    %c0_343 = arith.constant 0 : index
    %312 = vector.load %arg23[%c2_341, %c0_342, %c0_343] : memref<10x10x96xf32, #tpu.memory_space<vmem>>, vector<8x8x96xf32>
    %c6_344 = arith.constant 6 : index
    %c0_345 = arith.constant 0 : index
    %c0_346 = arith.constant 0 : index
    %c0_347 = arith.constant 0 : index
    %313 = vector.load %arg10[%c6_344, %c0_345, %c0_346, %c0_347] : memref<9x1x1x96xf32, #tpu.memory_space<vmem>>, vector<1x1x1x96xf32>
    %314 = vector.shape_cast %313 : vector<1x1x1x96xf32> to vector<1x1x96xf32>
    %315 = vector.broadcast %314 : vector<1x1x96xf32> to vector<8x8x96xf32>
    %316 = arith.mulf %312, %315 : vector<8x8x96xf32>
    %317 = arith.addf %311, %316 : vector<8x8x96xf32>
    %c2_348 = arith.constant 2 : index
    %c1_349 = arith.constant 1 : index
    %c0_350 = arith.constant 0 : index
    %318 = vector.load %arg23[%c2_348, %c1_349, %c0_350] : memref<10x10x96xf32, #tpu.memory_space<vmem>>, vector<8x8x96xf32>
    %c7_351 = arith.constant 7 : index
    %c0_352 = arith.constant 0 : index
    %c0_353 = arith.constant 0 : index
    %c0_354 = arith.constant 0 : index
    %319 = vector.load %arg10[%c7_351, %c0_352, %c0_353, %c0_354] : memref<9x1x1x96xf32, #tpu.memory_space<vmem>>, vector<1x1x1x96xf32>
    %320 = vector.shape_cast %319 : vector<1x1x1x96xf32> to vector<1x1x96xf32>
    %321 = vector.broadcast %320 : vector<1x1x96xf32> to vector<8x8x96xf32>
    %322 = arith.mulf %318, %321 : vector<8x8x96xf32>
    %323 = arith.addf %317, %322 : vector<8x8x96xf32>
    %c2_355 = arith.constant 2 : index
    %c2_356 = arith.constant 2 : index
    %c0_357 = arith.constant 0 : index
    %324 = vector.load %arg23[%c2_355, %c2_356, %c0_357] : memref<10x10x96xf32, #tpu.memory_space<vmem>>, vector<8x8x96xf32>
    %c8_358 = arith.constant 8 : index
    %c0_359 = arith.constant 0 : index
    %c0_360 = arith.constant 0 : index
    %c0_361 = arith.constant 0 : index
    %325 = vector.load %arg10[%c8_358, %c0_359, %c0_360, %c0_361] : memref<9x1x1x96xf32, #tpu.memory_space<vmem>>, vector<1x1x1x96xf32>
    %326 = vector.shape_cast %325 : vector<1x1x1x96xf32> to vector<1x1x96xf32>
    %327 = vector.broadcast %326 : vector<1x1x96xf32> to vector<8x8x96xf32>
    %328 = arith.mulf %324, %327 : vector<8x8x96xf32>
    %329 = arith.addf %323, %328 : vector<8x8x96xf32>
    %cst_362 = arith.constant 1.000000e-01 : f32
    %330 = vector.broadcast %cst_362 : f32 to vector<8x8x96xf32>
    %331 = arith.mulf %330, %329 : vector<8x8x96xf32>
    %332 = arith.maximumf %329, %331 : vector<8x8x96xf32>
    %333 = vector.shape_cast %332 : vector<8x8x96xf32> to vector<64x96xf32>
    %334 = arith.truncf %333 : vector<64x96xf32> to vector<64x96xbf16>
    %c0_363 = arith.constant 0 : index
    %c0_364 = arith.constant 0 : index
    %335 = vector.load %arg11[%c0_363, %c0_364] : memref<96x192xbf16, #tpu.memory_space<vmem>>, vector<96x192xbf16>
    %cst_365 = arith.constant dense<0.000000e+00> : vector<64x192xf32>
    %336 = tpu.matmul %334, %335, %cst_365 {dimension_numbers = #tpu.dot_dimension_numbers<[1], [0], [0], [1], [0, 0, 1, 1], [], []>} : vector<64x96xbf16>, vector<96x192xbf16>, vector<64x192xf32> -> vector<64x192xf32>
    %cst_366 = arith.constant 1.000000e-01 : f32
    %337 = vector.broadcast %cst_366 : f32 to vector<64x192xf32>
    %338 = arith.mulf %337, %336 : vector<64x192xf32>
    %339 = arith.maximumf %336, %338 : vector<64x192xf32>
    %340 = vector.shape_cast %339 : vector<64x192xf32> to vector<8x8x192xf32>
    %cst_367 = arith.constant 0.000000e+00 : f32
    %341 = vector.broadcast %cst_367 : f32 to vector<16x16x192xf32>
    %c0_368 = arith.constant 0 : index
    %c0_369 = arith.constant 0 : index
    %c0_370 = arith.constant 0 : index
    %342 = vector.load %arg24[%c0_368, %c0_369, %c0_370] : memref<16x16x192xf32, #tpu.memory_space<vmem>>, vector<16x16x192xf32>
    tpu.vector_store %arg24[%c0_368, %c0_369, %c0_370], %341 {strides = array<i32>} : memref<16x16x192xf32, #tpu.memory_space<vmem>>, vector<16x16x192xf32>,
    %c4_371 = arith.constant 4 : index
    %c4_372 = arith.constant 4 : index
    %c0_373 = arith.constant 0 : index
    %343 = vector.load %arg24[%c4_371, %c4_372, %c0_373] : memref<16x16x192xf32, #tpu.memory_space<vmem>>, vector<8x8x192xf32>
    tpu.vector_store %arg24[%c4_371, %c4_372, %c0_373], %340 {strides = array<i32>} : memref<16x16x192xf32, #tpu.memory_space<vmem>>, vector<8x8x192xf32>,
    %c0_374 = arith.constant 0 : index
    %c0_375 = arith.constant 0 : index
    %c0_376 = arith.constant 0 : index
    %344 = vector.load %arg24[%c0_374, %c0_375, %c0_376] : memref<16x16x192xf32, #tpu.memory_space<vmem>>, vector<8x8x192xf32>
    %c0_377 = arith.constant 0 : index
    %c0_378 = arith.constant 0 : index
    %c0_379 = arith.constant 0 : index
    %c0_380 = arith.constant 0 : index
    %345 = vector.load %arg12[%c0_377, %c0_378, %c0_379, %c0_380] : memref<9x1x1x192xf32, #tpu.memory_space<vmem>>, vector<1x1x1x192xf32>
    %346 = vector.shape_cast %345 : vector<1x1x1x192xf32> to vector<1x1x192xf32>
    %347 = vector.broadcast %346 : vector<1x1x192xf32> to vector<8x8x192xf32>
    %348 = arith.mulf %344, %347 : vector<8x8x192xf32>
    %c0_381 = arith.constant 0 : index
    %c4_382 = arith.constant 4 : index
    %c0_383 = arith.constant 0 : index
    %349 = vector.load %arg24[%c0_381, %c4_382, %c0_383] : memref<16x16x192xf32, #tpu.memory_space<vmem>>, vector<8x8x192xf32>
    %c1_384 = arith.constant 1 : index
    %c0_385 = arith.constant 0 : index
    %c0_386 = arith.constant 0 : index
    %c0_387 = arith.constant 0 : index
    %350 = vector.load %arg12[%c1_384, %c0_385, %c0_386, %c0_387] : memref<9x1x1x192xf32, #tpu.memory_space<vmem>>, vector<1x1x1x192xf32>
    %351 = vector.shape_cast %350 : vector<1x1x1x192xf32> to vector<1x1x192xf32>
    %352 = vector.broadcast %351 : vector<1x1x192xf32> to vector<8x8x192xf32>
    %353 = arith.mulf %349, %352 : vector<8x8x192xf32>
    %354 = arith.addf %348, %353 : vector<8x8x192xf32>
    %c0_388 = arith.constant 0 : index
    %c8_389 = arith.constant 8 : index
    %c0_390 = arith.constant 0 : index
    %355 = vector.load %arg24[%c0_388, %c8_389, %c0_390] : memref<16x16x192xf32, #tpu.memory_space<vmem>>, vector<8x8x192xf32>
    %c2_391 = arith.constant 2 : index
    %c0_392 = arith.constant 0 : index
    %c0_393 = arith.constant 0 : index
    %c0_394 = arith.constant 0 : index
    %356 = vector.load %arg12[%c2_391, %c0_392, %c0_393, %c0_394] : memref<9x1x1x192xf32, #tpu.memory_space<vmem>>, vector<1x1x1x192xf32>
    %357 = vector.shape_cast %356 : vector<1x1x1x192xf32> to vector<1x1x192xf32>
    %358 = vector.broadcast %357 : vector<1x1x192xf32> to vector<8x8x192xf32>
    %359 = arith.mulf %355, %358 : vector<8x8x192xf32>
    %360 = arith.addf %354, %359 : vector<8x8x192xf32>
    %c4_395 = arith.constant 4 : index
    %c0_396 = arith.constant 0 : index
    %c0_397 = arith.constant 0 : index
    %361 = vector.load %arg24[%c4_395, %c0_396, %c0_397] : memref<16x16x192xf32, #tpu.memory_space<vmem>>, vector<8x8x192xf32>
    %c3_398 = arith.constant 3 : index
    %c0_399 = arith.constant 0 : index
    %c0_400 = arith.constant 0 : index
    %c0_401 = arith.constant 0 : index
    %362 = vector.load %arg12[%c3_398, %c0_399, %c0_400, %c0_401] : memref<9x1x1x192xf32, #tpu.memory_space<vmem>>, vector<1x1x1x192xf32>
    %363 = vector.shape_cast %362 : vector<1x1x1x192xf32> to vector<1x1x192xf32>
    %364 = vector.broadcast %363 : vector<1x1x192xf32> to vector<8x8x192xf32>
    %365 = arith.mulf %361, %364 : vector<8x8x192xf32>
    %366 = arith.addf %360, %365 : vector<8x8x192xf32>
    %c4_402 = arith.constant 4 : index
    %c4_403 = arith.constant 4 : index
    %c0_404 = arith.constant 0 : index
    %367 = vector.load %arg24[%c4_402, %c4_403, %c0_404] : memref<16x16x192xf32, #tpu.memory_space<vmem>>, vector<8x8x192xf32>
    %c4_405 = arith.constant 4 : index
    %c0_406 = arith.constant 0 : index
    %c0_407 = arith.constant 0 : index
    %c0_408 = arith.constant 0 : index
    %368 = vector.load %arg12[%c4_405, %c0_406, %c0_407, %c0_408] : memref<9x1x1x192xf32, #tpu.memory_space<vmem>>, vector<1x1x1x192xf32>
    %369 = vector.shape_cast %368 : vector<1x1x1x192xf32> to vector<1x1x192xf32>
    %370 = vector.broadcast %369 : vector<1x1x192xf32> to vector<8x8x192xf32>
    %371 = arith.mulf %367, %370 : vector<8x8x192xf32>
    %372 = arith.addf %366, %371 : vector<8x8x192xf32>
    %c4_409 = arith.constant 4 : index
    %c8_410 = arith.constant 8 : index
    %c0_411 = arith.constant 0 : index
    %373 = vector.load %arg24[%c4_409, %c8_410, %c0_411] : memref<16x16x192xf32, #tpu.memory_space<vmem>>, vector<8x8x192xf32>
    %c5_412 = arith.constant 5 : index
    %c0_413 = arith.constant 0 : index
    %c0_414 = arith.constant 0 : index
    %c0_415 = arith.constant 0 : index
    %374 = vector.load %arg12[%c5_412, %c0_413, %c0_414, %c0_415] : memref<9x1x1x192xf32, #tpu.memory_space<vmem>>, vector<1x1x1x192xf32>
    %375 = vector.shape_cast %374 : vector<1x1x1x192xf32> to vector<1x1x192xf32>
    %376 = vector.broadcast %375 : vector<1x1x192xf32> to vector<8x8x192xf32>
    %377 = arith.mulf %373, %376 : vector<8x8x192xf32>
    %378 = arith.addf %372, %377 : vector<8x8x192xf32>
    %c8_416 = arith.constant 8 : index
    %c0_417 = arith.constant 0 : index
    %c0_418 = arith.constant 0 : index
    %379 = vector.load %arg24[%c8_416, %c0_417, %c0_418] : memref<16x16x192xf32, #tpu.memory_space<vmem>>, vector<8x8x192xf32>
    %c6_419 = arith.constant 6 : index
    %c0_420 = arith.constant 0 : index
    %c0_421 = arith.constant 0 : index
    %c0_422 = arith.constant 0 : index
    %380 = vector.load %arg12[%c6_419, %c0_420, %c0_421, %c0_422] : memref<9x1x1x192xf32, #tpu.memory_space<vmem>>, vector<1x1x1x192xf32>
    %381 = vector.shape_cast %380 : vector<1x1x1x192xf32> to vector<1x1x192xf32>
    %382 = vector.broadcast %381 : vector<1x1x192xf32> to vector<8x8x192xf32>
    %383 = arith.mulf %379, %382 : vector<8x8x192xf32>
    %384 = arith.addf %378, %383 : vector<8x8x192xf32>
    %c8_423 = arith.constant 8 : index
    %c4_424 = arith.constant 4 : index
    %c0_425 = arith.constant 0 : index
    %385 = vector.load %arg24[%c8_423, %c4_424, %c0_425] : memref<16x16x192xf32, #tpu.memory_space<vmem>>, vector<8x8x192xf32>
    %c7_426 = arith.constant 7 : index
    %c0_427 = arith.constant 0 : index
    %c0_428 = arith.constant 0 : index
    %c0_429 = arith.constant 0 : index
    %386 = vector.load %arg12[%c7_426, %c0_427, %c0_428, %c0_429] : memref<9x1x1x192xf32, #tpu.memory_space<vmem>>, vector<1x1x1x192xf32>
    %387 = vector.shape_cast %386 : vector<1x1x1x192xf32> to vector<1x1x192xf32>
    %388 = vector.broadcast %387 : vector<1x1x192xf32> to vector<8x8x192xf32>
    %389 = arith.mulf %385, %388 : vector<8x8x192xf32>
    %390 = arith.addf %384, %389 : vector<8x8x192xf32>
    %c8_430 = arith.constant 8 : index
    %c8_431 = arith.constant 8 : index
    %c0_432 = arith.constant 0 : index
    %391 = vector.load %arg24[%c8_430, %c8_431, %c0_432] : memref<16x16x192xf32, #tpu.memory_space<vmem>>, vector<8x8x192xf32>
    %c8_433 = arith.constant 8 : index
    %c0_434 = arith.constant 0 : index
    %c0_435 = arith.constant 0 : index
    %c0_436 = arith.constant 0 : index
    %392 = vector.load %arg12[%c8_433, %c0_434, %c0_435, %c0_436] : memref<9x1x1x192xf32, #tpu.memory_space<vmem>>, vector<1x1x1x192xf32>
    %393 = vector.shape_cast %392 : vector<1x1x1x192xf32> to vector<1x1x192xf32>
    %394 = vector.broadcast %393 : vector<1x1x192xf32> to vector<8x8x192xf32>
    %395 = arith.mulf %391, %394 : vector<8x8x192xf32>
    %396 = arith.addf %390, %395 : vector<8x8x192xf32>
    %cst_437 = arith.constant 1.000000e-01 : f32
    %397 = vector.broadcast %cst_437 : f32 to vector<8x8x192xf32>
    %398 = arith.mulf %397, %396 : vector<8x8x192xf32>
    %399 = arith.maximumf %396, %398 : vector<8x8x192xf32>
    %400 = vector.shape_cast %399 : vector<8x8x192xf32> to vector<64x192xf32>
    %401 = arith.truncf %400 : vector<64x192xf32> to vector<64x192xbf16>
    %c0_438 = arith.constant 0 : index
    %c0_439 = arith.constant 0 : index
    %402 = vector.load %arg13[%c0_438, %c0_439] : memref<192x192xbf16, #tpu.memory_space<vmem>>, vector<192x192xbf16>
    %cst_440 = arith.constant dense<0.000000e+00> : vector<64x192xf32>
    %403 = tpu.matmul %401, %402, %cst_440 {dimension_numbers = #tpu.dot_dimension_numbers<[1], [0], [0], [1], [0, 0, 1, 1], [], []>} : vector<64x192xbf16>, vector<192x192xbf16>, vector<64x192xf32> -> vector<64x192xf32>
    %cst_441 = arith.constant 1.000000e-01 : f32
    %404 = vector.broadcast %cst_441 : f32 to vector<64x192xf32>
    %405 = arith.mulf %404, %403 : vector<64x192xf32>
    %406 = arith.maximumf %403, %405 : vector<64x192xf32>
    %407 = vector.shape_cast %406 : vector<64x192xf32> to vector<8x8x192xf32>
    %cst_442 = arith.constant 0.000000e+00 : f32
    %408 = vector.broadcast %cst_442 : f32 to vector<10x10x192xf32>
    %c0_443 = arith.constant 0 : index
    %c0_444 = arith.constant 0 : index
    %c0_445 = arith.constant 0 : index
    %409 = vector.load %arg25[%c0_443, %c0_444, %c0_445] : memref<10x10x192xf32, #tpu.memory_space<vmem>>, vector<10x10x192xf32>
    tpu.vector_store %arg25[%c0_443, %c0_444, %c0_445], %408 {strides = array<i32>} : memref<10x10x192xf32, #tpu.memory_space<vmem>>, vector<10x10x192xf32>,
    %c1_446 = arith.constant 1 : index
    %c1_447 = arith.constant 1 : index
    %c0_448 = arith.constant 0 : index
    %410 = vector.load %arg25[%c1_446, %c1_447, %c0_448] : memref<10x10x192xf32, #tpu.memory_space<vmem>>, vector<8x8x192xf32>
    tpu.vector_store %arg25[%c1_446, %c1_447, %c0_448], %407 {strides = array<i32>} : memref<10x10x192xf32, #tpu.memory_space<vmem>>, vector<8x8x192xf32>,
    %c0_449 = arith.constant 0 : index
    %c0_450 = arith.constant 0 : index
    %c0_451 = arith.constant 0 : index
    %411 = vector.load %arg25[%c0_449, %c0_450, %c0_451] : memref<10x10x192xf32, #tpu.memory_space<vmem>>, vector<8x8x192xf32>
    %c0_452 = arith.constant 0 : index
    %c0_453 = arith.constant 0 : index
    %c0_454 = arith.constant 0 : index
    %c0_455 = arith.constant 0 : index
    %412 = vector.load %arg14[%c0_452, %c0_453, %c0_454, %c0_455] : memref<9x1x1x192xf32, #tpu.memory_space<vmem>>, vector<1x1x1x192xf32>
    %413 = vector.shape_cast %412 : vector<1x1x1x192xf32> to vector<1x1x192xf32>
    %414 = vector.broadcast %413 : vector<1x1x192xf32> to vector<8x8x192xf32>
    %415 = arith.mulf %411, %414 : vector<8x8x192xf32>
    %c0_456 = arith.constant 0 : index
    %c1_457 = arith.constant 1 : index
    %c0_458 = arith.constant 0 : index
    %416 = vector.load %arg25[%c0_456, %c1_457, %c0_458] : memref<10x10x192xf32, #tpu.memory_space<vmem>>, vector<8x8x192xf32>
    %c1_459 = arith.constant 1 : index
    %c0_460 = arith.constant 0 : index
    %c0_461 = arith.constant 0 : index
    %c0_462 = arith.constant 0 : index
    %417 = vector.load %arg14[%c1_459, %c0_460, %c0_461, %c0_462] : memref<9x1x1x192xf32, #tpu.memory_space<vmem>>, vector<1x1x1x192xf32>
    %418 = vector.shape_cast %417 : vector<1x1x1x192xf32> to vector<1x1x192xf32>
    %419 = vector.broadcast %418 : vector<1x1x192xf32> to vector<8x8x192xf32>
    %420 = arith.mulf %416, %419 : vector<8x8x192xf32>
    %421 = arith.addf %415, %420 : vector<8x8x192xf32>
    %c0_463 = arith.constant 0 : index
    %c2_464 = arith.constant 2 : index
    %c0_465 = arith.constant 0 : index
    %422 = vector.load %arg25[%c0_463, %c2_464, %c0_465] : memref<10x10x192xf32, #tpu.memory_space<vmem>>, vector<8x8x192xf32>
    %c2_466 = arith.constant 2 : index
    %c0_467 = arith.constant 0 : index
    %c0_468 = arith.constant 0 : index
    %c0_469 = arith.constant 0 : index
    %423 = vector.load %arg14[%c2_466, %c0_467, %c0_468, %c0_469] : memref<9x1x1x192xf32, #tpu.memory_space<vmem>>, vector<1x1x1x192xf32>
    %424 = vector.shape_cast %423 : vector<1x1x1x192xf32> to vector<1x1x192xf32>
    %425 = vector.broadcast %424 : vector<1x1x192xf32> to vector<8x8x192xf32>
    %426 = arith.mulf %422, %425 : vector<8x8x192xf32>
    %427 = arith.addf %421, %426 : vector<8x8x192xf32>
    %c1_470 = arith.constant 1 : index
    %c0_471 = arith.constant 0 : index
    %c0_472 = arith.constant 0 : index
    %428 = vector.load %arg25[%c1_470, %c0_471, %c0_472] : memref<10x10x192xf32, #tpu.memory_space<vmem>>, vector<8x8x192xf32>
    %c3_473 = arith.constant 3 : index
    %c0_474 = arith.constant 0 : index
    %c0_475 = arith.constant 0 : index
    %c0_476 = arith.constant 0 : index
    %429 = vector.load %arg14[%c3_473, %c0_474, %c0_475, %c0_476] : memref<9x1x1x192xf32, #tpu.memory_space<vmem>>, vector<1x1x1x192xf32>
    %430 = vector.shape_cast %429 : vector<1x1x1x192xf32> to vector<1x1x192xf32>
    %431 = vector.broadcast %430 : vector<1x1x192xf32> to vector<8x8x192xf32>
    %432 = arith.mulf %428, %431 : vector<8x8x192xf32>
    %433 = arith.addf %427, %432 : vector<8x8x192xf32>
    %c1_477 = arith.constant 1 : index
    %c1_478 = arith.constant 1 : index
    %c0_479 = arith.constant 0 : index
    %434 = vector.load %arg25[%c1_477, %c1_478, %c0_479] : memref<10x10x192xf32, #tpu.memory_space<vmem>>, vector<8x8x192xf32>
    %c4_480 = arith.constant 4 : index
    %c0_481 = arith.constant 0 : index
    %c0_482 = arith.constant 0 : index
    %c0_483 = arith.constant 0 : index
    %435 = vector.load %arg14[%c4_480, %c0_481, %c0_482, %c0_483] : memref<9x1x1x192xf32, #tpu.memory_space<vmem>>, vector<1x1x1x192xf32>
    %436 = vector.shape_cast %435 : vector<1x1x1x192xf32> to vector<1x1x192xf32>
    %437 = vector.broadcast %436 : vector<1x1x192xf32> to vector<8x8x192xf32>
    %438 = arith.mulf %434, %437 : vector<8x8x192xf32>
    %439 = arith.addf %433, %438 : vector<8x8x192xf32>
    %c1_484 = arith.constant 1 : index
    %c2_485 = arith.constant 2 : index
    %c0_486 = arith.constant 0 : index
    %440 = vector.load %arg25[%c1_484, %c2_485, %c0_486] : memref<10x10x192xf32, #tpu.memory_space<vmem>>, vector<8x8x192xf32>
    %c5_487 = arith.constant 5 : index
    %c0_488 = arith.constant 0 : index
    %c0_489 = arith.constant 0 : index
    %c0_490 = arith.constant 0 : index
    %441 = vector.load %arg14[%c5_487, %c0_488, %c0_489, %c0_490] : memref<9x1x1x192xf32, #tpu.memory_space<vmem>>, vector<1x1x1x192xf32>
    %442 = vector.shape_cast %441 : vector<1x1x1x192xf32> to vector<1x1x192xf32>
    %443 = vector.broadcast %442 : vector<1x1x192xf32> to vector<8x8x192xf32>
    %444 = arith.mulf %440, %443 : vector<8x8x192xf32>
    %445 = arith.addf %439, %444 : vector<8x8x192xf32>
    %c2_491 = arith.constant 2 : index
    %c0_492 = arith.constant 0 : index
    %c0_493 = arith.constant 0 : index
    %446 = vector.load %arg25[%c2_491, %c0_492, %c0_493] : memref<10x10x192xf32, #tpu.memory_space<vmem>>, vector<8x8x192xf32>
    %c6_494 = arith.constant 6 : index
    %c0_495 = arith.constant 0 : index
    %c0_496 = arith.constant 0 : index
    %c0_497 = arith.constant 0 : index
    %447 = vector.load %arg14[%c6_494, %c0_495, %c0_496, %c0_497] : memref<9x1x1x192xf32, #tpu.memory_space<vmem>>, vector<1x1x1x192xf32>
    %448 = vector.shape_cast %447 : vector<1x1x1x192xf32> to vector<1x1x192xf32>
    %449 = vector.broadcast %448 : vector<1x1x192xf32> to vector<8x8x192xf32>
    %450 = arith.mulf %446, %449 : vector<8x8x192xf32>
    %451 = arith.addf %445, %450 : vector<8x8x192xf32>
    %c2_498 = arith.constant 2 : index
    %c1_499 = arith.constant 1 : index
    %c0_500 = arith.constant 0 : index
    %452 = vector.load %arg25[%c2_498, %c1_499, %c0_500] : memref<10x10x192xf32, #tpu.memory_space<vmem>>, vector<8x8x192xf32>
    %c7_501 = arith.constant 7 : index
    %c0_502 = arith.constant 0 : index
    %c0_503 = arith.constant 0 : index
    %c0_504 = arith.constant 0 : index
    %453 = vector.load %arg14[%c7_501, %c0_502, %c0_503, %c0_504] : memref<9x1x1x192xf32, #tpu.memory_space<vmem>>, vector<1x1x1x192xf32>
    %454 = vector.shape_cast %453 : vector<1x1x1x192xf32> to vector<1x1x192xf32>
    %455 = vector.broadcast %454 : vector<1x1x192xf32> to vector<8x8x192xf32>
    %456 = arith.mulf %452, %455 : vector<8x8x192xf32>
    %457 = arith.addf %451, %456 : vector<8x8x192xf32>
    %c2_505 = arith.constant 2 : index
    %c2_506 = arith.constant 2 : index
    %c0_507 = arith.constant 0 : index
    %458 = vector.load %arg25[%c2_505, %c2_506, %c0_507] : memref<10x10x192xf32, #tpu.memory_space<vmem>>, vector<8x8x192xf32>
    %c8_508 = arith.constant 8 : index
    %c0_509 = arith.constant 0 : index
    %c0_510 = arith.constant 0 : index
    %c0_511 = arith.constant 0 : index
    %459 = vector.load %arg14[%c8_508, %c0_509, %c0_510, %c0_511] : memref<9x1x1x192xf32, #tpu.memory_space<vmem>>, vector<1x1x1x192xf32>
    %460 = vector.shape_cast %459 : vector<1x1x1x192xf32> to vector<1x1x192xf32>
    %461 = vector.broadcast %460 : vector<1x1x192xf32> to vector<8x8x192xf32>
    %462 = arith.mulf %458, %461 : vector<8x8x192xf32>
    %463 = arith.addf %457, %462 : vector<8x8x192xf32>
    %cst_512 = arith.constant 1.000000e-01 : f32
    %464 = vector.broadcast %cst_512 : f32 to vector<8x8x192xf32>
    %465 = arith.mulf %464, %463 : vector<8x8x192xf32>
    %466 = arith.maximumf %463, %465 : vector<8x8x192xf32>
    %467 = vector.shape_cast %466 : vector<8x8x192xf32> to vector<64x192xf32>
    %468 = arith.truncf %467 : vector<64x192xf32> to vector<64x192xbf16>
    %c0_513 = arith.constant 0 : index
    %c0_514 = arith.constant 0 : index
    %469 = vector.load %arg15[%c0_513, %c0_514] : memref<192x192xbf16, #tpu.memory_space<vmem>>, vector<192x192xbf16>
    %cst_515 = arith.constant dense<0.000000e+00> : vector<64x192xf32>
    %470 = tpu.matmul %468, %469, %cst_515 {dimension_numbers = #tpu.dot_dimension_numbers<[1], [0], [0], [1], [0, 0, 1, 1], [], []>} : vector<64x192xbf16>, vector<192x192xbf16>, vector<64x192xf32> -> vector<64x192xf32>
    %cst_516 = arith.constant 1.000000e-01 : f32
    %471 = vector.broadcast %cst_516 : f32 to vector<64x192xf32>
    %472 = arith.mulf %471, %470 : vector<64x192xf32>
    %473 = arith.maximumf %470, %472 : vector<64x192xf32>
    %474 = vector.shape_cast %473 : vector<64x192xf32> to vector<8x8x192xf32>
    %cst_517 = arith.constant 0.000000e+00 : f32
    %475 = vector.broadcast %cst_517 : f32 to vector<10x10x192xf32>
    %c0_518 = arith.constant 0 : index
    %c0_519 = arith.constant 0 : index
    %c0_520 = arith.constant 0 : index
    %476 = vector.load %arg26[%c0_518, %c0_519, %c0_520] : memref<10x10x192xf32, #tpu.memory_space<vmem>>, vector<10x10x192xf32>
    tpu.vector_store %arg26[%c0_518, %c0_519, %c0_520], %475 {strides = array<i32>} : memref<10x10x192xf32, #tpu.memory_space<vmem>>, vector<10x10x192xf32>,
    %c1_521 = arith.constant 1 : index
    %c1_522 = arith.constant 1 : index
    %c0_523 = arith.constant 0 : index
    %477 = vector.load %arg26[%c1_521, %c1_522, %c0_523] : memref<10x10x192xf32, #tpu.memory_space<vmem>>, vector<8x8x192xf32>
    tpu.vector_store %arg26[%c1_521, %c1_522, %c0_523], %474 {strides = array<i32>} : memref<10x10x192xf32, #tpu.memory_space<vmem>>, vector<8x8x192xf32>,
    %c0_524 = arith.constant 0 : index
    %c0_525 = arith.constant 0 : index
    %c0_526 = arith.constant 0 : index
    %478 = vector.load %arg26[%c0_524, %c0_525, %c0_526] : memref<10x10x192xf32, #tpu.memory_space<vmem>>, vector<8x8x192xf32>
    %c0_527 = arith.constant 0 : index
    %c0_528 = arith.constant 0 : index
    %c0_529 = arith.constant 0 : index
    %c0_530 = arith.constant 0 : index
    %479 = vector.load %arg16[%c0_527, %c0_528, %c0_529, %c0_530] : memref<9x1x1x192xf32, #tpu.memory_space<vmem>>, vector<1x1x1x192xf32>
    %480 = vector.shape_cast %479 : vector<1x1x1x192xf32> to vector<1x1x192xf32>
    %481 = vector.broadcast %480 : vector<1x1x192xf32> to vector<8x8x192xf32>
    %482 = arith.mulf %478, %481 : vector<8x8x192xf32>
    %c0_531 = arith.constant 0 : index
    %c1_532 = arith.constant 1 : index
    %c0_533 = arith.constant 0 : index
    %483 = vector.load %arg26[%c0_531, %c1_532, %c0_533] : memref<10x10x192xf32, #tpu.memory_space<vmem>>, vector<8x8x192xf32>
    %c1_534 = arith.constant 1 : index
    %c0_535 = arith.constant 0 : index
    %c0_536 = arith.constant 0 : index
    %c0_537 = arith.constant 0 : index
    %484 = vector.load %arg16[%c1_534, %c0_535, %c0_536, %c0_537] : memref<9x1x1x192xf32, #tpu.memory_space<vmem>>, vector<1x1x1x192xf32>
    %485 = vector.shape_cast %484 : vector<1x1x1x192xf32> to vector<1x1x192xf32>
    %486 = vector.broadcast %485 : vector<1x1x192xf32> to vector<8x8x192xf32>
    %487 = arith.mulf %483, %486 : vector<8x8x192xf32>
    %488 = arith.addf %482, %487 : vector<8x8x192xf32>
    %c0_538 = arith.constant 0 : index
    %c2_539 = arith.constant 2 : index
    %c0_540 = arith.constant 0 : index
    %489 = vector.load %arg26[%c0_538, %c2_539, %c0_540] : memref<10x10x192xf32, #tpu.memory_space<vmem>>, vector<8x8x192xf32>
    %c2_541 = arith.constant 2 : index
    %c0_542 = arith.constant 0 : index
    %c0_543 = arith.constant 0 : index
    %c0_544 = arith.constant 0 : index
    %490 = vector.load %arg16[%c2_541, %c0_542, %c0_543, %c0_544] : memref<9x1x1x192xf32, #tpu.memory_space<vmem>>, vector<1x1x1x192xf32>
    %491 = vector.shape_cast %490 : vector<1x1x1x192xf32> to vector<1x1x192xf32>
    %492 = vector.broadcast %491 : vector<1x1x192xf32> to vector<8x8x192xf32>
    %493 = arith.mulf %489, %492 : vector<8x8x192xf32>
    %494 = arith.addf %488, %493 : vector<8x8x192xf32>
    %c1_545 = arith.constant 1 : index
    %c0_546 = arith.constant 0 : index
    %c0_547 = arith.constant 0 : index
    %495 = vector.load %arg26[%c1_545, %c0_546, %c0_547] : memref<10x10x192xf32, #tpu.memory_space<vmem>>, vector<8x8x192xf32>
    %c3_548 = arith.constant 3 : index
    %c0_549 = arith.constant 0 : index
    %c0_550 = arith.constant 0 : index
    %c0_551 = arith.constant 0 : index
    %496 = vector.load %arg16[%c3_548, %c0_549, %c0_550, %c0_551] : memref<9x1x1x192xf32, #tpu.memory_space<vmem>>, vector<1x1x1x192xf32>
    %497 = vector.shape_cast %496 : vector<1x1x1x192xf32> to vector<1x1x192xf32>
    %498 = vector.broadcast %497 : vector<1x1x192xf32> to vector<8x8x192xf32>
    %499 = arith.mulf %495, %498 : vector<8x8x192xf32>
    %500 = arith.addf %494, %499 : vector<8x8x192xf32>
    %c1_552 = arith.constant 1 : index
    %c1_553 = arith.constant 1 : index
    %c0_554 = arith.constant 0 : index
    %501 = vector.load %arg26[%c1_552, %c1_553, %c0_554] : memref<10x10x192xf32, #tpu.memory_space<vmem>>, vector<8x8x192xf32>
    %c4_555 = arith.constant 4 : index
    %c0_556 = arith.constant 0 : index
    %c0_557 = arith.constant 0 : index
    %c0_558 = arith.constant 0 : index
    %502 = vector.load %arg16[%c4_555, %c0_556, %c0_557, %c0_558] : memref<9x1x1x192xf32, #tpu.memory_space<vmem>>, vector<1x1x1x192xf32>
    %503 = vector.shape_cast %502 : vector<1x1x1x192xf32> to vector<1x1x192xf32>
    %504 = vector.broadcast %503 : vector<1x1x192xf32> to vector<8x8x192xf32>
    %505 = arith.mulf %501, %504 : vector<8x8x192xf32>
    %506 = arith.addf %500, %505 : vector<8x8x192xf32>
    %c1_559 = arith.constant 1 : index
    %c2_560 = arith.constant 2 : index
    %c0_561 = arith.constant 0 : index
    %507 = vector.load %arg26[%c1_559, %c2_560, %c0_561] : memref<10x10x192xf32, #tpu.memory_space<vmem>>, vector<8x8x192xf32>
    %c5_562 = arith.constant 5 : index
    %c0_563 = arith.constant 0 : index
    %c0_564 = arith.constant 0 : index
    %c0_565 = arith.constant 0 : index
    %508 = vector.load %arg16[%c5_562, %c0_563, %c0_564, %c0_565] : memref<9x1x1x192xf32, #tpu.memory_space<vmem>>, vector<1x1x1x192xf32>
    %509 = vector.shape_cast %508 : vector<1x1x1x192xf32> to vector<1x1x192xf32>
    %510 = vector.broadcast %509 : vector<1x1x192xf32> to vector<8x8x192xf32>
    %511 = arith.mulf %507, %510 : vector<8x8x192xf32>
    %512 = arith.addf %506, %511 : vector<8x8x192xf32>
    %c2_566 = arith.constant 2 : index
    %c0_567 = arith.constant 0 : index
    %c0_568 = arith.constant 0 : index
    %513 = vector.load %arg26[%c2_566, %c0_567, %c0_568] : memref<10x10x192xf32, #tpu.memory_space<vmem>>, vector<8x8x192xf32>
    %c6_569 = arith.constant 6 : index
    %c0_570 = arith.constant 0 : index
    %c0_571 = arith.constant 0 : index
    %c0_572 = arith.constant 0 : index
    %514 = vector.load %arg16[%c6_569, %c0_570, %c0_571, %c0_572] : memref<9x1x1x192xf32, #tpu.memory_space<vmem>>, vector<1x1x1x192xf32>
    %515 = vector.shape_cast %514 : vector<1x1x1x192xf32> to vector<1x1x192xf32>
    %516 = vector.broadcast %515 : vector<1x1x192xf32> to vector<8x8x192xf32>
    %517 = arith.mulf %513, %516 : vector<8x8x192xf32>
    %518 = arith.addf %512, %517 : vector<8x8x192xf32>
    %c2_573 = arith.constant 2 : index
    %c1_574 = arith.constant 1 : index
    %c0_575 = arith.constant 0 : index
    %519 = vector.load %arg26[%c2_573, %c1_574, %c0_575] : memref<10x10x192xf32, #tpu.memory_space<vmem>>, vector<8x8x192xf32>
    %c7_576 = arith.constant 7 : index
    %c0_577 = arith.constant 0 : index
    %c0_578 = arith.constant 0 : index
    %c0_579 = arith.constant 0 : index
    %520 = vector.load %arg16[%c7_576, %c0_577, %c0_578, %c0_579] : memref<9x1x1x192xf32, #tpu.memory_space<vmem>>, vector<1x1x1x192xf32>
    %521 = vector.shape_cast %520 : vector<1x1x1x192xf32> to vector<1x1x192xf32>
    %522 = vector.broadcast %521 : vector<1x1x192xf32> to vector<8x8x192xf32>
    %523 = arith.mulf %519, %522 : vector<8x8x192xf32>
    %524 = arith.addf %518, %523 : vector<8x8x192xf32>
    %c2_580 = arith.constant 2 : index
    %c2_581 = arith.constant 2 : index
    %c0_582 = arith.constant 0 : index
    %525 = vector.load %arg26[%c2_580, %c2_581, %c0_582] : memref<10x10x192xf32, #tpu.memory_space<vmem>>, vector<8x8x192xf32>
    %c8_583 = arith.constant 8 : index
    %c0_584 = arith.constant 0 : index
    %c0_585 = arith.constant 0 : index
    %c0_586 = arith.constant 0 : index
    %526 = vector.load %arg16[%c8_583, %c0_584, %c0_585, %c0_586] : memref<9x1x1x192xf32, #tpu.memory_space<vmem>>, vector<1x1x1x192xf32>
    %527 = vector.shape_cast %526 : vector<1x1x1x192xf32> to vector<1x1x192xf32>
    %528 = vector.broadcast %527 : vector<1x1x192xf32> to vector<8x8x192xf32>
    %529 = arith.mulf %525, %528 : vector<8x8x192xf32>
    %530 = arith.addf %524, %529 : vector<8x8x192xf32>
    %cst_587 = arith.constant 1.000000e-01 : f32
    %531 = vector.broadcast %cst_587 : f32 to vector<8x8x192xf32>
    %532 = arith.mulf %531, %530 : vector<8x8x192xf32>
    %533 = arith.maximumf %530, %532 : vector<8x8x192xf32>
    %534 = vector.shape_cast %533 : vector<8x8x192xf32> to vector<64x192xf32>
    %535 = arith.truncf %534 : vector<64x192xf32> to vector<64x192xbf16>
    %c0_588 = arith.constant 0 : index
    %c0_589 = arith.constant 0 : index
    %536 = vector.load %arg17[%c0_588, %c0_589] : memref<192x192xbf16, #tpu.memory_space<vmem>>, vector<192x192xbf16>
    %cst_590 = arith.constant dense<0.000000e+00> : vector<64x192xf32>
    %537 = tpu.matmul %535, %536, %cst_590 {dimension_numbers = #tpu.dot_dimension_numbers<[1], [0], [0], [1], [0, 0, 1, 1], [], []>} : vector<64x192xbf16>, vector<192x192xbf16>, vector<64x192xf32> -> vector<64x192xf32>
    %cst_591 = arith.constant 1.000000e-01 : f32
    %538 = vector.broadcast %cst_591 : f32 to vector<64x192xf32>
    %539 = arith.mulf %538, %537 : vector<64x192xf32>
    %540 = arith.maximumf %537, %539 : vector<64x192xf32>
    %541 = vector.shape_cast %540 : vector<64x192xf32> to vector<8x8x192xf32>
    %cst_592 = arith.constant 0.000000e+00 : f32
    %542 = vector.broadcast %cst_592 : f32 to vector<10x10x192xf32>
    %c0_593 = arith.constant 0 : index
    %c0_594 = arith.constant 0 : index
    %c0_595 = arith.constant 0 : index
    %543 = vector.load %arg27[%c0_593, %c0_594, %c0_595] : memref<10x10x192xf32, #tpu.memory_space<vmem>>, vector<10x10x192xf32>
    tpu.vector_store %arg27[%c0_593, %c0_594, %c0_595], %542 {strides = array<i32>} : memref<10x10x192xf32, #tpu.memory_space<vmem>>, vector<10x10x192xf32>,
    %c1_596 = arith.constant 1 : index
    %c1_597 = arith.constant 1 : index
    %c0_598 = arith.constant 0 : index
    %544 = vector.load %arg27[%c1_596, %c1_597, %c0_598] : memref<10x10x192xf32, #tpu.memory_space<vmem>>, vector<8x8x192xf32>
    tpu.vector_store %arg27[%c1_596, %c1_597, %c0_598], %541 {strides = array<i32>} : memref<10x10x192xf32, #tpu.memory_space<vmem>>, vector<8x8x192xf32>,
    %cst_599 = arith.constant 0.000000e+00 : f32
    %545 = vector.broadcast %cst_599 : f32 to vector<64x128xf32>
    %c0_600 = arith.constant 0 : index
    %c0_601 = arith.constant 0 : index
    %c0_602 = arith.constant 0 : index
    %546 = vector.load %arg27[%c0_600, %c0_601, %c0_602] : memref<10x10x192xf32, #tpu.memory_space<vmem>>, vector<8x8x192xf32>
    %547 = vector.shape_cast %546 : vector<8x8x192xf32> to vector<64x192xf32>
    %548 = arith.truncf %547 : vector<64x192xf32> to vector<64x192xbf16>
    %c0_603 = arith.constant 0 : index
    %c0_604 = arith.constant 0 : index
    %c0_605 = arith.constant 0 : index
    %549 = vector.load %arg18[%c0_603, %c0_604, %c0_605] : memref<9x192x128xbf16, #tpu.memory_space<vmem>>, vector<1x192x128xbf16>
    %550 = vector.shape_cast %549 : vector<1x192x128xbf16> to vector<192x128xbf16>
    %cst_606 = arith.constant dense<0.000000e+00> : vector<64x128xf32>
    %551 = tpu.matmul %548, %550, %cst_606 {dimension_numbers = #tpu.dot_dimension_numbers<[1], [0], [0], [1], [0, 0, 1, 1], [], []>} : vector<64x192xbf16>, vector<192x128xbf16>, vector<64x128xf32> -> vector<64x128xf32>
    %552 = arith.addf %545, %551 : vector<64x128xf32>
    %c0_607 = arith.constant 0 : index
    %c1_608 = arith.constant 1 : index
    %c0_609 = arith.constant 0 : index
    %553 = vector.load %arg27[%c0_607, %c1_608, %c0_609] : memref<10x10x192xf32, #tpu.memory_space<vmem>>, vector<8x8x192xf32>
    %554 = vector.shape_cast %553 : vector<8x8x192xf32> to vector<64x192xf32>
    %555 = arith.truncf %554 : vector<64x192xf32> to vector<64x192xbf16>
    %c1_610 = arith.constant 1 : index
    %c0_611 = arith.constant 0 : index
    %c0_612 = arith.constant 0 : index
    %556 = vector.load %arg18[%c1_610, %c0_611, %c0_612] : memref<9x192x128xbf16, #tpu.memory_space<vmem>>, vector<1x192x128xbf16>
    %557 = vector.shape_cast %556 : vector<1x192x128xbf16> to vector<192x128xbf16>
    %cst_613 = arith.constant dense<0.000000e+00> : vector<64x128xf32>
    %558 = tpu.matmul %555, %557, %cst_613 {dimension_numbers = #tpu.dot_dimension_numbers<[1], [0], [0], [1], [0, 0, 1, 1], [], []>} : vector<64x192xbf16>, vector<192x128xbf16>, vector<64x128xf32> -> vector<64x128xf32>
    %559 = arith.addf %552, %558 : vector<64x128xf32>
    %c0_614 = arith.constant 0 : index
    %c2_615 = arith.constant 2 : index
    %c0_616 = arith.constant 0 : index
    %560 = vector.load %arg27[%c0_614, %c2_615, %c0_616] : memref<10x10x192xf32, #tpu.memory_space<vmem>>, vector<8x8x192xf32>
    %561 = vector.shape_cast %560 : vector<8x8x192xf32> to vector<64x192xf32>
    %562 = arith.truncf %561 : vector<64x192xf32> to vector<64x192xbf16>
    %c2_617 = arith.constant 2 : index
    %c0_618 = arith.constant 0 : index
    %c0_619 = arith.constant 0 : index
    %563 = vector.load %arg18[%c2_617, %c0_618, %c0_619] : memref<9x192x128xbf16, #tpu.memory_space<vmem>>, vector<1x192x128xbf16>
    %564 = vector.shape_cast %563 : vector<1x192x128xbf16> to vector<192x128xbf16>
    %cst_620 = arith.constant dense<0.000000e+00> : vector<64x128xf32>
    %565 = tpu.matmul %562, %564, %cst_620 {dimension_numbers = #tpu.dot_dimension_numbers<[1], [0], [0], [1], [0, 0, 1, 1], [], []>} : vector<64x192xbf16>, vector<192x128xbf16>, vector<64x128xf32> -> vector<64x128xf32>
    %566 = arith.addf %559, %565 : vector<64x128xf32>
    %c1_621 = arith.constant 1 : index
    %c0_622 = arith.constant 0 : index
    %c0_623 = arith.constant 0 : index
    %567 = vector.load %arg27[%c1_621, %c0_622, %c0_623] : memref<10x10x192xf32, #tpu.memory_space<vmem>>, vector<8x8x192xf32>
    %568 = vector.shape_cast %567 : vector<8x8x192xf32> to vector<64x192xf32>
    %569 = arith.truncf %568 : vector<64x192xf32> to vector<64x192xbf16>
    %c3_624 = arith.constant 3 : index
    %c0_625 = arith.constant 0 : index
    %c0_626 = arith.constant 0 : index
    %570 = vector.load %arg18[%c3_624, %c0_625, %c0_626] : memref<9x192x128xbf16, #tpu.memory_space<vmem>>, vector<1x192x128xbf16>
    %571 = vector.shape_cast %570 : vector<1x192x128xbf16> to vector<192x128xbf16>
    %cst_627 = arith.constant dense<0.000000e+00> : vector<64x128xf32>
    %572 = tpu.matmul %569, %571, %cst_627 {dimension_numbers = #tpu.dot_dimension_numbers<[1], [0], [0], [1], [0, 0, 1, 1], [], []>} : vector<64x192xbf16>, vector<192x128xbf16>, vector<64x128xf32> -> vector<64x128xf32>
    %573 = arith.addf %566, %572 : vector<64x128xf32>
    %c1_628 = arith.constant 1 : index
    %c1_629 = arith.constant 1 : index
    %c0_630 = arith.constant 0 : index
    %574 = vector.load %arg27[%c1_628, %c1_629, %c0_630] : memref<10x10x192xf32, #tpu.memory_space<vmem>>, vector<8x8x192xf32>
    %575 = vector.shape_cast %574 : vector<8x8x192xf32> to vector<64x192xf32>
    %576 = arith.truncf %575 : vector<64x192xf32> to vector<64x192xbf16>
    %c4_631 = arith.constant 4 : index
    %c0_632 = arith.constant 0 : index
    %c0_633 = arith.constant 0 : index
    %577 = vector.load %arg18[%c4_631, %c0_632, %c0_633] : memref<9x192x128xbf16, #tpu.memory_space<vmem>>, vector<1x192x128xbf16>
    %578 = vector.shape_cast %577 : vector<1x192x128xbf16> to vector<192x128xbf16>
    %cst_634 = arith.constant dense<0.000000e+00> : vector<64x128xf32>
    %579 = tpu.matmul %576, %578, %cst_634 {dimension_numbers = #tpu.dot_dimension_numbers<[1], [0], [0], [1], [0, 0, 1, 1], [], []>} : vector<64x192xbf16>, vector<192x128xbf16>, vector<64x128xf32> -> vector<64x128xf32>
    %580 = arith.addf %573, %579 : vector<64x128xf32>
    %c1_635 = arith.constant 1 : index
    %c2_636 = arith.constant 2 : index
    %c0_637 = arith.constant 0 : index
    %581 = vector.load %arg27[%c1_635, %c2_636, %c0_637] : memref<10x10x192xf32, #tpu.memory_space<vmem>>, vector<8x8x192xf32>
    %582 = vector.shape_cast %581 : vector<8x8x192xf32> to vector<64x192xf32>
    %583 = arith.truncf %582 : vector<64x192xf32> to vector<64x192xbf16>
    %c5_638 = arith.constant 5 : index
    %c0_639 = arith.constant 0 : index
    %c0_640 = arith.constant 0 : index
    %584 = vector.load %arg18[%c5_638, %c0_639, %c0_640] : memref<9x192x128xbf16, #tpu.memory_space<vmem>>, vector<1x192x128xbf16>
    %585 = vector.shape_cast %584 : vector<1x192x128xbf16> to vector<192x128xbf16>
    %cst_641 = arith.constant dense<0.000000e+00> : vector<64x128xf32>
    %586 = tpu.matmul %583, %585, %cst_641 {dimension_numbers = #tpu.dot_dimension_numbers<[1], [0], [0], [1], [0, 0, 1, 1], [], []>} : vector<64x192xbf16>, vector<192x128xbf16>, vector<64x128xf32> -> vector<64x128xf32>
    %587 = arith.addf %580, %586 : vector<64x128xf32>
    %c2_642 = arith.constant 2 : index
    %c0_643 = arith.constant 0 : index
    %c0_644 = arith.constant 0 : index
    %588 = vector.load %arg27[%c2_642, %c0_643, %c0_644] : memref<10x10x192xf32, #tpu.memory_space<vmem>>, vector<8x8x192xf32>
    %589 = vector.shape_cast %588 : vector<8x8x192xf32> to vector<64x192xf32>
    %590 = arith.truncf %589 : vector<64x192xf32> to vector<64x192xbf16>
    %c6_645 = arith.constant 6 : index
    %c0_646 = arith.constant 0 : index
    %c0_647 = arith.constant 0 : index
    %591 = vector.load %arg18[%c6_645, %c0_646, %c0_647] : memref<9x192x128xbf16, #tpu.memory_space<vmem>>, vector<1x192x128xbf16>
    %592 = vector.shape_cast %591 : vector<1x192x128xbf16> to vector<192x128xbf16>
    %cst_648 = arith.constant dense<0.000000e+00> : vector<64x128xf32>
    %593 = tpu.matmul %590, %592, %cst_648 {dimension_numbers = #tpu.dot_dimension_numbers<[1], [0], [0], [1], [0, 0, 1, 1], [], []>} : vector<64x192xbf16>, vector<192x128xbf16>, vector<64x128xf32> -> vector<64x128xf32>
    %594 = arith.addf %587, %593 : vector<64x128xf32>
    %c2_649 = arith.constant 2 : index
    %c1_650 = arith.constant 1 : index
    %c0_651 = arith.constant 0 : index
    %595 = vector.load %arg27[%c2_649, %c1_650, %c0_651] : memref<10x10x192xf32, #tpu.memory_space<vmem>>, vector<8x8x192xf32>
    %596 = vector.shape_cast %595 : vector<8x8x192xf32> to vector<64x192xf32>
    %597 = arith.truncf %596 : vector<64x192xf32> to vector<64x192xbf16>
    %c7_652 = arith.constant 7 : index
    %c0_653 = arith.constant 0 : index
    %c0_654 = arith.constant 0 : index
    %598 = vector.load %arg18[%c7_652, %c0_653, %c0_654] : memref<9x192x128xbf16, #tpu.memory_space<vmem>>, vector<1x192x128xbf16>
    %599 = vector.shape_cast %598 : vector<1x192x128xbf16> to vector<192x128xbf16>
    %cst_655 = arith.constant dense<0.000000e+00> : vector<64x128xf32>
    %600 = tpu.matmul %597, %599, %cst_655 {dimension_numbers = #tpu.dot_dimension_numbers<[1], [0], [0], [1], [0, 0, 1, 1], [], []>} : vector<64x192xbf16>, vector<192x128xbf16>, vector<64x128xf32> -> vector<64x128xf32>
    %601 = arith.addf %594, %600 : vector<64x128xf32>
    %c2_656 = arith.constant 2 : index
    %c2_657 = arith.constant 2 : index
    %c0_658 = arith.constant 0 : index
    %602 = vector.load %arg27[%c2_656, %c2_657, %c0_658] : memref<10x10x192xf32, #tpu.memory_space<vmem>>, vector<8x8x192xf32>
    %603 = vector.shape_cast %602 : vector<8x8x192xf32> to vector<64x192xf32>
    %604 = arith.truncf %603 : vector<64x192xf32> to vector<64x192xbf16>
    %c8_659 = arith.constant 8 : index
    %c0_660 = arith.constant 0 : index
    %c0_661 = arith.constant 0 : index
    %605 = vector.load %arg18[%c8_659, %c0_660, %c0_661] : memref<9x192x128xbf16, #tpu.memory_space<vmem>>, vector<1x192x128xbf16>
    %606 = vector.shape_cast %605 : vector<1x192x128xbf16> to vector<192x128xbf16>
    %cst_662 = arith.constant dense<0.000000e+00> : vector<64x128xf32>
    %607 = tpu.matmul %604, %606, %cst_662 {dimension_numbers = #tpu.dot_dimension_numbers<[1], [0], [0], [1], [0, 0, 1, 1], [], []>} : vector<64x192xbf16>, vector<192x128xbf16>, vector<64x128xf32> -> vector<64x128xf32>
    %608 = arith.addf %601, %607 : vector<64x128xf32>
    %c0_663 = arith.constant 0 : index
    %c0_664 = arith.constant 0 : index
    %c0_665 = arith.constant 0 : index
    %609 = vector.load %arg19[%c0_663, %c0_664, %c0_665] : memref<1x64x128xf32, #tpu.memory_space<vmem>>, vector<1x64x128xf32>
    %610 = vector.shape_cast %609 : vector<1x64x128xf32> to vector<64x128xf32>
    %611 = vector.shape_cast %608 : vector<64x128xf32> to vector<1x64x128xf32>
    tpu.vector_store %arg19[%c0_663, %c0_664, %c0_665], %611 {strides = array<i32>} : memref<1x64x128xf32, #tpu.memory_space<vmem>>, vector<1x64x128xf32>,
    return
  }
  func.func @transform_0(%arg0: i32) -> (i32, i32, i32, i32) {
    %c0_i32 = arith.constant 0 : i32
    %c0_i32_0 = arith.constant 0 : i32
    %c0_i32_1 = arith.constant 0 : i32
    %c0_i32_2 = arith.constant 0 : i32
    return %arg0, %c0_i32, %c0_i32_0, %c0_i32_1 : i32, i32, i32, i32
  }
  func.func @transform_1(%arg0: i32) -> (i32, i32, i32, i32) {
    %c0_i32 = arith.constant 0 : i32
    %c0_i32_0 = arith.constant 0 : i32
    %c0_i32_1 = arith.constant 0 : i32
    %c0_i32_2 = arith.constant 0 : i32
    %c0_i32_3 = arith.constant 0 : i32
    return %c0_i32, %c0_i32_0, %c0_i32_1, %c0_i32_2 : i32, i32, i32, i32
  }
  func.func @transform_2(%arg0: i32) -> (i32, i32) {
    %c0_i32 = arith.constant 0 : i32
    %c0_i32_0 = arith.constant 0 : i32
    %c0_i32_1 = arith.constant 0 : i32
    return %c0_i32, %c0_i32_0 : i32, i32
  }
  func.func @transform_3(%arg0: i32) -> (i32, i32, i32, i32) {
    %c0_i32 = arith.constant 0 : i32
    %c0_i32_0 = arith.constant 0 : i32
    %c0_i32_1 = arith.constant 0 : i32
    %c0_i32_2 = arith.constant 0 : i32
    %c0_i32_3 = arith.constant 0 : i32
    return %c0_i32, %c0_i32_0, %c0_i32_1, %c0_i32_2 : i32, i32, i32, i32
  }
  func.func @transform_4(%arg0: i32) -> (i32, i32) {
    %c0_i32 = arith.constant 0 : i32
    %c0_i32_0 = arith.constant 0 : i32
    %c0_i32_1 = arith.constant 0 : i32
    return %c0_i32, %c0_i32_0 : i32, i32
  }
  func.func @transform_5(%arg0: i32) -> (i32, i32, i32, i32) {
    %c0_i32 = arith.constant 0 : i32
    %c0_i32_0 = arith.constant 0 : i32
    %c0_i32_1 = arith.constant 0 : i32
    %c0_i32_2 = arith.constant 0 : i32
    %c0_i32_3 = arith.constant 0 : i32
    return %c0_i32, %c0_i32_0, %c0_i32_1, %c0_i32_2 : i32, i32, i32, i32
  }
  func.func @transform_6(%arg0: i32) -> (i32, i32) {
    %c0_i32 = arith.constant 0 : i32
    %c0_i32_0 = arith.constant 0 : i32
    %c0_i32_1 = arith.constant 0 : i32
    return %c0_i32, %c0_i32_0 : i32, i32
  }
  func.func @transform_7(%arg0: i32) -> (i32, i32, i32, i32) {
    %c0_i32 = arith.constant 0 : i32
    %c0_i32_0 = arith.constant 0 : i32
    %c0_i32_1 = arith.constant 0 : i32
    %c0_i32_2 = arith.constant 0 : i32
    %c0_i32_3 = arith.constant 0 : i32
    return %c0_i32, %c0_i32_0, %c0_i32_1, %c0_i32_2 : i32, i32, i32, i32
  }
  func.func @transform_8(%arg0: i32) -> (i32, i32) {
    %c0_i32 = arith.constant 0 : i32
    %c0_i32_0 = arith.constant 0 : i32
    %c0_i32_1 = arith.constant 0 : i32
    return %c0_i32, %c0_i32_0 : i32, i32
  }
  func.func @transform_9(%arg0: i32) -> (i32, i32, i32, i32) {
    %c0_i32 = arith.constant 0 : i32
    %c0_i32_0 = arith.constant 0 : i32
    %c0_i32_1 = arith.constant 0 : i32
    %c0_i32_2 = arith.constant 0 : i32
    %c0_i32_3 = arith.constant 0 : i32
    return %c0_i32, %c0_i32_0, %c0_i32_1, %c0_i32_2 : i32, i32, i32, i32
  }
  func.func @transform_10(%arg0: i32) -> (i32, i32) {
    %c0_i32 = arith.constant 0 : i32
    %c0_i32_0 = arith.constant 0 : i32
    %c0_i32_1 = arith.constant 0 : i32
    return %c0_i32, %c0_i32_0 : i32, i32
  }
  func.func @transform_11(%arg0: i32) -> (i32, i32, i32, i32) {
    %c0_i32 = arith.constant 0 : i32
    %c0_i32_0 = arith.constant 0 : i32
    %c0_i32_1 = arith.constant 0 : i32
    %c0_i32_2 = arith.constant 0 : i32
    %c0_i32_3 = arith.constant 0 : i32
    return %c0_i32, %c0_i32_0, %c0_i32_1, %c0_i32_2 : i32, i32, i32, i32
  }
  func.func @transform_12(%arg0: i32) -> (i32, i32) {
    %c0_i32 = arith.constant 0 : i32
    %c0_i32_0 = arith.constant 0 : i32
    %c0_i32_1 = arith.constant 0 : i32
    return %c0_i32, %c0_i32_0 : i32, i32
  }
  func.func @transform_13(%arg0: i32) -> (i32, i32, i32, i32) {
    %c0_i32 = arith.constant 0 : i32
    %c0_i32_0 = arith.constant 0 : i32
    %c0_i32_1 = arith.constant 0 : i32
    %c0_i32_2 = arith.constant 0 : i32
    %c0_i32_3 = arith.constant 0 : i32
    return %c0_i32, %c0_i32_0, %c0_i32_1, %c0_i32_2 : i32, i32, i32, i32
  }
  func.func @transform_14(%arg0: i32) -> (i32, i32) {
    %c0_i32 = arith.constant 0 : i32
    %c0_i32_0 = arith.constant 0 : i32
    %c0_i32_1 = arith.constant 0 : i32
    return %c0_i32, %c0_i32_0 : i32, i32
  }
  func.func @transform_15(%arg0: i32) -> (i32, i32, i32, i32) {
    %c0_i32 = arith.constant 0 : i32
    %c0_i32_0 = arith.constant 0 : i32
    %c0_i32_1 = arith.constant 0 : i32
    %c0_i32_2 = arith.constant 0 : i32
    %c0_i32_3 = arith.constant 0 : i32
    return %c0_i32, %c0_i32_0, %c0_i32_1, %c0_i32_2 : i32, i32, i32, i32
  }
  func.func @transform_16(%arg0: i32) -> (i32, i32) {
    %c0_i32 = arith.constant 0 : i32
    %c0_i32_0 = arith.constant 0 : i32
    %c0_i32_1 = arith.constant 0 : i32
    return %c0_i32, %c0_i32_0 : i32, i32
  }
  func.func @transform_17(%arg0: i32) -> (i32, i32, i32) {
    %c0_i32 = arith.constant 0 : i32
    %c0_i32_0 = arith.constant 0 : i32
    %c0_i32_1 = arith.constant 0 : i32
    %c0_i32_2 = arith.constant 0 : i32
    return %c0_i32, %c0_i32_0, %c0_i32_1 : i32, i32, i32
  }
  func.func @transform_18(%arg0: i32) -> (i32, i32, i32) {
    %c0_i32 = arith.constant 0 : i32
    %c0_i32_0 = arith.constant 0 : i32
    %c0_i32_1 = arith.constant 0 : i32
    return %arg0, %c0_i32, %c0_i32_0 : i32, i32, i32
  }
}

</mosaic_0001>

<llo_original>
// kernel: tiny_flownet_forward.1
$region0: #{tiny_flownet_forward.1}
  #allocation0 [shape = 'u32[]', space=smem, size = 0x4, offset = 0x4, fixed_abs, tag = 'smem constant byte address 0x4 - core index']
  #allocation1 [shape = 'u32[144,128]{1,0:T(1,128)}', space=vmem, size = 0x12000, scoped, tag = 'internal scratch']
  #allocation2 [shape = 'f32[10,10,24]{2,1,0:T(8,128)}', space=vmem, size = 0x14000, scoped, tag = 'scratch operand']
  #allocation3 [shape = 'f32[10,10,48]{2,1,0:T(8,128)}', space=vmem, size = 0x14000, scoped, tag = 'scratch operand']
  #allocation4 [shape = 'f32[10,10,96]{2,1,0:T(8,128)}', space=vmem, size = 0x14000, scoped, tag = 'scratch operand']
  #allocation5 [shape = 'f32[10,10,96]{2,1,0:T(8,128)}', space=vmem, size = 0x14000, scoped, tag = 'scratch operand']
  #allocation6 [shape = 'f32[16,16,192]{2,1,0:T(8,128)}', space=vmem, size = 0x40000, scoped, tag = 'scratch operand']
  #allocation7 [shape = 'f32[10,10,192]{2,1,0:T(8,128)}', space=vmem, size = 0x28000, scoped, tag = 'scratch operand']
  #allocation8 [shape = 'f32[10,10,192]{2,1,0:T(8,128)}', space=vmem, size = 0x28000, scoped, tag = 'scratch operand']
  #allocation9 [shape = 'f32[10,10,192]{2,1,0:T(8,128)}', space=vmem, size = 0x28000, scoped, tag = 'scratch operand']
  %s0 = inlined_call_operand.vmem [shape: f32[8,9,9,6], index: 0, kind: input, shape index: {}]
  %s1 = inlined_call_operand.vmem [shape: f32[9,1,1,6], index: 1, kind: input, shape index: {}]
  %s2 = inlined_call_operand.vmem [shape: bf16[6,24], index: 2, kind: input, shape index: {}]
  %s3 = inlined_call_operand.vmem [shape: f32[9,1,1,24], index: 3, kind: input, shape index: {}]
  %s4 = inlined_call_operand.vmem [shape: bf16[24,48], index: 4, kind: input, shape index: {}]
  %s5 = inlined_call_operand.vmem [shape: f32[9,1,1,48], index: 5, kind: input, shape index: {}]
  %s6 = inlined_call_operand.vmem [shape: bf16[48,96], index: 6, kind: input, shape index: {}]
  %s7 = inlined_call_operand.vmem [shape: f32[9,1,1,96], index: 7, kind: input, shape index: {}]
  %s8 = inlined_call_operand.vmem [shape: bf16[96,96], index: 8, kind: input, shape index: {}]
  %s9 = inlined_call_operand.vmem [shape: f32[9,1,1,96], index: 9, kind: input, shape index: {}]
  %s10 = inlined_call_operand.vmem [shape: bf16[96,192], index: 10, kind: input, shape index: {}]
  %s11 = inlined_call_operand.vmem [shape: f32[9,1,1,192], index: 11, kind: input, shape index: {}]
  %s12 = inlined_call_operand.vmem [shape: bf16[192,192], index: 12, kind: input, shape index: {}]
  %s13 = inlined_call_operand.vmem [shape: f32[9,1,1,192], index: 13, kind: input, shape index: {}]
  %s14 = inlined_call_operand.vmem [shape: bf16[192,192], index: 14, kind: input, shape index: {}]
  %s15 = inlined_call_operand.vmem [shape: f32[9,1,1,192], index: 15, kind: input, shape index: {}]
  %s16 = inlined_call_operand.vmem [shape: bf16[192,192], index: 16, kind: input, shape index: {}]
  %s17 = inlined_call_operand.vmem [shape: bf16[9,192,128], index: 17, kind: input, shape index: {}]
  %s18 = inlined_call_operand.vmem [shape: f32[2,64,128], index: 18, kind: output, shape index: {}]
  %s19 = sld [smem:[#allocation0]]
  $region105: #{tiny_flownet_forward.1} parent=0
    _
  %s21 = ssub.s32 1, %s19
  %s22 = scalar_select 0, %s21, %s19
  loop: start=0, step=1, limit=4
  $region2: #{tiny_flownet_forward.1} parent=0 // loop_pre_header
    _
  $region3: #{tiny_flownet_forward.1} parent=0 // loop_header
    %s24 = sphi 0, %s28
    %p25 = scmp.ge.s32.totalorder %s24, 4
    %s34 = sphi 0, %s36
    %s37 = sphi 0, %s34
    %s38 = sphi 0, %s37
    %s54 = sphi 0, %s38
    %s58 = sphi 0, %s58
    %s60 = sphi 0, %s58
    %s61 = sphi 0, %s60
    %s75 = sphi 0, %s61
    %s79 = sphi 0, %s79
    %s81 = sphi 0, %s79
    %s82 = sphi 0, %s81
    %s96 = sphi 0, %s82
    %s100 = sphi 0, %s100
    %s102 = sphi 0, %s100
    %s103 = sphi 0, %s102
    %s117 = sphi 0, %s103
    %s121 = sphi 0, %s121
    %s123 = sphi 0, %s121
    %s124 = sphi 0, %s123
    %s138 = sphi 0, %s124
    %s142 = sphi 0, %s142
    %s144 = sphi 0, %s142
    %s145 = sphi 0, %s144
    %s159 = sphi 0, %s145
    %s163 = sphi 0, %s163
    %s165 = sphi 0, %s163
    %s166 = sphi 0, %s165
    %s180 = sphi 0, %s166
    %s184 = sphi 0, %s184
    %s186 = sphi 0, %s184
    %s187 = sphi 0, %s186
    %s201 = sphi 0, %s187
    %s205 = sphi 0, %s205
    %s207 = sphi 0, %s205
    %s208 = sphi 0, %s207
    %s222 = sphi 0, %s208
    %s226 = sphi 0, %s226
    %s228 = sphi 0, %s226
    %s229 = sphi 0, %s228
    %s243 = sphi 0, %s229
    %s247 = sphi 0, %s247
    %s249 = sphi 0, %s247
    %s250 = sphi 0, %s249
    %s264 = sphi 0, %s250
    %s268 = sphi 0, %s268
    %s270 = sphi 0, %s268
    %s271 = sphi 0, %s270
    %s285 = sphi 0, %s271
    %s289 = sphi 0, %s289
    %s291 = sphi 0, %s289
    %s292 = sphi 0, %s291
    %s306 = sphi 0, %s292
    %s310 = sphi 0, %s310
    %s312 = sphi 0, %s310
    %s313 = sphi 0, %s312
    %s327 = sphi 0, %s313
    %s331 = sphi 0, %s331
    %s333 = sphi 0, %s331
    %s334 = sphi 0, %s333
    %s348 = sphi 0, %s334
    %s352 = sphi 0, %s352
    %s354 = sphi 0, %s352
    %s355 = sphi 0, %s354
    %s369 = sphi 0, %s355
    %s373 = sphi 0, %s373
    %s375 = sphi 0, %s373
    %s376 = sphi 0, %s375
    %s390 = sphi 0, %s376
    %s394 = sphi 0, %s394
    %s396 = sphi 0, %s394
    %s397 = sphi 0, %s396
    %s411 = sphi 0, %s397
    %s417 = sphi 0, %s419
    %s420 = sphi 0, %s417
    %s421 = sphi 0, %s420
    %s437 = sphi 0, %s421
  $region4: #{tiny_flownet_forward.1} parent=0 // loop_header_branch
    %27 = sbr.rel (%p25) target = $region8
  $region5: #{tiny_flownet_forward.1} parent=0 // loop_body
    %s29 = ssub.s32 %s24, 1
    %s30 = ssub.s32 %s24, 2
    %s31 = sadd.s32 %s24, 1
    %s32 = ssub.s32 %s24, %s31
    %p33 = scmp.eq.s32.totalorder %s32, 0
    %s35 = sadd.s32 %s34, 1
    %s36 = scalar_select %p33, %s34, %s35
    %p39 = pneg %p33
    %p40 = scmp.eq.s32.totalorder %s24, 1
    %p41 = por %p39, %p40
    %p42 = scmp.ne.s32.totalorder %s34, %s37
    %p43 = scmp.eq.s32.totalorder %s24, 0
    %p44 = por %p42, %p43
    %p45 = scmp.ne.s32.totalorder %s34, %s37
    %p46 = scmp.eq.s32.totalorder %s29, 1
    %p47 = por %p45, %p46
    %p48 = scmp.ne.s32.totalorder %s37, %s38
    %p49 = scmp.eq.s32.totalorder %s29, 0
    %p50 = por %p48, %p49
    %p51 = scmp.ne.s32.totalorder %s37, %s38
    %p52 = scmp.eq.s32.totalorder %s30, 1
    %p53 = por %p51, %p52
    %p55 = scmp.ne.s32.totalorder %s38, %s54
    %p56 = scmp.eq.s32.totalorder %s30, 0
    %p57 = por %p55, %p56
    %s59 = sadd.s32 %s58, 1
    %p62 = scmp.eq.s32.totalorder %s24, 1
    %p63 = scmp.ne.s32.totalorder %s58, %s60
    %p64 = scmp.eq.s32.totalorder %s24, 0
    %p65 = por %p63, %p64
    %p66 = scmp.ne.s32.totalorder %s58, %s60
    %p67 = scmp.eq.s32.totalorder %s29, 1
    %p68 = por %p66, %p67
    %p69 = scmp.ne.s32.totalorder %s60, %s61
    %p70 = scmp.eq.s32.totalorder %s29, 0
    %p71 = por %p69, %p70
    %p72 = scmp.ne.s32.totalorder %s60, %s61
    %p73 = scmp.eq.s32.totalorder %s30, 1
    %p74 = por %p72, %p73
    %p76 = scmp.ne.s32.totalorder %s61, %s75
    %p77 = scmp.eq.s32.totalorder %s30, 0
    %p78 = por %p76, %p77
    %s80 = sadd.s32 %s79, 1
    %p83 = scmp.eq.s32.totalorder %s24, 1
    %p84 = scmp.ne.s32.totalorder %s79, %s81
    %p85 = scmp.eq.s32.totalorder %s24, 0
    %p86 = por %p84, %p85
    %p87 = scmp.ne.s32.totalorder %s79, %s81
    %p88 = scmp.eq.s32.totalorder %s29, 1
    %p89 = por %p87, %p88
    %p90 = scmp.ne.s32.totalorder %s81, %s82
    %p91 = scmp.eq.s32.totalorder %s29, 0
    %p92 = por %p90, %p91
    %p93 = scmp.ne.s32.totalorder %s81, %s82
    %p94 = scmp.eq.s32.totalorder %s30, 1
    %p95 = por %p93, %p94
    %p97 = scmp.ne.s32.totalorder %s82, %s96
    %p98 = scmp.eq.s32.totalorder %s30, 0
    %p99 = por %p97, %p98
    %s101 = sadd.s32 %s100, 1
    %p104 = scmp.eq.s32.totalorder %s24, 1
    %p105 = scmp.ne.s32.totalorder %s100, %s102
    %p106 = scmp.eq.s32.totalorder %s24, 0
    %p107 = por %p105, %p106
    %p108 = scmp.ne.s32.totalorder %s100, %s102
    %p109 = scmp.eq.s32.totalorder %s29, 1
    %p110 = por %p108, %p109
    %p111 = scmp.ne.s32.totalorder %s102, %s103
    %p112 = scmp.eq.s32.totalorder %s29, 0
    %p113 = por %p111, %p112
    %p114 = scmp.ne.s32.totalorder %s102, %s103
    %p115 = scmp.eq.s32.totalorder %s30, 1
    %p116 = por %p114, %p115
    %p118 = scmp.ne.s32.totalorder %s103, %s117
    %p119 = scmp.eq.s32.totalorder %s30, 0
    %p120 = por %p118, %p119
    %s122 = sadd.s32 %s121, 1
    %p125 = scmp.eq.s32.totalorder %s24, 1
    %p126 = scmp.ne.s32.totalorder %s121, %s123
    %p127 = scmp.eq.s32.totalorder %s24, 0
    %p128 = por %p126, %p127
    %p129 = scmp.ne.s32.totalorder %s121, %s123
    %p130 = scmp.eq.s32.totalorder %s29, 1
    %p131 = por %p129, %p130
    %p132 = scmp.ne.s32.totalorder %s123, %s124
    %p133 = scmp.eq.s32.totalorder %s29, 0
    %p134 = por %p132, %p133
    %p135 = scmp.ne.s32.totalorder %s123, %s124
    %p136 = scmp.eq.s32.totalorder %s30, 1
    %p137 = por %p135, %p136
    %p139 = scmp.ne.s32.totalorder %s124, %s138
    %p140 = scmp.eq.s32.totalorder %s30, 0
    %p141 = por %p139, %p140
    %s143 = sadd.s32 %s142, 1
    %p146 = scmp.eq.s32.totalorder %s24, 1
    %p147 = scmp.ne.s32.totalorder %s142, %s144
    %p148 = scmp.eq.s32.totalorder %s24, 0
    %p149 = por %p147, %p148
    %p150 = scmp.ne.s32.totalorder %s142, %s144
    %p151 = scmp.eq.s32.totalorder %s29, 1
    %p152 = por %p150, %p151
    %p153 = scmp.ne.s32.totalorder %s144, %s145
    %p154 = scmp.eq.s32.totalorder %s29, 0
    %p155 = por %p153, %p154
    %p156 = scmp.ne.s32.totalorder %s144, %s145
    %p157 = scmp.eq.s32.totalorder %s30, 1
    %p158 = por %p156, %p157
    %p160 = scmp.ne.s32.totalorder %s145, %s159
    %p161 = scmp.eq.s32.totalorder %s30, 0
    %p162 = por %p160, %p161
    %s164 = sadd.s32 %s163, 1
    %p167 = scmp.eq.s32.totalorder %s24, 1
    %p168 = scmp.ne.s32.totalorder %s163, %s165
    %p169 = scmp.eq.s32.totalorder %s24, 0
    %p170 = por %p168, %p169
    %p171 = scmp.ne.s32.totalorder %s163, %s165
    %p172 = scmp.eq.s32.totalorder %s29, 1
    %p173 = por %p171, %p172
    %p174 = scmp.ne.s32.totalorder %s165, %s166
    %p175 = scmp.eq.s32.totalorder %s29, 0
    %p176 = por %p174, %p175
    %p177 = scmp.ne.s32.totalorder %s165, %s166
    %p178 = scmp.eq.s32.totalorder %s30, 1
    %p179 = por %p177, %p178
    %p181 = scmp.ne.s32.totalorder %s166, %s180
    %p182 = scmp.eq.s32.totalorder %s30, 0
    %p183 = por %p181, %p182
    %s185 = sadd.s32 %s184, 1
    %p188 = scmp.eq.s32.totalorder %s24, 1
    %p189 = scmp.ne.s32.totalorder %s184, %s186
    %p190 = scmp.eq.s32.totalorder %s24, 0
    %p191 = por %p189, %p190
    %p192 = scmp.ne.s32.totalorder %s184, %s186
    %p193 = scmp.eq.s32.totalorder %s29, 1
    %p194 = por %p192, %p193
    %p195 = scmp.ne.s32.totalorder %s186, %s187
    %p196 = scmp.eq.s32.totalorder %s29, 0
    %p197 = por %p195, %p196
    %p198 = scmp.ne.s32.totalorder %s186, %s187
    %p199 = scmp.eq.s32.totalorder %s30, 1
    %p200 = por %p198, %p199
    %p202 = scmp.ne.s32.totalorder %s187, %s201
    %p203 = scmp.eq.s32.totalorder %s30, 0
    %p204 = por %p202, %p203
    %s206 = sadd.s32 %s205, 1
    %p209 = scmp.eq.s32.totalorder %s24, 1
    %p210 = scmp.ne.s32.totalorder %s205, %s207
    %p211 = scmp.eq.s32.totalorder %s24, 0
    %p212 = por %p210, %p211
    %p213 = scmp.ne.s32.totalorder %s205, %s207
    %p214 = scmp.eq.s32.totalorder %s29, 1
    %p215 = por %p213, %p214
    %p216 = scmp.ne.s32.totalorder %s207, %s208
    %p217 = scmp.eq.s32.totalorder %s29, 0
    %p218 = por %p216, %p217
    %p219 = scmp.ne.s32.totalorder %s207, %s208
    %p220 = scmp.eq.s32.totalorder %s30, 1
    %p221 = por %p219, %p220
    %p223 = scmp.ne.s32.totalorder %s208, %s222
    %p224 = scmp.eq.s32.totalorder %s30, 0
    %p225 = por %p223, %p224
    %s227 = sadd.s32 %s226, 1
    %p230 = scmp.eq.s32.totalorder %s24, 1
    %p231 = scmp.ne.s32.totalorder %s226, %s228
    %p232 = scmp.eq.s32.totalorder %s24, 0
    %p233 = por %p231, %p232
    %p234 = scmp.ne.s32.totalorder %s226, %s228
    %p235 = scmp.eq.s32.totalorder %s29, 1
    %p236 = por %p234, %p235
    %p237 = scmp.ne.s32.totalorder %s228, %s229
    %p238 = scmp.eq.s32.totalorder %s29, 0
    %p239 = por %p237, %p238
    %p240 = scmp.ne.s32.totalorder %s228, %s229
    %p241 = scmp.eq.s32.totalorder %s30, 1
    %p242 = por %p240, %p241
    %p244 = scmp.ne.s32.totalorder %s229, %s243
    %p245 = scmp.eq.s32.totalorder %s30, 0
    %p246 = por %p244, %p245
    %s248 = sadd.s32 %s247, 1
    %p251 = scmp.eq.s32.totalorder %s24, 1
    %p252 = scmp.ne.s32.totalorder %s247, %s249
    %p253 = scmp.eq.s32.totalorder %s24, 0
    %p254 = por %p252, %p253
    %p255 = scmp.ne.s32.totalorder %s247, %s249
    %p256 = scmp.eq.s32.totalorder %s29, 1
    %p257 = por %p255, %p256
    %p258 = scmp.ne.s32.totalorder %s249, %s250
    %p259 = scmp.eq.s32.totalorder %s29, 0
    %p260 = por %p258, %p259
    %p261 = scmp.ne.s32.totalorder %s249, %s250
    %p262 = scmp.eq.s32.totalorder %s30, 1
    %p263 = por %p261, %p262
    %p265 = scmp.ne.s32.totalorder %s250, %s264
    %p266 = scmp.eq.s32.totalorder %s30, 0
    %p267 = por %p265, %p266
    %s269 = sadd.s32 %s268, 1
    %p272 = scmp.eq.s32.totalorder %s24, 1
    %p273 = scmp.ne.s32.totalorder %s268, %s270
    %p274 = scmp.eq.s32.totalorder %s24, 0
    %p275 = por %p273, %p274
    %p276 = scmp.ne.s32.totalorder %s268, %s270
    %p277 = scmp.eq.s32.totalorder %s29, 1
    %p278 = por %p276, %p277
    %p279 = scmp.ne.s32.totalorder %s270, %s271
    %p280 = scmp.eq.s32.totalorder %s29, 0
    %p281 = por %p279, %p280
    %p282 = scmp.ne.s32.totalorder %s270, %s271
    %p283 = scmp.eq.s32.totalorder %s30, 1
    %p284 = por %p282, %p283
    %p286 = scmp.ne.s32.totalorder %s271, %s285
    %p287 = scmp.eq.s32.totalorder %s30, 0
    %p288 = por %p286, %p287
    %s290 = sadd.s32 %s289, 1
    %p293 = scmp.eq.s32.totalorder %s24, 1
    %p294 = scmp.ne.s32.totalorder %s289, %s291
    %p295 = scmp.eq.s32.totalorder %s24, 0
    %p296 = por %p294, %p295
    %p297 = scmp.ne.s32.totalorder %s289, %s291
    %p298 = scmp.eq.s32.totalorder %s29, 1
    %p299 = por %p297, %p298
    %p300 = scmp.ne.s32.totalorder %s291, %s292
    %p301 = scmp.eq.s32.totalorder %s29, 0
    %p302 = por %p300, %p301
    %p303 = scmp.ne.s32.totalorder %s291, %s292
    %p304 = scmp.eq.s32.totalorder %s30, 1
    %p305 = por %p303, %p304
    %p307 = scmp.ne.s32.totalorder %s292, %s306
    %p308 = scmp.eq.s32.totalorder %s30, 0
    %p309 = por %p307, %p308
    %s311 = sadd.s32 %s310, 1
    %p314 = scmp.eq.s32.totalorder %s24, 1
    %p315 = scmp.ne.s32.totalorder %s310, %s312
    %p316 = scmp.eq.s32.totalorder %s24, 0
    %p317 = por %p315, %p316
    %p318 = scmp.ne.s32.totalorder %s310, %s312
    %p319 = scmp.eq.s32.totalorder %s29, 1
    %p320 = por %p318, %p319
    %p321 = scmp.ne.s32.totalorder %s312, %s313
    %p322 = scmp.eq.s32.totalorder %s29, 0
    %p323 = por %p321, %p322
    %p324 = scmp.ne.s32.totalorder %s312, %s313
    %p325 = scmp.eq.s32.totalorder %s30, 1
    %p326 = por %p324, %p325
    %p328 = scmp.ne.s32.totalorder %s313, %s327
    %p329 = scmp.eq.s32.totalorder %s30, 0
    %p330 = por %p328, %p329
    %s332 = sadd.s32 %s331, 1
    %p335 = scmp.eq.s32.totalorder %s24, 1
    %p336 = scmp.ne.s32.totalorder %s331, %s333
    %p337 = scmp.eq.s32.totalorder %s24, 0
    %p338 = por %p336, %p337
    %p339 = scmp.ne.s32.totalorder %s331, %s333
    %p340 = scmp.eq.s32.totalorder %s29, 1
    %p341 = por %p339, %p340
    %p342 = scmp.ne.s32.totalorder %s333, %s334
    %p343 = scmp.eq.s32.totalorder %s29, 0
    %p344 = por %p342, %p343
    %p345 = scmp.ne.s32.totalorder %s333, %s334
    %p346 = scmp.eq.s32.totalorder %s30, 1
    %p347 = por %p345, %p346
    %p349 = scmp.ne.s32.totalorder %s334, %s348
    %p350 = scmp.eq.s32.totalorder %s30, 0
    %p351 = por %p349, %p350
    %s353 = sadd.s32 %s352, 1
    %p356 = scmp.eq.s32.totalorder %s24, 1
    %p357 = scmp.ne.s32.totalorder %s352, %s354
    %p358 = scmp.eq.s32.totalorder %s24, 0
    %p359 = por %p357, %p358
    %p360 = scmp.ne.s32.totalorder %s352, %s354
    %p361 = scmp.eq.s32.totalorder %s29, 1
    %p362 = por %p360, %p361
    %p363 = scmp.ne.s32.totalorder %s354, %s355
    %p364 = scmp.eq.s32.totalorder %s29, 0
    %p365 = por %p363, %p364
    %p366 = scmp.ne.s32.totalorder %s354, %s355
    %p367 = scmp.eq.s32.totalorder %s30, 1
    %p368 = por %p366, %p367
    %p370 = scmp.ne.s32.totalorder %s355, %s369
    %p371 = scmp.eq.s32.totalorder %s30, 0
    %p372 = por %p370, %p371
    %s374 = sadd.s32 %s373, 1
    %p377 = scmp.eq.s32.totalorder %s24, 1
    %p378 = scmp.ne.s32.totalorder %s373, %s375
    %p379 = scmp.eq.s32.totalorder %s24, 0
    %p380 = por %p378, %p379
    %p381 = scmp.ne.s32.totalorder %s373, %s375
    %p382 = scmp.eq.s32.totalorder %s29, 1
    %p383 = por %p381, %p382
    %p384 = scmp.ne.s32.totalorder %s375, %s376
    %p385 = scmp.eq.s32.totalorder %s29, 0
    %p386 = por %p384, %p385
    %p387 = scmp.ne.s32.totalorder %s375, %s376
    %p388 = scmp.eq.s32.totalorder %s30, 1
    %p389 = por %p387, %p388
    %p391 = scmp.ne.s32.totalorder %s376, %s390
    %p392 = scmp.eq.s32.totalorder %s30, 0
    %p393 = por %p391, %p392
    %s395 = sadd.s32 %s394, 1
    %p398 = scmp.eq.s32.totalorder %s24, 1
    %p399 = scmp.ne.s32.totalorder %s394, %s396
    %p400 = scmp.eq.s32.totalorder %s24, 0
    %p401 = por %p399, %p400
    %p402 = scmp.ne.s32.totalorder %s394, %s396
    %p403 = scmp.eq.s32.totalorder %s29, 1
    %p404 = por %p402, %p403
    %p405 = scmp.ne.s32.totalorder %s396, %s397
    %p406 = scmp.eq.s32.totalorder %s29, 0
    %p407 = por %p405, %p406
    %p408 = scmp.ne.s32.totalorder %s396, %s397
    %p409 = scmp.eq.s32.totalorder %s30, 1
    %p410 = por %p408, %p409
    %p412 = scmp.ne.s32.totalorder %s397, %s411
    %p413 = scmp.eq.s32.totalorder %s30, 0
    %p414 = por %p412, %p413
    %s415 = ssub.s32 %s24, %s31
    %p416 = scmp.eq.s32.totalorder %s415, 0
    %s418 = sadd.s32 %s417, 1
    %s419 = scalar_select %p416, %s417, %s418
    %p422 = pneg %p416
    %p423 = scmp.eq.s32.totalorder %s24, 1
    %p424 = por %p422, %p423
    %p425 = scmp.ne.s32.totalorder %s417, %s420
    %p426 = scmp.eq.s32.totalorder %s24, 0
    %p427 = por %p425, %p426
    %p428 = scmp.ne.s32.totalorder %s417, %s420
    %p429 = scmp.eq.s32.totalorder %s29, 1
    %p430 = por %p428, %p429
    %p431 = scmp.ne.s32.totalorder %s420, %s421
    %p432 = scmp.eq.s32.totalorder %s29, 0
    %p433 = por %p431, %p432
    %p434 = scmp.ne.s32.totalorder %s420, %s421
    %p435 = scmp.eq.s32.totalorder %s30, 1
    %p436 = por %p434, %p435
    %p438 = scmp.ne.s32.totalorder %s421, %s437
    %p439 = scmp.eq.s32.totalorder %s30, 0
    %p440 = por %p438, %p439
    %p441 = scmp.le.s32.totalorder 1, %s24
    %p442 = scmp.lt.s32.totalorder %s24, 3
    %p443 = pnand %p441, %p442
    %p444 = pneg %p443
    // Predicated region
    $region9: #{tiny_flownet_forward.1} parent=5 // pred_check
      _
    $region10: #{tiny_flownet_forward.1} parent=5 // pred_check_branch
      %446 = sbr.rel (%p443) target = $region12
    $region11: #{tiny_flownet_forward.1} parent=5 // pred_region
      %s447 = ssub.s32 %s24, 1
      // Predicated region
      $region13: #{tiny_flownet_forward.1} parent=11 // pred_check
        %p448 = pneg %p71
      $region14: #{tiny_flownet_forward.1} parent=11 // pred_check_branch
        %450 = sbr.rel (%p448) target = $region16
      $region15: #{tiny_flownet_forward.1} parent=11 // pred_region
        _
      $region16: #{tiny_flownet_forward.1} parent=11 // pred_fallthru
        _
      // Predicated region
      $region17: #{tiny_flownet_forward.1} parent=11 // pred_check
        %p451 = pneg %p92
      $region18: #{tiny_flownet_forward.1} parent=11 // pred_check_branch
        %453 = sbr.rel (%p451) target = $region20
      $region19: #{tiny_flownet_forward.1} parent=11 // pred_region
        _
      $region20: #{tiny_flownet_forward.1} parent=11 // pred_fallthru
        _
      // Predicated region
      $region21: #{tiny_flownet_forward.1} parent=11 // pred_check
        %p454 = pneg %p113
      $region22: #{tiny_flownet_forward.1} parent=11 // pred_check_branch
        %456 = sbr.rel (%p454) target = $region24
      $region23: #{tiny_flownet_forward.1} parent=11 // pred_region
        _
      $region24: #{tiny_flownet_forward.1} parent=11 // pred_fallthru
        _
      // Predicated region
      $region25: #{tiny_flownet_forward.1} parent=11 // pred_check
        %p457 = pneg %p134
      $region26: #{tiny_flownet_forward.1} parent=11 // pred_check_branch
        %459 = sbr.rel (%p457) target = $region28
      $region27: #{tiny_flownet_forward.1} parent=11 // pred_region
        _
      $region28: #{tiny_flownet_forward.1} parent=11 // pred_fallthru
        _
      // Predicated region
      $region29: #{tiny_flownet_forward.1} parent=11 // pred_check
        %p460 = pneg %p155
      $region30: #{tiny_flownet_forward.1} parent=11 // pred_check_branch
        %462 = sbr.rel (%p460) target = $region32
      $region31: #{tiny_flownet_forward.1} parent=11 // pred_region
        _
      $region32: #{tiny_flownet_forward.1} parent=11 // pred_fallthru
        _
      // Predicated region
      $region33: #{tiny_flownet_forward.1} parent=11 // pred_check
        %p463 = pneg %p176
      $region34: #{tiny_flownet_forward.1} parent=11 // pred_check_branch
        %465 = sbr.rel (%p463) target = $region36
      $region35: #{tiny_flownet_forward.1} parent=11 // pred_region
        _
      $region36: #{tiny_flownet_forward.1} parent=11 // pred_fallthru
        _
      // Predicated region
      $region37: #{tiny_flownet_forward.1} parent=11 // pred_check
        %p466 = pneg %p197
      $region38: #{tiny_flownet_forward.1} parent=11 // pred_check_branch
        %468 = sbr.rel (%p466) target = $region40
      $region39: #{tiny_flownet_forward.1} parent=11 // pred_region
        _
      $region40: #{tiny_flownet_forward.1} parent=11 // pred_fallthru
        _
      // Predicated region
      $region41: #{tiny_flownet_forward.1} parent=11 // pred_check
        %p469 = pneg %p218
      $region42: #{tiny_flownet_forward.1} parent=11 // pred_check_branch
        %471 = sbr.rel (%p469) target = $region44
      $region43: #{tiny_flownet_forward.1} parent=11 // pred_region
        _
      $region44: #{tiny_flownet_forward.1} parent=11 // pred_fallthru
        _
      // Predicated region
      $region45: #{tiny_flownet_forward.1} parent=11 // pred_check
        %p472 = pneg %p239
      $region46: #{tiny_flownet_forward.1} parent=11 // pred_check_branch
        %474 = sbr.rel (%p472) target = $region48
      $region47: #{tiny_flownet_forward.1} parent=11 // pred_region
        _
      $region48: #{tiny_flownet_forward.1} parent=11 // pred_fallthru
        _
      // Predicated region
      $region49: #{tiny_flownet_forward.1} parent=11 // pred_check
        %p475 = pneg %p260
      $region50: #{tiny_flownet_forward.1} parent=11 // pred_check_branch
        %477 = sbr.rel (%p475) target = $region52
      $region51: #{tiny_flownet_forward.1} parent=11 // pred_region
        _
      $region52: #{tiny_flownet_forward.1} parent=11 // pred_fallthru
        _
      // Predicated region
      $region53: #{tiny_flownet_forward.1} parent=11 // pred_check
        %p478 = pneg %p281
      $region54: #{tiny_flownet_forward.1} parent=11 // pred_check_branch
        %480 = sbr.rel (%p478) target = $region56
      $region55: #{tiny_flownet_forward.1} parent=11 // pred_region
        _
      $region56: #{tiny_flownet_forward.1} parent=11 // pred_fallthru
        _
      // Predicated region
      $region57: #{tiny_flownet_forward.1} parent=11 // pred_check
        %p481 = pneg %p302
      $region58: #{tiny_flownet_forward.1} parent=11 // pred_check_branch
        %483 = sbr.rel (%p481) target = $region60
      $region59: #{tiny_flownet_forward.1} parent=11 // pred_region
        _
      $region60: #{tiny_flownet_forward.1} parent=11 // pred_fallthru
        _
      // Predicated region
      $region61: #{tiny_flownet_forward.1} parent=11 // pred_check
        %p484 = pneg %p323
      $region62: #{tiny_flownet_forward.1} parent=11 // pred_check_branch
        %486 = sbr.rel (%p484) target = $region64
      $region63: #{tiny_flownet_forward.1} parent=11 // pred_region
        _
      $region64: #{tiny_flownet_forward.1} parent=11 // pred_fallthru
        _
      // Predicated region
      $region65: #{tiny_flownet_forward.1} parent=11 // pred_check
        %p487 = pneg %p344
      $region66: #{tiny_flownet_forward.1} parent=11 // pred_check_branch
        %489 = sbr.rel (%p487) target = $region68
      $region67: #{tiny_flownet_forward.1} parent=11 // pred_region
        _
      $region68: #{tiny_flownet_forward.1} parent=11 // pred_fallthru
        _
      // Predicated region
      $region69: #{tiny_flownet_forward.1} parent=11 // pred_check
        %p490 = pneg %p365
      $region70: #{tiny_flownet_forward.1} parent=11 // pred_check_branch
        %492 = sbr.rel (%p490) target = $region72
      $region71: #{tiny_flownet_forward.1} parent=11 // pred_region
        _
      $region72: #{tiny_flownet_forward.1} parent=11 // pred_fallthru
        _
      // Predicated region
      $region73: #{tiny_flownet_forward.1} parent=11 // pred_check
        %p493 = pneg %p386
      $region74: #{tiny_flownet_forward.1} parent=11 // pred_check_branch
        %495 = sbr.rel (%p493) target = $region76
      $region75: #{tiny_flownet_forward.1} parent=11 // pred_region
        _
      $region76: #{tiny_flownet_forward.1} parent=11 // pred_fallthru
        _
      // Predicated region
      $region77: #{tiny_flownet_forward.1} parent=11 // pred_check
        %p496 = pneg %p407
      $region78: #{tiny_flownet_forward.1} parent=11 // pred_check_branch
        %498 = sbr.rel (%p496) target = $region80
      $region79: #{tiny_flownet_forward.1} parent=11 // pred_region
        _
      $region80: #{tiny_flownet_forward.1} parent=11 // pred_fallthru
        _
    $region12: #{tiny_flownet_forward.1} parent=5 // pred_fallthru
      _
    %p499 = scmp.lt.s32.totalorder %s24, 2
    // Predicated region
    $region81: #{tiny_flownet_forward.1} parent=5 // pred_check
      %p500 = pneg %p499
    $region82: #{tiny_flownet_forward.1} parent=5 // pred_check_branch
      %502 = sbr.rel (%p500) target = $region84
    $region83: #{tiny_flownet_forward.1} parent=5 // pred_region
      // Predicated region
      $region85: #{tiny_flownet_forward.1} parent=83 // pred_check
        %p503 = pneg %p44
      $region86: #{tiny_flownet_forward.1} parent=83 // pred_check_branch
        %505 = sbr.rel (%p503) target = $region88
      $region87: #{tiny_flownet_forward.1} parent=83 // pred_region
        %s506 = smul.u32 4, %s24
        %p507 = scmp.lt.s32.totalorder %s506, 7
        %s508 = scalar_select %p507, %s506, 7
        %s509 = smul.addr %s508, 18
        %s510 = smul.addr %s509, 8
        %s511 = scalar_lea.vmem %s0, %s510
        %s512 = smul.u32 4, %s24
      $region88: #{tiny_flownet_forward.1} parent=83 // pred_fallthru
        _
    $region84: #{tiny_flownet_forward.1} parent=5 // pred_fallthru
      _
    %p513 = scmp.le.s32.totalorder 1, %s24
    %p514 = scmp.lt.s32.totalorder %s24, 3
    %p515 = pnand %p513, %p514
    %p516 = pneg %p515
    // Predicated region
    $region89: #{tiny_flownet_forward.1} parent=5 // pred_check
      _
    $region90: #{tiny_flownet_forward.1} parent=5 // pred_check_branch
      %518 = sbr.rel (%p515) target = $region92
    $region91: #{tiny_flownet_forward.1} parent=5 // pred_region
      %s519 = ssub.s32 %s24, 1
      %s520 = smul.u32 4, %s29
      %p521 = scmp.lt.s32.totalorder %s520, 7
      %s522 = scalar_select %p521, %s520, 7
      %s523 = smul.addr %s522, 18
      %s524 = smul.addr %s523, 8
      %s525 = scalar_lea.vmem %s0, %s524
      %p526 = pneg %p50
      %p527 = pneg %p47
      %p528 = pneg %p71
      %p529 = pneg %p68
      %p530 = pneg %p92
      %p531 = pneg %p89
      %p532 = pneg %p113
      %p533 = pneg %p110
      %p534 = pneg %p134
      %p535 = pneg %p131
      %p536 = pneg %p155
      %p537 = pneg %p152
      %p538 = pneg %p176
      %p539 = pneg %p173
      %p540 = pneg %p197
      %p541 = pneg %p194
      %p542 = pneg %p218
      %p543 = pneg %p215
      %p544 = pneg %p239
      %p545 = pneg %p236
      %p546 = pneg %p260
      %p547 = pneg %p257
      %p548 = pneg %p281
      %p549 = pneg %p278
      %p550 = pneg %p302
      %p551 = pneg %p299
      %p552 = pneg %p323
      %p553 = pneg %p320
      %p554 = pneg %p344
      %p555 = pneg %p341
      %p556 = pneg %p365
      %p557 = pneg %p362
      %p558 = pneg %p386
      %p559 = pneg %p383
      %p560 = pneg %p407
      %p561 = pneg %p404
      %p562 = pneg %p433
      %p563 = pneg %p430
      %p564 = scmp.lt.s32.totalorder %s29, 1
      %s565 = scalar_select %p564, %s29, 1
      %s566 = smul.addr %s565, 8
      %s567 = smul.addr %s566, 8
      %s568 = scalar_lea.vmem %s18, %s567
      %s569 = smul.u32 4, %s29
      %p570 = scmp.lt.s32.totalorder %s569, 7
      %s571 = scalar_select %p570, %s569, 7
      %s572 = smul.addr %s571, 18
      %s573 = smul.addr %s572, 8
      %s574 = scalar_lea.vmem %s0, %s573
      %s575 = smul.u32 4, %s29
      %p576 = scmp.lt.s32.totalorder %s29, 1
      %s577 = scalar_select %p576, %s29, 1
      %s578 = smul.addr %s577, 8
      %s579 = smul.addr %s578, 8
      %s580 = scalar_lea.vmem %s18, %s579
      %v582 = vld [vmem:[%s574] sm:$0xff]
      %v583 = vld [vmem:[%s574 + $0x10] sm:$0xff]
      %v584 = vld [vmem:[%s574 + $0x20] sm:$0xff]
      %v585 = vld [vmem:[%s574 + $0x30] sm:$0xff]
      %v586 = vld [vmem:[%s574 + $0x40] sm:$0xff]
      %v587 = vld [vmem:[%s574 + $0x50] sm:$0xff]
      %v588 = vld [vmem:[%s574 + $0x60] sm:$0xff]
      %v589 = vld [vmem:[%s574 + $0x70] sm:$0xff]
      %v590 = vld [vmem:[%s1] sm:$0x1]
      %v592 = vlaneseq
      %v593 = vshrl.u32 %v592, 7
      %v594 = vsub.s32 0, %v593
      %v595 = vrot.slane %v590, %v594
      %v597 = vmul.f32 %v582, %v595
      %v598 = vmul.f32 %v583, %v595
      %v599 = vmul.f32 %v584, %v595
      %v600 = vmul.f32 %v585, %v595
      %v601 = vmul.f32 %v586, %v595
      %v602 = vmul.f32 %v587, %v595
      %v603 = vmul.f32 %v588, %v595
      %v604 = vmul.f32 %v589, %v595
      %s605 = scalar_lea.vmem %s574, 144
      %v606 = vld [vmem:[%s605] sm:$0xff]
      %v607 = vld [vmem:[%s605 + $0x10] sm:$0xff]
      %v608 = vld [vmem:[%s605 + $0x20] sm:$0xff]
      %v609 = vld [vmem:[%s605 + $0x30] sm:$0xff]
      %v610 = vld [vmem:[%s605 + $0x40] sm:$0xff]
      %v611 = vld [vmem:[%s605 + $0x50] sm:$0xff]
      %v612 = vld [vmem:[%s605 + $0x60] sm:$0xff]
      %v613 = vld [vmem:[%s605 + $0x70] sm:$0xff]
      %s614 = scalar_lea.vmem %s1, 1
      %v615 = vld [vmem:[%s614] sm:$0x1]
      %v617 = vlaneseq
      %v618 = vshrl.u32 %v617, 7
      %v619 = vsub.s32 0, %v618
      %v620 = vrot.slane %v615, %v619
      %v622 = vmul.f32 %v606, %v620
      %v623 = vmul.f32 %v607, %v620
      %v624 = vmul.f32 %v608, %v620
      %v625 = vmul.f32 %v609, %v620
      %v626 = vmul.f32 %v610, %v620
      %v627 = vmul.f32 %v611, %v620
      %v628 = vmul.f32 %v612, %v620
      %v629 = vmul.f32 %v613, %v620
      %v630 = vadd.f32 %v597, %v622
      %v631 = vadd.f32 %v598, %v623
      %v632 = vadd.f32 %v599, %v624
      %v633 = vadd.f32 %v600, %v625
      %v634 = vadd.f32 %v601, %v626
      %v635 = vadd.f32 %v602, %v627
      %v636 = vadd.f32 %v603, %v628
      %v637 = vadd.f32 %v604, %v629
      %v638 = vld [vmem:[%s574 + $0x1] sm:$0xff]
      %v639 = vld [vmem:[%s574 + $0x11] sm:$0xff]
      %v640 = vld [vmem:[%s574 + $0x21] sm:$0xff]
      %v641 = vld [vmem:[%s574 + $0x31] sm:$0xff]
      %v642 = vld [vmem:[%s574 + $0x41] sm:$0xff]
      %v643 = vld [vmem:[%s574 + $0x51] sm:$0xff]
      %v644 = vld [vmem:[%s574 + $0x61] sm:$0xff]
      %v645 = vld [vmem:[%s574 + $0x71] sm:$0xff]
      %s646 = scalar_lea.vmem %s1, 2
      %v647 = vld [vmem:[%s646] sm:$0x1]
      %v649 = vlaneseq
      %v650 = vshrl.u32 %v649, 7
      %v651 = vsub.s32 0, %v650
      %v652 = vrot.slane %v647, %v651
      %v654 = vmul.f32 %v638, %v652
      %v655 = vmul.f32 %v639, %v652
      %v656 = vmul.f32 %v640, %v652
      %v657 = vmul.f32 %v641, %v652
      %v658 = vmul.f32 %v642, %v652
      %v659 = vmul.f32 %v643, %v652
      %v660 = vmul.f32 %v644, %v652
      %v661 = vmul.f32 %v645, %v652
      %v662 = vadd.f32 %v630, %v654
      %v663 = vadd.f32 %v631, %v655
      %v664 = vadd.f32 %v632, %v656
      %v665 = vadd.f32 %v633, %v657
      %v666 = vadd.f32 %v634, %v658
      %v667 = vadd.f32 %v635, %v659
      %v668 = vadd.f32 %v636, %v660
      %v669 = vadd.f32 %v637, %v661
      %s670 = scalar_lea.vmem %s574, 288
      %v671 = vld [vmem:[%s670] sm:$0xff]
      %v672 = vld [vmem:[%s670 + $0x10] sm:$0xff]
      %v673 = vld [vmem:[%s670 + $0x20] sm:$0xff]
      %v674 = vld [vmem:[%s670 + $0x30] sm:$0xff]
      %v675 = vld [vmem:[%s670 + $0x40] sm:$0xff]
      %v676 = vld [vmem:[%s670 + $0x50] sm:$0xff]
      %v677 = vld [vmem:[%s670 + $0x60] sm:$0xff]
      %v678 = vld [vmem:[%s670 + $0x70] sm:$0xff]
      %s679 = scalar_lea.vmem %s1, 3
      %v680 = vld [vmem:[%s679] sm:$0x1]
      %v682 = vlaneseq
      %v683 = vshrl.u32 %v682, 7
      %v684 = vsub.s32 0, %v683
      %v685 = vrot.slane %v680, %v684
      %v687 = vmul.f32 %v671, %v685
      %v688 = vmul.f32 %v672, %v685
      %v689 = vmul.f32 %v673, %v685
      %v690 = vmul.f32 %v674, %v685
      %v691 = vmul.f32 %v675, %v685
      %v692 = vmul.f32 %v676, %v685
      %v693 = vmul.f32 %v677, %v685
      %v694 = vmul.f32 %v678, %v685
      %v695 = vadd.f32 %v662, %v687
      %v696 = vadd.f32 %v663, %v688
      %v697 = vadd.f32 %v664, %v689
      %v698 = vadd.f32 %v665, %v690
      %v699 = vadd.f32 %v666, %v691
      %v700 = vadd.f32 %v667, %v692
      %v701 = vadd.f32 %v668, %v693
      %v702 = vadd.f32 %v669, %v694
      %s703 = scalar_lea.vmem %s574, 432
      %v704 = vld [vmem:[%s703] sm:$0xff]
      %v705 = vld [vmem:[%s703 + $0x10] sm:$0xff]
      %v706 = vld [vmem:[%s703 + $0x20] sm:$0xff]
      %v707 = vld [vmem:[%s703 + $0x30] sm:$0xff]
      %v708 = vld [vmem:[%s703 + $0x40] sm:$0xff]
      %v709 = vld [vmem:[%s703 + $0x50] sm:$0xff]
      %v710 = vld [vmem:[%s703 + $0x60] sm:$0xff]
      %v711 = vld [vmem:[%s703 + $0x70] sm:$0xff]
      %s712 = scalar_lea.vmem %s1, 4
      %v713 = vld [vmem:[%s712] sm:$0x1]
      %v715 = vlaneseq
      %v716 = vshrl.u32 %v715, 7
      %v717 = vsub.s32 0, %v716
      %v718 = vrot.slane %v713, %v717
      %v720 = vmul.f32 %v704, %v718
      %v721 = vmul.f32 %v705, %v718
      %v722 = vmul.f32 %v706, %v718
      %v723 = vmul.f32 %v707, %v718
      %v724 = vmul.f32 %v708, %v718
      %v725 = vmul.f32 %v709, %v718
      %v726 = vmul.f32 %v710, %v718
      %v727 = vmul.f32 %v711, %v718
      %v728 = vadd.f32 %v695, %v720
      %v729 = vadd.f32 %v696, %v721
      %v730 = vadd.f32 %v697, %v722
      %v731 = vadd.f32 %v698, %v723
      %v732 = vadd.f32 %v699, %v724
      %v733 = vadd.f32 %v700, %v725
      %v734 = vadd.f32 %v701, %v726
      %v735 = vadd.f32 %v702, %v727
      %v736 = vld [vmem:[%s670 + $0x1] sm:$0xff]
      %v737 = vld [vmem:[%s670 + $0x11] sm:$0xff]
      %v738 = vld [vmem:[%s670 + $0x21] sm:$0xff]
      %v739 = vld [vmem:[%s670 + $0x31] sm:$0xff]
      %v740 = vld [vmem:[%s670 + $0x41] sm:$0xff]
      %v741 = vld [vmem:[%s670 + $0x51] sm:$0xff]
      %v742 = vld [vmem:[%s670 + $0x61] sm:$0xff]
      %v743 = vld [vmem:[%s670 + $0x71] sm:$0xff]
      %s744 = scalar_lea.vmem %s1, 5
      %v745 = vld [vmem:[%s744] sm:$0x1]
      %v747 = vlaneseq
      %v748 = vshrl.u32 %v747, 7
      %v749 = vsub.s32 0, %v748
      %v750 = vrot.slane %v745, %v749
      %v752 = vmul.f32 %v736, %v750
      %v753 = vmul.f32 %v737, %v750
      %v754 = vmul.f32 %v738, %v750
      %v755 = vmul.f32 %v739, %v750
      %v756 = vmul.f32 %v740, %v750
      %v757 = vmul.f32 %v741, %v750
      %v758 = vmul.f32 %v742, %v750
      %v759 = vmul.f32 %v743, %v750
      %v760 = vadd.f32 %v728, %v752
      %v761 = vadd.f32 %v729, %v753
      %v762 = vadd.f32 %v730, %v754
      %v763 = vadd.f32 %v731, %v755
      %v764 = vadd.f32 %v732, %v756
      %v765 = vadd.f32 %v733, %v757
      %v766 = vadd.f32 %v734, %v758
      %v767 = vadd.f32 %v735, %v759
      %s768 = scalar_lea.vmem %s574, 16
      %v769 = vld [vmem:[%s768] sm:$0xff]
      %v770 = vld [vmem:[%s768 + $0x10] sm:$0xff]
      %v771 = vld [vmem:[%s768 + $0x20] sm:$0xff]
      %v772 = vld [vmem:[%s768 + $0x30] sm:$0xff]
      %v773 = vld [vmem:[%s768 + $0x40] sm:$0xff]
      %v774 = vld [vmem:[%s768 + $0x50] sm:$0xff]
      %v775 = vld [vmem:[%s768 + $0x60] sm:$0xff]
      %v776 = vld [vmem:[%s768 + $0x70] sm:$0xff]
      %s777 = scalar_lea.vmem %s1, 6
      %v778 = vld [vmem:[%s777] sm:$0x1]
      %v780 = vlaneseq
      %v781 = vshrl.u32 %v780, 7
      %v782 = vsub.s32 0, %v781
      %v783 = vrot.slane %v778, %v782
      %v785 = vmul.f32 %v769, %v783
      %v786 = vmul.f32 %v770, %v783
      %v787 = vmul.f32 %v771, %v783
      %v788 = vmul.f32 %v772, %v783
      %v789 = vmul.f32 %v773, %v783
      %v790 = vmul.f32 %v774, %v783
      %v791 = vmul.f32 %v775, %v783
      %v792 = vmul.f32 %v776, %v783
      %v793 = vadd.f32 %v760, %v785
      %v794 = vadd.f32 %v761, %v786
      %v795 = vadd.f32 %v762, %v787
      %v796 = vadd.f32 %v763, %v788
      %v797 = vadd.f32 %v764, %v789
      %v798 = vadd.f32 %v765, %v790
      %v799 = vadd.f32 %v766, %v791
      %v800 = vadd.f32 %v767, %v792
      %s801 = scalar_lea.vmem %s574, 160
      %v802 = vld [vmem:[%s801] sm:$0xff]
      %v803 = vld [vmem:[%s801 + $0x10] sm:$0xff]
      %v804 = vld [vmem:[%s801 + $0x20] sm:$0xff]
      %v805 = vld [vmem:[%s801 + $0x30] sm:$0xff]
      %v806 = vld [vmem:[%s801 + $0x40] sm:$0xff]
      %v807 = vld [vmem:[%s801 + $0x50] sm:$0xff]
      %v808 = vld [vmem:[%s801 + $0x60] sm:$0xff]
      %v809 = vld [vmem:[%s801 + $0x70] sm:$0xff]
      %s810 = scalar_lea.vmem %s1, 7
      %v811 = vld [vmem:[%s810] sm:$0x1]
      %v813 = vlaneseq
      %v814 = vshrl.u32 %v813, 7
      %v815 = vsub.s32 0, %v814
      %v816 = vrot.slane %v811, %v815
      %v818 = vmul.f32 %v802, %v816
      %v819 = vmul.f32 %v803, %v816
      %v820 = vmul.f32 %v804, %v816
      %v821 = vmul.f32 %v805, %v816
      %v822 = vmul.f32 %v806, %v816
      %v823 = vmul.f32 %v807, %v816
      %v824 = vmul.f32 %v808, %v816
      %v825 = vmul.f32 %v809, %v816
      %v826 = vadd.f32 %v793, %v818
      %v827 = vadd.f32 %v794, %v819
      %v828 = vadd.f32 %v795, %v820
      %v829 = vadd.f32 %v796, %v821
      %v830 = vadd.f32 %v797, %v822
      %v831 = vadd.f32 %v798, %v823
      %v832 = vadd.f32 %v799, %v824
      %v833 = vadd.f32 %v800, %v825
      %v834 = vld [vmem:[%s768 + $0x1] sm:$0xff]
      %v835 = vld [vmem:[%s768 + $0x11] sm:$0xff]
      %v836 = vld [vmem:[%s768 + $0x21] sm:$0xff]
      %v837 = vld [vmem:[%s768 + $0x31] sm:$0xff]
      %v838 = vld [vmem:[%s768 + $0x41] sm:$0xff]
      %v839 = vld [vmem:[%s768 + $0x51] sm:$0xff]
      %v840 = vld [vmem:[%s768 + $0x61] sm:$0xff]
      %v841 = vld [vmem:[%s768 + $0x71] sm:$0xff]
      %s842 = scalar_lea.vmem %s1, 8
      %v843 = vld [vmem:[%s842] sm:$0x1]
      %v845 = vlaneseq
      %v846 = vshrl.u32 %v845, 7
      %v847 = vsub.s32 0, %v846
      %v848 = vrot.slane %v843, %v847
      %v850 = vmul.f32 %v834, %v848
      %v851 = vmul.f32 %v835, %v848
      %v852 = vmul.f32 %v836, %v848
      %v853 = vmul.f32 %v837, %v848
      %v854 = vmul.f32 %v838, %v848
      %v855 = vmul.f32 %v839, %v848
      %v856 = vmul.f32 %v840, %v848
      %v857 = vmul.f32 %v841, %v848
      %v858 = vadd.f32 %v826, %v850
      %v859 = vadd.f32 %v827, %v851
      %v860 = vadd.f32 %v828, %v852
      %v861 = vadd.f32 %v829, %v853
      %v862 = vadd.f32 %v830, %v854
      %v863 = vadd.f32 %v831, %v855
      %v864 = vadd.f32 %v832, %v856
      %v865 = vadd.f32 %v833, %v857
      %v866 = vmul.f32 %v858, 0.1
      %v867 = vmul.f32 %v859, 0.1
      %v868 = vmul.f32 %v860, 0.1
      %v869 = vmul.f32 %v861, 0.1
      %v870 = vmul.f32 %v862, 0.1
      %v871 = vmul.f32 %v863, 0.1
      %v872 = vmul.f32 %v864, 0.1
      %v873 = vmul.f32 %v865, 0.1
      %v874 = vmax.f32 %v858, %v866
      %v875 = vmax.f32 %v859, %v867
      %v876 = vmax.f32 %v860, %v868
      %v877 = vmax.f32 %v861, %v869
      %v878 = vmax.f32 %v862, %v870
      %v879 = vmax.f32 %v863, %v871
      %v880 = vmax.f32 %v864, %v872
      %v881 = vmax.f32 %v865, %v873
      %v882 = vpack.c.bf16 %v875, %v874
      %v883 = vpack.c.bf16 %v877, %v876
      %v884 = vpack.c.bf16 %v879, %v878
      %v885 = vpack.c.bf16 %v881, %v880
      %v886 = vld [vmem:[%s2] sm:$0x7]
      %vm887 = vcmask 48128
      %v889 = vsel %vm887, %v882, 0
      %v892 = vsel %vm887, %v883, 0
      %v895 = vsel %vm887, %v884, 0
      %v898 = vsel %vm887, %v885, 0
      %vm900 = vcmask 1042432
      %v902 = vsel %vm900, %v886, 0
      %904 = vmatprep.subr.bf16.mxu0 0
      %905 = vmatpush1.bf16.msra.mxu0 %v902
      %906 = vmatprep.subr.bf16.mxu0 0
      %907 = vmatpush1.bf16.msra.mxu0 0
      %908 = vmatprep.subr.bf16.mxu0 0
      %909 = vmatpush1.bf16.msra.mxu0 0
      %910 = vmatprep.subr.bf16.mxu0 0
      %911 = vmatpush1.bf16.msra.mxu0 0
      %912 = vmatprep.subr.bf16.mxu0 0
      %913 = vmatpush1.bf16.msra.mxu0 0
      %914 = vmatprep.subr.bf16.mxu0 0
      %915 = vmatpush1.bf16.msra.mxu0 0
      %916 = vmatprep.subr.bf16.mxu0 0
      %917 = vmatpush1.bf16.msra.mxu0 0
      %918 = vmatprep.subr.bf16.mxu0 0
      %919 = vmatpush1.bf16.msra.mxu0 0
      %920 = vmatprep.subr.bf16.mxu0 0
      %921 = vmatpush1.bf16.msra.mxu0 0
      %922 = vmatprep.subr.bf16.mxu0 0
      %923 = vmatpush1.bf16.msra.mxu0 0
      %924 = vmatprep.subr.bf16.mxu0 0
      %925 = vmatpush1.bf16.msra.mxu0 0
      %926 = vmatprep.subr.bf16.mxu0 0
      %927 = vmatpush1.bf16.msra.mxu0 0
      %928 = vmatprep.subr.bf16.mxu0 0
      %929 = vmatpush1.bf16.msra.mxu0 0
      %930 = vmatprep.subr.bf16.mxu0 0
      %931 = vmatpush1.bf16.msra.mxu0 0
      %932 = vmatprep.subr.bf16.mxu0 0
      %933 = vmatpush1.bf16.msra.mxu0 0
      %934 = vmatprep.subr.bf16.mxu0 0
      %935 = vmatpush1.bf16.msra.mxu0 0
      %936 = vmatprep.mubr.bf16.mxu0 0
      %937 = vmatmul.mubr.bf16.gmra.mrb[0].mxu0 %v889
      %v938 = vpop.f32.mrb[0].mxu0
      %v939 = vadd.f32 0.0, %v938
      %v940 = vpop.f32.mrb[0].mxu0
      %v941 = vpop.f32.mrb[0].mxu0
      %v942 = vadd.f32 0.0, %v941
      %v943 = vpop.f32.mrb[0].mxu0
      %944 = vmatprep.mubr.bf16.mxu0 0
      %945 = vmatmul.mubr.bf16.gmra.mrb[0].mxu0 %v892
      %v946 = vpop.f32.mrb[0].mxu0
      %v947 = vadd.f32 0.0, %v946
      %v948 = vpop.f32.mrb[0].mxu0
      %v949 = vpop.f32.mrb[0].mxu0
      %v950 = vadd.f32 0.0, %v949
      %v951 = vpop.f32.mrb[0].mxu0
      %952 = vmatprep.mubr.bf16.mxu0 0
      %953 = vmatmul.mubr.bf16.gmra.mrb[0].mxu0 %v895
      %v954 = vpop.f32.mrb[0].mxu0
      %v955 = vadd.f32 0.0, %v954
      %v956 = vpop.f32.mrb[0].mxu0
      %v957 = vpop.f32.mrb[0].mxu0
      %v958 = vadd.f32 0.0, %v957
      %v959 = vpop.f32.mrb[0].mxu0
      %960 = vmatprep.mubr.bf16.mxu0 0
      %961 = vmatmul.mubr.bf16.gmra.mrb[0].mxu0 %v898
      %v962 = vpop.f32.mrb[0].mxu0
      %v963 = vadd.f32 0.0, %v962
      %v964 = vpop.f32.mrb[0].mxu0
      %v965 = vpop.f32.mrb[0].mxu0
      %v966 = vadd.f32 0.0, %v965
      %v967 = vpop.f32.mrb[0].mxu0
      %968 = vdwg.mxu0
      %v969 = vmul.f32 %v939, 0.1
      %v970 = vmul.f32 %v942, 0.1
      %v971 = vmul.f32 %v947, 0.1
      %v972 = vmul.f32 %v950, 0.1
      %v973 = vmul.f32 %v955, 0.1
      %v974 = vmul.f32 %v958, 0.1
      %v975 = vmul.f32 %v963, 0.1
      %v976 = vmul.f32 %v966, 0.1
      %v977 = vmax.f32 %v939, %v969
      %v978 = vmax.f32 %v942, %v970
      %v979 = vmax.f32 %v947, %v971
      %v980 = vmax.f32 %v950, %v972
      %v981 = vmax.f32 %v955, %v973
      %v982 = vmax.f32 %v958, %v974
      %v983 = vmax.f32 %v963, %v975
      %v984 = vmax.f32 %v966, %v976
      %vm985 = vcmask 195584
      %986 = vst.msk [vmem:[#allocation2] sm:$0xff] %vm985, 0.0
      %vm987 = vcmask 189440
      %988 = vst.msk [vmem:[#allocation2 + $0x8] sm:$0x3] %vm987, 0.0
      %989 = vst.msk [vmem:[#allocation2 + $0x10] sm:$0xff] %vm985, 0.0
      %990 = vst.msk [vmem:[#allocation2 + $0x18] sm:$0x3] %vm987, 0.0
      %991 = vst.msk [vmem:[#allocation2 + $0x20] sm:$0xff] %vm985, 0.0
      %992 = vst.msk [vmem:[#allocation2 + $0x28] sm:$0x3] %vm987, 0.0
      %993 = vst.msk [vmem:[#allocation2 + $0x30] sm:$0xff] %vm985, 0.0
      %994 = vst.msk [vmem:[#allocation2 + $0x38] sm:$0x3] %vm987, 0.0
      %995 = vst.msk [vmem:[#allocation2 + $0x40] sm:$0xff] %vm985, 0.0
      %996 = vst.msk [vmem:[#allocation2 + $0x48] sm:$0x3] %vm987, 0.0
      %997 = vst.msk [vmem:[#allocation2 + $0x50] sm:$0xff] %vm985, 0.0
      %998 = vst.msk [vmem:[#allocation2 + $0x58] sm:$0x3] %vm987, 0.0
      %999 = vst.msk [vmem:[#allocation2 + $0x60] sm:$0xff] %vm985, 0.0
      %1000 = vst.msk [vmem:[#allocation2 + $0x68] sm:$0x3] %vm987, 0.0
      %1001 = vst.msk [vmem:[#allocation2 + $0x70] sm:$0xff] %vm985, 0.0
      %1002 = vst.msk [vmem:[#allocation2 + $0x78] sm:$0x3] %vm987, 0.0
      %1003 = vst.msk [vmem:[#allocation2 + $0x80] sm:$0xff] %vm985, 0.0
      %1004 = vst.msk [vmem:[#allocation2 + $0x88] sm:$0x3] %vm987, 0.0
      %1005 = vst.msk [vmem:[#allocation2 + $0x90] sm:$0xff] %vm985, 0.0
      %1006 = vst.msk [vmem:[#allocation2 + $0x98] sm:$0x3] %vm987, 0.0
      %s1007 = scalar_lea.vmem [#allocation2], 16
      %1008 = vst.msk [vmem:[%s1007 + $0x1] sm:$0xff] %vm985, %v977
      %1009 = vst.msk [vmem:[%s1007 + $0x11] sm:$0xff] %vm985, %v978
      %1010 = vst.msk [vmem:[%s1007 + $0x21] sm:$0xff] %vm985, %v979
      %1011 = vst.msk [vmem:[%s1007 + $0x31] sm:$0xff] %vm985, %v980
      %1012 = vst.msk [vmem:[%s1007 + $0x41] sm:$0xff] %vm985, %v981
      %1013 = vst.msk [vmem:[%s1007 + $0x51] sm:$0xff] %vm985, %v982
      %1014 = vst.msk [vmem:[%s1007 + $0x61] sm:$0xff] %vm985, %v983
      %1015 = vst.msk [vmem:[%s1007 + $0x71] sm:$0xff] %vm985, %v984
      %v1016 = vld [vmem:[#allocation2] sm:$0xff]
      %v1017 = vld [vmem:[#allocation2 + $0x10] sm:$0xff]
      %v1018 = vld [vmem:[#allocation2 + $0x20] sm:$0xff]
      %v1019 = vld [vmem:[#allocation2 + $0x30] sm:$0xff]
      %v1020 = vld [vmem:[#allocation2 + $0x40] sm:$0xff]
      %v1021 = vld [vmem:[#allocation2 + $0x50] sm:$0xff]
      %v1022 = vld [vmem:[#allocation2 + $0x60] sm:$0xff]
      %v1023 = vld [vmem:[#allocation2 + $0x70] sm:$0xff]
      %v1024 = vld [vmem:[%s3] sm:$0x1]
      %v1026 = vlaneseq
      %v1027 = vshrl.u32 %v1026, 7
      %v1028 = vsub.s32 0, %v1027
      %v1029 = vrot.slane %v1024, %v1028
      %v1031 = vmul.f32 %v1016, %v1029
      %v1032 = vmul.f32 %v1017, %v1029
      %v1033 = vmul.f32 %v1018, %v1029
      %v1034 = vmul.f32 %v1019, %v1029
      %v1035 = vmul.f32 %v1020, %v1029
      %v1036 = vmul.f32 %v1021, %v1029
      %v1037 = vmul.f32 %v1022, %v1029
      %v1038 = vmul.f32 %v1023, %v1029
      %v1039 = vld [vmem:[#allocation2 + $0x1] sm:$0xff]
      %v1040 = vld [vmem:[#allocation2 + $0x11] sm:$0xff]
      %v1041 = vld [vmem:[#allocation2 + $0x21] sm:$0xff]
      %v1042 = vld [vmem:[#allocation2 + $0x31] sm:$0xff]
      %v1043 = vld [vmem:[#allocation2 + $0x41] sm:$0xff]
      %v1044 = vld [vmem:[#allocation2 + $0x51] sm:$0xff]
      %v1045 = vld [vmem:[#allocation2 + $0x61] sm:$0xff]
      %v1046 = vld [vmem:[#allocation2 + $0x71] sm:$0xff]
      %s1047 = scalar_lea.vmem %s3, 1
      %v1048 = vld [vmem:[%s1047] sm:$0x1]
      %v1050 = vlaneseq
      %v1051 = vshrl.u32 %v1050, 7
      %v1052 = vsub.s32 0, %v1051
      %v1053 = vrot.slane %v1048, %v1052
      %v1055 = vmul.f32 %v1039, %v1053
      %v1056 = vmul.f32 %v1040, %v1053
      %v1057 = vmul.f32 %v1041, %v1053
      %v1058 = vmul.f32 %v1042, %v1053
      %v1059 = vmul.f32 %v1043, %v1053
      %v1060 = vmul.f32 %v1044, %v1053
      %v1061 = vmul.f32 %v1045, %v1053
      %v1062 = vmul.f32 %v1046, %v1053
      %v1063 = vadd.f32 %v1031, %v1055
      %v1064 = vadd.f32 %v1032, %v1056
      %v1065 = vadd.f32 %v1033, %v1057
      %v1066 = vadd.f32 %v1034, %v1058
      %v1067 = vadd.f32 %v1035, %v1059
      %v1068 = vadd.f32 %v1036, %v1060
      %v1069 = vadd.f32 %v1037, %v1061
      %v1070 = vadd.f32 %v1038, %v1062
      %v1071 = vld [vmem:[#allocation2 + $0x2] sm:$0xff]
      %v1072 = vld [vmem:[#allocation2 + $0x12] sm:$0xff]
      %v1073 = vld [vmem:[#allocation2 + $0x22] sm:$0xff]
      %v1074 = vld [vmem:[#allocation2 + $0x32] sm:$0xff]
      %v1075 = vld [vmem:[#allocation2 + $0x42] sm:$0xff]
      %v1076 = vld [vmem:[#allocation2 + $0x52] sm:$0xff]
      %v1077 = vld [vmem:[#allocation2 + $0x62] sm:$0xff]
      %v1078 = vld [vmem:[#allocation2 + $0x72] sm:$0xff]
      %s1079 = scalar_lea.vmem %s3, 2
      %v1080 = vld [vmem:[%s1079] sm:$0x1]
      %v1082 = vlaneseq
      %v1083 = vshrl.u32 %v1082, 7
      %v1084 = vsub.s32 0, %v1083
      %v1085 = vrot.slane %v1080, %v1084
      %v1087 = vmul.f32 %v1071, %v1085
      %v1088 = vmul.f32 %v1072, %v1085
      %v1089 = vmul.f32 %v1073, %v1085
      %v1090 = vmul.f32 %v1074, %v1085
      %v1091 = vmul.f32 %v1075, %v1085
      %v1092 = vmul.f32 %v1076, %v1085
      %v1093 = vmul.f32 %v1077, %v1085
      %v1094 = vmul.f32 %v1078, %v1085
      %v1095 = vadd.f32 %v1063, %v1087
      %v1096 = vadd.f32 %v1064, %v1088
      %v1097 = vadd.f32 %v1065, %v1089
      %v1098 = vadd.f32 %v1066, %v1090
      %v1099 = vadd.f32 %v1067, %v1091
      %v1100 = vadd.f32 %v1068, %v1092
      %v1101 = vadd.f32 %v1069, %v1093
      %v1102 = vadd.f32 %v1070, %v1094
      %v1103 = vld [vmem:[%s1007] sm:$0xff]
      %v1104 = vld [vmem:[%s1007 + $0x10] sm:$0xff]
      %v1105 = vld [vmem:[%s1007 + $0x20] sm:$0xff]
      %v1106 = vld [vmem:[%s1007 + $0x30] sm:$0xff]
      %v1107 = vld [vmem:[%s1007 + $0x40] sm:$0xff]
      %v1108 = vld [vmem:[%s1007 + $0x50] sm:$0xff]
      %v1109 = vld [vmem:[%s1007 + $0x60] sm:$0xff]
      %v1110 = vld [vmem:[%s1007 + $0x70] sm:$0xff]
      %s1111 = scalar_lea.vmem %s3, 3
      %v1112 = vld [vmem:[%s1111] sm:$0x1]
      %v1114 = vlaneseq
      %v1115 = vshrl.u32 %v1114, 7
      %v1116 = vsub.s32 0, %v1115
      %v1117 = vrot.slane %v1112, %v1116
      %v1119 = vmul.f32 %v1103, %v1117
      %v1120 = vmul.f32 %v1104, %v1117
      %v1121 = vmul.f32 %v1105, %v1117
      %v1122 = vmul.f32 %v1106, %v1117
      %v1123 = vmul.f32 %v1107, %v1117
      %v1124 = vmul.f32 %v1108, %v1117
      %v1125 = vmul.f32 %v1109, %v1117
      %v1126 = vmul.f32 %v1110, %v1117
      %v1127 = vadd.f32 %v1095, %v1119
      %v1128 = vadd.f32 %v1096, %v1120
      %v1129 = vadd.f32 %v1097, %v1121
      %v1130 = vadd.f32 %v1098, %v1122
      %v1131 = vadd.f32 %v1099, %v1123
      %v1132 = vadd.f32 %v1100, %v1124
      %v1133 = vadd.f32 %v1101, %v1125
      %v1134 = vadd.f32 %v1102, %v1126
      %v1135 = vld [vmem:[%s1007 + $0x1] sm:$0xff]
      %v1136 = vld [vmem:[%s1007 + $0x11] sm:$0xff]
      %v1137 = vld [vmem:[%s1007 + $0x21] sm:$0xff]
      %v1138 = vld [vmem:[%s1007 + $0x31] sm:$0xff]
      %v1139 = vld [vmem:[%s1007 + $0x41] sm:$0xff]
      %v1140 = vld [vmem:[%s1007 + $0x51] sm:$0xff]
      %v1141 = vld [vmem:[%s1007 + $0x61] sm:$0xff]
      %v1142 = vld [vmem:[%s1007 + $0x71] sm:$0xff]
      %s1143 = scalar_lea.vmem %s3, 4
      %v1144 = vld [vmem:[%s1143] sm:$0x1]
      %v1146 = vlaneseq
      %v1147 = vshrl.u32 %v1146, 7
      %v1148 = vsub.s32 0, %v1147
      %v1149 = vrot.slane %v1144, %v1148
      %v1151 = vmul.f32 %v1135, %v1149
      %v1152 = vmul.f32 %v1136, %v1149
      %v1153 = vmul.f32 %v1137, %v1149
      %v1154 = vmul.f32 %v1138, %v1149
      %v1155 = vmul.f32 %v1139, %v1149
      %v1156 = vmul.f32 %v1140, %v1149
      %v1157 = vmul.f32 %v1141, %v1149
      %v1158 = vmul.f32 %v1142, %v1149
      %v1159 = vadd.f32 %v1127, %v1151
      %v1160 = vadd.f32 %v1128, %v1152
      %v1161 = vadd.f32 %v1129, %v1153
      %v1162 = vadd.f32 %v1130, %v1154
      %v1163 = vadd.f32 %v1131, %v1155
      %v1164 = vadd.f32 %v1132, %v1156
      %v1165 = vadd.f32 %v1133, %v1157
      %v1166 = vadd.f32 %v1134, %v1158
      %v1167 = vld [vmem:[%s1007 + $0x2] sm:$0xff]
      %v1168 = vld [vmem:[%s1007 + $0x12] sm:$0xff]
      %v1169 = vld [vmem:[%s1007 + $0x22] sm:$0xff]
      %v1170 = vld [vmem:[%s1007 + $0x32] sm:$0xff]
      %v1171 = vld [vmem:[%s1007 + $0x42] sm:$0xff]
      %v1172 = vld [vmem:[%s1007 + $0x52] sm:$0xff]
      %v1173 = vld [vmem:[%s1007 + $0x62] sm:$0xff]
      %v1174 = vld [vmem:[%s1007 + $0x72] sm:$0xff]
      %s1175 = scalar_lea.vmem %s3, 5
      %v1176 = vld [vmem:[%s1175] sm:$0x1]
      %v1178 = vlaneseq
      %v1179 = vshrl.u32 %v1178, 7
      %v1180 = vsub.s32 0, %v1179
      %v1181 = vrot.slane %v1176, %v1180
      %v1183 = vmul.f32 %v1167, %v1181
      %v1184 = vmul.f32 %v1168, %v1181
      %v1185 = vmul.f32 %v1169, %v1181
      %v1186 = vmul.f32 %v1170, %v1181
      %v1187 = vmul.f32 %v1171, %v1181
      %v1188 = vmul.f32 %v1172, %v1181
      %v1189 = vmul.f32 %v1173, %v1181
      %v1190 = vmul.f32 %v1174, %v1181
      %v1191 = vadd.f32 %v1159, %v1183
      %v1192 = vadd.f32 %v1160, %v1184
      %v1193 = vadd.f32 %v1161, %v1185
      %v1194 = vadd.f32 %v1162, %v1186
      %v1195 = vadd.f32 %v1163, %v1187
      %v1196 = vadd.f32 %v1164, %v1188
      %v1197 = vadd.f32 %v1165, %v1189
      %v1198 = vadd.f32 %v1166, %v1190
      %s1199 = scalar_lea.vmem [#allocation2], 32
      %v1200 = vld [vmem:[%s1199] sm:$0xff]
      %v1201 = vld [vmem:[%s1199 + $0x10] sm:$0xff]
      %v1202 = vld [vmem:[%s1199 + $0x20] sm:$0xff]
      %v1203 = vld [vmem:[%s1199 + $0x30] sm:$0xff]
      %v1204 = vld [vmem:[%s1199 + $0x40] sm:$0xff]
      %v1205 = vld [vmem:[%s1199 + $0x50] sm:$0xff]
      %v1206 = vld [vmem:[%s1199 + $0x60] sm:$0xff]
      %v1207 = vld [vmem:[%s1199 + $0x70] sm:$0xff]
      %s1208 = scalar_lea.vmem %s3, 6
      %v1209 = vld [vmem:[%s1208] sm:$0x1]
      %v1211 = vlaneseq
      %v1212 = vshrl.u32 %v1211, 7
      %v1213 = vsub.s32 0, %v1212
      %v1214 = vrot.slane %v1209, %v1213
      %v1216 = vmul.f32 %v1200, %v1214
      %v1217 = vmul.f32 %v1201, %v1214
      %v1218 = vmul.f32 %v1202, %v1214
      %v1219 = vmul.f32 %v1203, %v1214
      %v1220 = vmul.f32 %v1204, %v1214
      %v1221 = vmul.f32 %v1205, %v1214
      %v1222 = vmul.f32 %v1206, %v1214
      %v1223 = vmul.f32 %v1207, %v1214
      %v1224 = vadd.f32 %v1191, %v1216
      %v1225 = vadd.f32 %v1192, %v1217
      %v1226 = vadd.f32 %v1193, %v1218
      %v1227 = vadd.f32 %v1194, %v1219
      %v1228 = vadd.f32 %v1195, %v1220
      %v1229 = vadd.f32 %v1196, %v1221
      %v1230 = vadd.f32 %v1197, %v1222
      %v1231 = vadd.f32 %v1198, %v1223
      %v1232 = vld [vmem:[%s1199 + $0x1] sm:$0xff]
      %v1233 = vld [vmem:[%s1199 + $0x11] sm:$0xff]
      %v1234 = vld [vmem:[%s1199 + $0x21] sm:$0xff]
      %v1235 = vld [vmem:[%s1199 + $0x31] sm:$0xff]
      %v1236 = vld [vmem:[%s1199 + $0x41] sm:$0xff]
      %v1237 = vld [vmem:[%s1199 + $0x51] sm:$0xff]
      %v1238 = vld [vmem:[%s1199 + $0x61] sm:$0xff]
      %v1239 = vld [vmem:[%s1199 + $0x71] sm:$0xff]
      %s1240 = scalar_lea.vmem %s3, 7
      %v1241 = vld [vmem:[%s1240] sm:$0x1]
      %v1243 = vlaneseq
      %v1244 = vshrl.u32 %v1243, 7
      %v1245 = vsub.s32 0, %v1244
      %v1246 = vrot.slane %v1241, %v1245
      %v1248 = vmul.f32 %v1232, %v1246
      %v1249 = vmul.f32 %v1233, %v1246
      %v1250 = vmul.f32 %v1234, %v1246
      %v1251 = vmul.f32 %v1235, %v1246
      %v1252 = vmul.f32 %v1236, %v1246
      %v1253 = vmul.f32 %v1237, %v1246
      %v1254 = vmul.f32 %v1238, %v1246
      %v1255 = vmul.f32 %v1239, %v1246
      %v1256 = vadd.f32 %v1224, %v1248
      %v1257 = vadd.f32 %v1225, %v1249
      %v1258 = vadd.f32 %v1226, %v1250
      %v1259 = vadd.f32 %v1227, %v1251
      %v1260 = vadd.f32 %v1228, %v1252
      %v1261 = vadd.f32 %v1229, %v1253
      %v1262 = vadd.f32 %v1230, %v1254
      %v1263 = vadd.f32 %v1231, %v1255
      %v1264 = vld [vmem:[%s1199 + $0x2] sm:$0xff]
      %v1265 = vld [vmem:[%s1199 + $0x12] sm:$0xff]
      %v1266 = vld [vmem:[%s1199 + $0x22] sm:$0xff]
      %v1267 = vld [vmem:[%s1199 + $0x32] sm:$0xff]
      %v1268 = vld [vmem:[%s1199 + $0x42] sm:$0xff]
      %v1269 = vld [vmem:[%s1199 + $0x52] sm:$0xff]
      %v1270 = vld [vmem:[%s1199 + $0x62] sm:$0xff]
      %v1271 = vld [vmem:[%s1199 + $0x72] sm:$0xff]
      %s1272 = scalar_lea.vmem %s3, 8
      %v1273 = vld [vmem:[%s1272] sm:$0x1]
      %v1275 = vlaneseq
      %v1276 = vshrl.u32 %v1275, 7
      %v1277 = vsub.s32 0, %v1276
      %v1278 = vrot.slane %v1273, %v1277
      %v1280 = vmul.f32 %v1264, %v1278
      %v1281 = vmul.f32 %v1265, %v1278
      %v1282 = vmul.f32 %v1266, %v1278
      %v1283 = vmul.f32 %v1267, %v1278
      %v1284 = vmul.f32 %v1268, %v1278
      %v1285 = vmul.f32 %v1269, %v1278
      %v1286 = vmul.f32 %v1270, %v1278
      %v1287 = vmul.f32 %v1271, %v1278
      %v1288 = vadd.f32 %v1256, %v1280
      %v1289 = vadd.f32 %v1257, %v1281
      %v1290 = vadd.f32 %v1258, %v1282
      %v1291 = vadd.f32 %v1259, %v1283
      %v1292 = vadd.f32 %v1260, %v1284
      %v1293 = vadd.f32 %v1261, %v1285
      %v1294 = vadd.f32 %v1262, %v1286
      %v1295 = vadd.f32 %v1263, %v1287
      %v1296 = vmul.f32 %v1288, 0.1
      %v1297 = vmul.f32 %v1289, 0.1
      %v1298 = vmul.f32 %v1290, 0.1
      %v1299 = vmul.f32 %v1291, 0.1
      %v1300 = vmul.f32 %v1292, 0.1
      %v1301 = vmul.f32 %v1293, 0.1
      %v1302 = vmul.f32 %v1294, 0.1
      %v1303 = vmul.f32 %v1295, 0.1
      %v1304 = vmax.f32 %v1288, %v1296
      %v1305 = vmax.f32 %v1289, %v1297
      %v1306 = vmax.f32 %v1290, %v1298
      %v1307 = vmax.f32 %v1291, %v1299
      %v1308 = vmax.f32 %v1292, %v1300
      %v1309 = vmax.f32 %v1293, %v1301
      %v1310 = vmax.f32 %v1294, %v1302
      %v1311 = vmax.f32 %v1295, %v1303
      %v1312 = vpack.c.bf16 %v1305, %v1304
      %v1313 = vpack.c.bf16 %v1307, %v1306
      %v1314 = vpack.c.bf16 %v1309, %v1308
      %v1315 = vpack.c.bf16 %v1311, %v1310
      %v1316 = vld [vmem:[%s4] sm:$0xf]
      %v1317 = vld [vmem:[%s4 + $0x4] sm:$0xf]
      %v1318 = vld [vmem:[%s4 + $0x8] sm:$0xf]
      %v1322 = vunpack.c.l.b16 %v1316
      %v1323 = vunpack.c.l.b16 %v1317
      %v1324 = vunpack.c.l.b16 %v1318
      %v1325 = vpack.c.b16 %v1323, %v1322
      %v1326 = vpack.c.b16 %v1324, %v1324
      %v1329 = vsel %vm985, %v1312, 0
      %v1332 = vsel %vm985, %v1313, 0
      %v1335 = vsel %vm985, %v1314, 0
      %v1338 = vsel %vm985, %v1315, 0
      %vm1340 = vcmask 1043456
      %v1342 = vsel %vm1340, %v1326, 0
      %1344 = vmatprep.subr.bf16.mxu0 0
      %1345 = vmatpush1.bf16.msra.mxu0 %v1325
      %1346 = vmatprep.subr.bf16.mxu0 0
      %1347 = vmatpush1.bf16.msra.mxu0 %v1342
      %1348 = vmatprep.subr.bf16.mxu0 0
      %1349 = vmatpush1.bf16.msra.mxu0 0
      %1350 = vmatprep.subr.bf16.mxu0 0
      %1351 = vmatpush1.bf16.msra.mxu0 0
      %1352 = vmatprep.subr.bf16.mxu0 0
      %1353 = vmatpush1.bf16.msra.mxu0 0
      %1354 = vmatprep.subr.bf16.mxu0 0
      %1355 = vmatpush1.bf16.msra.mxu0 0
      %1356 = vmatprep.subr.bf16.mxu0 0
      %1357 = vmatpush1.bf16.msra.mxu0 0
      %1358 = vmatprep.subr.bf16.mxu0 0
      %1359 = vmatpush1.bf16.msra.mxu0 0
      %1360 = vmatprep.subr.bf16.mxu0 0
      %1361 = vmatpush1.bf16.msra.mxu0 0
      %1362 = vmatprep.subr.bf16.mxu0 0
      %1363 = vmatpush1.bf16.msra.mxu0 0
      %1364 = vmatprep.subr.bf16.mxu0 0
      %1365 = vmatpush1.bf16.msra.mxu0 0
      %1366 = vmatprep.subr.bf16.mxu0 0
      %1367 = vmatpush1.bf16.msra.mxu0 0
      %1368 = vmatprep.subr.bf16.mxu0 0
      %1369 = vmatpush1.bf16.msra.mxu0 0
      %1370 = vmatprep.subr.bf16.mxu0 0
      %1371 = vmatpush1.bf16.msra.mxu0 0
      %1372 = vmatprep.subr.bf16.mxu0 0
      %1373 = vmatpush1.bf16.msra.mxu0 0
      %1374 = vmatprep.subr.bf16.mxu0 0
      %1375 = vmatpush1.bf16.msra.mxu0 0
      %1376 = vmatprep.mubr.bf16.mxu0 0
      %1377 = vmatmul.mubr.bf16.gmra.mrb[0].mxu0 %v1329
      %v1378 = vpop.f32.mrb[0].mxu0
      %v1379 = vadd.f32 0.0, %v1378
      %v1380 = vpop.f32.mrb[0].mxu0
      %v1381 = vpop.f32.mrb[0].mxu0
      %v1382 = vadd.f32 0.0, %v1381
      %v1383 = vpop.f32.mrb[0].mxu0
      %1384 = vmatprep.mubr.bf16.mxu0 0
      %1385 = vmatmul.mubr.bf16.gmra.mrb[0].mxu0 %v1332
      %v1386 = vpop.f32.mrb[0].mxu0
      %v1387 = vadd.f32 0.0, %v1386
      %v1388 = vpop.f32.mrb[0].mxu0
      %v1389 = vpop.f32.mrb[0].mxu0
      %v1390 = vadd.f32 0.0, %v1389
      %v1391 = vpop.f32.mrb[0].mxu0
      %1392 = vmatprep.mubr.bf16.mxu0 0
      %1393 = vmatmul.mubr.bf16.gmra.mrb[0].mxu0 %v1335
      %v1394 = vpop.f32.mrb[0].mxu0
      %v1395 = vadd.f32 0.0, %v1394
      %v1396 = vpop.f32.mrb[0].mxu0
      %v1397 = vpop.f32.mrb[0].mxu0
      %v1398 = vadd.f32 0.0, %v1397
      %v1399 = vpop.f32.mrb[0].mxu0
      %1400 = vmatprep.mubr.bf16.mxu0 0
      %1401 = vmatmul.mubr.bf16.gmra.mrb[0].mxu0 %v1338
      %v1402 = vpop.f32.mrb[0].mxu0
      %v1403 = vadd.f32 0.0, %v1402
      %v1404 = vpop.f32.mrb[0].mxu0
      %v1405 = vpop.f32.mrb[0].mxu0
      %v1406 = vadd.f32 0.0, %v1405
      %v1407 = vpop.f32.mrb[0].mxu0
      %1408 = vdwg.mxu0
      %v1409 = vmul.f32 %v1379, 0.1
      %v1410 = vmul.f32 %v1382, 0.1
      %v1411 = vmul.f32 %v1387, 0.1
      %v1412 = vmul.f32 %v1390, 0.1
      %v1413 = vmul.f32 %v1395, 0.1
      %v1414 = vmul.f32 %v1398, 0.1
      %v1415 = vmul.f32 %v1403, 0.1
      %v1416 = vmul.f32 %v1406, 0.1
      %v1417 = vmax.f32 %v1379, %v1409
      %v1418 = vmax.f32 %v1382, %v1410
      %v1419 = vmax.f32 %v1387, %v1411
      %v1420 = vmax.f32 %v1390, %v1412
      %v1421 = vmax.f32 %v1395, %v1413
      %v1422 = vmax.f32 %v1398, %v1414
      %v1423 = vmax.f32 %v1403, %v1415
      %v1424 = vmax.f32 %v1406, %v1416
      %vm1425 = vcmask 392192
      %1426 = vst.msk [vmem:[#allocation3] sm:$0xff] %vm1425, 0.0
      %vm1427 = vcmask 386048
      %1428 = vst.msk [vmem:[#allocation3 + $0x8] sm:$0x3] %vm1427, 0.0
      %1429 = vst.msk [vmem:[#allocation3 + $0x10] sm:$0xff] %vm1425, 0.0
      %1430 = vst.msk [vmem:[#allocation3 + $0x18] sm:$0x3] %vm1427, 0.0
      %1431 = vst.msk [vmem:[#allocation3 + $0x20] sm:$0xff] %vm1425, 0.0
      %1432 = vst.msk [vmem:[#allocation3 + $0x28] sm:$0x3] %vm1427, 0.0
      %1433 = vst.msk [vmem:[#allocation3 + $0x30] sm:$0xff] %vm1425, 0.0
      %1434 = vst.msk [vmem:[#allocation3 + $0x38] sm:$0x3] %vm1427, 0.0
      %1435 = vst.msk [vmem:[#allocation3 + $0x40] sm:$0xff] %vm1425, 0.0
      %1436 = vst.msk [vmem:[#allocation3 + $0x48] sm:$0x3] %vm1427, 0.0
      %1437 = vst.msk [vmem:[#allocation3 + $0x50] sm:$0xff] %vm1425, 0.0
      %1438 = vst.msk [vmem:[#allocation3 + $0x58] sm:$0x3] %vm1427, 0.0
      %1439 = vst.msk [vmem:[#allocation3 + $0x60] sm:$0xff] %vm1425, 0.0
      %1440 = vst.msk [vmem:[#allocation3 + $0x68] sm:$0x3] %vm1427, 0.0
      %1441 = vst.msk [vmem:[#allocation3 + $0x70] sm:$0xff] %vm1425, 0.0
      %1442 = vst.msk [vmem:[#allocation3 + $0x78] sm:$0x3] %vm1427, 0.0
      %1443 = vst.msk [vmem:[#allocation3 + $0x80] sm:$0xff] %vm1425, 0.0
      %1444 = vst.msk [vmem:[#allocation3 + $0x88] sm:$0x3] %vm1427, 0.0
      %1445 = vst.msk [vmem:[#allocation3 + $0x90] sm:$0xff] %vm1425, 0.0
      %1446 = vst.msk [vmem:[#allocation3 + $0x98] sm:$0x3] %vm1427, 0.0
      %s1447 = scalar_lea.vmem [#allocation3], 16
      %1448 = vst.msk [vmem:[%s1447 + $0x1] sm:$0xff] %vm1425, %v1417
      %1449 = vst.msk [vmem:[%s1447 + $0x11] sm:$0xff] %vm1425, %v1418
      %1450 = vst.msk [vmem:[%s1447 + $0x21] sm:$0xff] %vm1425, %v1419
      %1451 = vst.msk [vmem:[%s1447 + $0x31] sm:$0xff] %vm1425, %v1420
      %1452 = vst.msk [vmem:[%s1447 + $0x41] sm:$0xff] %vm1425, %v1421
      %1453 = vst.msk [vmem:[%s1447 + $0x51] sm:$0xff] %vm1425, %v1422
      %1454 = vst.msk [vmem:[%s1447 + $0x61] sm:$0xff] %vm1425, %v1423
      %1455 = vst.msk [vmem:[%s1447 + $0x71] sm:$0xff] %vm1425, %v1424
      %v1456 = vld [vmem:[#allocation3] sm:$0xff]
      %v1457 = vld [vmem:[#allocation3 + $0x10] sm:$0xff]
      %v1458 = vld [vmem:[#allocation3 + $0x20] sm:$0xff]
      %v1459 = vld [vmem:[#allocation3 + $0x30] sm:$0xff]
      %v1460 = vld [vmem:[#allocation3 + $0x40] sm:$0xff]
      %v1461 = vld [vmem:[#allocation3 + $0x50] sm:$0xff]
      %v1462 = vld [vmem:[#allocation3 + $0x60] sm:$0xff]
      %v1463 = vld [vmem:[#allocation3 + $0x70] sm:$0xff]
      %v1464 = vld [vmem:[%s5] sm:$0x1]
      %v1466 = vlaneseq
      %v1467 = vshrl.u32 %v1466, 7
      %v1468 = vsub.s32 0, %v1467
      %v1469 = vrot.slane %v1464, %v1468
      %v1471 = vmul.f32 %v1456, %v1469
      %v1472 = vmul.f32 %v1457, %v1469
      %v1473 = vmul.f32 %v1458, %v1469
      %v1474 = vmul.f32 %v1459, %v1469
      %v1475 = vmul.f32 %v1460, %v1469
      %v1476 = vmul.f32 %v1461, %v1469
      %v1477 = vmul.f32 %v1462, %v1469
      %v1478 = vmul.f32 %v1463, %v1469
      %v1479 = vld [vmem:[#allocation3 + $0x1] sm:$0xff]
      %v1480 = vld [vmem:[#allocation3 + $0x11] sm:$0xff]
      %v1481 = vld [vmem:[#allocation3 + $0x21] sm:$0xff]
      %v1482 = vld [vmem:[#allocation3 + $0x31] sm:$0xff]
      %v1483 = vld [vmem:[#allocation3 + $0x41] sm:$0xff]
      %v1484 = vld [vmem:[#allocation3 + $0x51] sm:$0xff]
      %v1485 = vld [vmem:[#allocation3 + $0x61] sm:$0xff]
      %v1486 = vld [vmem:[#allocation3 + $0x71] sm:$0xff]
      %s1487 = scalar_lea.vmem %s5, 1
      %v1488 = vld [vmem:[%s1487] sm:$0x1]
      %v1490 = vlaneseq
      %v1491 = vshrl.u32 %v1490, 7
      %v1492 = vsub.s32 0, %v1491
      %v1493 = vrot.slane %v1488, %v1492
      %v1495 = vmul.f32 %v1479, %v1493
      %v1496 = vmul.f32 %v1480, %v1493
      %v1497 = vmul.f32 %v1481, %v1493
      %v1498 = vmul.f32 %v1482, %v1493
      %v1499 = vmul.f32 %v1483, %v1493
      %v1500 = vmul.f32 %v1484, %v1493
      %v1501 = vmul.f32 %v1485, %v1493
      %v1502 = vmul.f32 %v1486, %v1493
      %v1503 = vadd.f32 %v1471, %v1495
      %v1504 = vadd.f32 %v1472, %v1496
      %v1505 = vadd.f32 %v1473, %v1497
      %v1506 = vadd.f32 %v1474, %v1498
      %v1507 = vadd.f32 %v1475, %v1499
      %v1508 = vadd.f32 %v1476, %v1500
      %v1509 = vadd.f32 %v1477, %v1501
      %v1510 = vadd.f32 %v1478, %v1502
      %v1511 = vld [vmem:[#allocation3 + $0x2] sm:$0xff]
      %v1512 = vld [vmem:[#allocation3 + $0x12] sm:$0xff]
      %v1513 = vld [vmem:[#allocation3 + $0x22] sm:$0xff]
      %v1514 = vld [vmem:[#allocation3 + $0x32] sm:$0xff]
      %v1515 = vld [vmem:[#allocation3 + $0x42] sm:$0xff]
      %v1516 = vld [vmem:[#allocation3 + $0x52] sm:$0xff]
      %v1517 = vld [vmem:[#allocation3 + $0x62] sm:$0xff]
      %v1518 = vld [vmem:[#allocation3 + $0x72] sm:$0xff]
      %s1519 = scalar_lea.vmem %s5, 2
      %v1520 = vld [vmem:[%s1519] sm:$0x1]
      %v1522 = vlaneseq
      %v1523 = vshrl.u32 %v1522, 7
      %v1524 = vsub.s32 0, %v1523
      %v1525 = vrot.slane %v1520, %v1524
      %v1527 = vmul.f32 %v1511, %v1525
      %v1528 = vmul.f32 %v1512, %v1525
      %v1529 = vmul.f32 %v1513, %v1525
      %v1530 = vmul.f32 %v1514, %v1525
      %v1531 = vmul.f32 %v1515, %v1525
      %v1532 = vmul.f32 %v1516, %v1525
      %v1533 = vmul.f32 %v1517, %v1525
      %v1534 = vmul.f32 %v1518, %v1525
      %v1535 = vadd.f32 %v1503, %v1527
      %v1536 = vadd.f32 %v1504, %v1528
      %v1537 = vadd.f32 %v1505, %v1529
      %v1538 = vadd.f32 %v1506, %v1530
      %v1539 = vadd.f32 %v1507, %v1531
      %v1540 = vadd.f32 %v1508, %v1532
      %v1541 = vadd.f32 %v1509, %v1533
      %v1542 = vadd.f32 %v1510, %v1534
      %v1543 = vld [vmem:[%s1447] sm:$0xff]
      %v1544 = vld [vmem:[%s1447 + $0x10] sm:$0xff]
      %v1545 = vld [vmem:[%s1447 + $0x20] sm:$0xff]
      %v1546 = vld [vmem:[%s1447 + $0x30] sm:$0xff]
      %v1547 = vld [vmem:[%s1447 + $0x40] sm:$0xff]
      %v1548 = vld [vmem:[%s1447 + $0x50] sm:$0xff]
      %v1549 = vld [vmem:[%s1447 + $0x60] sm:$0xff]
      %v1550 = vld [vmem:[%s1447 + $0x70] sm:$0xff]
      %s1551 = scalar_lea.vmem %s5, 3
      %v1552 = vld [vmem:[%s1551] sm:$0x1]
      %v1554 = vlaneseq
      %v1555 = vshrl.u32 %v1554, 7
      %v1556 = vsub.s32 0, %v1555
      %v1557 = vrot.slane %v1552, %v1556
      %v1559 = vmul.f32 %v1543, %v1557
      %v1560 = vmul.f32 %v1544, %v1557
      %v1561 = vmul.f32 %v1545, %v1557
      %v1562 = vmul.f32 %v1546, %v1557
      %v1563 = vmul.f32 %v1547, %v1557
      %v1564 = vmul.f32 %v1548, %v1557
      %v1565 = vmul.f32 %v1549, %v1557
      %v1566 = vmul.f32 %v1550, %v1557
      %v1567 = vadd.f32 %v1535, %v1559
      %v1568 = vadd.f32 %v1536, %v1560
      %v1569 = vadd.f32 %v1537, %v1561
      %v1570 = vadd.f32 %v1538, %v1562
      %v1571 = vadd.f32 %v1539, %v1563
      %v1572 = vadd.f32 %v1540, %v1564
      %v1573 = vadd.f32 %v1541, %v1565
      %v1574 = vadd.f32 %v1542, %v1566
      %v1575 = vld [vmem:[%s1447 + $0x1] sm:$0xff]
      %v1576 = vld [vmem:[%s1447 + $0x11] sm:$0xff]
      %v1577 = vld [vmem:[%s1447 + $0x21] sm:$0xff]
      %v1578 = vld [vmem:[%s1447 + $0x31] sm:$0xff]
      %v1579 = vld [vmem:[%s1447 + $0x41] sm:$0xff]
      %v1580 = vld [vmem:[%s1447 + $0x51] sm:$0xff]
      %v1581 = vld [vmem:[%s1447 + $0x61] sm:$0xff]
      %v1582 = vld [vmem:[%s1447 + $0x71] sm:$0xff]
      %s1583 = scalar_lea.vmem %s5, 4
      %v1584 = vld [vmem:[%s1583] sm:$0x1]
      %v1586 = vlaneseq
      %v1587 = vshrl.u32 %v1586, 7
      %v1588 = vsub.s32 0, %v1587
      %v1589 = vrot.slane %v1584, %v1588
      %v1591 = vmul.f32 %v1575, %v1589
      %v1592 = vmul.f32 %v1576, %v1589
      %v1593 = vmul.f32 %v1577, %v1589
      %v1594 = vmul.f32 %v1578, %v1589
      %v1595 = vmul.f32 %v1579, %v1589
      %v1596 = vmul.f32 %v1580, %v1589
      %v1597 = vmul.f32 %v1581, %v1589
      %v1598 = vmul.f32 %v1582, %v1589
      %v1599 = vadd.f32 %v1567, %v1591
      %v1600 = vadd.f32 %v1568, %v1592
      %v1601 = vadd.f32 %v1569, %v1593
      %v1602 = vadd.f32 %v1570, %v1594
      %v1603 = vadd.f32 %v1571, %v1595
      %v1604 = vadd.f32 %v1572, %v1596
      %v1605 = vadd.f32 %v1573, %v1597
      %v1606 = vadd.f32 %v1574, %v1598
      %v1607 = vld [vmem:[%s1447 + $0x2] sm:$0xff]
      %v1608 = vld [vmem:[%s1447 + $0x12] sm:$0xff]
      %v1609 = vld [vmem:[%s1447 + $0x22] sm:$0xff]
      %v1610 = vld [vmem:[%s1447 + $0x32] sm:$0xff]
      %v1611 = vld [vmem:[%s1447 + $0x42] sm:$0xff]
      %v1612 = vld [vmem:[%s1447 + $0x52] sm:$0xff]
      %v1613 = vld [vmem:[%s1447 + $0x62] sm:$0xff]
      %v1614 = vld [vmem:[%s1447 + $0x72] sm:$0xff]
      %s1615 = scalar_lea.vmem %s5, 5
      %v1616 = vld [vmem:[%s1615] sm:$0x1]
      %v1618 = vlaneseq
      %v1619 = vshrl.u32 %v1618, 7
      %v1620 = vsub.s32 0, %v1619
      %v1621 = vrot.slane %v1616, %v1620
      %v1623 = vmul.f32 %v1607, %v1621
      %v1624 = vmul.f32 %v1608, %v1621
      %v1625 = vmul.f32 %v1609, %v1621
      %v1626 = vmul.f32 %v1610, %v1621
      %v1627 = vmul.f32 %v1611, %v1621
      %v1628 = vmul.f32 %v1612, %v1621
      %v1629 = vmul.f32 %v1613, %v1621
      %v1630 = vmul.f32 %v1614, %v1621
      %v1631 = vadd.f32 %v1599, %v1623
      %v1632 = vadd.f32 %v1600, %v1624
      %v1633 = vadd.f32 %v1601, %v1625
      %v1634 = vadd.f32 %v1602, %v1626
      %v1635 = vadd.f32 %v1603, %v1627
      %v1636 = vadd.f32 %v1604, %v1628
      %v1637 = vadd.f32 %v1605, %v1629
      %v1638 = vadd.f32 %v1606, %v1630
      %s1639 = scalar_lea.vmem [#allocation3], 32
      %v1640 = vld [vmem:[%s1639] sm:$0xff]
      %v1641 = vld [vmem:[%s1639 + $0x10] sm:$0xff]
      %v1642 = vld [vmem:[%s1639 + $0x20] sm:$0xff]
      %v1643 = vld [vmem:[%s1639 + $0x30] sm:$0xff]
      %v1644 = vld [vmem:[%s1639 + $0x40] sm:$0xff]
      %v1645 = vld [vmem:[%s1639 + $0x50] sm:$0xff]
      %v1646 = vld [vmem:[%s1639 + $0x60] sm:$0xff]
      %v1647 = vld [vmem:[%s1639 + $0x70] sm:$0xff]
      %s1648 = scalar_lea.vmem %s5, 6
      %v1649 = vld [vmem:[%s1648] sm:$0x1]
      %v1651 = vlaneseq
      %v1652 = vshrl.u32 %v1651, 7
      %v1653 = vsub.s32 0, %v1652
      %v1654 = vrot.slane %v1649, %v1653
      %v1656 = vmul.f32 %v1640, %v1654
      %v1657 = vmul.f32 %v1641, %v1654
      %v1658 = vmul.f32 %v1642, %v1654
      %v1659 = vmul.f32 %v1643, %v1654
      %v1660 = vmul.f32 %v1644, %v1654
      %v1661 = vmul.f32 %v1645, %v1654
      %v1662 = vmul.f32 %v1646, %v1654
      %v1663 = vmul.f32 %v1647, %v1654
      %v1664 = vadd.f32 %v1631, %v1656
      %v1665 = vadd.f32 %v1632, %v1657
      %v1666 = vadd.f32 %v1633, %v1658
      %v1667 = vadd.f32 %v1634, %v1659
      %v1668 = vadd.f32 %v1635, %v1660
      %v1669 = vadd.f32 %v1636, %v1661
      %v1670 = vadd.f32 %v1637, %v1662
      %v1671 = vadd.f32 %v1638, %v1663
      %v1672 = vld [vmem:[%s1639 + $0x1] sm:$0xff]
      %v1673 = vld [vmem:[%s1639 + $0x11] sm:$0xff]
      %v1674 = vld [vmem:[%s1639 + $0x21] sm:$0xff]
      %v1675 = vld [vmem:[%s1639 + $0x31] sm:$0xff]
      %v1676 = vld [vmem:[%s1639 + $0x41] sm:$0xff]
      %v1677 = vld [vmem:[%s1639 + $0x51] sm:$0xff]
      %v1678 = vld [vmem:[%s1639 + $0x61] sm:$0xff]
      %v1679 = vld [vmem:[%s1639 + $0x71] sm:$0xff]
      %s1680 = scalar_lea.vmem %s5, 7
      %v1681 = vld [vmem:[%s1680] sm:$0x1]
      %v1683 = vlaneseq
      %v1684 = vshrl.u32 %v1683, 7
      %v1685 = vsub.s32 0, %v1684
      %v1686 = vrot.slane %v1681, %v1685
      %v1688 = vmul.f32 %v1672, %v1686
      %v1689 = vmul.f32 %v1673, %v1686
      %v1690 = vmul.f32 %v1674, %v1686
      %v1691 = vmul.f32 %v1675, %v1686
      %v1692 = vmul.f32 %v1676, %v1686
      %v1693 = vmul.f32 %v1677, %v1686
      %v1694 = vmul.f32 %v1678, %v1686
      %v1695 = vmul.f32 %v1679, %v1686
      %v1696 = vadd.f32 %v1664, %v1688
      %v1697 = vadd.f32 %v1665, %v1689
      %v1698 = vadd.f32 %v1666, %v1690
      %v1699 = vadd.f32 %v1667, %v1691
      %v1700 = vadd.f32 %v1668, %v1692
      %v1701 = vadd.f32 %v1669, %v1693
      %v1702 = vadd.f32 %v1670, %v1694
      %v1703 = vadd.f32 %v1671, %v1695
      %v1704 = vld [vmem:[%s1639 + $0x2] sm:$0xff]
      %v1705 = vld [vmem:[%s1639 + $0x12] sm:$0xff]
      %v1706 = vld [vmem:[%s1639 + $0x22] sm:$0xff]
      %v1707 = vld [vmem:[%s1639 + $0x32] sm:$0xff]
      %v1708 = vld [vmem:[%s1639 + $0x42] sm:$0xff]
      %v1709 = vld [vmem:[%s1639 + $0x52] sm:$0xff]
      %v1710 = vld [vmem:[%s1639 + $0x62] sm:$0xff]
      %v1711 = vld [vmem:[%s1639 + $0x72] sm:$0xff]
      %s1712 = scalar_lea.vmem %s5, 8
      %v1713 = vld [vmem:[%s1712] sm:$0x1]
      %v1715 = vlaneseq
      %v1716 = vshrl.u32 %v1715, 7
      %v1717 = vsub.s32 0, %v1716
      %v1718 = vrot.slane %v1713, %v1717
      %v1720 = vmul.f32 %v1704, %v1718
      %v1721 = vmul.f32 %v1705, %v1718
      %v1722 = vmul.f32 %v1706, %v1718
      %v1723 = vmul.f32 %v1707, %v1718
      %v1724 = vmul.f32 %v1708, %v1718
      %v1725 = vmul.f32 %v1709, %v1718
      %v1726 = vmul.f32 %v1710, %v1718
      %v1727 = vmul.f32 %v1711, %v1718
      %v1728 = vadd.f32 %v1696, %v1720
      %v1729 = vadd.f32 %v1697, %v1721
      %v1730 = vadd.f32 %v1698, %v1722
      %v1731 = vadd.f32 %v1699, %v1723
      %v1732 = vadd.f32 %v1700, %v1724
      %v1733 = vadd.f32 %v1701, %v1725
      %v1734 = vadd.f32 %v1702, %v1726
      %v1735 = vadd.f32 %v1703, %v1727
      %v1736 = vmul.f32 %v1728, 0.1
      %v1737 = vmul.f32 %v1729, 0.1
      %v1738 = vmul.f32 %v1730, 0.1
      %v1739 = vmul.f32 %v1731, 0.1
      %v1740 = vmul.f32 %v1732, 0.1
      %v1741 = vmul.f32 %v1733, 0.1
      %v1742 = vmul.f32 %v1734, 0.1
      %v1743 = vmul.f32 %v1735, 0.1
      %v1744 = vmax.f32 %v1728, %v1736
      %v1745 = vmax.f32 %v1729, %v1737
      %v1746 = vmax.f32 %v1730, %v1738
      %v1747 = vmax.f32 %v1731, %v1739
      %v1748 = vmax.f32 %v1732, %v1740
      %v1749 = vmax.f32 %v1733, %v1741
      %v1750 = vmax.f32 %v1734, %v1742
      %v1751 = vmax.f32 %v1735, %v1743
      %v1752 = vpack.c.bf16 %v1745, %v1744
      %v1753 = vpack.c.bf16 %v1747, %v1746
      %v1754 = vpack.c.bf16 %v1749, %v1748
      %v1755 = vpack.c.bf16 %v1751, %v1750
      %v1756 = vld [vmem:[%s6] sm:$0xf]
      %v1757 = vld [vmem:[%s6 + $0x4] sm:$0xf]
      %v1758 = vld [vmem:[%s6 + $0x8] sm:$0xf]
      %v1759 = vld [vmem:[%s6 + $0xc] sm:$0xf]
      %v1760 = vld [vmem:[%s6 + $0x10] sm:$0xf]
      %v1761 = vld [vmem:[%s6 + $0x14] sm:$0xf]
      %v1768 = vunpack.c.l.b16 %v1756
      %v1769 = vunpack.c.l.b16 %v1757
      %v1770 = vunpack.c.l.b16 %v1758
      %v1771 = vunpack.c.l.b16 %v1759
      %v1772 = vunpack.c.l.b16 %v1760
      %v1773 = vunpack.c.l.b16 %v1761
      %v1774 = vpack.c.b16 %v1769, %v1768
      %v1775 = vpack.c.b16 %v1771, %v1770
      %v1776 = vpack.c.b16 %v1773, %v1772
      %v1781 = vsel %vm1425, %v1752, 0
      %v1784 = vsel %vm1425, %v1753, 0
      %v1787 = vsel %vm1425, %v1754, 0
      %v1790 = vsel %vm1425, %v1755, 0
      %1792 = vmatprep.subr.bf16.mxu0 0
      %1793 = vmatpush1.bf16.msra.mxu0 %v1774
      %1794 = vmatprep.subr.bf16.mxu0 0
      %1795 = vmatpush1.bf16.msra.mxu0 %v1775
      %1796 = vmatprep.subr.bf16.mxu0 0
      %1797 = vmatpush1.bf16.msra.mxu0 %v1776
      %1798 = vmatprep.subr.bf16.mxu0 0
      %1799 = vmatpush1.bf16.msra.mxu0 0
      %1800 = vmatprep.subr.bf16.mxu0 0
      %1801 = vmatpush1.bf16.msra.mxu0 0
      %1802 = vmatprep.subr.bf16.mxu0 0
      %1803 = vmatpush1.bf16.msra.mxu0 0
      %1804 = vmatprep.subr.bf16.mxu0 0
      %1805 = vmatpush1.bf16.msra.mxu0 0
      %1806 = vmatprep.subr.bf16.mxu0 0
      %1807 = vmatpush1.bf16.msra.mxu0 0
      %1808 = vmatprep.subr.bf16.mxu0 0
      %1809 = vmatpush1.bf16.msra.mxu0 0
      %1810 = vmatprep.subr.bf16.mxu0 0
      %1811 = vmatpush1.bf16.msra.mxu0 0
      %1812 = vmatprep.subr.bf16.mxu0 0
      %1813 = vmatpush1.bf16.msra.mxu0 0
      %1814 = vmatprep.subr.bf16.mxu0 0
      %1815 = vmatpush1.bf16.msra.mxu0 0
      %1816 = vmatprep.subr.bf16.mxu0 0
      %1817 = vmatpush1.bf16.msra.mxu0 0
      %1818 = vmatprep.subr.bf16.mxu0 0
      %1819 = vmatpush1.bf16.msra.mxu0 0
      %1820 = vmatprep.subr.bf16.mxu0 0
      %1821 = vmatpush1.bf16.msra.mxu0 0
      %1822 = vmatprep.subr.bf16.mxu0 0
      %1823 = vmatpush1.bf16.msra.mxu0 0
      %1824 = vmatprep.mubr.bf16.mxu0 0
      %1825 = vmatmul.mubr.bf16.gmra.mrb[0].mxu0 %v1781
      %v1826 = vpop.f32.mrb[0].mxu0
      %v1827 = vadd.f32 0.0, %v1826
      %v1828 = vpop.f32.mrb[0].mxu0
      %v1829 = vpop.f32.mrb[0].mxu0
      %v1830 = vadd.f32 0.0, %v1829
      %v1831 = vpop.f32.mrb[0].mxu0
      %1832 = vmatprep.mubr.bf16.mxu0 0
      %1833 = vmatmul.mubr.bf16.gmra.mrb[0].mxu0 %v1784
      %v1834 = vpop.f32.mrb[0].mxu0
      %v1835 = vadd.f32 0.0, %v1834
      %v1836 = vpop.f32.mrb[0].mxu0
      %v1837 = vpop.f32.mrb[0].mxu0
      %v1838 = vadd.f32 0.0, %v1837
      %v1839 = vpop.f32.mrb[0].mxu0
      %1840 = vmatprep.mubr.bf16.mxu0 0
      %1841 = vmatmul.mubr.bf16.gmra.mrb[0].mxu0 %v1787
      %v1842 = vpop.f32.mrb[0].mxu0
      %v1843 = vadd.f32 0.0, %v1842
      %v1844 = vpop.f32.mrb[0].mxu0
      %v1845 = vpop.f32.mrb[0].mxu0
      %v1846 = vadd.f32 0.0, %v1845
      %v1847 = vpop.f32.mrb[0].mxu0
      %1848 = vmatprep.mubr.bf16.mxu0 0
      %1849 = vmatmul.mubr.bf16.gmra.mrb[0].mxu0 %v1790
      %v1850 = vpop.f32.mrb[0].mxu0
      %v1851 = vadd.f32 0.0, %v1850
      %v1852 = vpop.f32.mrb[0].mxu0
      %v1853 = vpop.f32.mrb[0].mxu0
      %v1854 = vadd.f32 0.0, %v1853
      %v1855 = vpop.f32.mrb[0].mxu0
      %1856 = vdwg.mxu0
      %v1857 = vmul.f32 %v1827, 0.1
      %v1858 = vmul.f32 %v1830, 0.1
      %v1859 = vmul.f32 %v1835, 0.1
      %v1860 = vmul.f32 %v1838, 0.1
      %v1861 = vmul.f32 %v1843, 0.1
      %v1862 = vmul.f32 %v1846, 0.1
      %v1863 = vmul.f32 %v1851, 0.1
      %v1864 = vmul.f32 %v1854, 0.1
      %v1865 = vmax.f32 %v1827, %v1857
      %v1866 = vmax.f32 %v1830, %v1858
      %v1867 = vmax.f32 %v1835, %v1859
      %v1868 = vmax.f32 %v1838, %v1860
      %v1869 = vmax.f32 %v1843, %v1861
      %v1870 = vmax.f32 %v1846, %v1862
      %v1871 = vmax.f32 %v1851, %v1863
      %v1872 = vmax.f32 %v1854, %v1864
      %vm1873 = vcmask 785408
      %1874 = vst.msk [vmem:[#allocation4] sm:$0xff] %vm1873, 0.0
      %vm1875 = vcmask 779264
      %1876 = vst.msk [vmem:[#allocation4 + $0x8] sm:$0x3] %vm1875, 0.0
      %1877 = vst.msk [vmem:[#allocation4 + $0x10] sm:$0xff] %vm1873, 0.0
      %1878 = vst.msk [vmem:[#allocation4 + $0x18] sm:$0x3] %vm1875, 0.0
      %1879 = vst.msk [vmem:[#allocation4 + $0x20] sm:$0xff] %vm1873, 0.0
      %1880 = vst.msk [vmem:[#allocation4 + $0x28] sm:$0x3] %vm1875, 0.0
      %1881 = vst.msk [vmem:[#allocation4 + $0x30] sm:$0xff] %vm1873, 0.0
      %1882 = vst.msk [vmem:[#allocation4 + $0x38] sm:$0x3] %vm1875, 0.0
      %1883 = vst.msk [vmem:[#allocation4 + $0x40] sm:$0xff] %vm1873, 0.0
      %1884 = vst.msk [vmem:[#allocation4 + $0x48] sm:$0x3] %vm1875, 0.0
      %1885 = vst.msk [vmem:[#allocation4 + $0x50] sm:$0xff] %vm1873, 0.0
      %1886 = vst.msk [vmem:[#allocation4 + $0x58] sm:$0x3] %vm1875, 0.0
      %1887 = vst.msk [vmem:[#allocation4 + $0x60] sm:$0xff] %vm1873, 0.0
      %1888 = vst.msk [vmem:[#allocation4 + $0x68] sm:$0x3] %vm1875, 0.0
      %1889 = vst.msk [vmem:[#allocation4 + $0x70] sm:$0xff] %vm1873, 0.0
      %1890 = vst.msk [vmem:[#allocation4 + $0x78] sm:$0x3] %vm1875, 0.0
      %1891 = vst.msk [vmem:[#allocation4 + $0x80] sm:$0xff] %vm1873, 0.0
      %1892 = vst.msk [vmem:[#allocation4 + $0x88] sm:$0x3] %vm1875, 0.0
      %1893 = vst.msk [vmem:[#allocation4 + $0x90] sm:$0xff] %vm1873, 0.0
      %1894 = vst.msk [vmem:[#allocation4 + $0x98] sm:$0x3] %vm1875, 0.0
      %s1895 = scalar_lea.vmem [#allocation4], 16
      %1896 = vst.msk [vmem:[%s1895 + $0x1] sm:$0xff] %vm1873, %v1865
      %1897 = vst.msk [vmem:[%s1895 + $0x11] sm:$0xff] %vm1873, %v1866
      %1898 = vst.msk [vmem:[%s1895 + $0x21] sm:$0xff] %vm1873, %v1867
      %1899 = vst.msk [vmem:[%s1895 + $0x31] sm:$0xff] %vm1873, %v1868
      %1900 = vst.msk [vmem:[%s1895 + $0x41] sm:$0xff] %vm1873, %v1869
      %1901 = vst.msk [vmem:[%s1895 + $0x51] sm:$0xff] %vm1873, %v1870
      %1902 = vst.msk [vmem:[%s1895 + $0x61] sm:$0xff] %vm1873, %v1871
      %1903 = vst.msk [vmem:[%s1895 + $0x71] sm:$0xff] %vm1873, %v1872
      %v1904 = vld [vmem:[#allocation4] sm:$0xff]
      %v1905 = vld [vmem:[#allocation4 + $0x10] sm:$0xff]
      %v1906 = vld [vmem:[#allocation4 + $0x20] sm:$0xff]
      %v1907 = vld [vmem:[#allocation4 + $0x30] sm:$0xff]
      %v1908 = vld [vmem:[#allocation4 + $0x40] sm:$0xff]
      %v1909 = vld [vmem:[#allocation4 + $0x50] sm:$0xff]
      %v1910 = vld [vmem:[#allocation4 + $0x60] sm:$0xff]
      %v1911 = vld [vmem:[#allocation4 + $0x70] sm:$0xff]
      %v1912 = vld [vmem:[%s7] sm:$0x1]
      %v1914 = vlaneseq
      %v1915 = vshrl.u32 %v1914, 7
      %v1916 = vsub.s32 0, %v1915
      %v1917 = vrot.slane %v1912, %v1916
      %v1919 = vmul.f32 %v1904, %v1917
      %v1920 = vmul.f32 %v1905, %v1917
      %v1921 = vmul.f32 %v1906, %v1917
      %v1922 = vmul.f32 %v1907, %v1917
      %v1923 = vmul.f32 %v1908, %v1917
      %v1924 = vmul.f32 %v1909, %v1917
      %v1925 = vmul.f32 %v1910, %v1917
      %v1926 = vmul.f32 %v1911, %v1917
      %v1927 = vld [vmem:[#allocation4 + $0x1] sm:$0xff]
      %v1928 = vld [vmem:[#allocation4 + $0x11] sm:$0xff]
      %v1929 = vld [vmem:[#allocation4 + $0x21] sm:$0xff]
      %v1930 = vld [vmem:[#allocation4 + $0x31] sm:$0xff]
      %v1931 = vld [vmem:[#allocation4 + $0x41] sm:$0xff]
      %v1932 = vld [vmem:[#allocation4 + $0x51] sm:$0xff]
      %v1933 = vld [vmem:[#allocation4 + $0x61] sm:$0xff]
      %v1934 = vld [vmem:[#allocation4 + $0x71] sm:$0xff]
      %s1935 = scalar_lea.vmem %s7, 1
      %v1936 = vld [vmem:[%s1935] sm:$0x1]
      %v1938 = vlaneseq
      %v1939 = vshrl.u32 %v1938, 7
      %v1940 = vsub.s32 0, %v1939
      %v1941 = vrot.slane %v1936, %v1940
      %v1943 = vmul.f32 %v1927, %v1941
      %v1944 = vmul.f32 %v1928, %v1941
      %v1945 = vmul.f32 %v1929, %v1941
      %v1946 = vmul.f32 %v1930, %v1941
      %v1947 = vmul.f32 %v1931, %v1941
      %v1948 = vmul.f32 %v1932, %v1941
      %v1949 = vmul.f32 %v1933, %v1941
      %v1950 = vmul.f32 %v1934, %v1941
      %v1951 = vadd.f32 %v1919, %v1943
      %v1952 = vadd.f32 %v1920, %v1944
      %v1953 = vadd.f32 %v1921, %v1945
      %v1954 = vadd.f32 %v1922, %v1946
      %v1955 = vadd.f32 %v1923, %v1947
      %v1956 = vadd.f32 %v1924, %v1948
      %v1957 = vadd.f32 %v1925, %v1949
      %v1958 = vadd.f32 %v1926, %v1950
      %v1959 = vld [vmem:[#allocation4 + $0x2] sm:$0xff]
      %v1960 = vld [vmem:[#allocation4 + $0x12] sm:$0xff]
      %v1961 = vld [vmem:[#allocation4 + $0x22] sm:$0xff]
      %v1962 = vld [vmem:[#allocation4 + $0x32] sm:$0xff]
      %v1963 = vld [vmem:[#allocation4 + $0x42] sm:$0xff]
      %v1964 = vld [vmem:[#allocation4 + $0x52] sm:$0xff]
      %v1965 = vld [vmem:[#allocation4 + $0x62] sm:$0xff]
      %v1966 = vld [vmem:[#allocation4 + $0x72] sm:$0xff]
      %s1967 = scalar_lea.vmem %s7, 2
      %v1968 = vld [vmem:[%s1967] sm:$0x1]
      %v1970 = vlaneseq
      %v1971 = vshrl.u32 %v1970, 7
      %v1972 = vsub.s32 0, %v1971
      %v1973 = vrot.slane %v1968, %v1972
      %v1975 = vmul.f32 %v1959, %v1973
      %v1976 = vmul.f32 %v1960, %v1973
      %v1977 = vmul.f32 %v1961, %v1973
      %v1978 = vmul.f32 %v1962, %v1973
      %v1979 = vmul.f32 %v1963, %v1973
      %v1980 = vmul.f32 %v1964, %v1973
      %v1981 = vmul.f32 %v1965, %v1973
      %v1982 = vmul.f32 %v1966, %v1973
      %v1983 = vadd.f32 %v1951, %v1975
      %v1984 = vadd.f32 %v1952, %v1976
      %v1985 = vadd.f32 %v1953, %v1977
      %v1986 = vadd.f32 %v1954, %v1978
      %v1987 = vadd.f32 %v1955, %v1979
      %v1988 = vadd.f32 %v1956, %v1980
      %v1989 = vadd.f32 %v1957, %v1981
      %v1990 = vadd.f32 %v1958, %v1982
      %v1991 = vld [vmem:[%s1895] sm:$0xff]
      %v1992 = vld [vmem:[%s1895 + $0x10] sm:$0xff]
      %v1993 = vld [vmem:[%s1895 + $0x20] sm:$0xff]
      %v1994 = vld [vmem:[%s1895 + $0x30] sm:$0xff]
      %v1995 = vld [vmem:[%s1895 + $0x40] sm:$0xff]
      %v1996 = vld [vmem:[%s1895 + $0x50] sm:$0xff]
      %v1997 = vld [vmem:[%s1895 + $0x60] sm:$0xff]
      %v1998 = vld [vmem:[%s1895 + $0x70] sm:$0xff]
      %s1999 = scalar_lea.vmem %s7, 3
      %v2000 = vld [vmem:[%s1999] sm:$0x1]
      %v2002 = vlaneseq
      %v2003 = vshrl.u32 %v2002, 7
      %v2004 = vsub.s32 0, %v2003
      %v2005 = vrot.slane %v2000, %v2004
      %v2007 = vmul.f32 %v1991, %v2005
      %v2008 = vmul.f32 %v1992, %v2005
      %v2009 = vmul.f32 %v1993, %v2005
      %v2010 = vmul.f32 %v1994, %v2005
      %v2011 = vmul.f32 %v1995, %v2005
      %v2012 = vmul.f32 %v1996, %v2005
      %v2013 = vmul.f32 %v1997, %v2005
      %v2014 = vmul.f32 %v1998, %v2005
      %v2015 = vadd.f32 %v1983, %v2007
      %v2016 = vadd.f32 %v1984, %v2008
      %v2017 = vadd.f32 %v1985, %v2009
      %v2018 = vadd.f32 %v1986, %v2010
      %v2019 = vadd.f32 %v1987, %v2011
      %v2020 = vadd.f32 %v1988, %v2012
      %v2021 = vadd.f32 %v1989, %v2013
      %v2022 = vadd.f32 %v1990, %v2014
      %v2023 = vld [vmem:[%s1895 + $0x1] sm:$0xff]
      %v2024 = vld [vmem:[%s1895 + $0x11] sm:$0xff]
      %v2025 = vld [vmem:[%s1895 + $0x21] sm:$0xff]
      %v2026 = vld [vmem:[%s1895 + $0x31] sm:$0xff]
      %v2027 = vld [vmem:[%s1895 + $0x41] sm:$0xff]
      %v2028 = vld [vmem:[%s1895 + $0x51] sm:$0xff]
      %v2029 = vld [vmem:[%s1895 + $0x61] sm:$0xff]
      %v2030 = vld [vmem:[%s1895 + $0x71] sm:$0xff]
      %s2031 = scalar_lea.vmem %s7, 4
      %v2032 = vld [vmem:[%s2031] sm:$0x1]
      %v2034 = vlaneseq
      %v2035 = vshrl.u32 %v2034, 7
      %v2036 = vsub.s32 0, %v2035
      %v2037 = vrot.slane %v2032, %v2036
      %v2039 = vmul.f32 %v2023, %v2037
      %v2040 = vmul.f32 %v2024, %v2037
      %v2041 = vmul.f32 %v2025, %v2037
      %v2042 = vmul.f32 %v2026, %v2037
      %v2043 = vmul.f32 %v2027, %v2037
      %v2044 = vmul.f32 %v2028, %v2037
      %v2045 = vmul.f32 %v2029, %v2037
      %v2046 = vmul.f32 %v2030, %v2037
      %v2047 = vadd.f32 %v2015, %v2039
      %v2048 = vadd.f32 %v2016, %v2040
      %v2049 = vadd.f32 %v2017, %v2041
      %v2050 = vadd.f32 %v2018, %v2042
      %v2051 = vadd.f32 %v2019, %v2043
      %v2052 = vadd.f32 %v2020, %v2044
      %v2053 = vadd.f32 %v2021, %v2045
      %v2054 = vadd.f32 %v2022, %v2046
      %v2055 = vld [vmem:[%s1895 + $0x2] sm:$0xff]
      %v2056 = vld [vmem:[%s1895 + $0x12] sm:$0xff]
      %v2057 = vld [vmem:[%s1895 + $0x22] sm:$0xff]
      %v2058 = vld [vmem:[%s1895 + $0x32] sm:$0xff]
      %v2059 = vld [vmem:[%s1895 + $0x42] sm:$0xff]
      %v2060 = vld [vmem:[%s1895 + $0x52] sm:$0xff]
      %v2061 = vld [vmem:[%s1895 + $0x62] sm:$0xff]
      %v2062 = vld [vmem:[%s1895 + $0x72] sm:$0xff]
      %s2063 = scalar_lea.vmem %s7, 5
      %v2064 = vld [vmem:[%s2063] sm:$0x1]
      %v2066 = vlaneseq
      %v2067 = vshrl.u32 %v2066, 7
      %v2068 = vsub.s32 0, %v2067
      %v2069 = vrot.slane %v2064, %v2068
      %v2071 = vmul.f32 %v2055, %v2069
      %v2072 = vmul.f32 %v2056, %v2069
      %v2073 = vmul.f32 %v2057, %v2069
      %v2074 = vmul.f32 %v2058, %v2069
      %v2075 = vmul.f32 %v2059, %v2069
      %v2076 = vmul.f32 %v2060, %v2069
      %v2077 = vmul.f32 %v2061, %v2069
      %v2078 = vmul.f32 %v2062, %v2069
      %v2079 = vadd.f32 %v2047, %v2071
      %v2080 = vadd.f32 %v2048, %v2072
      %v2081 = vadd.f32 %v2049, %v2073
      %v2082 = vadd.f32 %v2050, %v2074
      %v2083 = vadd.f32 %v2051, %v2075
      %v2084 = vadd.f32 %v2052, %v2076
      %v2085 = vadd.f32 %v2053, %v2077
      %v2086 = vadd.f32 %v2054, %v2078
      %s2087 = scalar_lea.vmem [#allocation4], 32
      %v2088 = vld [vmem:[%s2087] sm:$0xff]
      %v2089 = vld [vmem:[%s2087 + $0x10] sm:$0xff]
      %v2090 = vld [vmem:[%s2087 + $0x20] sm:$0xff]
      %v2091 = vld [vmem:[%s2087 + $0x30] sm:$0xff]
      %v2092 = vld [vmem:[%s2087 + $0x40] sm:$0xff]
      %v2093 = vld [vmem:[%s2087 + $0x50] sm:$0xff]
      %v2094 = vld [vmem:[%s2087 + $0x60] sm:$0xff]
      %v2095 = vld [vmem:[%s2087 + $0x70] sm:$0xff]
      %s2096 = scalar_lea.vmem %s7, 6
      %v2097 = vld [vmem:[%s2096] sm:$0x1]
      %v2099 = vlaneseq
      %v2100 = vshrl.u32 %v2099, 7
      %v2101 = vsub.s32 0, %v2100
      %v2102 = vrot.slane %v2097, %v2101
      %v2104 = vmul.f32 %v2088, %v2102
      %v2105 = vmul.f32 %v2089, %v2102
      %v2106 = vmul.f32 %v2090, %v2102
      %v2107 = vmul.f32 %v2091, %v2102
      %v2108 = vmul.f32 %v2092, %v2102
      %v2109 = vmul.f32 %v2093, %v2102
      %v2110 = vmul.f32 %v2094, %v2102
      %v2111 = vmul.f32 %v2095, %v2102
      %v2112 = vadd.f32 %v2079, %v2104
      %v2113 = vadd.f32 %v2080, %v2105
      %v2114 = vadd.f32 %v2081, %v2106
      %v2115 = vadd.f32 %v2082, %v2107
      %v2116 = vadd.f32 %v2083, %v2108
      %v2117 = vadd.f32 %v2084, %v2109
      %v2118 = vadd.f32 %v2085, %v2110
      %v2119 = vadd.f32 %v2086, %v2111
      %v2120 = vld [vmem:[%s2087 + $0x1] sm:$0xff]
      %v2121 = vld [vmem:[%s2087 + $0x11] sm:$0xff]
      %v2122 = vld [vmem:[%s2087 + $0x21] sm:$0xff]
      %v2123 = vld [vmem:[%s2087 + $0x31] sm:$0xff]
      %v2124 = vld [vmem:[%s2087 + $0x41] sm:$0xff]
      %v2125 = vld [vmem:[%s2087 + $0x51] sm:$0xff]
      %v2126 = vld [vmem:[%s2087 + $0x61] sm:$0xff]
      %v2127 = vld [vmem:[%s2087 + $0x71] sm:$0xff]
      %s2128 = scalar_lea.vmem %s7, 7
      %v2129 = vld [vmem:[%s2128] sm:$0x1]
      %v2131 = vlaneseq
      %v2132 = vshrl.u32 %v2131, 7
      %v2133 = vsub.s32 0, %v2132
      %v2134 = vrot.slane %v2129, %v2133
      %v2136 = vmul.f32 %v2120, %v2134
      %v2137 = vmul.f32 %v2121, %v2134
      %v2138 = vmul.f32 %v2122, %v2134
      %v2139 = vmul.f32 %v2123, %v2134
      %v2140 = vmul.f32 %v2124, %v2134
      %v2141 = vmul.f32 %v2125, %v2134
      %v2142 = vmul.f32 %v2126, %v2134
      %v2143 = vmul.f32 %v2127, %v2134
      %v2144 = vadd.f32 %v2112, %v2136
      %v2145 = vadd.f32 %v2113, %v2137
      %v2146 = vadd.f32 %v2114, %v2138
      %v2147 = vadd.f32 %v2115, %v2139
      %v2148 = vadd.f32 %v2116, %v2140
      %v2149 = vadd.f32 %v2117, %v2141
      %v2150 = vadd.f32 %v2118, %v2142
      %v2151 = vadd.f32 %v2119, %v2143
      %v2152 = vld [vmem:[%s2087 + $0x2] sm:$0xff]
      %v2153 = vld [vmem:[%s2087 + $0x12] sm:$0xff]
      %v2154 = vld [vmem:[%s2087 + $0x22] sm:$0xff]
      %v2155 = vld [vmem:[%s2087 + $0x32] sm:$0xff]
      %v2156 = vld [vmem:[%s2087 + $0x42] sm:$0xff]
      %v2157 = vld [vmem:[%s2087 + $0x52] sm:$0xff]
      %v2158 = vld [vmem:[%s2087 + $0x62] sm:$0xff]
      %v2159 = vld [vmem:[%s2087 + $0x72] sm:$0xff]
      %s2160 = scalar_lea.vmem %s7, 8
      %v2161 = vld [vmem:[%s2160] sm:$0x1]
      %v2163 = vlaneseq
      %v2164 = vshrl.u32 %v2163, 7
      %v2165 = vsub.s32 0, %v2164
      %v2166 = vrot.slane %v2161, %v2165
      %v2168 = vmul.f32 %v2152, %v2166
      %v2169 = vmul.f32 %v2153, %v2166
      %v2170 = vmul.f32 %v2154, %v2166
      %v2171 = vmul.f32 %v2155, %v2166
      %v2172 = vmul.f32 %v2156, %v2166
      %v2173 = vmul.f32 %v2157, %v2166
      %v2174 = vmul.f32 %v2158, %v2166
      %v2175 = vmul.f32 %v2159, %v2166
      %v2176 = vadd.f32 %v2144, %v2168
      %v2177 = vadd.f32 %v2145, %v2169
      %v2178 = vadd.f32 %v2146, %v2170
      %v2179 = vadd.f32 %v2147, %v2171
      %v2180 = vadd.f32 %v2148, %v2172
      %v2181 = vadd.f32 %v2149, %v2173
      %v2182 = vadd.f32 %v2150, %v2174
      %v2183 = vadd.f32 %v2151, %v2175
      %v2184 = vmul.f32 %v2176, 0.1
      %v2185 = vmul.f32 %v2177, 0.1
      %v2186 = vmul.f32 %v2178, 0.1
      %v2187 = vmul.f32 %v2179, 0.1
      %v2188 = vmul.f32 %v2180, 0.1
      %v2189 = vmul.f32 %v2181, 0.1
      %v2190 = vmul.f32 %v2182, 0.1
      %v2191 = vmul.f32 %v2183, 0.1
      %v2192 = vmax.f32 %v2176, %v2184
      %v2193 = vmax.f32 %v2177, %v2185
      %v2194 = vmax.f32 %v2178, %v2186
      %v2195 = vmax.f32 %v2179, %v2187
      %v2196 = vmax.f32 %v2180, %v2188
      %v2197 = vmax.f32 %v2181, %v2189
      %v2198 = vmax.f32 %v2182, %v2190
      %v2199 = vmax.f32 %v2183, %v2191
      %v2200 = vpack.c.bf16 %v2193, %v2192
      %v2201 = vpack.c.bf16 %v2195, %v2194
      %v2202 = vpack.c.bf16 %v2197, %v2196
      %v2203 = vpack.c.bf16 %v2199, %v2198
      %v2204 = vld [vmem:[%s8] sm:$0xf]
      %v2205 = vld [vmem:[%s8 + $0x4] sm:$0xf]
      %v2206 = vld [vmem:[%s8 + $0x8] sm:$0xf]
      %v2207 = vld [vmem:[%s8 + $0xc] sm:$0xf]
      %v2208 = vld [vmem:[%s8 + $0x10] sm:$0xf]
      %v2209 = vld [vmem:[%s8 + $0x14] sm:$0xf]
      %v2210 = vld [vmem:[%s8 + $0x18] sm:$0xf]
      %v2211 = vld [vmem:[%s8 + $0x1c] sm:$0xf]
      %v2212 = vld [vmem:[%s8 + $0x20] sm:$0xf]
      %v2213 = vld [vmem:[%s8 + $0x24] sm:$0xf]
      %v2214 = vld [vmem:[%s8 + $0x28] sm:$0xf]
      %v2215 = vld [vmem:[%s8 + $0x2c] sm:$0xf]
      %v2228 = vunpack.c.l.b16 %v2204
      %v2229 = vunpack.c.l.b16 %v2205
      %v2230 = vunpack.c.l.b16 %v2206
      %v2231 = vunpack.c.l.b16 %v2207
      %v2232 = vunpack.c.l.b16 %v2208
      %v2233 = vunpack.c.l.b16 %v2209
      %v2234 = vunpack.c.l.b16 %v2210
      %v2235 = vunpack.c.l.b16 %v2211
      %v2236 = vunpack.c.l.b16 %v2212
      %v2237 = vunpack.c.l.b16 %v2213
      %v2238 = vunpack.c.l.b16 %v2214
      %v2239 = vunpack.c.l.b16 %v2215
      %v2240 = vpack.c.b16 %v2229, %v2228
      %v2241 = vpack.c.b16 %v2231, %v2230
      %v2242 = vpack.c.b16 %v2233, %v2232
      %v2243 = vpack.c.b16 %v2235, %v2234
      %v2244 = vpack.c.b16 %v2237, %v2236
      %v2245 = vpack.c.b16 %v2239, %v2238
      %v2253 = vsel %vm1873, %v2200, 0
      %v2256 = vsel %vm1873, %v2201, 0
      %v2259 = vsel %vm1873, %v2202, 0
      %v2262 = vsel %vm1873, %v2203, 0
      %2264 = vmatprep.subr.bf16.mxu0 0
      %2265 = vmatpush1.bf16.msra.mxu0 %v2240
      %2266 = vmatprep.subr.bf16.mxu0 0
      %2267 = vmatpush1.bf16.msra.mxu0 %v2241
      %2268 = vmatprep.subr.bf16.mxu0 0
      %2269 = vmatpush1.bf16.msra.mxu0 %v2242
      %2270 = vmatprep.subr.bf16.mxu0 0
      %2271 = vmatpush1.bf16.msra.mxu0 %v2243
      %2272 = vmatprep.subr.bf16.mxu0 0
      %2273 = vmatpush1.bf16.msra.mxu0 %v2244
      %2274 = vmatprep.subr.bf16.mxu0 0
      %2275 = vmatpush1.bf16.msra.mxu0 %v2245
      %2276 = vmatprep.subr.bf16.mxu0 0
      %2277 = vmatpush1.bf16.msra.mxu0 0
      %2278 = vmatprep.subr.bf16.mxu0 0
      %2279 = vmatpush1.bf16.msra.mxu0 0
      %2280 = vmatprep.subr.bf16.mxu0 0
      %2281 = vmatpush1.bf16.msra.mxu0 0
      %2282 = vmatprep.subr.bf16.mxu0 0
      %2283 = vmatpush1.bf16.msra.mxu0 0
      %2284 = vmatprep.subr.bf16.mxu0 0
      %2285 = vmatpush1.bf16.msra.mxu0 0
      %2286 = vmatprep.subr.bf16.mxu0 0
      %2287 = vmatpush1.bf16.msra.mxu0 0
      %2288 = vmatprep.subr.bf16.mxu0 0
      %2289 = vmatpush1.bf16.msra.mxu0 0
      %2290 = vmatprep.subr.bf16.mxu0 0
      %2291 = vmatpush1.bf16.msra.mxu0 0
      %2292 = vmatprep.subr.bf16.mxu0 0
      %2293 = vmatpush1.bf16.msra.mxu0 0
      %2294 = vmatprep.subr.bf16.mxu0 0
      %2295 = vmatpush1.bf16.msra.mxu0 0
      %2296 = vmatprep.mubr.bf16.mxu0 0
      %2297 = vmatmul.mubr.bf16.gmra.mrb[0].mxu0 %v2253
      %v2298 = vpop.f32.mrb[0].mxu0
      %v2299 = vadd.f32 0.0, %v2298
      %v2300 = vpop.f32.mrb[0].mxu0
      %v2301 = vpop.f32.mrb[0].mxu0
      %v2302 = vadd.f32 0.0, %v2301
      %v2303 = vpop.f32.mrb[0].mxu0
      %2304 = vmatprep.mubr.bf16.mxu0 0
      %2305 = vmatmul.mubr.bf16.gmra.mrb[0].mxu0 %v2256
      %v2306 = vpop.f32.mrb[0].mxu0
      %v2307 = vadd.f32 0.0, %v2306
      %v2308 = vpop.f32.mrb[0].mxu0
      %v2309 = vpop.f32.mrb[0].mxu0
      %v2310 = vadd.f32 0.0, %v2309
      %v2311 = vpop.f32.mrb[0].mxu0
      %2312 = vmatprep.mubr.bf16.mxu0 0
      %2313 = vmatmul.mubr.bf16.gmra.mrb[0].mxu0 %v2259
      %v2314 = vpop.f32.mrb[0].mxu0
      %v2315 = vadd.f32 0.0, %v2314
      %v2316 = vpop.f32.mrb[0].mxu0
      %v2317 = vpop.f32.mrb[0].mxu0
      %v2318 = vadd.f32 0.0, %v2317
      %v2319 = vpop.f32.mrb[0].mxu0
      %2320 = vmatprep.mubr.bf16.mxu0 0
      %2321 = vmatmul.mubr.bf16.gmra.mrb[0].mxu0 %v2262
      %v2322 = vpop.f32.mrb[0].mxu0
      %v2323 = vadd.f32 0.0, %v2322
      %v2324 = vpop.f32.mrb[0].mxu0
      %v2325 = vpop.f32.mrb[0].mxu0
      %v2326 = vadd.f32 0.0, %v2325
      %v2327 = vpop.f32.mrb[0].mxu0
      %2328 = vdwg.mxu0
      %v2329 = vmul.f32 %v2299, 0.1
      %v2330 = vmul.f32 %v2302, 0.1
      %v2331 = vmul.f32 %v2307, 0.1
      %v2332 = vmul.f32 %v2310, 0.1
      %v2333 = vmul.f32 %v2315, 0.1
      %v2334 = vmul.f32 %v2318, 0.1
      %v2335 = vmul.f32 %v2323, 0.1
      %v2336 = vmul.f32 %v2326, 0.1
      %v2337 = vmax.f32 %v2299, %v2329
      %v2338 = vmax.f32 %v2302, %v2330
      %v2339 = vmax.f32 %v2307, %v2331
      %v2340 = vmax.f32 %v2310, %v2332
      %v2341 = vmax.f32 %v2315, %v2333
      %v2342 = vmax.f32 %v2318, %v2334
      %v2343 = vmax.f32 %v2323, %v2335
      %v2344 = vmax.f32 %v2326, %v2336
      %2345 = vst.msk [vmem:[#allocation5] sm:$0xff] %vm1873, 0.0
      %2346 = vst.msk [vmem:[#allocation5 + $0x8] sm:$0x3] %vm1875, 0.0
      %2347 = vst.msk [vmem:[#allocation5 + $0x10] sm:$0xff] %vm1873, 0.0
      %2348 = vst.msk [vmem:[#allocation5 + $0x18] sm:$0x3] %vm1875, 0.0
      %2349 = vst.msk [vmem:[#allocation5 + $0x20] sm:$0xff] %vm1873, 0.0
      %2350 = vst.msk [vmem:[#allocation5 + $0x28] sm:$0x3] %vm1875, 0.0
      %2351 = vst.msk [vmem:[#allocation5 + $0x30] sm:$0xff] %vm1873, 0.0
      %2352 = vst.msk [vmem:[#allocation5 + $0x38] sm:$0x3] %vm1875, 0.0
      %2353 = vst.msk [vmem:[#allocation5 + $0x40] sm:$0xff] %vm1873, 0.0
      %2354 = vst.msk [vmem:[#allocation5 + $0x48] sm:$0x3] %vm1875, 0.0
      %2355 = vst.msk [vmem:[#allocation5 + $0x50] sm:$0xff] %vm1873, 0.0
      %2356 = vst.msk [vmem:[#allocation5 + $0x58] sm:$0x3] %vm1875, 0.0
      %2357 = vst.msk [vmem:[#allocation5 + $0x60] sm:$0xff] %vm1873, 0.0
      %2358 = vst.msk [vmem:[#allocation5 + $0x68] sm:$0x3] %vm1875, 0.0
      %2359 = vst.msk [vmem:[#allocation5 + $0x70] sm:$0xff] %vm1873, 0.0
      %2360 = vst.msk [vmem:[#allocation5 + $0x78] sm:$0x3] %vm1875, 0.0
      %2361 = vst.msk [vmem:[#allocation5 + $0x80] sm:$0xff] %vm1873, 0.0
      %2362 = vst.msk [vmem:[#allocation5 + $0x88] sm:$0x3] %vm1875, 0.0
      %2363 = vst.msk [vmem:[#allocation5 + $0x90] sm:$0xff] %vm1873, 0.0
      %2364 = vst.msk [vmem:[#allocation5 + $0x98] sm:$0x3] %vm1875, 0.0
      %s2365 = scalar_lea.vmem [#allocation5], 16
      %2366 = vst.msk [vmem:[%s2365 + $0x1] sm:$0xff] %vm1873, %v2337
      %2367 = vst.msk [vmem:[%s2365 + $0x11] sm:$0xff] %vm1873, %v2338
      %2368 = vst.msk [vmem:[%s2365 + $0x21] sm:$0xff] %vm1873, %v2339
      %2369 = vst.msk [vmem:[%s2365 + $0x31] sm:$0xff] %vm1873, %v2340
      %2370 = vst.msk [vmem:[%s2365 + $0x41] sm:$0xff] %vm1873, %v2341
      %2371 = vst.msk [vmem:[%s2365 + $0x51] sm:$0xff] %vm1873, %v2342
      %2372 = vst.msk [vmem:[%s2365 + $0x61] sm:$0xff] %vm1873, %v2343
      %2373 = vst.msk [vmem:[%s2365 + $0x71] sm:$0xff] %vm1873, %v2344
      %v2374 = vld [vmem:[#allocation5] sm:$0xff]
      %v2375 = vld [vmem:[#allocation5 + $0x10] sm:$0xff]
      %v2376 = vld [vmem:[#allocation5 + $0x20] sm:$0xff]
      %v2377 = vld [vmem:[#allocation5 + $0x30] sm:$0xff]
      %v2378 = vld [vmem:[#allocation5 + $0x40] sm:$0xff]
      %v2379 = vld [vmem:[#allocation5 + $0x50] sm:$0xff]
      %v2380 = vld [vmem:[#allocation5 + $0x60] sm:$0xff]
      %v2381 = vld [vmem:[#allocation5 + $0x70] sm:$0xff]
      %v2382 = vld [vmem:[%s9] sm:$0x1]
      %v2384 = vlaneseq
      %v2385 = vshrl.u32 %v2384, 7
      %v2386 = vsub.s32 0, %v2385
      %v2387 = vrot.slane %v2382, %v2386
      %v2389 = vmul.f32 %v2374, %v2387
      %v2390 = vmul.f32 %v2375, %v2387
      %v2391 = vmul.f32 %v2376, %v2387
      %v2392 = vmul.f32 %v2377, %v2387
      %v2393 = vmul.f32 %v2378, %v2387
      %v2394 = vmul.f32 %v2379, %v2387
      %v2395 = vmul.f32 %v2380, %v2387
      %v2396 = vmul.f32 %v2381, %v2387
      %v2397 = vld [vmem:[#allocation5 + $0x1] sm:$0xff]
      %v2398 = vld [vmem:[#allocation5 + $0x11] sm:$0xff]
      %v2399 = vld [vmem:[#allocation5 + $0x21] sm:$0xff]
      %v2400 = vld [vmem:[#allocation5 + $0x31] sm:$0xff]
      %v2401 = vld [vmem:[#allocation5 + $0x41] sm:$0xff]
      %v2402 = vld [vmem:[#allocation5 + $0x51] sm:$0xff]
      %v2403 = vld [vmem:[#allocation5 + $0x61] sm:$0xff]
      %v2404 = vld [vmem:[#allocation5 + $0x71] sm:$0xff]
      %s2405 = scalar_lea.vmem %s9, 1
      %v2406 = vld [vmem:[%s2405] sm:$0x1]
      %v2408 = vlaneseq
      %v2409 = vshrl.u32 %v2408, 7
      %v2410 = vsub.s32 0, %v2409
      %v2411 = vrot.slane %v2406, %v2410
      %v2413 = vmul.f32 %v2397, %v2411
      %v2414 = vmul.f32 %v2398, %v2411
      %v2415 = vmul.f32 %v2399, %v2411
      %v2416 = vmul.f32 %v2400, %v2411
      %v2417 = vmul.f32 %v2401, %v2411
      %v2418 = vmul.f32 %v2402, %v2411
      %v2419 = vmul.f32 %v2403, %v2411
      %v2420 = vmul.f32 %v2404, %v2411
      %v2421 = vadd.f32 %v2389, %v2413
      %v2422 = vadd.f32 %v2390, %v2414
      %v2423 = vadd.f32 %v2391, %v2415
      %v2424 = vadd.f32 %v2392, %v2416
      %v2425 = vadd.f32 %v2393, %v2417
      %v2426 = vadd.f32 %v2394, %v2418
      %v2427 = vadd.f32 %v2395, %v2419
      %v2428 = vadd.f32 %v2396, %v2420
      %v2429 = vld [vmem:[#allocation5 + $0x2] sm:$0xff]
      %v2430 = vld [vmem:[#allocation5 + $0x12] sm:$0xff]
      %v2431 = vld [vmem:[#allocation5 + $0x22] sm:$0xff]
      %v2432 = vld [vmem:[#allocation5 + $0x32] sm:$0xff]
      %v2433 = vld [vmem:[#allocation5 + $0x42] sm:$0xff]
      %v2434 = vld [vmem:[#allocation5 + $0x52] sm:$0xff]
      %v2435 = vld [vmem:[#allocation5 + $0x62] sm:$0xff]
      %v2436 = vld [vmem:[#allocation5 + $0x72] sm:$0xff]
      %s2437 = scalar_lea.vmem %s9, 2
      %v2438 = vld [vmem:[%s2437] sm:$0x1]
      %v2440 = vlaneseq
      %v2441 = vshrl.u32 %v2440, 7
      %v2442 = vsub.s32 0, %v2441
      %v2443 = vrot.slane %v2438, %v2442
      %v2445 = vmul.f32 %v2429, %v2443
      %v2446 = vmul.f32 %v2430, %v2443
      %v2447 = vmul.f32 %v2431, %v2443
      %v2448 = vmul.f32 %v2432, %v2443
      %v2449 = vmul.f32 %v2433, %v2443
      %v2450 = vmul.f32 %v2434, %v2443
      %v2451 = vmul.f32 %v2435, %v2443
      %v2452 = vmul.f32 %v2436, %v2443
      %v2453 = vadd.f32 %v2421, %v2445
      %v2454 = vadd.f32 %v2422, %v2446
      %v2455 = vadd.f32 %v2423, %v2447
      %v2456 = vadd.f32 %v2424, %v2448
      %v2457 = vadd.f32 %v2425, %v2449
      %v2458 = vadd.f32 %v2426, %v2450
      %v2459 = vadd.f32 %v2427, %v2451
      %v2460 = vadd.f32 %v2428, %v2452
      %v2461 = vld [vmem:[%s2365] sm:$0xff]
      %v2462 = vld [vmem:[%s2365 + $0x10] sm:$0xff]
      %v2463 = vld [vmem:[%s2365 + $0x20] sm:$0xff]
      %v2464 = vld [vmem:[%s2365 + $0x30] sm:$0xff]
      %v2465 = vld [vmem:[%s2365 + $0x40] sm:$0xff]
      %v2466 = vld [vmem:[%s2365 + $0x50] sm:$0xff]
      %v2467 = vld [vmem:[%s2365 + $0x60] sm:$0xff]
      %v2468 = vld [vmem:[%s2365 + $0x70] sm:$0xff]
      %s2469 = scalar_lea.vmem %s9, 3
      %v2470 = vld [vmem:[%s2469] sm:$0x1]
      %v2472 = vlaneseq
      %v2473 = vshrl.u32 %v2472, 7
      %v2474 = vsub.s32 0, %v2473
      %v2475 = vrot.slane %v2470, %v2474
      %v2477 = vmul.f32 %v2461, %v2475
      %v2478 = vmul.f32 %v2462, %v2475
      %v2479 = vmul.f32 %v2463, %v2475
      %v2480 = vmul.f32 %v2464, %v2475
      %v2481 = vmul.f32 %v2465, %v2475
      %v2482 = vmul.f32 %v2466, %v2475
      %v2483 = vmul.f32 %v2467, %v2475
      %v2484 = vmul.f32 %v2468, %v2475
      %v2485 = vadd.f32 %v2453, %v2477
      %v2486 = vadd.f32 %v2454, %v2478
      %v2487 = vadd.f32 %v2455, %v2479
      %v2488 = vadd.f32 %v2456, %v2480
      %v2489 = vadd.f32 %v2457, %v2481
      %v2490 = vadd.f32 %v2458, %v2482
      %v2491 = vadd.f32 %v2459, %v2483
      %v2492 = vadd.f32 %v2460, %v2484
      %v2493 = vld [vmem:[%s2365 + $0x1] sm:$0xff]
      %v2494 = vld [vmem:[%s2365 + $0x11] sm:$0xff]
      %v2495 = vld [vmem:[%s2365 + $0x21] sm:$0xff]
      %v2496 = vld [vmem:[%s2365 + $0x31] sm:$0xff]
      %v2497 = vld [vmem:[%s2365 + $0x41] sm:$0xff]
      %v2498 = vld [vmem:[%s2365 + $0x51] sm:$0xff]
      %v2499 = vld [vmem:[%s2365 + $0x61] sm:$0xff]
      %v2500 = vld [vmem:[%s2365 + $0x71] sm:$0xff]
      %s2501 = scalar_lea.vmem %s9, 4
      %v2502 = vld [vmem:[%s2501] sm:$0x1]
      %v2504 = vlaneseq
      %v2505 = vshrl.u32 %v2504, 7
      %v2506 = vsub.s32 0, %v2505
      %v2507 = vrot.slane %v2502, %v2506
      %v2509 = vmul.f32 %v2493, %v2507
      %v2510 = vmul.f32 %v2494, %v2507
      %v2511 = vmul.f32 %v2495, %v2507
      %v2512 = vmul.f32 %v2496, %v2507
      %v2513 = vmul.f32 %v2497, %v2507
      %v2514 = vmul.f32 %v2498, %v2507
      %v2515 = vmul.f32 %v2499, %v2507
      %v2516 = vmul.f32 %v2500, %v2507
      %v2517 = vadd.f32 %v2485, %v2509
      %v2518 = vadd.f32 %v2486, %v2510
      %v2519 = vadd.f32 %v2487, %v2511
      %v2520 = vadd.f32 %v2488, %v2512
      %v2521 = vadd.f32 %v2489, %v2513
      %v2522 = vadd.f32 %v2490, %v2514
      %v2523 = vadd.f32 %v2491, %v2515
      %v2524 = vadd.f32 %v2492, %v2516
      %v2525 = vld [vmem:[%s2365 + $0x2] sm:$0xff]
      %v2526 = vld [vmem:[%s2365 + $0x12] sm:$0xff]
      %v2527 = vld [vmem:[%s2365 + $0x22] sm:$0xff]
      %v2528 = vld [vmem:[%s2365 + $0x32] sm:$0xff]
      %v2529 = vld [vmem:[%s2365 + $0x42] sm:$0xff]
      %v2530 = vld [vmem:[%s2365 + $0x52] sm:$0xff]
      %v2531 = vld [vmem:[%s2365 + $0x62] sm:$0xff]
      %v2532 = vld [vmem:[%s2365 + $0x72] sm:$0xff]
      %s2533 = scalar_lea.vmem %s9, 5
      %v2534 = vld [vmem:[%s2533] sm:$0x1]
      %v2536 = vlaneseq
      %v2537 = vshrl.u32 %v2536, 7
      %v2538 = vsub.s32 0, %v2537
      %v2539 = vrot.slane %v2534, %v2538
      %v2541 = vmul.f32 %v2525, %v2539
      %v2542 = vmul.f32 %v2526, %v2539
      %v2543 = vmul.f32 %v2527, %v2539
      %v2544 = vmul.f32 %v2528, %v2539
      %v2545 = vmul.f32 %v2529, %v2539
      %v2546 = vmul.f32 %v2530, %v2539
      %v2547 = vmul.f32 %v2531, %v2539
      %v2548 = vmul.f32 %v2532, %v2539
      %v2549 = vadd.f32 %v2517, %v2541
      %v2550 = vadd.f32 %v2518, %v2542
      %v2551 = vadd.f32 %v2519, %v2543
      %v2552 = vadd.f32 %v2520, %v2544
      %v2553 = vadd.f32 %v2521, %v2545
      %v2554 = vadd.f32 %v2522, %v2546
      %v2555 = vadd.f32 %v2523, %v2547
      %v2556 = vadd.f32 %v2524, %v2548
      %s2557 = scalar_lea.vmem [#allocation5], 32
      %v2558 = vld [vmem:[%s2557] sm:$0xff]
      %v2559 = vld [vmem:[%s2557 + $0x10] sm:$0xff]
      %v2560 = vld [vmem:[%s2557 + $0x20] sm:$0xff]
      %v2561 = vld [vmem:[%s2557 + $0x30] sm:$0xff]
      %v2562 = vld [vmem:[%s2557 + $0x40] sm:$0xff]
      %v2563 = vld [vmem:[%s2557 + $0x50] sm:$0xff]
      %v2564 = vld [vmem:[%s2557 + $0x60] sm:$0xff]
      %v2565 = vld [vmem:[%s2557 + $0x70] sm:$0xff]
      %s2566 = scalar_lea.vmem %s9, 6
      %v2567 = vld [vmem:[%s2566] sm:$0x1]
      %v2569 = vlaneseq
      %v2570 = vshrl.u32 %v2569, 7
      %v2571 = vsub.s32 0, %v2570
      %v2572 = vrot.slane %v2567, %v2571
      %v2574 = vmul.f32 %v2558, %v2572
      %v2575 = vmul.f32 %v2559, %v2572
      %v2576 = vmul.f32 %v2560, %v2572
      %v2577 = vmul.f32 %v2561, %v2572
      %v2578 = vmul.f32 %v2562, %v2572
      %v2579 = vmul.f32 %v2563, %v2572
      %v2580 = vmul.f32 %v2564, %v2572
      %v2581 = vmul.f32 %v2565, %v2572
      %v2582 = vadd.f32 %v2549, %v2574
      %v2583 = vadd.f32 %v2550, %v2575
      %v2584 = vadd.f32 %v2551, %v2576
      %v2585 = vadd.f32 %v2552, %v2577
      %v2586 = vadd.f32 %v2553, %v2578
      %v2587 = vadd.f32 %v2554, %v2579
      %v2588 = vadd.f32 %v2555, %v2580
      %v2589 = vadd.f32 %v2556, %v2581
      %v2590 = vld [vmem:[%s2557 + $0x1] sm:$0xff]
      %v2591 = vld [vmem:[%s2557 + $0x11] sm:$0xff]
      %v2592 = vld [vmem:[%s2557 + $0x21] sm:$0xff]
      %v2593 = vld [vmem:[%s2557 + $0x31] sm:$0xff]
      %v2594 = vld [vmem:[%s2557 + $0x41] sm:$0xff]
      %v2595 = vld [vmem:[%s2557 + $0x51] sm:$0xff]
      %v2596 = vld [vmem:[%s2557 + $0x61] sm:$0xff]
      %v2597 = vld [vmem:[%s2557 + $0x71] sm:$0xff]
      %s2598 = scalar_lea.vmem %s9, 7
      %v2599 = vld [vmem:[%s2598] sm:$0x1]
      %v2601 = vlaneseq
      %v2602 = vshrl.u32 %v2601, 7
      %v2603 = vsub.s32 0, %v2602
      %v2604 = vrot.slane %v2599, %v2603
      %v2606 = vmul.f32 %v2590, %v2604
      %v2607 = vmul.f32 %v2591, %v2604
      %v2608 = vmul.f32 %v2592, %v2604
      %v2609 = vmul.f32 %v2593, %v2604
      %v2610 = vmul.f32 %v2594, %v2604
      %v2611 = vmul.f32 %v2595, %v2604
      %v2612 = vmul.f32 %v2596, %v2604
      %v2613 = vmul.f32 %v2597, %v2604
      %v2614 = vadd.f32 %v2582, %v2606
      %v2615 = vadd.f32 %v2583, %v2607
      %v2616 = vadd.f32 %v2584, %v2608
      %v2617 = vadd.f32 %v2585, %v2609
      %v2618 = vadd.f32 %v2586, %v2610
      %v2619 = vadd.f32 %v2587, %v2611
      %v2620 = vadd.f32 %v2588, %v2612
      %v2621 = vadd.f32 %v2589, %v2613
      %v2622 = vld [vmem:[%s2557 + $0x2] sm:$0xff]
      %v2623 = vld [vmem:[%s2557 + $0x12] sm:$0xff]
      %v2624 = vld [vmem:[%s2557 + $0x22] sm:$0xff]
      %v2625 = vld [vmem:[%s2557 + $0x32] sm:$0xff]
      %v2626 = vld [vmem:[%s2557 + $0x42] sm:$0xff]
      %v2627 = vld [vmem:[%s2557 + $0x52] sm:$0xff]
      %v2628 = vld [vmem:[%s2557 + $0x62] sm:$0xff]
      %v2629 = vld [vmem:[%s2557 + $0x72] sm:$0xff]
      %s2630 = scalar_lea.vmem %s9, 8
      %v2631 = vld [vmem:[%s2630] sm:$0x1]
      %v2633 = vlaneseq
      %v2634 = vshrl.u32 %v2633, 7
      %v2635 = vsub.s32 0, %v2634
      %v2636 = vrot.slane %v2631, %v2635
      %v2638 = vmul.f32 %v2622, %v2636
      %v2639 = vmul.f32 %v2623, %v2636
      %v2640 = vmul.f32 %v2624, %v2636
      %v2641 = vmul.f32 %v2625, %v2636
      %v2642 = vmul.f32 %v2626, %v2636
      %v2643 = vmul.f32 %v2627, %v2636
      %v2644 = vmul.f32 %v2628, %v2636
      %v2645 = vmul.f32 %v2629, %v2636
      %v2646 = vadd.f32 %v2614, %v2638
      %v2647 = vadd.f32 %v2615, %v2639
      %v2648 = vadd.f32 %v2616, %v2640
      %v2649 = vadd.f32 %v2617, %v2641
      %v2650 = vadd.f32 %v2618, %v2642
      %v2651 = vadd.f32 %v2619, %v2643
      %v2652 = vadd.f32 %v2620, %v2644
      %v2653 = vadd.f32 %v2621, %v2645
      %v2654 = vmul.f32 %v2646, 0.1
      %v2655 = vmul.f32 %v2647, 0.1
      %v2656 = vmul.f32 %v2648, 0.1
      %v2657 = vmul.f32 %v2649, 0.1
      %v2658 = vmul.f32 %v2650, 0.1
      %v2659 = vmul.f32 %v2651, 0.1
      %v2660 = vmul.f32 %v2652, 0.1
      %v2661 = vmul.f32 %v2653, 0.1
      %v2662 = vmax.f32 %v2646, %v2654
      %v2663 = vmax.f32 %v2647, %v2655
      %v2664 = vmax.f32 %v2648, %v2656
      %v2665 = vmax.f32 %v2649, %v2657
      %v2666 = vmax.f32 %v2650, %v2658
      %v2667 = vmax.f32 %v2651, %v2659
      %v2668 = vmax.f32 %v2652, %v2660
      %v2669 = vmax.f32 %v2653, %v2661
      %v2670 = vpack.c.bf16 %v2663, %v2662
      %v2671 = vpack.c.bf16 %v2665, %v2664
      %v2672 = vpack.c.bf16 %v2667, %v2666
      %v2673 = vpack.c.bf16 %v2669, %v2668
      %v2674 = vld [vmem:[%s10] sm:$0xff]
      %v2675 = vld [vmem:[%s10 + $0x8] sm:$0xff]
      %v2676 = vld [vmem:[%s10 + $0x10] sm:$0xff]
      %v2677 = vld [vmem:[%s10 + $0x18] sm:$0xff]
      %v2678 = vld [vmem:[%s10 + $0x20] sm:$0xff]
      %v2679 = vld [vmem:[%s10 + $0x28] sm:$0xff]
      %v2680 = vld [vmem:[%s10 + $0x30] sm:$0xff]
      %v2681 = vld [vmem:[%s10 + $0x38] sm:$0xff]
      %v2682 = vld [vmem:[%s10 + $0x40] sm:$0xff]
      %v2683 = vld [vmem:[%s10 + $0x48] sm:$0xff]
      %v2684 = vld [vmem:[%s10 + $0x50] sm:$0xff]
      %v2685 = vld [vmem:[%s10 + $0x58] sm:$0xff]
      %v2698 = vunpack.c.l.b16 %v2674
      %v2699 = vunpack.c.h.b16 %v2674
      %v2700 = vunpack.c.l.b16 %v2675
      %v2701 = vunpack.c.h.b16 %v2675
      %v2702 = vunpack.c.l.b16 %v2676
      %v2703 = vunpack.c.h.b16 %v2676
      %v2704 = vunpack.c.l.b16 %v2677
      %v2705 = vunpack.c.h.b16 %v2677
      %v2706 = vunpack.c.l.b16 %v2678
      %v2707 = vunpack.c.h.b16 %v2678
      %v2708 = vunpack.c.l.b16 %v2679
      %v2709 = vunpack.c.h.b16 %v2679
      %v2710 = vunpack.c.l.b16 %v2680
      %v2711 = vunpack.c.h.b16 %v2680
      %v2712 = vunpack.c.l.b16 %v2681
      %v2713 = vunpack.c.h.b16 %v2681
      %v2714 = vunpack.c.l.b16 %v2682
      %v2715 = vunpack.c.h.b16 %v2682
      %v2716 = vunpack.c.l.b16 %v2683
      %v2717 = vunpack.c.h.b16 %v2683
      %v2718 = vunpack.c.l.b16 %v2684
      %v2719 = vunpack.c.h.b16 %v2684
      %v2720 = vunpack.c.l.b16 %v2685
      %v2721 = vunpack.c.h.b16 %v2685
      %v2722 = vpack.c.b16 %v2700, %v2698
      %v2723 = vpack.c.b16 %v2701, %v2699
      %v2724 = vpack.c.b16 %v2704, %v2702
      %v2725 = vpack.c.b16 %v2705, %v2703
      %v2726 = vpack.c.b16 %v2708, %v2706
      %v2727 = vpack.c.b16 %v2709, %v2707
      %v2728 = vpack.c.b16 %v2712, %v2710
      %v2729 = vpack.c.b16 %v2713, %v2711
      %v2730 = vpack.c.b16 %v2716, %v2714
      %v2731 = vpack.c.b16 %v2717, %v2715
      %v2732 = vpack.c.b16 %v2720, %v2718
      %v2733 = vpack.c.b16 %v2721, %v2719
      %v2747 = vsel %vm1873, %v2670, 0
      %v2750 = vsel %vm1873, %v2671, 0
      %v2753 = vsel %vm1873, %v2672, 0
      %v2756 = vsel %vm1873, %v2673, 0
      %2758 = vmatprep.subr.bf16.mxu0 %v2723
      %2759 = vmatpush1.bf16.msra.mxu0 %v2722
      %2760 = vmatprep.subr.bf16.mxu0 %v2725
      %2761 = vmatpush1.bf16.msra.mxu0 %v2724
      %2762 = vmatprep.subr.bf16.mxu0 %v2727
      %2763 = vmatpush1.bf16.msra.mxu0 %v2726
      %2764 = vmatprep.subr.bf16.mxu0 %v2729
      %2765 = vmatpush1.bf16.msra.mxu0 %v2728
      %2766 = vmatprep.subr.bf16.mxu0 %v2731
      %2767 = vmatpush1.bf16.msra.mxu0 %v2730
      %2768 = vmatprep.subr.bf16.mxu0 %v2733
      %2769 = vmatpush1.bf16.msra.mxu0 %v2732
      %2770 = vmatprep.subr.bf16.mxu0 0
      %2771 = vmatpush1.bf16.msra.mxu0 0
      %2772 = vmatprep.subr.bf16.mxu0 0
      %2773 = vmatpush1.bf16.msra.mxu0 0
      %2774 = vmatprep.subr.bf16.mxu0 0
      %2775 = vmatpush1.bf16.msra.mxu0 0
      %2776 = vmatprep.subr.bf16.mxu0 0
      %2777 = vmatpush1.bf16.msra.mxu0 0
      %2778 = vmatprep.subr.bf16.mxu0 0
      %2779 = vmatpush1.bf16.msra.mxu0 0
      %2780 = vmatprep.subr.bf16.mxu0 0
      %2781 = vmatpush1.bf16.msra.mxu0 0
      %2782 = vmatprep.subr.bf16.mxu0 0
      %2783 = vmatpush1.bf16.msra.mxu0 0
      %2784 = vmatprep.subr.bf16.mxu0 0
      %2785 = vmatpush1.bf16.msra.mxu0 0
      %2786 = vmatprep.subr.bf16.mxu0 0
      %2787 = vmatpush1.bf16.msra.mxu0 0
      %2788 = vmatprep.subr.bf16.mxu0 0
      %2789 = vmatpush1.bf16.msra.mxu0 0
      %2790 = vmatprep.mubr.bf16.mxu0 0
      %2791 = vmatmul.mubr.bf16.gmra.mrb[0].mxu0 %v2747
      %v2792 = vpop.f32.mrb[0].mxu0
      %v2793 = vadd.f32 0.0, %v2792
      %v2794 = vpop.f32.mrb[0].mxu0
      %v2795 = vadd.f32 0.0, %v2794
      %v2796 = vpop.f32.mrb[0].mxu0
      %v2797 = vadd.f32 0.0, %v2796
      %v2798 = vpop.f32.mrb[0].mxu0
      %v2799 = vadd.f32 0.0, %v2798
      %2800 = vmatprep.mubr.bf16.mxu0 0
      %2801 = vmatmul.mubr.bf16.gmra.mrb[0].mxu0 %v2750
      %v2802 = vpop.f32.mrb[0].mxu0
      %v2803 = vadd.f32 0.0, %v2802
      %v2804 = vpop.f32.mrb[0].mxu0
      %v2805 = vadd.f32 0.0, %v2804
      %v2806 = vpop.f32.mrb[0].mxu0
      %v2807 = vadd.f32 0.0, %v2806
      %v2808 = vpop.f32.mrb[0].mxu0
      %v2809 = vadd.f32 0.0, %v2808
      %2810 = vmatprep.mubr.bf16.mxu0 0
      %2811 = vmatmul.mubr.bf16.gmra.mrb[0].mxu0 %v2753
      %v2812 = vpop.f32.mrb[0].mxu0
      %v2813 = vadd.f32 0.0, %v2812
      %v2814 = vpop.f32.mrb[0].mxu0
      %v2815 = vadd.f32 0.0, %v2814
      %v2816 = vpop.f32.mrb[0].mxu0
      %v2817 = vadd.f32 0.0, %v2816
      %v2818 = vpop.f32.mrb[0].mxu0
      %v2819 = vadd.f32 0.0, %v2818
      %2820 = vmatprep.mubr.bf16.mxu0 0
      %2821 = vmatmul.mubr.bf16.gmra.mrb[0].mxu0 %v2756
      %v2822 = vpop.f32.mrb[0].mxu0
      %v2823 = vadd.f32 0.0, %v2822
      %v2824 = vpop.f32.mrb[0].mxu0
      %v2825 = vadd.f32 0.0, %v2824
      %v2826 = vpop.f32.mrb[0].mxu0
      %v2827 = vadd.f32 0.0, %v2826
      %v2828 = vpop.f32.mrb[0].mxu0
      %v2829 = vadd.f32 0.0, %v2828
      %2830 = vdwg.mxu0
      %v2831 = vmul.f32 %v2793, 0.1
      %v2832 = vmul.f32 %v2795, 0.1
      %v2833 = vmul.f32 %v2797, 0.1
      %v2834 = vmul.f32 %v2799, 0.1
      %v2835 = vmul.f32 %v2803, 0.1
      %v2836 = vmul.f32 %v2805, 0.1
      %v2837 = vmul.f32 %v2807, 0.1
      %v2838 = vmul.f32 %v2809, 0.1
      %v2839 = vmul.f32 %v2813, 0.1
      %v2840 = vmul.f32 %v2815, 0.1
      %v2841 = vmul.f32 %v2817, 0.1
      %v2842 = vmul.f32 %v2819, 0.1
      %v2843 = vmul.f32 %v2823, 0.1
      %v2844 = vmul.f32 %v2825, 0.1
      %v2845 = vmul.f32 %v2827, 0.1
      %v2846 = vmul.f32 %v2829, 0.1
      %v2847 = vmax.f32 %v2793, %v2831
      %v2848 = vmax.f32 %v2795, %v2832
      %v2849 = vmax.f32 %v2797, %v2833
      %v2850 = vmax.f32 %v2799, %v2834
      %v2851 = vmax.f32 %v2803, %v2835
      %v2852 = vmax.f32 %v2805, %v2836
      %v2853 = vmax.f32 %v2807, %v2837
      %v2854 = vmax.f32 %v2809, %v2838
      %v2855 = vmax.f32 %v2813, %v2839
      %v2856 = vmax.f32 %v2815, %v2840
      %v2857 = vmax.f32 %v2817, %v2841
      %v2858 = vmax.f32 %v2819, %v2842
      %v2859 = vmax.f32 %v2823, %v2843
      %v2860 = vmax.f32 %v2825, %v2844
      %v2861 = vmax.f32 %v2827, %v2845
      %v2862 = vmax.f32 %v2829, %v2846
      %2863 = vst [vmem:[#allocation6] sm:$0xff] 0.0
      %vm2864 = vcmask 523264
      %2865 = vst.msk [vmem:[#allocation6 + $0x8] sm:$0xff] %vm2864, 0.0
      %2866 = vst [vmem:[#allocation6 + $0x10] sm:$0xff] 0.0
      %2867 = vst.msk [vmem:[#allocation6 + $0x18] sm:$0xff] %vm2864, 0.0
      %2868 = vst [vmem:[#allocation6 + $0x20] sm:$0xff] 0.0
      %2869 = vst.msk [vmem:[#allocation6 + $0x28] sm:$0xff] %vm2864, 0.0
      %2870 = vst [vmem:[#allocation6 + $0x30] sm:$0xff] 0.0
      %2871 = vst.msk [vmem:[#allocation6 + $0x38] sm:$0xff] %vm2864, 0.0
      %2872 = vst [vmem:[#allocation6 + $0x40] sm:$0xff] 0.0
      %2873 = vst.msk [vmem:[#allocation6 + $0x48] sm:$0xff] %vm2864, 0.0
      %2874 = vst [vmem:[#allocation6 + $0x50] sm:$0xff] 0.0
      %2875 = vst.msk [vmem:[#allocation6 + $0x58] sm:$0xff] %vm2864, 0.0
      %2876 = vst [vmem:[#allocation6 + $0x60] sm:$0xff] 0.0
      %2877 = vst.msk [vmem:[#allocation6 + $0x68] sm:$0xff] %vm2864, 0.0
      %2878 = vst [vmem:[#allocation6 + $0x70] sm:$0xff] 0.0
      %2879 = vst.msk [vmem:[#allocation6 + $0x78] sm:$0xff] %vm2864, 0.0
      %2880 = vst [vmem:[#allocation6 + $0x80] sm:$0xff] 0.0
      %2881 = vst.msk [vmem:[#allocation6 + $0x88] sm:$0xff] %vm2864, 0.0
      %2882 = vst [vmem:[#allocation6 + $0x90] sm:$0xff] 0.0
      %2883 = vst.msk [vmem:[#allocation6 + $0x98] sm:$0xff] %vm2864, 0.0
      %2884 = vst [vmem:[#allocation6 + $0xa0] sm:$0xff] 0.0
      %2885 = vst.msk [vmem:[#allocation6 + $0xa8] sm:$0xff] %vm2864, 0.0
      %2886 = vst [vmem:[#allocation6 + $0xb0] sm:$0xff] 0.0
      %2887 = vst.msk [vmem:[#allocation6 + $0xb8] sm:$0xff] %vm2864, 0.0
      %2888 = vst [vmem:[#allocation6 + $0xc0] sm:$0xff] 0.0
      %2889 = vst.msk [vmem:[#allocation6 + $0xc8] sm:$0xff] %vm2864, 0.0
      %2890 = vst [vmem:[#allocation6 + $0xd0] sm:$0xff] 0.0
      %2891 = vst.msk [vmem:[#allocation6 + $0xd8] sm:$0xff] %vm2864, 0.0
      %2892 = vst [vmem:[#allocation6 + $0xe0] sm:$0xff] 0.0
      %2893 = vst.msk [vmem:[#allocation6 + $0xe8] sm:$0xff] %vm2864, 0.0
      %2894 = vst [vmem:[#allocation6 + $0xf0] sm:$0xff] 0.0
      %2895 = vst.msk [vmem:[#allocation6 + $0xf8] sm:$0xff] %vm2864, 0.0
      %2896 = vst [vmem:[#allocation6 + $0x100] sm:$0xff] 0.0
      %2897 = vst.msk [vmem:[#allocation6 + $0x108] sm:$0xff] %vm2864, 0.0
      %2898 = vst [vmem:[#allocation6 + $0x110] sm:$0xff] 0.0
      %2899 = vst.msk [vmem:[#allocation6 + $0x118] sm:$0xff] %vm2864, 0.0
      %2900 = vst [vmem:[#allocation6 + $0x120] sm:$0xff] 0.0
      %2901 = vst.msk [vmem:[#allocation6 + $0x128] sm:$0xff] %vm2864, 0.0
      %2902 = vst [vmem:[#allocation6 + $0x130] sm:$0xff] 0.0
      %2903 = vst.msk [vmem:[#allocation6 + $0x138] sm:$0xff] %vm2864, 0.0
      %2904 = vst [vmem:[#allocation6 + $0x140] sm:$0xff] 0.0
      %2905 = vst.msk [vmem:[#allocation6 + $0x148] sm:$0xff] %vm2864, 0.0
      %2906 = vst [vmem:[#allocation6 + $0x150] sm:$0xff] 0.0
      %2907 = vst.msk [vmem:[#allocation6 + $0x158] sm:$0xff] %vm2864, 0.0
      %2908 = vst [vmem:[#allocation6 + $0x160] sm:$0xff] 0.0
      %2909 = vst.msk [vmem:[#allocation6 + $0x168] sm:$0xff] %vm2864, 0.0
      %2910 = vst [vmem:[#allocation6 + $0x170] sm:$0xff] 0.0
      %2911 = vst.msk [vmem:[#allocation6 + $0x178] sm:$0xff] %vm2864, 0.0
      %2912 = vst [vmem:[#allocation6 + $0x180] sm:$0xff] 0.0
      %2913 = vst.msk [vmem:[#allocation6 + $0x188] sm:$0xff] %vm2864, 0.0
      %2914 = vst [vmem:[#allocation6 + $0x190] sm:$0xff] 0.0
      %2915 = vst.msk [vmem:[#allocation6 + $0x198] sm:$0xff] %vm2864, 0.0
      %2916 = vst [vmem:[#allocation6 + $0x1a0] sm:$0xff] 0.0
      %2917 = vst.msk [vmem:[#allocation6 + $0x1a8] sm:$0xff] %vm2864, 0.0
      %2918 = vst [vmem:[#allocation6 + $0x1b0] sm:$0xff] 0.0
      %2919 = vst.msk [vmem:[#allocation6 + $0x1b8] sm:$0xff] %vm2864, 0.0
      %2920 = vst [vmem:[#allocation6 + $0x1c0] sm:$0xff] 0.0
      %2921 = vst.msk [vmem:[#allocation6 + $0x1c8] sm:$0xff] %vm2864, 0.0
      %2922 = vst [vmem:[#allocation6 + $0x1d0] sm:$0xff] 0.0
      %2923 = vst.msk [vmem:[#allocation6 + $0x1d8] sm:$0xff] %vm2864, 0.0
      %2924 = vst [vmem:[#allocation6 + $0x1e0] sm:$0xff] 0.0
      %2925 = vst.msk [vmem:[#allocation6 + $0x1e8] sm:$0xff] %vm2864, 0.0
      %2926 = vst [vmem:[#allocation6 + $0x1f0] sm:$0xff] 0.0
      %2927 = vst.msk [vmem:[#allocation6 + $0x1f8] sm:$0xff] %vm2864, 0.0
      %v2944 = vrot.slane %v2847, 4
      %v2945 = vrot.slane %v2848, 4
      %v2946 = vrot.slane %v2849, 4
      %v2947 = vrot.slane %v2850, 4
      %v2948 = vrot.slane %v2851, 4
      %v2949 = vrot.slane %v2852, 4
      %v2950 = vrot.slane %v2853, 4
      %v2951 = vrot.slane %v2854, 4
      %v2952 = vrot.slane %v2855, 4
      %v2953 = vrot.slane %v2856, 4
      %v2954 = vrot.slane %v2857, 4
      %v2955 = vrot.slane %v2858, 4
      %v2956 = vrot.slane %v2859, 4
      %v2957 = vrot.slane %v2860, 4
      %v2958 = vrot.slane %v2861, 4
      %v2959 = vrot.slane %v2862, 4
      %s2976 = scalar_lea.vmem [#allocation6], 128
      %2977 = vst [vmem:[%s2976] sm:$0xf0] %v2944
      %vm2978 = vcmask 523268
      %2979 = vst.msk [vmem:[%s2976 + $0x8] sm:$0xf0] %vm2978, %v2945
      %2980 = vst [vmem:[%s2976 + $0x10] sm:$0xf] %v2944
      %vm2981 = vcmask 519168
      %2982 = vst.msk [vmem:[%s2976 + $0x18] sm:$0xf] %vm2981, %v2945
      %2983 = vst [vmem:[%s2976 + $0x20] sm:$0xf0] %v2946
      %2984 = vst.msk [vmem:[%s2976 + $0x28] sm:$0xf0] %vm2978, %v2947
      %2985 = vst [vmem:[%s2976 + $0x30] sm:$0xf] %v2946
      %2986 = vst.msk [vmem:[%s2976 + $0x38] sm:$0xf] %vm2981, %v2947
      %2987 = vst [vmem:[%s2976 + $0x40] sm:$0xf0] %v2948
      %2988 = vst.msk [vmem:[%s2976 + $0x48] sm:$0xf0] %vm2978, %v2949
      %2989 = vst [vmem:[%s2976 + $0x50] sm:$0xf] %v2948
      %2990 = vst.msk [vmem:[%s2976 + $0x58] sm:$0xf] %vm2981, %v2949
      %2991 = vst [vmem:[%s2976 + $0x60] sm:$0xf0] %v2950
      %2992 = vst.msk [vmem:[%s2976 + $0x68] sm:$0xf0] %vm2978, %v2951
      %2993 = vst [vmem:[%s2976 + $0x70] sm:$0xf] %v2950
      %2994 = vst.msk [vmem:[%s2976 + $0x78] sm:$0xf] %vm2981, %v2951
      %2995 = vst [vmem:[%s2976 + $0x80] sm:$0xf0] %v2952
      %2996 = vst.msk [vmem:[%s2976 + $0x88] sm:$0xf0] %vm2978, %v2953
      %2997 = vst [vmem:[%s2976 + $0x90] sm:$0xf] %v2952
      %2998 = vst.msk [vmem:[%s2976 + $0x98] sm:$0xf] %vm2981, %v2953
      %2999 = vst [vmem:[%s2976 + $0xa0] sm:$0xf0] %v2954
      %3000 = vst.msk [vmem:[%s2976 + $0xa8] sm:$0xf0] %vm2978, %v2955
      %3001 = vst [vmem:[%s2976 + $0xb0] sm:$0xf] %v2954
      %3002 = vst.msk [vmem:[%s2976 + $0xb8] sm:$0xf] %vm2981, %v2955
      %3003 = vst [vmem:[%s2976 + $0xc0] sm:$0xf0] %v2956
      %3004 = vst.msk [vmem:[%s2976 + $0xc8] sm:$0xf0] %vm2978, %v2957
      %3005 = vst [vmem:[%s2976 + $0xd0] sm:$0xf] %v2956
      %3006 = vst.msk [vmem:[%s2976 + $0xd8] sm:$0xf] %vm2981, %v2957
      %3007 = vst [vmem:[%s2976 + $0xe0] sm:$0xf0] %v2958
      %3008 = vst.msk [vmem:[%s2976 + $0xe8] sm:$0xf0] %vm2978, %v2959
      %3009 = vst [vmem:[%s2976 + $0xf0] sm:$0xf] %v2958
      %3010 = vst.msk [vmem:[%s2976 + $0xf8] sm:$0xf] %vm2981, %v2959
      %v3011 = vld [vmem:[#allocation6] sm:$0xff]
      %v3012 = vld [vmem:[#allocation6 + $0x8] sm:$0xff]
      %v3013 = vld [vmem:[#allocation6 + $0x20] sm:$0xff]
      %v3014 = vld [vmem:[#allocation6 + $0x28] sm:$0xff]
      %v3015 = vld [vmem:[#allocation6 + $0x40] sm:$0xff]
      %v3016 = vld [vmem:[#allocation6 + $0x48] sm:$0xff]
      %v3017 = vld [vmem:[#allocation6 + $0x60] sm:$0xff]
      %v3018 = vld [vmem:[#allocation6 + $0x68] sm:$0xff]
      %v3019 = vld [vmem:[#allocation6 + $0x80] sm:$0xff]
      %v3020 = vld [vmem:[#allocation6 + $0x88] sm:$0xff]
      %v3021 = vld [vmem:[#allocation6 + $0xa0] sm:$0xff]
      %v3022 = vld [vmem:[#allocation6 + $0xa8] sm:$0xff]
      %v3023 = vld [vmem:[#allocation6 + $0xc0] sm:$0xff]
      %v3024 = vld [vmem:[#allocation6 + $0xc8] sm:$0xff]
      %v3025 = vld [vmem:[#allocation6 + $0xe0] sm:$0xff]
      %v3026 = vld [vmem:[#allocation6 + $0xe8] sm:$0xff]
      %v3027 = vld [vmem:[%s11] sm:$0x3]
      %v3029 = vlaneseq
      %v3030 = vshrl.u32 %v3029, 7
      %v3031 = vsub.s32 0, %v3030
      %v3032 = vrot.slane %v3027, %v3031
      %v3033 = vlaneseq
      %v3034 = vshrl.u32 %v3033, 7
      %v3035 = vsub.s32 1, %v3034
      %v3036 = vrot.slane %v3027, %v3035
      %v3039 = vmul.f32 %v3011, %v3032
      %v3040 = vmul.f32 %v3012, %v3036
      %v3041 = vmul.f32 %v3013, %v3032
      %v3042 = vmul.f32 %v3014, %v3036
      %v3043 = vmul.f32 %v3015, %v3032
      %v3044 = vmul.f32 %v3016, %v3036
      %v3045 = vmul.f32 %v3017, %v3032
      %v3046 = vmul.f32 %v3018, %v3036
      %v3047 = vmul.f32 %v3019, %v3032
      %v3048 = vmul.f32 %v3020, %v3036
      %v3049 = vmul.f32 %v3021, %v3032
      %v3050 = vmul.f32 %v3022, %v3036
      %v3051 = vmul.f32 %v3023, %v3032
      %v3052 = vmul.f32 %v3024, %v3036
      %v3053 = vmul.f32 %v3025, %v3032
      %v3054 = vmul.f32 %v3026, %v3036
      %v3055 = vld [vmem:[#allocation6] sm:$0xf0]
      %v3056 = vld [vmem:[#allocation6 + $0x8] sm:$0xf0]
      %v3057 = vld [vmem:[#allocation6 + $0x10] sm:$0xf]
      %v3058 = vld [vmem:[#allocation6 + $0x18] sm:$0xf]
      %v3059 = vld [vmem:[#allocation6 + $0x20] sm:$0xf0]
      %v3060 = vld [vmem:[#allocation6 + $0x28] sm:$0xf0]
      %v3061 = vld [vmem:[#allocation6 + $0x30] sm:$0xf]
      %v3062 = vld [vmem:[#allocation6 + $0x38] sm:$0xf]
      %v3063 = vld [vmem:[#allocation6 + $0x40] sm:$0xf0]
      %v3064 = vld [vmem:[#allocation6 + $0x48] sm:$0xf0]
      %v3065 = vld [vmem:[#allocation6 + $0x50] sm:$0xf]
      %v3066 = vld [vmem:[#allocation6 + $0x58] sm:$0xf]
      %v3067 = vld [vmem:[#allocation6 + $0x60] sm:$0xf0]
      %v3068 = vld [vmem:[#allocation6 + $0x68] sm:$0xf0]
      %v3069 = vld [vmem:[#allocation6 + $0x70] sm:$0xf]
      %v3070 = vld [vmem:[#allocation6 + $0x78] sm:$0xf]
      %v3071 = vld [vmem:[#allocation6 + $0x80] sm:$0xf0]
      %v3072 = vld [vmem:[#allocation6 + $0x88] sm:$0xf0]
      %v3073 = vld [vmem:[#allocation6 + $0x90] sm:$0xf]
      %v3074 = vld [vmem:[#allocation6 + $0x98] sm:$0xf]
      %v3075 = vld [vmem:[#allocation6 + $0xa0] sm:$0xf0]
      %v3076 = vld [vmem:[#allocation6 + $0xa8] sm:$0xf0]
      %v3077 = vld [vmem:[#allocation6 + $0xb0] sm:$0xf]
      %v3078 = vld [vmem:[#allocation6 + $0xb8] sm:$0xf]
      %v3079 = vld [vmem:[#allocation6 + $0xc0] sm:$0xf0]
      %v3080 = vld [vmem:[#allocation6 + $0xc8] sm:$0xf0]
      %v3081 = vld [vmem:[#allocation6 + $0xd0] sm:$0xf]
      %v3082 = vld [vmem:[#allocation6 + $0xd8] sm:$0xf]
      %v3083 = vld [vmem:[#allocation6 + $0xe0] sm:$0xf0]
      %v3084 = vld [vmem:[#allocation6 + $0xe8] sm:$0xf0]
      %v3085 = vld [vmem:[#allocation6 + $0xf0] sm:$0xf]
      %v3086 = vld [vmem:[#allocation6 + $0xf8] sm:$0xf]
      %s3087 = scalar_lea.vmem %s11, 2
      %v3088 = vld [vmem:[%s3087] sm:$0x3]
      %v3090 = vlaneseq
      %v3091 = vshrl.u32 %v3090, 7
      %v3092 = vsub.s32 0, %v3091
      %v3093 = vrot.slane %v3088, %v3092
      %v3094 = vlaneseq
      %v3095 = vshrl.u32 %v3094, 7
      %v3096 = vsub.s32 1, %v3095
      %v3097 = vrot.slane %v3088, %v3096
      %v3100 = vmul.f32 %v3055, %v3093
      %v3101 = vmul.f32 %v3056, %v3097
      %v3102 = vmul.f32 %v3057, %v3093
      %v3103 = vmul.f32 %v3058, %v3097
      %v3104 = vmul.f32 %v3059, %v3093
      %v3105 = vmul.f32 %v3060, %v3097
      %v3106 = vmul.f32 %v3061, %v3093
      %v3107 = vmul.f32 %v3062, %v3097
      %v3108 = vmul.f32 %v3063, %v3093
      %v3109 = vmul.f32 %v3064, %v3097
      %v3110 = vmul.f32 %v3065, %v3093
      %v3111 = vmul.f32 %v3066, %v3097
      %v3112 = vmul.f32 %v3067, %v3093
      %v3113 = vmul.f32 %v3068, %v3097
      %v3114 = vmul.f32 %v3069, %v3093
      %v3115 = vmul.f32 %v3070, %v3097
      %v3116 = vmul.f32 %v3071, %v3093
      %v3117 = vmul.f32 %v3072, %v3097
      %v3118 = vmul.f32 %v3073, %v3093
      %v3119 = vmul.f32 %v3074, %v3097
      %v3120 = vmul.f32 %v3075, %v3093
      %v3121 = vmul.f32 %v3076, %v3097
      %v3122 = vmul.f32 %v3077, %v3093
      %v3123 = vmul.f32 %v3078, %v3097
      %v3124 = vmul.f32 %v3079, %v3093
      %v3125 = vmul.f32 %v3080, %v3097
      %v3126 = vmul.f32 %v3081, %v3093
      %v3127 = vmul.f32 %v3082, %v3097
      %v3128 = vmul.f32 %v3083, %v3093
      %v3129 = vmul.f32 %v3084, %v3097
      %v3130 = vmul.f32 %v3085, %v3093
      %v3131 = vmul.f32 %v3086, %v3097
      %v3164 = vrot.slane %v3100, 4
      %v3165 = vrot.slane %v3102, 4
      %v3166 = vsel %vm1340, %v3164, %v3165
      %v3167 = vrot.slane %v3101, 4
      %v3168 = vrot.slane %v3103, 4
      %v3169 = vsel %vm1340, %v3167, %v3168
      %v3170 = vrot.slane %v3104, 4
      %v3171 = vrot.slane %v3106, 4
      %v3172 = vsel %vm1340, %v3170, %v3171
      %v3173 = vrot.slane %v3105, 4
      %v3174 = vrot.slane %v3107, 4
      %v3175 = vsel %vm1340, %v3173, %v3174
      %v3176 = vrot.slane %v3108, 4
      %v3177 = vrot.slane %v3110, 4
      %v3178 = vsel %vm1340, %v3176, %v3177
      %v3179 = vrot.slane %v3109, 4
      %v3180 = vrot.slane %v3111, 4
      %v3181 = vsel %vm1340, %v3179, %v3180
      %v3182 = vrot.slane %v3112, 4
      %v3183 = vrot.slane %v3114, 4
      %v3184 = vsel %vm1340, %v3182, %v3183
      %v3185 = vrot.slane %v3113, 4
      %v3186 = vrot.slane %v3115, 4
      %v3187 = vsel %vm1340, %v3185, %v3186
      %v3188 = vrot.slane %v3116, 4
      %v3189 = vrot.slane %v3118, 4
      %v3190 = vsel %vm1340, %v3188, %v3189
      %v3191 = vrot.slane %v3117, 4
      %v3192 = vrot.slane %v3119, 4
      %v3193 = vsel %vm1340, %v3191, %v3192
      %v3194 = vrot.slane %v3120, 4
      %v3195 = vrot.slane %v3122, 4
      %v3196 = vsel %vm1340, %v3194, %v3195
      %v3197 = vrot.slane %v3121, 4
      %v3198 = vrot.slane %v3123, 4
      %v3199 = vsel %vm1340, %v3197, %v3198
      %v3200 = vrot.slane %v3124, 4
      %v3201 = vrot.slane %v3126, 4
      %v3202 = vsel %vm1340, %v3200, %v3201
      %v3203 = vrot.slane %v3125, 4
      %v3204 = vrot.slane %v3127, 4
      %v3205 = vsel %vm1340, %v3203, %v3204
      %v3206 = vrot.slane %v3128, 4
      %v3207 = vrot.slane %v3130, 4
      %v3208 = vsel %vm1340, %v3206, %v3207
      %v3209 = vrot.slane %v3129, 4
      %v3210 = vrot.slane %v3131, 4
      %v3211 = vsel %vm1340, %v3209, %v3210
      %v3228 = vadd.f32 %v3039, %v3166
      %v3229 = vadd.f32 %v3040, %v3169
      %v3230 = vadd.f32 %v3041, %v3172
      %v3231 = vadd.f32 %v3042, %v3175
      %v3232 = vadd.f32 %v3043, %v3178
      %v3233 = vadd.f32 %v3044, %v3181
      %v3234 = vadd.f32 %v3045, %v3184
      %v3235 = vadd.f32 %v3046, %v3187
      %v3236 = vadd.f32 %v3047, %v3190
      %v3237 = vadd.f32 %v3048, %v3193
      %v3238 = vadd.f32 %v3049, %v3196
      %v3239 = vadd.f32 %v3050, %v3199
      %v3240 = vadd.f32 %v3051, %v3202
      %v3241 = vadd.f32 %v3052, %v3205
      %v3242 = vadd.f32 %v3053, %v3208
      %v3243 = vadd.f32 %v3054, %v3211
      %v3244 = vld [vmem:[#allocation6 + $0x10] sm:$0xff]
      %v3245 = vld [vmem:[#allocation6 + $0x18] sm:$0xff]
      %v3246 = vld [vmem:[#allocation6 + $0x30] sm:$0xff]
      %v3247 = vld [vmem:[#allocation6 + $0x38] sm:$0xff]
      %v3248 = vld [vmem:[#allocation6 + $0x50] sm:$0xff]
      %v3249 = vld [vmem:[#allocation6 + $0x58] sm:$0xff]
      %v3250 = vld [vmem:[#allocation6 + $0x70] sm:$0xff]
      %v3251 = vld [vmem:[#allocation6 + $0x78] sm:$0xff]
      %v3252 = vld [vmem:[#allocation6 + $0x90] sm:$0xff]
      %v3253 = vld [vmem:[#allocation6 + $0x98] sm:$0xff]
      %v3254 = vld [vmem:[#allocation6 + $0xb0] sm:$0xff]
      %v3255 = vld [vmem:[#allocation6 + $0xb8] sm:$0xff]
      %v3256 = vld [vmem:[#allocation6 + $0xd0] sm:$0xff]
      %v3257 = vld [vmem:[#allocation6 + $0xd8] sm:$0xff]
      %v3258 = vld [vmem:[#allocation6 + $0xf0] sm:$0xff]
      %v3259 = vld [vmem:[#allocation6 + $0xf8] sm:$0xff]
      %s3260 = scalar_lea.vmem %s11, 4
      %v3261 = vld [vmem:[%s3260] sm:$0x3]
      %v3263 = vlaneseq
      %v3264 = vshrl.u32 %v3263, 7
      %v3265 = vsub.s32 0, %v3264
      %v3266 = vrot.slane %v3261, %v3265
      %v3267 = vlaneseq
      %v3268 = vshrl.u32 %v3267, 7
      %v3269 = vsub.s32 1, %v3268
      %v3270 = vrot.slane %v3261, %v3269
      %v3273 = vmul.f32 %v3244, %v3266
      %v3274 = vmul.f32 %v3245, %v3270
      %v3275 = vmul.f32 %v3246, %v3266
      %v3276 = vmul.f32 %v3247, %v3270
      %v3277 = vmul.f32 %v3248, %v3266
      %v3278 = vmul.f32 %v3249, %v3270
      %v3279 = vmul.f32 %v3250, %v3266
      %v3280 = vmul.f32 %v3251, %v3270
      %v3281 = vmul.f32 %v3252, %v3266
      %v3282 = vmul.f32 %v3253, %v3270
      %v3283 = vmul.f32 %v3254, %v3266
      %v3284 = vmul.f32 %v3255, %v3270
      %v3285 = vmul.f32 %v3256, %v3266
      %v3286 = vmul.f32 %v3257, %v3270
      %v3287 = vmul.f32 %v3258, %v3266
      %v3288 = vmul.f32 %v3259, %v3270
      %v3289 = vadd.f32 %v3228, %v3273
      %v3290 = vadd.f32 %v3229, %v3274
      %v3291 = vadd.f32 %v3230, %v3275
      %v3292 = vadd.f32 %v3231, %v3276
      %v3293 = vadd.f32 %v3232, %v3277
      %v3294 = vadd.f32 %v3233, %v3278
      %v3295 = vadd.f32 %v3234, %v3279
      %v3296 = vadd.f32 %v3235, %v3280
      %v3297 = vadd.f32 %v3236, %v3281
      %v3298 = vadd.f32 %v3237, %v3282
      %v3299 = vadd.f32 %v3238, %v3283
      %v3300 = vadd.f32 %v3239, %v3284
      %v3301 = vadd.f32 %v3240, %v3285
      %v3302 = vadd.f32 %v3241, %v3286
      %v3303 = vadd.f32 %v3242, %v3287
      %v3304 = vadd.f32 %v3243, %v3288
      %v3305 = vld [vmem:[%s2976] sm:$0xff]
      %v3306 = vld [vmem:[%s2976 + $0x8] sm:$0xff]
      %v3307 = vld [vmem:[%s2976 + $0x20] sm:$0xff]
      %v3308 = vld [vmem:[%s2976 + $0x28] sm:$0xff]
      %v3309 = vld [vmem:[%s2976 + $0x40] sm:$0xff]
      %v3310 = vld [vmem:[%s2976 + $0x48] sm:$0xff]
      %v3311 = vld [vmem:[%s2976 + $0x60] sm:$0xff]
      %v3312 = vld [vmem:[%s2976 + $0x68] sm:$0xff]
      %v3313 = vld [vmem:[%s2976 + $0x80] sm:$0xff]
      %v3314 = vld [vmem:[%s2976 + $0x88] sm:$0xff]
      %v3315 = vld [vmem:[%s2976 + $0xa0] sm:$0xff]
      %v3316 = vld [vmem:[%s2976 + $0xa8] sm:$0xff]
      %v3317 = vld [vmem:[%s2976 + $0xc0] sm:$0xff]
      %v3318 = vld [vmem:[%s2976 + $0xc8] sm:$0xff]
      %v3319 = vld [vmem:[%s2976 + $0xe0] sm:$0xff]
      %v3320 = vld [vmem:[%s2976 + $0xe8] sm:$0xff]
      %s3321 = scalar_lea.vmem %s11, 6
      %v3322 = vld [vmem:[%s3321] sm:$0x3]
      %v3324 = vlaneseq
      %v3325 = vshrl.u32 %v3324, 7
      %v3326 = vsub.s32 0, %v3325
      %v3327 = vrot.slane %v3322, %v3326
      %v3328 = vlaneseq
      %v3329 = vshrl.u32 %v3328, 7
      %v3330 = vsub.s32 1, %v3329
      %v3331 = vrot.slane %v3322, %v3330
      %v3334 = vmul.f32 %v3305, %v3327
      %v3335 = vmul.f32 %v3306, %v3331
      %v3336 = vmul.f32 %v3307, %v3327
      %v3337 = vmul.f32 %v3308, %v3331
      %v3338 = vmul.f32 %v3309, %v3327
      %v3339 = vmul.f32 %v3310, %v3331
      %v3340 = vmul.f32 %v3311, %v3327
      %v3341 = vmul.f32 %v3312, %v3331
      %v3342 = vmul.f32 %v3313, %v3327
      %v3343 = vmul.f32 %v3314, %v3331
      %v3344 = vmul.f32 %v3315, %v3327
      %v3345 = vmul.f32 %v3316, %v3331
      %v3346 = vmul.f32 %v3317, %v3327
      %v3347 = vmul.f32 %v3318, %v3331
      %v3348 = vmul.f32 %v3319, %v3327
      %v3349 = vmul.f32 %v3320, %v3331
      %v3350 = vadd.f32 %v3289, %v3334
      %v3351 = vadd.f32 %v3290, %v3335
      %v3352 = vadd.f32 %v3291, %v3336
      %v3353 = vadd.f32 %v3292, %v3337
      %v3354 = vadd.f32 %v3293, %v3338
      %v3355 = vadd.f32 %v3294, %v3339
      %v3356 = vadd.f32 %v3295, %v3340
      %v3357 = vadd.f32 %v3296, %v3341
      %v3358 = vadd.f32 %v3297, %v3342
      %v3359 = vadd.f32 %v3298, %v3343
      %v3360 = vadd.f32 %v3299, %v3344
      %v3361 = vadd.f32 %v3300, %v3345
      %v3362 = vadd.f32 %v3301, %v3346
      %v3363 = vadd.f32 %v3302, %v3347
      %v3364 = vadd.f32 %v3303, %v3348
      %v3365 = vadd.f32 %v3304, %v3349
      %v3366 = vld [vmem:[%s2976] sm:$0xf0]
      %v3367 = vld [vmem:[%s2976 + $0x8] sm:$0xf0]
      %v3368 = vld [vmem:[%s2976 + $0x10] sm:$0xf]
      %v3369 = vld [vmem:[%s2976 + $0x18] sm:$0xf]
      %v3370 = vld [vmem:[%s2976 + $0x20] sm:$0xf0]
      %v3371 = vld [vmem:[%s2976 + $0x28] sm:$0xf0]
      %v3372 = vld [vmem:[%s2976 + $0x30] sm:$0xf]
      %v3373 = vld [vmem:[%s2976 + $0x38] sm:$0xf]
      %v3374 = vld [vmem:[%s2976 + $0x40] sm:$0xf0]
      %v3375 = vld [vmem:[%s2976 + $0x48] sm:$0xf0]
      %v3376 = vld [vmem:[%s2976 + $0x50] sm:$0xf]
      %v3377 = vld [vmem:[%s2976 + $0x58] sm:$0xf]
      %v3378 = vld [vmem:[%s2976 + $0x60] sm:$0xf0]
      %v3379 = vld [vmem:[%s2976 + $0x68] sm:$0xf0]
      %v3380 = vld [vmem:[%s2976 + $0x70] sm:$0xf]
      %v3381 = vld [vmem:[%s2976 + $0x78] sm:$0xf]
      %v3382 = vld [vmem:[%s2976 + $0x80] sm:$0xf0]
      %v3383 = vld [vmem:[%s2976 + $0x88] sm:$0xf0]
      %v3384 = vld [vmem:[%s2976 + $0x90] sm:$0xf]
      %v3385 = vld [vmem:[%s2976 + $0x98] sm:$0xf]
      %v3386 = vld [vmem:[%s2976 + $0xa0] sm:$0xf0]
      %v3387 = vld [vmem:[%s2976 + $0xa8] sm:$0xf0]
      %v3388 = vld [vmem:[%s2976 + $0xb0] sm:$0xf]
      %v3389 = vld [vmem:[%s2976 + $0xb8] sm:$0xf]
      %v3390 = vld [vmem:[%s2976 + $0xc0] sm:$0xf0]
      %v3391 = vld [vmem:[%s2976 + $0xc8] sm:$0xf0]
      %v3392 = vld [vmem:[%s2976 + $0xd0] sm:$0xf]
      %v3393 = vld [vmem:[%s2976 + $0xd8] sm:$0xf]
      %v3394 = vld [vmem:[%s2976 + $0xe0] sm:$0xf0]
      %v3395 = vld [vmem:[%s2976 + $0xe8] sm:$0xf0]
      %v3396 = vld [vmem:[%s2976 + $0xf0] sm:$0xf]
      %v3397 = vld [vmem:[%s2976 + $0xf8] sm:$0xf]
      %s3398 = scalar_lea.vmem %s11, 8
      %v3399 = vld [vmem:[%s3398] sm:$0x3]
      %v3401 = vlaneseq
      %v3402 = vshrl.u32 %v3401, 7
      %v3403 = vsub.s32 0, %v3402
      %v3404 = vrot.slane %v3399, %v3403
      %v3405 = vlaneseq
      %v3406 = vshrl.u32 %v3405, 7
      %v3407 = vsub.s32 1, %v3406
      %v3408 = vrot.slane %v3399, %v3407
      %v3411 = vmul.f32 %v3366, %v3404
      %v3412 = vmul.f32 %v3367, %v3408
      %v3413 = vmul.f32 %v3368, %v3404
      %v3414 = vmul.f32 %v3369, %v3408
      %v3415 = vmul.f32 %v3370, %v3404
      %v3416 = vmul.f32 %v3371, %v3408
      %v3417 = vmul.f32 %v3372, %v3404
      %v3418 = vmul.f32 %v3373, %v3408
      %v3419 = vmul.f32 %v3374, %v3404
      %v3420 = vmul.f32 %v3375, %v3408
      %v3421 = vmul.f32 %v3376, %v3404
      %v3422 = vmul.f32 %v3377, %v3408
      %v3423 = vmul.f32 %v3378, %v3404
      %v3424 = vmul.f32 %v3379, %v3408
      %v3425 = vmul.f32 %v3380, %v3404
      %v3426 = vmul.f32 %v3381, %v3408
      %v3427 = vmul.f32 %v3382, %v3404
      %v3428 = vmul.f32 %v3383, %v3408
      %v3429 = vmul.f32 %v3384, %v3404
      %v3430 = vmul.f32 %v3385, %v3408
      %v3431 = vmul.f32 %v3386, %v3404
      %v3432 = vmul.f32 %v3387, %v3408
      %v3433 = vmul.f32 %v3388, %v3404
      %v3434 = vmul.f32 %v3389, %v3408
      %v3435 = vmul.f32 %v3390, %v3404
      %v3436 = vmul.f32 %v3391, %v3408
      %v3437 = vmul.f32 %v3392, %v3404
      %v3438 = vmul.f32 %v3393, %v3408
      %v3439 = vmul.f32 %v3394, %v3404
      %v3440 = vmul.f32 %v3395, %v3408
      %v3441 = vmul.f32 %v3396, %v3404
      %v3442 = vmul.f32 %v3397, %v3408
      %v3475 = vrot.slane %v3411, 4
      %v3476 = vrot.slane %v3413, 4
      %v3477 = vsel %vm1340, %v3475, %v3476
      %v3478 = vrot.slane %v3412, 4
      %v3479 = vrot.slane %v3414, 4
      %v3480 = vsel %vm1340, %v3478, %v3479
      %v3481 = vrot.slane %v3415, 4
      %v3482 = vrot.slane %v3417, 4
      %v3483 = vsel %vm1340, %v3481, %v3482
      %v3484 = vrot.slane %v3416, 4
      %v3485 = vrot.slane %v3418, 4
      %v3486 = vsel %vm1340, %v3484, %v3485
      %v3487 = vrot.slane %v3419, 4
      %v3488 = vrot.slane %v3421, 4
      %v3489 = vsel %vm1340, %v3487, %v3488
      %v3490 = vrot.slane %v3420, 4
      %v3491 = vrot.slane %v3422, 4
      %v3492 = vsel %vm1340, %v3490, %v3491
      %v3493 = vrot.slane %v3423, 4
      %v3494 = vrot.slane %v3425, 4
      %v3495 = vsel %vm1340, %v3493, %v3494
      %v3496 = vrot.slane %v3424, 4
      %v3497 = vrot.slane %v3426, 4
      %v3498 = vsel %vm1340, %v3496, %v3497
      %v3499 = vrot.slane %v3427, 4
      %v3500 = vrot.slane %v3429, 4
      %v3501 = vsel %vm1340, %v3499, %v3500
      %v3502 = vrot.slane %v3428, 4
      %v3503 = vrot.slane %v3430, 4
      %v3504 = vsel %vm1340, %v3502, %v3503
      %v3505 = vrot.slane %v3431, 4
      %v3506 = vrot.slane %v3433, 4
      %v3507 = vsel %vm1340, %v3505, %v3506
      %v3508 = vrot.slane %v3432, 4
      %v3509 = vrot.slane %v3434, 4
      %v3510 = vsel %vm1340, %v3508, %v3509
      %v3511 = vrot.slane %v3435, 4
      %v3512 = vrot.slane %v3437, 4
      %v3513 = vsel %vm1340, %v3511, %v3512
      %v3514 = vrot.slane %v3436, 4
      %v3515 = vrot.slane %v3438, 4
      %v3516 = vsel %vm1340, %v3514, %v3515
      %v3517 = vrot.slane %v3439, 4
      %v3518 = vrot.slane %v3441, 4
      %v3519 = vsel %vm1340, %v3517, %v3518
      %v3520 = vrot.slane %v3440, 4
      %v3521 = vrot.slane %v3442, 4
      %v3522 = vsel %vm1340, %v3520, %v3521
      %v3539 = vadd.f32 %v3350, %v3477
      %v3540 = vadd.f32 %v3351, %v3480
      %v3541 = vadd.f32 %v3352, %v3483
      %v3542 = vadd.f32 %v3353, %v3486
      %v3543 = vadd.f32 %v3354, %v3489
      %v3544 = vadd.f32 %v3355, %v3492
      %v3545 = vadd.f32 %v3356, %v3495
      %v3546 = vadd.f32 %v3357, %v3498
      %v3547 = vadd.f32 %v3358, %v3501
      %v3548 = vadd.f32 %v3359, %v3504
      %v3549 = vadd.f32 %v3360, %v3507
      %v3550 = vadd.f32 %v3361, %v3510
      %v3551 = vadd.f32 %v3362, %v3513
      %v3552 = vadd.f32 %v3363, %v3516
      %v3553 = vadd.f32 %v3364, %v3519
      %v3554 = vadd.f32 %v3365, %v3522
      %v3555 = vld [vmem:[%s2976 + $0x10] sm:$0xff]
      %v3556 = vld [vmem:[%s2976 + $0x18] sm:$0xff]
      %v3557 = vld [vmem:[%s2976 + $0x30] sm:$0xff]
      %v3558 = vld [vmem:[%s2976 + $0x38] sm:$0xff]
      %v3559 = vld [vmem:[%s2976 + $0x50] sm:$0xff]
      %v3560 = vld [vmem:[%s2976 + $0x58] sm:$0xff]
      %v3561 = vld [vmem:[%s2976 + $0x70] sm:$0xff]
      %v3562 = vld [vmem:[%s2976 + $0x78] sm:$0xff]
      %v3563 = vld [vmem:[%s2976 + $0x90] sm:$0xff]
      %v3564 = vld [vmem:[%s2976 + $0x98] sm:$0xff]
      %v3565 = vld [vmem:[%s2976 + $0xb0] sm:$0xff]
      %v3566 = vld [vmem:[%s2976 + $0xb8] sm:$0xff]
      %v3567 = vld [vmem:[%s2976 + $0xd0] sm:$0xff]
      %v3568 = vld [vmem:[%s2976 + $0xd8] sm:$0xff]
      %v3569 = vld [vmem:[%s2976 + $0xf0] sm:$0xff]
      %v3570 = vld [vmem:[%s2976 + $0xf8] sm:$0xff]
      %s3571 = scalar_lea.vmem %s11, 10
      %v3572 = vld [vmem:[%s3571] sm:$0x3]
      %v3574 = vlaneseq
      %v3575 = vshrl.u32 %v3574, 7
      %v3576 = vsub.s32 0, %v3575
      %v3577 = vrot.slane %v3572, %v3576
      %v3578 = vlaneseq
      %v3579 = vshrl.u32 %v3578, 7
      %v3580 = vsub.s32 1, %v3579
      %v3581 = vrot.slane %v3572, %v3580
      %v3584 = vmul.f32 %v3555, %v3577
      %v3585 = vmul.f32 %v3556, %v3581
      %v3586 = vmul.f32 %v3557, %v3577
      %v3587 = vmul.f32 %v3558, %v3581
      %v3588 = vmul.f32 %v3559, %v3577
      %v3589 = vmul.f32 %v3560, %v3581
      %v3590 = vmul.f32 %v3561, %v3577
      %v3591 = vmul.f32 %v3562, %v3581
      %v3592 = vmul.f32 %v3563, %v3577
      %v3593 = vmul.f32 %v3564, %v3581
      %v3594 = vmul.f32 %v3565, %v3577
      %v3595 = vmul.f32 %v3566, %v3581
      %v3596 = vmul.f32 %v3567, %v3577
      %v3597 = vmul.f32 %v3568, %v3581
      %v3598 = vmul.f32 %v3569, %v3577
      %v3599 = vmul.f32 %v3570, %v3581
      %v3600 = vadd.f32 %v3539, %v3584
      %v3601 = vadd.f32 %v3540, %v3585
      %v3602 = vadd.f32 %v3541, %v3586
      %v3603 = vadd.f32 %v3542, %v3587
      %v3604 = vadd.f32 %v3543, %v3588
      %v3605 = vadd.f32 %v3544, %v3589
      %v3606 = vadd.f32 %v3545, %v3590
      %v3607 = vadd.f32 %v3546, %v3591
      %v3608 = vadd.f32 %v3547, %v3592
      %v3609 = vadd.f32 %v3548, %v3593
      %v3610 = vadd.f32 %v3549, %v3594
      %v3611 = vadd.f32 %v3550, %v3595
      %v3612 = vadd.f32 %v3551, %v3596
      %v3613 = vadd.f32 %v3552, %v3597
      %v3614 = vadd.f32 %v3553, %v3598
      %v3615 = vadd.f32 %v3554, %v3599
      %s3616 = scalar_lea.vmem [#allocation6], 256
      %v3617 = vld [vmem:[%s3616] sm:$0xff]
      %v3618 = vld [vmem:[%s3616 + $0x8] sm:$0xff]
      %v3619 = vld [vmem:[%s3616 + $0x20] sm:$0xff]
      %v3620 = vld [vmem:[%s3616 + $0x28] sm:$0xff]
      %v3621 = vld [vmem:[%s3616 + $0x40] sm:$0xff]
      %v3622 = vld [vmem:[%s3616 + $0x48] sm:$0xff]
      %v3623 = vld [vmem:[%s3616 + $0x60] sm:$0xff]
      %v3624 = vld [vmem:[%s3616 + $0x68] sm:$0xff]
      %v3625 = vld [vmem:[%s3616 + $0x80] sm:$0xff]
      %v3626 = vld [vmem:[%s3616 + $0x88] sm:$0xff]
      %v3627 = vld [vmem:[%s3616 + $0xa0] sm:$0xff]
      %v3628 = vld [vmem:[%s3616 + $0xa8] sm:$0xff]
      %v3629 = vld [vmem:[%s3616 + $0xc0] sm:$0xff]
      %v3630 = vld [vmem:[%s3616 + $0xc8] sm:$0xff]
      %v3631 = vld [vmem:[%s3616 + $0xe0] sm:$0xff]
      %v3632 = vld [vmem:[%s3616 + $0xe8] sm:$0xff]
      %s3633 = scalar_lea.vmem %s11, 12
      %v3634 = vld [vmem:[%s3633] sm:$0x3]
      %v3636 = vlaneseq
      %v3637 = vshrl.u32 %v3636, 7
      %v3638 = vsub.s32 0, %v3637
      %v3639 = vrot.slane %v3634, %v3638
      %v3640 = vlaneseq
      %v3641 = vshrl.u32 %v3640, 7
      %v3642 = vsub.s32 1, %v3641
      %v3643 = vrot.slane %v3634, %v3642
      %v3646 = vmul.f32 %v3617, %v3639
      %v3647 = vmul.f32 %v3618, %v3643
      %v3648 = vmul.f32 %v3619, %v3639
      %v3649 = vmul.f32 %v3620, %v3643
      %v3650 = vmul.f32 %v3621, %v3639
      %v3651 = vmul.f32 %v3622, %v3643
      %v3652 = vmul.f32 %v3623, %v3639
      %v3653 = vmul.f32 %v3624, %v3643
      %v3654 = vmul.f32 %v3625, %v3639
      %v3655 = vmul.f32 %v3626, %v3643
      %v3656 = vmul.f32 %v3627, %v3639
      %v3657 = vmul.f32 %v3628, %v3643
      %v3658 = vmul.f32 %v3629, %v3639
      %v3659 = vmul.f32 %v3630, %v3643
      %v3660 = vmul.f32 %v3631, %v3639
      %v3661 = vmul.f32 %v3632, %v3643
      %v3662 = vadd.f32 %v3600, %v3646
      %v3663 = vadd.f32 %v3601, %v3647
      %v3664 = vadd.f32 %v3602, %v3648
      %v3665 = vadd.f32 %v3603, %v3649
      %v3666 = vadd.f32 %v3604, %v3650
      %v3667 = vadd.f32 %v3605, %v3651
      %v3668 = vadd.f32 %v3606, %v3652
      %v3669 = vadd.f32 %v3607, %v3653
      %v3670 = vadd.f32 %v3608, %v3654
      %v3671 = vadd.f32 %v3609, %v3655
      %v3672 = vadd.f32 %v3610, %v3656
      %v3673 = vadd.f32 %v3611, %v3657
      %v3674 = vadd.f32 %v3612, %v3658
      %v3675 = vadd.f32 %v3613, %v3659
      %v3676 = vadd.f32 %v3614, %v3660
      %v3677 = vadd.f32 %v3615, %v3661
      %v3678 = vld [vmem:[%s3616] sm:$0xf0]
      %v3679 = vld [vmem:[%s3616 + $0x8] sm:$0xf0]
      %v3680 = vld [vmem:[%s3616 + $0x10] sm:$0xf]
      %v3681 = vld [vmem:[%s3616 + $0x18] sm:$0xf]
      %v3682 = vld [vmem:[%s3616 + $0x20] sm:$0xf0]
      %v3683 = vld [vmem:[%s3616 + $0x28] sm:$0xf0]
      %v3684 = vld [vmem:[%s3616 + $0x30] sm:$0xf]
      %v3685 = vld [vmem:[%s3616 + $0x38] sm:$0xf]
      %v3686 = vld [vmem:[%s3616 + $0x40] sm:$0xf0]
      %v3687 = vld [vmem:[%s3616 + $0x48] sm:$0xf0]
      %v3688 = vld [vmem:[%s3616 + $0x50] sm:$0xf]
      %v3689 = vld [vmem:[%s3616 + $0x58] sm:$0xf]
      %v3690 = vld [vmem:[%s3616 + $0x60] sm:$0xf0]
      %v3691 = vld [vmem:[%s3616 + $0x68] sm:$0xf0]
      %v3692 = vld [vmem:[%s3616 + $0x70] sm:$0xf]
      %v3693 = vld [vmem:[%s3616 + $0x78] sm:$0xf]
      %v3694 = vld [vmem:[%s3616 + $0x80] sm:$0xf0]
      %v3695 = vld [vmem:[%s3616 + $0x88] sm:$0xf0]
      %v3696 = vld [vmem:[%s3616 + $0x90] sm:$0xf]
      %v3697 = vld [vmem:[%s3616 + $0x98] sm:$0xf]
      %v3698 = vld [vmem:[%s3616 + $0xa0] sm:$0xf0]
      %v3699 = vld [vmem:[%s3616 + $0xa8] sm:$0xf0]
      %v3700 = vld [vmem:[%s3616 + $0xb0] sm:$0xf]
      %v3701 = vld [vmem:[%s3616 + $0xb8] sm:$0xf]
      %v3702 = vld [vmem:[%s3616 + $0xc0] sm:$0xf0]
      %v3703 = vld [vmem:[%s3616 + $0xc8] sm:$0xf0]
      %v3704 = vld [vmem:[%s3616 + $0xd0] sm:$0xf]
      %v3705 = vld [vmem:[%s3616 + $0xd8] sm:$0xf]
      %v3706 = vld [vmem:[%s3616 + $0xe0] sm:$0xf0]
      %v3707 = vld [vmem:[%s3616 + $0xe8] sm:$0xf0]
      %v3708 = vld [vmem:[%s3616 + $0xf0] sm:$0xf]
      %v3709 = vld [vmem:[%s3616 + $0xf8] sm:$0xf]
      %s3710 = scalar_lea.vmem %s11, 14
      %v3711 = vld [vmem:[%s3710] sm:$0x3]
      %v3713 = vlaneseq
      %v3714 = vshrl.u32 %v3713, 7
      %v3715 = vsub.s32 0, %v3714
      %v3716 = vrot.slane %v3711, %v3715
      %v3717 = vlaneseq
      %v3718 = vshrl.u32 %v3717, 7
      %v3719 = vsub.s32 1, %v3718
      %v3720 = vrot.slane %v3711, %v3719
      %v3723 = vmul.f32 %v3678, %v3716
      %v3724 = vmul.f32 %v3679, %v3720
      %v3725 = vmul.f32 %v3680, %v3716
      %v3726 = vmul.f32 %v3681, %v3720
      %v3727 = vmul.f32 %v3682, %v3716
      %v3728 = vmul.f32 %v3683, %v3720
      %v3729 = vmul.f32 %v3684, %v3716
      %v3730 = vmul.f32 %v3685, %v3720
      %v3731 = vmul.f32 %v3686, %v3716
      %v3732 = vmul.f32 %v3687, %v3720
      %v3733 = vmul.f32 %v3688, %v3716
      %v3734 = vmul.f32 %v3689, %v3720
      %v3735 = vmul.f32 %v3690, %v3716
      %v3736 = vmul.f32 %v3691, %v3720
      %v3737 = vmul.f32 %v3692, %v3716
      %v3738 = vmul.f32 %v3693, %v3720
      %v3739 = vmul.f32 %v3694, %v3716
      %v3740 = vmul.f32 %v3695, %v3720
      %v3741 = vmul.f32 %v3696, %v3716
      %v3742 = vmul.f32 %v3697, %v3720
      %v3743 = vmul.f32 %v3698, %v3716
      %v3744 = vmul.f32 %v3699, %v3720
      %v3745 = vmul.f32 %v3700, %v3716
      %v3746 = vmul.f32 %v3701, %v3720
      %v3747 = vmul.f32 %v3702, %v3716
      %v3748 = vmul.f32 %v3703, %v3720
      %v3749 = vmul.f32 %v3704, %v3716
      %v3750 = vmul.f32 %v3705, %v3720
      %v3751 = vmul.f32 %v3706, %v3716
      %v3752 = vmul.f32 %v3707, %v3720
      %v3753 = vmul.f32 %v3708, %v3716
      %v3754 = vmul.f32 %v3709, %v3720
      %v3787 = vrot.slane %v3723, 4
      %v3788 = vrot.slane %v3725, 4
      %v3789 = vsel %vm1340, %v3787, %v3788
      %v3790 = vrot.slane %v3724, 4
      %v3791 = vrot.slane %v3726, 4
      %v3792 = vsel %vm1340, %v3790, %v3791
      %v3793 = vrot.slane %v3727, 4
      %v3794 = vrot.slane %v3729, 4
      %v3795 = vsel %vm1340, %v3793, %v3794
      %v3796 = vrot.slane %v3728, 4
      %v3797 = vrot.slane %v3730, 4
      %v3798 = vsel %vm1340, %v3796, %v3797
      %v3799 = vrot.slane %v3731, 4
      %v3800 = vrot.slane %v3733, 4
      %v3801 = vsel %vm1340, %v3799, %v3800
      %v3802 = vrot.slane %v3732, 4
      %v3803 = vrot.slane %v3734, 4
      %v3804 = vsel %vm1340, %v3802, %v3803
      %v3805 = vrot.slane %v3735, 4
      %v3806 = vrot.slane %v3737, 4
      %v3807 = vsel %vm1340, %v3805, %v3806
      %v3808 = vrot.slane %v3736, 4
      %v3809 = vrot.slane %v3738, 4
      %v3810 = vsel %vm1340, %v3808, %v3809
      %v3811 = vrot.slane %v3739, 4
      %v3812 = vrot.slane %v3741, 4
      %v3813 = vsel %vm1340, %v3811, %v3812
      %v3814 = vrot.slane %v3740, 4
      %v3815 = vrot.slane %v3742, 4
      %v3816 = vsel %vm1340, %v3814, %v3815
      %v3817 = vrot.slane %v3743, 4
      %v3818 = vrot.slane %v3745, 4
      %v3819 = vsel %vm1340, %v3817, %v3818
      %v3820 = vrot.slane %v3744, 4
      %v3821 = vrot.slane %v3746, 4
      %v3822 = vsel %vm1340, %v3820, %v3821
      %v3823 = vrot.slane %v3747, 4
      %v3824 = vrot.slane %v3749, 4
      %v3825 = vsel %vm1340, %v3823, %v3824
      %v3826 = vrot.slane %v3748, 4
      %v3827 = vrot.slane %v3750, 4
      %v3828 = vsel %vm1340, %v3826, %v3827
      %v3829 = vrot.slane %v3751, 4
      %v3830 = vrot.slane %v3753, 4
      %v3831 = vsel %vm1340, %v3829, %v3830
      %v3832 = vrot.slane %v3752, 4
      %v3833 = vrot.slane %v3754, 4
      %v3834 = vsel %vm1340, %v3832, %v3833
      %v3851 = vadd.f32 %v3662, %v3789
      %v3852 = vadd.f32 %v3663, %v3792
      %v3853 = vadd.f32 %v3664, %v3795
      %v3854 = vadd.f32 %v3665, %v3798
      %v3855 = vadd.f32 %v3666, %v3801
      %v3856 = vadd.f32 %v3667, %v3804
      %v3857 = vadd.f32 %v3668, %v3807
      %v3858 = vadd.f32 %v3669, %v3810
      %v3859 = vadd.f32 %v3670, %v3813
      %v3860 = vadd.f32 %v3671, %v3816
      %v3861 = vadd.f32 %v3672, %v3819
      %v3862 = vadd.f32 %v3673, %v3822
      %v3863 = vadd.f32 %v3674, %v3825
      %v3864 = vadd.f32 %v3675, %v3828
      %v3865 = vadd.f32 %v3676, %v3831
      %v3866 = vadd.f32 %v3677, %v3834
      %v3867 = vld [vmem:[%s3616 + $0x10] sm:$0xff]
      %v3868 = vld [vmem:[%s3616 + $0x18] sm:$0xff]
      %v3869 = vld [vmem:[%s3616 + $0x30] sm:$0xff]
      %v3870 = vld [vmem:[%s3616 + $0x38] sm:$0xff]
      %v3871 = vld [vmem:[%s3616 + $0x50] sm:$0xff]
      %v3872 = vld [vmem:[%s3616 + $0x58] sm:$0xff]
      %v3873 = vld [vmem:[%s3616 + $0x70] sm:$0xff]
      %v3874 = vld [vmem:[%s3616 + $0x78] sm:$0xff]
      %v3875 = vld [vmem:[%s3616 + $0x90] sm:$0xff]
      %v3876 = vld [vmem:[%s3616 + $0x98] sm:$0xff]
      %v3877 = vld [vmem:[%s3616 + $0xb0] sm:$0xff]
      %v3878 = vld [vmem:[%s3616 + $0xb8] sm:$0xff]
      %v3879 = vld [vmem:[%s3616 + $0xd0] sm:$0xff]
      %v3880 = vld [vmem:[%s3616 + $0xd8] sm:$0xff]
      %v3881 = vld [vmem:[%s3616 + $0xf0] sm:$0xff]
      %v3882 = vld [vmem:[%s3616 + $0xf8] sm:$0xff]
      %s3883 = scalar_lea.vmem %s11, 16
      %v3884 = vld [vmem:[%s3883] sm:$0x3]
      %v3886 = vlaneseq
      %v3887 = vshrl.u32 %v3886, 7
      %v3888 = vsub.s32 0, %v3887
      %v3889 = vrot.slane %v3884, %v3888
      %v3890 = vlaneseq
      %v3891 = vshrl.u32 %v3890, 7
      %v3892 = vsub.s32 1, %v3891
      %v3893 = vrot.slane %v3884, %v3892
      %v3896 = vmul.f32 %v3867, %v3889
      %v3897 = vmul.f32 %v3868, %v3893
      %v3898 = vmul.f32 %v3869, %v3889
      %v3899 = vmul.f32 %v3870, %v3893
      %v3900 = vmul.f32 %v3871, %v3889
      %v3901 = vmul.f32 %v3872, %v3893
      %v3902 = vmul.f32 %v3873, %v3889
      %v3903 = vmul.f32 %v3874, %v3893
      %v3904 = vmul.f32 %v3875, %v3889
      %v3905 = vmul.f32 %v3876, %v3893
      %v3906 = vmul.f32 %v3877, %v3889
      %v3907 = vmul.f32 %v3878, %v3893
      %v3908 = vmul.f32 %v3879, %v3889
      %v3909 = vmul.f32 %v3880, %v3893
      %v3910 = vmul.f32 %v3881, %v3889
      %v3911 = vmul.f32 %v3882, %v3893
      %v3912 = vadd.f32 %v3851, %v3896
      %v3913 = vadd.f32 %v3852, %v3897
      %v3914 = vadd.f32 %v3853, %v3898
      %v3915 = vadd.f32 %v3854, %v3899
      %v3916 = vadd.f32 %v3855, %v3900
      %v3917 = vadd.f32 %v3856, %v3901
      %v3918 = vadd.f32 %v3857, %v3902
      %v3919 = vadd.f32 %v3858, %v3903
      %v3920 = vadd.f32 %v3859, %v3904
      %v3921 = vadd.f32 %v3860, %v3905
      %v3922 = vadd.f32 %v3861, %v3906
      %v3923 = vadd.f32 %v3862, %v3907
      %v3924 = vadd.f32 %v3863, %v3908
      %v3925 = vadd.f32 %v3864, %v3909
      %v3926 = vadd.f32 %v3865, %v3910
      %v3927 = vadd.f32 %v3866, %v3911
      %v3928 = vmul.f32 %v3912, 0.1
      %v3929 = vmul.f32 %v3913, 0.1
      %v3930 = vmul.f32 %v3914, 0.1
      %v3931 = vmul.f32 %v3915, 0.1
      %v3932 = vmul.f32 %v3916, 0.1
      %v3933 = vmul.f32 %v3917, 0.1
      %v3934 = vmul.f32 %v3918, 0.1
      %v3935 = vmul.f32 %v3919, 0.1
      %v3936 = vmul.f32 %v3920, 0.1
      %v3937 = vmul.f32 %v3921, 0.1
      %v3938 = vmul.f32 %v3922, 0.1
      %v3939 = vmul.f32 %v3923, 0.1
      %v3940 = vmul.f32 %v3924, 0.1
      %v3941 = vmul.f32 %v3925, 0.1
      %v3942 = vmul.f32 %v3926, 0.1
      %v3943 = vmul.f32 %v3927, 0.1
      %v3944 = vmax.f32 %v3912, %v3928
      %v3945 = vmax.f32 %v3913, %v3929
      %v3946 = vmax.f32 %v3914, %v3930
      %v3947 = vmax.f32 %v3915, %v3931
      %v3948 = vmax.f32 %v3916, %v3932
      %v3949 = vmax.f32 %v3917, %v3933
      %v3950 = vmax.f32 %v3918, %v3934
      %v3951 = vmax.f32 %v3919, %v3935
      %v3952 = vmax.f32 %v3920, %v3936
      %v3953 = vmax.f32 %v3921, %v3937
      %v3954 = vmax.f32 %v3922, %v3938
      %v3955 = vmax.f32 %v3923, %v3939
      %v3956 = vmax.f32 %v3924, %v3940
      %v3957 = vmax.f32 %v3925, %v3941
      %v3958 = vmax.f32 %v3926, %v3942
      %v3959 = vmax.f32 %v3927, %v3943
      %v3960 = vpack.c.bf16 %v3946, %v3944
      %v3961 = vpack.c.bf16 %v3947, %v3945
      %v3962 = vpack.c.bf16 %v3950, %v3948
      %v3963 = vpack.c.bf16 %v3951, %v3949
      %v3964 = vpack.c.bf16 %v3954, %v3952
      %v3965 = vpack.c.bf16 %v3955, %v3953
      %v3966 = vpack.c.bf16 %v3958, %v3956
      %v3967 = vpack.c.bf16 %v3959, %v3957
      %v3968 = vld [vmem:[%s12] sm:$0xff]
      %v3969 = vld [vmem:[%s12 + $0x8] sm:$0xff]
      %v3970 = vld [vmem:[%s12 + $0x10] sm:$0xff]
      %v3971 = vld [vmem:[%s12 + $0x18] sm:$0xff]
      %v3972 = vld [vmem:[%s12 + $0x20] sm:$0xff]
      %v3973 = vld [vmem:[%s12 + $0x28] sm:$0xff]
      %v3974 = vld [vmem:[%s12 + $0x30] sm:$0xff]
      %v3975 = vld [vmem:[%s12 + $0x38] sm:$0xff]
      %v3976 = vld [vmem:[%s12 + $0x40] sm:$0xff]
      %v3977 = vld [vmem:[%s12 + $0x48] sm:$0xff]
      %v3978 = vld [vmem:[%s12 + $0x50] sm:$0xff]
      %v3979 = vld [vmem:[%s12 + $0x58] sm:$0xff]
      %v3980 = vld [vmem:[%s12 + $0x60] sm:$0xff]
      %v3981 = vld [vmem:[%s12 + $0x68] sm:$0xff]
      %v3982 = vld [vmem:[%s12 + $0x70] sm:$0xff]
      %v3983 = vld [vmem:[%s12 + $0x78] sm:$0xff]
      %v3984 = vld [vmem:[%s12 + $0x80] sm:$0xff]
      %v3985 = vld [vmem:[%s12 + $0x88] sm:$0xff]
      %v3986 = vld [vmem:[%s12 + $0x90] sm:$0xff]
      %v3987 = vld [vmem:[%s12 + $0x98] sm:$0xff]
      %v3988 = vld [vmem:[%s12 + $0xa0] sm:$0xff]
      %v3989 = vld [vmem:[%s12 + $0xa8] sm:$0xff]
      %v3990 = vld [vmem:[%s12 + $0xb0] sm:$0xff]
      %v3991 = vld [vmem:[%s12 + $0xb8] sm:$0xff]
      %v4016 = vunpack.c.l.b16 %v3968
      %v4017 = vunpack.c.h.b16 %v3968
      %v4018 = vunpack.c.l.b16 %v3969
      %v4019 = vunpack.c.h.b16 %v3969
      %v4020 = vunpack.c.l.b16 %v3970
      %v4021 = vunpack.c.h.b16 %v3970
      %v4022 = vunpack.c.l.b16 %v3971
      %v4023 = vunpack.c.h.b16 %v3971
      %v4024 = vunpack.c.l.b16 %v3972
      %v4025 = vunpack.c.h.b16 %v3972
      %v4026 = vunpack.c.l.b16 %v3973
      %v4027 = vunpack.c.h.b16 %v3973
      %v4028 = vunpack.c.l.b16 %v3974
      %v4029 = vunpack.c.h.b16 %v3974
      %v4030 = vunpack.c.l.b16 %v3975
      %v4031 = vunpack.c.h.b16 %v3975
      %v4032 = vunpack.c.l.b16 %v3976
      %v4033 = vunpack.c.h.b16 %v3976
      %v4034 = vunpack.c.l.b16 %v3977
      %v4035 = vunpack.c.h.b16 %v3977
      %v4036 = vunpack.c.l.b16 %v3978
      %v4037 = vunpack.c.h.b16 %v3978
      %v4038 = vunpack.c.l.b16 %v3979
      %v4039 = vunpack.c.h.b16 %v3979
      %v4040 = vunpack.c.l.b16 %v3980
      %v4041 = vunpack.c.h.b16 %v3980
      %v4042 = vunpack.c.l.b16 %v3981
      %v4043 = vunpack.c.h.b16 %v3981
      %v4044 = vunpack.c.l.b16 %v3982
      %v4045 = vunpack.c.h.b16 %v3982
      %v4046 = vunpack.c.l.b16 %v3983
      %v4047 = vunpack.c.h.b16 %v3983
      %v4048 = vunpack.c.l.b16 %v3984
      %v4049 = vunpack.c.h.b16 %v3984
      %v4050 = vunpack.c.l.b16 %v3985
      %v4051 = vunpack.c.h.b16 %v3985
      %v4052 = vunpack.c.l.b16 %v3986
      %v4053 = vunpack.c.h.b16 %v3986
      %v4054 = vunpack.c.l.b16 %v3987
      %v4055 = vunpack.c.h.b16 %v3987
      %v4056 = vunpack.c.l.b16 %v3988
      %v4057 = vunpack.c.h.b16 %v3988
      %v4058 = vunpack.c.l.b16 %v3989
      %v4059 = vunpack.c.h.b16 %v3989
      %v4060 = vunpack.c.l.b16 %v3990
      %v4061 = vunpack.c.h.b16 %v3990
      %v4062 = vunpack.c.l.b16 %v3991
      %v4063 = vunpack.c.h.b16 %v3991
      %v4064 = vpack.c.b16 %v4018, %v4016
      %v4065 = vpack.c.b16 %v4019, %v4017
      %v4066 = vpack.c.b16 %v4022, %v4020
      %v4067 = vpack.c.b16 %v4023, %v4021
      %v4068 = vpack.c.b16 %v4026, %v4024
      %v4069 = vpack.c.b16 %v4027, %v4025
      %v4070 = vpack.c.b16 %v4030, %v4028
      %v4071 = vpack.c.b16 %v4031, %v4029
      %v4072 = vpack.c.b16 %v4034, %v4032
      %v4073 = vpack.c.b16 %v4035, %v4033
      %v4074 = vpack.c.b16 %v4038, %v4036
      %v4075 = vpack.c.b16 %v4039, %v4037
      %v4076 = vpack.c.b16 %v4042, %v4040
      %v4077 = vpack.c.b16 %v4043, %v4041
      %v4078 = vpack.c.b16 %v4046, %v4044
      %v4079 = vpack.c.b16 %v4047, %v4045
      %v4080 = vpack.c.b16 %v4050, %v4048
      %v4081 = vpack.c.b16 %v4051, %v4049
      %v4082 = vpack.c.b16 %v4054, %v4052
      %v4083 = vpack.c.b16 %v4055, %v4053
      %v4084 = vpack.c.b16 %v4058, %v4056
      %v4085 = vpack.c.b16 %v4059, %v4057
      %v4086 = vpack.c.b16 %v4062, %v4060
      %v4087 = vpack.c.b16 %v4063, %v4061
      %v4113 = vsel %vm2864, %v3961, 0
      %v4116 = vsel %vm2864, %v3963, 0
      %v4119 = vsel %vm2864, %v3965, 0
      %v4122 = vsel %vm2864, %v3967, 0
      %4124 = vmatprep.subr.bf16.mxu0 %v4065
      %4125 = vmatpush1.bf16.msra.mxu0 %v4064
      %4126 = vmatprep.subr.bf16.mxu0 %v4067
      %4127 = vmatpush1.bf16.msra.mxu0 %v4066
      %4128 = vmatprep.subr.bf16.mxu0 %v4069
      %4129 = vmatpush1.bf16.msra.mxu0 %v4068
      %4130 = vmatprep.subr.bf16.mxu0 %v4071
      %4131 = vmatpush1.bf16.msra.mxu0 %v4070
      %4132 = vmatprep.subr.bf16.mxu0 %v4073
      %4133 = vmatpush1.bf16.msra.mxu0 %v4072
      %4134 = vmatprep.subr.bf16.mxu0 %v4075
      %4135 = vmatpush1.bf16.msra.mxu0 %v4074
      %4136 = vmatprep.subr.bf16.mxu0 %v4077
      %4137 = vmatpush1.bf16.msra.mxu0 %v4076
      %4138 = vmatprep.subr.bf16.mxu0 %v4079
      %4139 = vmatpush1.bf16.msra.mxu0 %v4078
      %4140 = vmatprep.subr.bf16.mxu0 %v4081
      %4141 = vmatpush1.bf16.msra.mxu0 %v4080
      %4142 = vmatprep.subr.bf16.mxu0 %v4083
      %4143 = vmatpush1.bf16.msra.mxu0 %v4082
      %4144 = vmatprep.subr.bf16.mxu0 %v4085
      %4145 = vmatpush1.bf16.msra.mxu0 %v4084
      %4146 = vmatprep.subr.bf16.mxu0 %v4087
      %4147 = vmatpush1.bf16.msra.mxu0 %v4086
      %4148 = vmatprep.subr.bf16.mxu0 0
      %4149 = vmatpush1.bf16.msra.mxu0 0
      %4150 = vmatprep.subr.bf16.mxu0 0
      %4151 = vmatpush1.bf16.msra.mxu0 0
      %4152 = vmatprep.subr.bf16.mxu0 0
      %4153 = vmatpush1.bf16.msra.mxu0 0
      %4154 = vmatprep.subr.bf16.mxu0 0
      %4155 = vmatpush1.bf16.msra.mxu0 0
      %4156 = vmatprep.mubr.bf16.mxu0 %v4113
      %4157 = vmatmul.mubr.bf16.gmra.mrb[0].mxu0 %v3960
      %v4158 = vpop.f32.mrb[0].mxu0
      %v4159 = vadd.f32 0.0, %v4158
      %v4160 = vpop.f32.mrb[0].mxu0
      %v4161 = vadd.f32 0.0, %v4160
      %v4162 = vpop.f32.mrb[0].mxu0
      %v4163 = vadd.f32 0.0, %v4162
      %v4164 = vpop.f32.mrb[0].mxu0
      %v4165 = vadd.f32 0.0, %v4164
      %4166 = vmatprep.mubr.bf16.mxu0 %v4116
      %4167 = vmatmul.mubr.bf16.gmra.mrb[0].mxu0 %v3962
      %v4168 = vpop.f32.mrb[0].mxu0
      %v4169 = vadd.f32 0.0, %v4168
      %v4170 = vpop.f32.mrb[0].mxu0
      %v4171 = vadd.f32 0.0, %v4170
      %v4172 = vpop.f32.mrb[0].mxu0
      %v4173 = vadd.f32 0.0, %v4172
      %v4174 = vpop.f32.mrb[0].mxu0
      %v4175 = vadd.f32 0.0, %v4174
      %4176 = vmatprep.mubr.bf16.mxu0 %v4119
      %4177 = vmatmul.mubr.bf16.gmra.mrb[0].mxu0 %v3964
      %v4178 = vpop.f32.mrb[0].mxu0
      %v4179 = vadd.f32 0.0, %v4178
      %v4180 = vpop.f32.mrb[0].mxu0
      %v4181 = vadd.f32 0.0, %v4180
      %v4182 = vpop.f32.mrb[0].mxu0
      %v4183 = vadd.f32 0.0, %v4182
      %v4184 = vpop.f32.mrb[0].mxu0
      %v4185 = vadd.f32 0.0, %v4184
      %4186 = vmatprep.mubr.bf16.mxu0 %v4122
      %4187 = vmatmul.mubr.bf16.gmra.mrb[0].mxu0 %v3966
      %v4188 = vpop.f32.mrb[0].mxu0
      %v4189 = vadd.f32 0.0, %v4188
      %v4190 = vpop.f32.mrb[0].mxu0
      %v4191 = vadd.f32 0.0, %v4190
      %v4192 = vpop.f32.mrb[0].mxu0
      %v4193 = vadd.f32 0.0, %v4192
      %v4194 = vpop.f32.mrb[0].mxu0
      %v4195 = vadd.f32 0.0, %v4194
      %4196 = vdwg.mxu0
      %v4197 = vmul.f32 %v4159, 0.1
      %v4198 = vmul.f32 %v4161, 0.1
      %v4199 = vmul.f32 %v4163, 0.1
      %v4200 = vmul.f32 %v4165, 0.1
      %v4201 = vmul.f32 %v4169, 0.1
      %v4202 = vmul.f32 %v4171, 0.1
      %v4203 = vmul.f32 %v4173, 0.1
      %v4204 = vmul.f32 %v4175, 0.1
      %v4205 = vmul.f32 %v4179, 0.1
      %v4206 = vmul.f32 %v4181, 0.1
      %v4207 = vmul.f32 %v4183, 0.1
      %v4208 = vmul.f32 %v4185, 0.1
      %v4209 = vmul.f32 %v4189, 0.1
      %v4210 = vmul.f32 %v4191, 0.1
      %v4211 = vmul.f32 %v4193, 0.1
      %v4212 = vmul.f32 %v4195, 0.1
      %v4213 = vmax.f32 %v4159, %v4197
      %v4214 = vmax.f32 %v4161, %v4198
      %v4215 = vmax.f32 %v4163, %v4199
      %v4216 = vmax.f32 %v4165, %v4200
      %v4217 = vmax.f32 %v4169, %v4201
      %v4218 = vmax.f32 %v4171, %v4202
      %v4219 = vmax.f32 %v4173, %v4203
      %v4220 = vmax.f32 %v4175, %v4204
      %v4221 = vmax.f32 %v4179, %v4205
      %v4222 = vmax.f32 %v4181, %v4206
      %v4223 = vmax.f32 %v4183, %v4207
      %v4224 = vmax.f32 %v4185, %v4208
      %v4225 = vmax.f32 %v4189, %v4209
      %v4226 = vmax.f32 %v4191, %v4210
      %v4227 = vmax.f32 %v4193, %v4211
      %v4228 = vmax.f32 %v4195, %v4212
      %4229 = vst [vmem:[#allocation7] sm:$0xff] 0.0
      %4230 = vst.msk [vmem:[#allocation7 + $0x8] sm:$0xff] %vm2864, 0.0
      %4231 = vst [vmem:[#allocation7 + $0x10] sm:$0x3] 0.0
      %vm4232 = vcmask 517120
      %4233 = vst.msk [vmem:[#allocation7 + $0x18] sm:$0x3] %vm4232, 0.0
      %4234 = vst [vmem:[#allocation7 + $0x20] sm:$0xff] 0.0
      %4235 = vst.msk [vmem:[#allocation7 + $0x28] sm:$0xff] %vm2864, 0.0
      %4236 = vst [vmem:[#allocation7 + $0x30] sm:$0x3] 0.0
      %4237 = vst.msk [vmem:[#allocation7 + $0x38] sm:$0x3] %vm4232, 0.0
      %4238 = vst [vmem:[#allocation7 + $0x40] sm:$0xff] 0.0
      %4239 = vst.msk [vmem:[#allocation7 + $0x48] sm:$0xff] %vm2864, 0.0
      %4240 = vst [vmem:[#allocation7 + $0x50] sm:$0x3] 0.0
      %4241 = vst.msk [vmem:[#allocation7 + $0x58] sm:$0x3] %vm4232, 0.0
      %4242 = vst [vmem:[#allocation7 + $0x60] sm:$0xff] 0.0
      %4243 = vst.msk [vmem:[#allocation7 + $0x68] sm:$0xff] %vm2864, 0.0
      %4244 = vst [vmem:[#allocation7 + $0x70] sm:$0x3] 0.0
      %4245 = vst.msk [vmem:[#allocation7 + $0x78] sm:$0x3] %vm4232, 0.0
      %4246 = vst [vmem:[#allocation7 + $0x80] sm:$0xff] 0.0
      %4247 = vst.msk [vmem:[#allocation7 + $0x88] sm:$0xff] %vm2864, 0.0
      %4248 = vst [vmem:[#allocation7 + $0x90] sm:$0x3] 0.0
      %4249 = vst.msk [vmem:[#allocation7 + $0x98] sm:$0x3] %vm4232, 0.0
      %4250 = vst [vmem:[#allocation7 + $0xa0] sm:$0xff] 0.0
      %4251 = vst.msk [vmem:[#allocation7 + $0xa8] sm:$0xff] %vm2864, 0.0
      %4252 = vst [vmem:[#allocation7 + $0xb0] sm:$0x3] 0.0
      %4253 = vst.msk [vmem:[#allocation7 + $0xb8] sm:$0x3] %vm4232, 0.0
      %4254 = vst [vmem:[#allocation7 + $0xc0] sm:$0xff] 0.0
      %4255 = vst.msk [vmem:[#allocation7 + $0xc8] sm:$0xff] %vm2864, 0.0
      %4256 = vst [vmem:[#allocation7 + $0xd0] sm:$0x3] 0.0
      %4257 = vst.msk [vmem:[#allocation7 + $0xd8] sm:$0x3] %vm4232, 0.0
      %4258 = vst [vmem:[#allocation7 + $0xe0] sm:$0xff] 0.0
      %4259 = vst.msk [vmem:[#allocation7 + $0xe8] sm:$0xff] %vm2864, 0.0
      %4260 = vst [vmem:[#allocation7 + $0xf0] sm:$0x3] 0.0
      %4261 = vst.msk [vmem:[#allocation7 + $0xf8] sm:$0x3] %vm4232, 0.0
      %4262 = vst [vmem:[#allocation7 + $0x100] sm:$0xff] 0.0
      %4263 = vst.msk [vmem:[#allocation7 + $0x108] sm:$0xff] %vm2864, 0.0
      %4264 = vst [vmem:[#allocation7 + $0x110] sm:$0x3] 0.0
      %4265 = vst.msk [vmem:[#allocation7 + $0x118] sm:$0x3] %vm4232, 0.0
      %4266 = vst [vmem:[#allocation7 + $0x120] sm:$0xff] 0.0
      %4267 = vst.msk [vmem:[#allocation7 + $0x128] sm:$0xff] %vm2864, 0.0
      %4268 = vst [vmem:[#allocation7 + $0x130] sm:$0x3] 0.0
      %4269 = vst.msk [vmem:[#allocation7 + $0x138] sm:$0x3] %vm4232, 0.0
      %v4286 = vrot.slane %v4213, 7
      %v4287 = vrot.slane %v4214, 7
      %v4288 = vrot.slane %v4215, 7
      %v4289 = vrot.slane %v4216, 7
      %v4290 = vrot.slane %v4217, 7
      %v4291 = vrot.slane %v4218, 7
      %v4292 = vrot.slane %v4219, 7
      %v4293 = vrot.slane %v4220, 7
      %v4294 = vrot.slane %v4221, 7
      %v4295 = vrot.slane %v4222, 7
      %v4296 = vrot.slane %v4223, 7
      %v4297 = vrot.slane %v4224, 7
      %v4298 = vrot.slane %v4225, 7
      %v4299 = vrot.slane %v4226, 7
      %v4300 = vrot.slane %v4227, 7
      %v4301 = vrot.slane %v4228, 7
      %s4318 = scalar_lea.vmem [#allocation7], 32
      %4319 = vst [vmem:[%s4318] sm:$0xfe] %v4286
      %vm4320 = vcmask 523265
      %4321 = vst.msk [vmem:[%s4318 + $0x8] sm:$0xfe] %vm4320, %v4287
      %4322 = vst [vmem:[%s4318 + $0x10] sm:$0x1] %v4286
      %vm4323 = vcmask 516096
      %4324 = vst.msk [vmem:[%s4318 + $0x18] sm:$0x1] %vm4323, %v4287
      %4325 = vst [vmem:[%s4318 + $0x20] sm:$0xfe] %v4288
      %4326 = vst.msk [vmem:[%s4318 + $0x28] sm:$0xfe] %vm4320, %v4289
      %4327 = vst [vmem:[%s4318 + $0x30] sm:$0x1] %v4288
      %4328 = vst.msk [vmem:[%s4318 + $0x38] sm:$0x1] %vm4323, %v4289
      %4329 = vst [vmem:[%s4318 + $0x40] sm:$0xfe] %v4290
      %4330 = vst.msk [vmem:[%s4318 + $0x48] sm:$0xfe] %vm4320, %v4291
      %4331 = vst [vmem:[%s4318 + $0x50] sm:$0x1] %v4290
      %4332 = vst.msk [vmem:[%s4318 + $0x58] sm:$0x1] %vm4323, %v4291
      %4333 = vst [vmem:[%s4318 + $0x60] sm:$0xfe] %v4292
      %4334 = vst.msk [vmem:[%s4318 + $0x68] sm:$0xfe] %vm4320, %v4293
      %4335 = vst [vmem:[%s4318 + $0x70] sm:$0x1] %v4292
      %4336 = vst.msk [vmem:[%s4318 + $0x78] sm:$0x1] %vm4323, %v4293
      %4337 = vst [vmem:[%s4318 + $0x80] sm:$0xfe] %v4294
      %4338 = vst.msk [vmem:[%s4318 + $0x88] sm:$0xfe] %vm4320, %v4295
      %4339 = vst [vmem:[%s4318 + $0x90] sm:$0x1] %v4294
      %4340 = vst.msk [vmem:[%s4318 + $0x98] sm:$0x1] %vm4323, %v4295
      %4341 = vst [vmem:[%s4318 + $0xa0] sm:$0xfe] %v4296
      %4342 = vst.msk [vmem:[%s4318 + $0xa8] sm:$0xfe] %vm4320, %v4297
      %4343 = vst [vmem:[%s4318 + $0xb0] sm:$0x1] %v4296
      %4344 = vst.msk [vmem:[%s4318 + $0xb8] sm:$0x1] %vm4323, %v4297
      %4345 = vst [vmem:[%s4318 + $0xc0] sm:$0xfe] %v4298
      %4346 = vst.msk [vmem:[%s4318 + $0xc8] sm:$0xfe] %vm4320, %v4299
      %4347 = vst [vmem:[%s4318 + $0xd0] sm:$0x1] %v4298
      %4348 = vst.msk [vmem:[%s4318 + $0xd8] sm:$0x1] %vm4323, %v4299
      %4349 = vst [vmem:[%s4318 + $0xe0] sm:$0xfe] %v4300
      %4350 = vst.msk [vmem:[%s4318 + $0xe8] sm:$0xfe] %vm4320, %v4301
      %4351 = vst [vmem:[%s4318 + $0xf0] sm:$0x1] %v4300
      %4352 = vst.msk [vmem:[%s4318 + $0xf8] sm:$0x1] %vm4323, %v4301
      %v4353 = vld [vmem:[#allocation7] sm:$0xff]
      %v4354 = vld [vmem:[#allocation7 + $0x8] sm:$0xff]
      %v4355 = vld [vmem:[#allocation7 + $0x20] sm:$0xff]
      %v4356 = vld [vmem:[#allocation7 + $0x28] sm:$0xff]
      %v4357 = vld [vmem:[#allocation7 + $0x40] sm:$0xff]
      %v4358 = vld [vmem:[#allocation7 + $0x48] sm:$0xff]
      %v4359 = vld [vmem:[#allocation7 + $0x60] sm:$0xff]
      %v4360 = vld [vmem:[#allocation7 + $0x68] sm:$0xff]
      %v4361 = vld [vmem:[#allocation7 + $0x80] sm:$0xff]
      %v4362 = vld [vmem:[#allocation7 + $0x88] sm:$0xff]
      %v4363 = vld [vmem:[#allocation7 + $0xa0] sm:$0xff]
      %v4364 = vld [vmem:[#allocation7 + $0xa8] sm:$0xff]
      %v4365 = vld [vmem:[#allocation7 + $0xc0] sm:$0xff]
      %v4366 = vld [vmem:[#allocation7 + $0xc8] sm:$0xff]
      %v4367 = vld [vmem:[#allocation7 + $0xe0] sm:$0xff]
      %v4368 = vld [vmem:[#allocation7 + $0xe8] sm:$0xff]
      %v4369 = vld [vmem:[%s13] sm:$0x3]
      %v4371 = vlaneseq
      %v4372 = vshrl.u32 %v4371, 7
      %v4373 = vsub.s32 0, %v4372
      %v4374 = vrot.slane %v4369, %v4373
      %v4375 = vlaneseq
      %v4376 = vshrl.u32 %v4375, 7
      %v4377 = vsub.s32 1, %v4376
      %v4378 = vrot.slane %v4369, %v4377
      %v4381 = vmul.f32 %v4353, %v4374
      %v4382 = vmul.f32 %v4354, %v4378
      %v4383 = vmul.f32 %v4355, %v4374
      %v4384 = vmul.f32 %v4356, %v4378
      %v4385 = vmul.f32 %v4357, %v4374
      %v4386 = vmul.f32 %v4358, %v4378
      %v4387 = vmul.f32 %v4359, %v4374
      %v4388 = vmul.f32 %v4360, %v4378
      %v4389 = vmul.f32 %v4361, %v4374
      %v4390 = vmul.f32 %v4362, %v4378
      %v4391 = vmul.f32 %v4363, %v4374
      %v4392 = vmul.f32 %v4364, %v4378
      %v4393 = vmul.f32 %v4365, %v4374
      %v4394 = vmul.f32 %v4366, %v4378
      %v4395 = vmul.f32 %v4367, %v4374
      %v4396 = vmul.f32 %v4368, %v4378
      %v4397 = vld [vmem:[#allocation7] sm:$0xfe]
      %v4398 = vld [vmem:[#allocation7 + $0x8] sm:$0xfe]
      %v4399 = vld [vmem:[#allocation7 + $0x10] sm:$0x1]
      %v4400 = vld [vmem:[#allocation7 + $0x18] sm:$0x1]
      %v4401 = vld [vmem:[#allocation7 + $0x20] sm:$0xfe]
      %v4402 = vld [vmem:[#allocation7 + $0x28] sm:$0xfe]
      %v4403 = vld [vmem:[#allocation7 + $0x30] sm:$0x1]
      %v4404 = vld [vmem:[#allocation7 + $0x38] sm:$0x1]
      %v4405 = vld [vmem:[#allocation7 + $0x40] sm:$0xfe]
      %v4406 = vld [vmem:[#allocation7 + $0x48] sm:$0xfe]
      %v4407 = vld [vmem:[#allocation7 + $0x50] sm:$0x1]
      %v4408 = vld [vmem:[#allocation7 + $0x58] sm:$0x1]
      %v4409 = vld [vmem:[#allocation7 + $0x60] sm:$0xfe]
      %v4410 = vld [vmem:[#allocation7 + $0x68] sm:$0xfe]
      %v4411 = vld [vmem:[#allocation7 + $0x70] sm:$0x1]
      %v4412 = vld [vmem:[#allocation7 + $0x78] sm:$0x1]
      %v4413 = vld [vmem:[#allocation7 + $0x80] sm:$0xfe]
      %v4414 = vld [vmem:[#allocation7 + $0x88] sm:$0xfe]
      %v4415 = vld [vmem:[#allocation7 + $0x90] sm:$0x1]
      %v4416 = vld [vmem:[#allocation7 + $0x98] sm:$0x1]
      %v4417 = vld [vmem:[#allocation7 + $0xa0] sm:$0xfe]
      %v4418 = vld [vmem:[#allocation7 + $0xa8] sm:$0xfe]
      %v4419 = vld [vmem:[#allocation7 + $0xb0] sm:$0x1]
      %v4420 = vld [vmem:[#allocation7 + $0xb8] sm:$0x1]
      %v4421 = vld [vmem:[#allocation7 + $0xc0] sm:$0xfe]
      %v4422 = vld [vmem:[#allocation7 + $0xc8] sm:$0xfe]
      %v4423 = vld [vmem:[#allocation7 + $0xd0] sm:$0x1]
      %v4424 = vld [vmem:[#allocation7 + $0xd8] sm:$0x1]
      %v4425 = vld [vmem:[#allocation7 + $0xe0] sm:$0xfe]
      %v4426 = vld [vmem:[#allocation7 + $0xe8] sm:$0xfe]
      %v4427 = vld [vmem:[#allocation7 + $0xf0] sm:$0x1]
      %v4428 = vld [vmem:[#allocation7 + $0xf8] sm:$0x1]
      %s4429 = scalar_lea.vmem %s13, 2
      %v4430 = vld [vmem:[%s4429] sm:$0x3]
      %v4432 = vlaneseq
      %v4433 = vshrl.u32 %v4432, 7
      %v4434 = vsub.s32 0, %v4433
      %v4435 = vrot.slane %v4430, %v4434
      %v4436 = vlaneseq
      %v4437 = vshrl.u32 %v4436, 7
      %v4438 = vsub.s32 1, %v4437
      %v4439 = vrot.slane %v4430, %v4438
      %v4442 = vmul.f32 %v4397, %v4435
      %v4443 = vmul.f32 %v4398, %v4439
      %v4444 = vmul.f32 %v4399, %v4435
      %v4445 = vmul.f32 %v4400, %v4439
      %v4446 = vmul.f32 %v4401, %v4435
      %v4447 = vmul.f32 %v4402, %v4439
      %v4448 = vmul.f32 %v4403, %v4435
      %v4449 = vmul.f32 %v4404, %v4439
      %v4450 = vmul.f32 %v4405, %v4435
      %v4451 = vmul.f32 %v4406, %v4439
      %v4452 = vmul.f32 %v4407, %v4435
      %v4453 = vmul.f32 %v4408, %v4439
      %v4454 = vmul.f32 %v4409, %v4435
      %v4455 = vmul.f32 %v4410, %v4439
      %v4456 = vmul.f32 %v4411, %v4435
      %v4457 = vmul.f32 %v4412, %v4439
      %v4458 = vmul.f32 %v4413, %v4435
      %v4459 = vmul.f32 %v4414, %v4439
      %v4460 = vmul.f32 %v4415, %v4435
      %v4461 = vmul.f32 %v4416, %v4439
      %v4462 = vmul.f32 %v4417, %v4435
      %v4463 = vmul.f32 %v4418, %v4439
      %v4464 = vmul.f32 %v4419, %v4435
      %v4465 = vmul.f32 %v4420, %v4439
      %v4466 = vmul.f32 %v4421, %v4435
      %v4467 = vmul.f32 %v4422, %v4439
      %v4468 = vmul.f32 %v4423, %v4435
      %v4469 = vmul.f32 %v4424, %v4439
      %v4470 = vmul.f32 %v4425, %v4435
      %v4471 = vmul.f32 %v4426, %v4439
      %v4472 = vmul.f32 %v4427, %v4435
      %v4473 = vmul.f32 %v4428, %v4439
      %vm4506 = vcmask 1046528
      %v4507 = vrot.slane %v4442, 1
      %v4508 = vrot.slane %v4444, 1
      %v4509 = vsel %vm4506, %v4507, %v4508
      %v4510 = vrot.slane %v4443, 1
      %v4511 = vrot.slane %v4445, 1
      %v4512 = vsel %vm4506, %v4510, %v4511
      %v4513 = vrot.slane %v4446, 1
      %v4514 = vrot.slane %v4448, 1
      %v4515 = vsel %vm4506, %v4513, %v4514
      %v4516 = vrot.slane %v4447, 1
      %v4517 = vrot.slane %v4449, 1
      %v4518 = vsel %vm4506, %v4516, %v4517
      %v4519 = vrot.slane %v4450, 1
      %v4520 = vrot.slane %v4452, 1
      %v4521 = vsel %vm4506, %v4519, %v4520
      %v4522 = vrot.slane %v4451, 1
      %v4523 = vrot.slane %v4453, 1
      %v4524 = vsel %vm4506, %v4522, %v4523
      %v4525 = vrot.slane %v4454, 1
      %v4526 = vrot.slane %v4456, 1
      %v4527 = vsel %vm4506, %v4525, %v4526
      %v4528 = vrot.slane %v4455, 1
      %v4529 = vrot.slane %v4457, 1
      %v4530 = vsel %vm4506, %v4528, %v4529
      %v4531 = vrot.slane %v4458, 1
      %v4532 = vrot.slane %v4460, 1
      %v4533 = vsel %vm4506, %v4531, %v4532
      %v4534 = vrot.slane %v4459, 1
      %v4535 = vrot.slane %v4461, 1
      %v4536 = vsel %vm4506, %v4534, %v4535
      %v4537 = vrot.slane %v4462, 1
      %v4538 = vrot.slane %v4464, 1
      %v4539 = vsel %vm4506, %v4537, %v4538
      %v4540 = vrot.slane %v4463, 1
      %v4541 = vrot.slane %v4465, 1
      %v4542 = vsel %vm4506, %v4540, %v4541
      %v4543 = vrot.slane %v4466, 1
      %v4544 = vrot.slane %v4468, 1
      %v4545 = vsel %vm4506, %v4543, %v4544
      %v4546 = vrot.slane %v4467, 1
      %v4547 = vrot.slane %v4469, 1
      %v4548 = vsel %vm4506, %v4546, %v4547
      %v4549 = vrot.slane %v4470, 1
      %v4550 = vrot.slane %v4472, 1
      %v4551 = vsel %vm4506, %v4549, %v4550
      %v4552 = vrot.slane %v4471, 1
      %v4553 = vrot.slane %v4473, 1
      %v4554 = vsel %vm4506, %v4552, %v4553
      %v4571 = vadd.f32 %v4381, %v4509
      %v4572 = vadd.f32 %v4382, %v4512
      %v4573 = vadd.f32 %v4383, %v4515
      %v4574 = vadd.f32 %v4384, %v4518
      %v4575 = vadd.f32 %v4385, %v4521
      %v4576 = vadd.f32 %v4386, %v4524
      %v4577 = vadd.f32 %v4387, %v4527
      %v4578 = vadd.f32 %v4388, %v4530
      %v4579 = vadd.f32 %v4389, %v4533
      %v4580 = vadd.f32 %v4390, %v4536
      %v4581 = vadd.f32 %v4391, %v4539
      %v4582 = vadd.f32 %v4392, %v4542
      %v4583 = vadd.f32 %v4393, %v4545
      %v4584 = vadd.f32 %v4394, %v4548
      %v4585 = vadd.f32 %v4395, %v4551
      %v4586 = vadd.f32 %v4396, %v4554
      %v4587 = vld [vmem:[#allocation7] sm:$0xfc]
      %v4588 = vld [vmem:[#allocation7 + $0x8] sm:$0xfc]
      %v4589 = vld [vmem:[#allocation7 + $0x10] sm:$0x3]
      %v4590 = vld [vmem:[#allocation7 + $0x18] sm:$0x3]
      %v4591 = vld [vmem:[#allocation7 + $0x20] sm:$0xfc]
      %v4592 = vld [vmem:[#allocation7 + $0x28] sm:$0xfc]
      %v4593 = vld [vmem:[#allocation7 + $0x30] sm:$0x3]
      %v4594 = vld [vmem:[#allocation7 + $0x38] sm:$0x3]
      %v4595 = vld [vmem:[#allocation7 + $0x40] sm:$0xfc]
      %v4596 = vld [vmem:[#allocation7 + $0x48] sm:$0xfc]
      %v4597 = vld [vmem:[#allocation7 + $0x50] sm:$0x3]
      %v4598 = vld [vmem:[#allocation7 + $0x58] sm:$0x3]
      %v4599 = vld [vmem:[#allocation7 + $0x60] sm:$0xfc]
      %v4600 = vld [vmem:[#allocation7 + $0x68] sm:$0xfc]
      %v4601 = vld [vmem:[#allocation7 + $0x70] sm:$0x3]
      %v4602 = vld [vmem:[#allocation7 + $0x78] sm:$0x3]
      %v4603 = vld [vmem:[#allocation7 + $0x80] sm:$0xfc]
      %v4604 = vld [vmem:[#allocation7 + $0x88] sm:$0xfc]
      %v4605 = vld [vmem:[#allocation7 + $0x90] sm:$0x3]
      %v4606 = vld [vmem:[#allocation7 + $0x98] sm:$0x3]
      %v4607 = vld [vmem:[#allocation7 + $0xa0] sm:$0xfc]
      %v4608 = vld [vmem:[#allocation7 + $0xa8] sm:$0xfc]
      %v4609 = vld [vmem:[#allocation7 + $0xb0] sm:$0x3]
      %v4610 = vld [vmem:[#allocation7 + $0xb8] sm:$0x3]
      %v4611 = vld [vmem:[#allocation7 + $0xc0] sm:$0xfc]
      %v4612 = vld [vmem:[#allocation7 + $0xc8] sm:$0xfc]
      %v4613 = vld [vmem:[#allocation7 + $0xd0] sm:$0x3]
      %v4614 = vld [vmem:[#allocation7 + $0xd8] sm:$0x3]
      %v4615 = vld [vmem:[#allocation7 + $0xe0] sm:$0xfc]
      %v4616 = vld [vmem:[#allocation7 + $0xe8] sm:$0xfc]
      %v4617 = vld [vmem:[#allocation7 + $0xf0] sm:$0x3]
      %v4618 = vld [vmem:[#allocation7 + $0xf8] sm:$0x3]
      %s4619 = scalar_lea.vmem %s13, 4
      %v4620 = vld [vmem:[%s4619] sm:$0x3]
      %v4622 = vlaneseq
      %v4623 = vshrl.u32 %v4622, 7
      %v4624 = vsub.s32 0, %v4623
      %v4625 = vrot.slane %v4620, %v4624
      %v4626 = vlaneseq
      %v4627 = vshrl.u32 %v4626, 7
      %v4628 = vsub.s32 1, %v4627
      %v4629 = vrot.slane %v4620, %v4628
      %v4632 = vmul.f32 %v4587, %v4625
      %v4633 = vmul.f32 %v4588, %v4629
      %v4634 = vmul.f32 %v4589, %v4625
      %v4635 = vmul.f32 %v4590, %v4629
      %v4636 = vmul.f32 %v4591, %v4625
      %v4637 = vmul.f32 %v4592, %v4629
      %v4638 = vmul.f32 %v4593, %v4625
      %v4639 = vmul.f32 %v4594, %v4629
      %v4640 = vmul.f32 %v4595, %v4625
      %v4641 = vmul.f32 %v4596, %v4629
      %v4642 = vmul.f32 %v4597, %v4625
      %v4643 = vmul.f32 %v4598, %v4629
      %v4644 = vmul.f32 %v4599, %v4625
      %v4645 = vmul.f32 %v4600, %v4629
      %v4646 = vmul.f32 %v4601, %v4625
      %v4647 = vmul.f32 %v4602, %v4629
      %v4648 = vmul.f32 %v4603, %v4625
      %v4649 = vmul.f32 %v4604, %v4629
      %v4650 = vmul.f32 %v4605, %v4625
      %v4651 = vmul.f32 %v4606, %v4629
      %v4652 = vmul.f32 %v4607, %v4625
      %v4653 = vmul.f32 %v4608, %v4629
      %v4654 = vmul.f32 %v4609, %v4625
      %v4655 = vmul.f32 %v4610, %v4629
      %v4656 = vmul.f32 %v4611, %v4625
      %v4657 = vmul.f32 %v4612, %v4629
      %v4658 = vmul.f32 %v4613, %v4625
      %v4659 = vmul.f32 %v4614, %v4629
      %v4660 = vmul.f32 %v4615, %v4625
      %v4661 = vmul.f32 %v4616, %v4629
      %v4662 = vmul.f32 %v4617, %v4625
      %v4663 = vmul.f32 %v4618, %v4629
      %vm4696 = vcmask 1045504
      %v4697 = vrot.slane %v4632, 2
      %v4698 = vrot.slane %v4634, 2
      %v4699 = vsel %vm4696, %v4697, %v4698
      %v4700 = vrot.slane %v4633, 2
      %v4701 = vrot.slane %v4635, 2
      %v4702 = vsel %vm4696, %v4700, %v4701
      %v4703 = vrot.slane %v4636, 2
      %v4704 = vrot.slane %v4638, 2
      %v4705 = vsel %vm4696, %v4703, %v4704
      %v4706 = vrot.slane %v4637, 2
      %v4707 = vrot.slane %v4639, 2
      %v4708 = vsel %vm4696, %v4706, %v4707
      %v4709 = vrot.slane %v4640, 2
      %v4710 = vrot.slane %v4642, 2
      %v4711 = vsel %vm4696, %v4709, %v4710
      %v4712 = vrot.slane %v4641, 2
      %v4713 = vrot.slane %v4643, 2
      %v4714 = vsel %vm4696, %v4712, %v4713
      %v4715 = vrot.slane %v4644, 2
      %v4716 = vrot.slane %v4646, 2
      %v4717 = vsel %vm4696, %v4715, %v4716
      %v4718 = vrot.slane %v4645, 2
      %v4719 = vrot.slane %v4647, 2
      %v4720 = vsel %vm4696, %v4718, %v4719
      %v4721 = vrot.slane %v4648, 2
      %v4722 = vrot.slane %v4650, 2
      %v4723 = vsel %vm4696, %v4721, %v4722
      %v4724 = vrot.slane %v4649, 2
      %v4725 = vrot.slane %v4651, 2
      %v4726 = vsel %vm4696, %v4724, %v4725
      %v4727 = vrot.slane %v4652, 2
      %v4728 = vrot.slane %v4654, 2
      %v4729 = vsel %vm4696, %v4727, %v4728
      %v4730 = vrot.slane %v4653, 2
      %v4731 = vrot.slane %v4655, 2
      %v4732 = vsel %vm4696, %v4730, %v4731
      %v4733 = vrot.slane %v4656, 2
      %v4734 = vrot.slane %v4658, 2
      %v4735 = vsel %vm4696, %v4733, %v4734
      %v4736 = vrot.slane %v4657, 2
      %v4737 = vrot.slane %v4659, 2
      %v4738 = vsel %vm4696, %v4736, %v4737
      %v4739 = vrot.slane %v4660, 2
      %v4740 = vrot.slane %v4662, 2
      %v4741 = vsel %vm4696, %v4739, %v4740
      %v4742 = vrot.slane %v4661, 2
      %v4743 = vrot.slane %v4663, 2
      %v4744 = vsel %vm4696, %v4742, %v4743
      %v4761 = vadd.f32 %v4571, %v4699
      %v4762 = vadd.f32 %v4572, %v4702
      %v4763 = vadd.f32 %v4573, %v4705
      %v4764 = vadd.f32 %v4574, %v4708
      %v4765 = vadd.f32 %v4575, %v4711
      %v4766 = vadd.f32 %v4576, %v4714
      %v4767 = vadd.f32 %v4577, %v4717
      %v4768 = vadd.f32 %v4578, %v4720
      %v4769 = vadd.f32 %v4579, %v4723
      %v4770 = vadd.f32 %v4580, %v4726
      %v4771 = vadd.f32 %v4581, %v4729
      %v4772 = vadd.f32 %v4582, %v4732
      %v4773 = vadd.f32 %v4583, %v4735
      %v4774 = vadd.f32 %v4584, %v4738
      %v4775 = vadd.f32 %v4585, %v4741
      %v4776 = vadd.f32 %v4586, %v4744
      %v4777 = vld [vmem:[%s4318] sm:$0xff]
      %v4778 = vld [vmem:[%s4318 + $0x8] sm:$0xff]
      %v4779 = vld [vmem:[%s4318 + $0x20] sm:$0xff]
      %v4780 = vld [vmem:[%s4318 + $0x28] sm:$0xff]
      %v4781 = vld [vmem:[%s4318 + $0x40] sm:$0xff]
      %v4782 = vld [vmem:[%s4318 + $0x48] sm:$0xff]
      %v4783 = vld [vmem:[%s4318 + $0x60] sm:$0xff]
      %v4784 = vld [vmem:[%s4318 + $0x68] sm:$0xff]
      %v4785 = vld [vmem:[%s4318 + $0x80] sm:$0xff]
      %v4786 = vld [vmem:[%s4318 + $0x88] sm:$0xff]
      %v4787 = vld [vmem:[%s4318 + $0xa0] sm:$0xff]
      %v4788 = vld [vmem:[%s4318 + $0xa8] sm:$0xff]
      %v4789 = vld [vmem:[%s4318 + $0xc0] sm:$0xff]
      %v4790 = vld [vmem:[%s4318 + $0xc8] sm:$0xff]
      %v4791 = vld [vmem:[%s4318 + $0xe0] sm:$0xff]
      %v4792 = vld [vmem:[%s4318 + $0xe8] sm:$0xff]
      %s4793 = scalar_lea.vmem %s13, 6
      %v4794 = vld [vmem:[%s4793] sm:$0x3]
      %v4796 = vlaneseq
      %v4797 = vshrl.u32 %v4796, 7
      %v4798 = vsub.s32 0, %v4797
      %v4799 = vrot.slane %v4794, %v4798
      %v4800 = vlaneseq
      %v4801 = vshrl.u32 %v4800, 7
      %v4802 = vsub.s32 1, %v4801
      %v4803 = vrot.slane %v4794, %v4802
      %v4806 = vmul.f32 %v4777, %v4799
      %v4807 = vmul.f32 %v4778, %v4803
      %v4808 = vmul.f32 %v4779, %v4799
      %v4809 = vmul.f32 %v4780, %v4803
      %v4810 = vmul.f32 %v4781, %v4799
      %v4811 = vmul.f32 %v4782, %v4803
      %v4812 = vmul.f32 %v4783, %v4799
      %v4813 = vmul.f32 %v4784, %v4803
      %v4814 = vmul.f32 %v4785, %v4799
      %v4815 = vmul.f32 %v4786, %v4803
      %v4816 = vmul.f32 %v4787, %v4799
      %v4817 = vmul.f32 %v4788, %v4803
      %v4818 = vmul.f32 %v4789, %v4799
      %v4819 = vmul.f32 %v4790, %v4803
      %v4820 = vmul.f32 %v4791, %v4799
      %v4821 = vmul.f32 %v4792, %v4803
      %v4822 = vadd.f32 %v4761, %v4806
      %v4823 = vadd.f32 %v4762, %v4807
      %v4824 = vadd.f32 %v4763, %v4808
      %v4825 = vadd.f32 %v4764, %v4809
      %v4826 = vadd.f32 %v4765, %v4810
      %v4827 = vadd.f32 %v4766, %v4811
      %v4828 = vadd.f32 %v4767, %v4812
      %v4829 = vadd.f32 %v4768, %v4813
      %v4830 = vadd.f32 %v4769, %v4814
      %v4831 = vadd.f32 %v4770, %v4815
      %v4832 = vadd.f32 %v4771, %v4816
      %v4833 = vadd.f32 %v4772, %v4817
      %v4834 = vadd.f32 %v4773, %v4818
      %v4835 = vadd.f32 %v4774, %v4819
      %v4836 = vadd.f32 %v4775, %v4820
      %v4837 = vadd.f32 %v4776, %v4821
      %v4838 = vld [vmem:[%s4318] sm:$0xfe]
      %v4839 = vld [vmem:[%s4318 + $0x8] sm:$0xfe]
      %v4840 = vld [vmem:[%s4318 + $0x10] sm:$0x1]
      %v4841 = vld [vmem:[%s4318 + $0x18] sm:$0x1]
      %v4842 = vld [vmem:[%s4318 + $0x20] sm:$0xfe]
      %v4843 = vld [vmem:[%s4318 + $0x28] sm:$0xfe]
      %v4844 = vld [vmem:[%s4318 + $0x30] sm:$0x1]
      %v4845 = vld [vmem:[%s4318 + $0x38] sm:$0x1]
      %v4846 = vld [vmem:[%s4318 + $0x40] sm:$0xfe]
      %v4847 = vld [vmem:[%s4318 + $0x48] sm:$0xfe]
      %v4848 = vld [vmem:[%s4318 + $0x50] sm:$0x1]
      %v4849 = vld [vmem:[%s4318 + $0x58] sm:$0x1]
      %v4850 = vld [vmem:[%s4318 + $0x60] sm:$0xfe]
      %v4851 = vld [vmem:[%s4318 + $0x68] sm:$0xfe]
      %v4852 = vld [vmem:[%s4318 + $0x70] sm:$0x1]
      %v4853 = vld [vmem:[%s4318 + $0x78] sm:$0x1]
      %v4854 = vld [vmem:[%s4318 + $0x80] sm:$0xfe]
      %v4855 = vld [vmem:[%s4318 + $0x88] sm:$0xfe]
      %v4856 = vld [vmem:[%s4318 + $0x90] sm:$0x1]
      %v4857 = vld [vmem:[%s4318 + $0x98] sm:$0x1]
      %v4858 = vld [vmem:[%s4318 + $0xa0] sm:$0xfe]
      %v4859 = vld [vmem:[%s4318 + $0xa8] sm:$0xfe]
      %v4860 = vld [vmem:[%s4318 + $0xb0] sm:$0x1]
      %v4861 = vld [vmem:[%s4318 + $0xb8] sm:$0x1]
      %v4862 = vld [vmem:[%s4318 + $0xc0] sm:$0xfe]
      %v4863 = vld [vmem:[%s4318 + $0xc8] sm:$0xfe]
      %v4864 = vld [vmem:[%s4318 + $0xd0] sm:$0x1]
      %v4865 = vld [vmem:[%s4318 + $0xd8] sm:$0x1]
      %v4866 = vld [vmem:[%s4318 + $0xe0] sm:$0xfe]
      %v4867 = vld [vmem:[%s4318 + $0xe8] sm:$0xfe]
      %v4868 = vld [vmem:[%s4318 + $0xf0] sm:$0x1]
      %v4869 = vld [vmem:[%s4318 + $0xf8] sm:$0x1]
      %s4870 = scalar_lea.vmem %s13, 8
      %v4871 = vld [vmem:[%s4870] sm:$0x3]
      %v4873 = vlaneseq
      %v4874 = vshrl.u32 %v4873, 7
      %v4875 = vsub.s32 0, %v4874
      %v4876 = vrot.slane %v4871, %v4875
      %v4877 = vlaneseq
      %v4878 = vshrl.u32 %v4877, 7
      %v4879 = vsub.s32 1, %v4878
      %v4880 = vrot.slane %v4871, %v4879
      %v4883 = vmul.f32 %v4838, %v4876
      %v4884 = vmul.f32 %v4839, %v4880
      %v4885 = vmul.f32 %v4840, %v4876
      %v4886 = vmul.f32 %v4841, %v4880
      %v4887 = vmul.f32 %v4842, %v4876
      %v4888 = vmul.f32 %v4843, %v4880
      %v4889 = vmul.f32 %v4844, %v4876
      %v4890 = vmul.f32 %v4845, %v4880
      %v4891 = vmul.f32 %v4846, %v4876
      %v4892 = vmul.f32 %v4847, %v4880
      %v4893 = vmul.f32 %v4848, %v4876
      %v4894 = vmul.f32 %v4849, %v4880
      %v4895 = vmul.f32 %v4850, %v4876
      %v4896 = vmul.f32 %v4851, %v4880
      %v4897 = vmul.f32 %v4852, %v4876
      %v4898 = vmul.f32 %v4853, %v4880
      %v4899 = vmul.f32 %v4854, %v4876
      %v4900 = vmul.f32 %v4855, %v4880
      %v4901 = vmul.f32 %v4856, %v4876
      %v4902 = vmul.f32 %v4857, %v4880
      %v4903 = vmul.f32 %v4858, %v4876
      %v4904 = vmul.f32 %v4859, %v4880
      %v4905 = vmul.f32 %v4860, %v4876
      %v4906 = vmul.f32 %v4861, %v4880
      %v4907 = vmul.f32 %v4862, %v4876
      %v4908 = vmul.f32 %v4863, %v4880
      %v4909 = vmul.f32 %v4864, %v4876
      %v4910 = vmul.f32 %v4865, %v4880
      %v4911 = vmul.f32 %v4866, %v4876
      %v4912 = vmul.f32 %v4867, %v4880
      %v4913 = vmul.f32 %v4868, %v4876
      %v4914 = vmul.f32 %v4869, %v4880
      %v4947 = vrot.slane %v4883, 1
      %v4948 = vrot.slane %v4885, 1
      %v4949 = vsel %vm4506, %v4947, %v4948
      %v4950 = vrot.slane %v4884, 1
      %v4951 = vrot.slane %v4886, 1
      %v4952 = vsel %vm4506, %v4950, %v4951
      %v4953 = vrot.slane %v4887, 1
      %v4954 = vrot.slane %v4889, 1
      %v4955 = vsel %vm4506, %v4953, %v4954
      %v4956 = vrot.slane %v4888, 1
      %v4957 = vrot.slane %v4890, 1
      %v4958 = vsel %vm4506, %v4956, %v4957
      %v4959 = vrot.slane %v4891, 1
      %v4960 = vrot.slane %v4893, 1
      %v4961 = vsel %vm4506, %v4959, %v4960
      %v4962 = vrot.slane %v4892, 1
      %v4963 = vrot.slane %v4894, 1
      %v4964 = vsel %vm4506, %v4962, %v4963
      %v4965 = vrot.slane %v4895, 1
      %v4966 = vrot.slane %v4897, 1
      %v4967 = vsel %vm4506, %v4965, %v4966
      %v4968 = vrot.slane %v4896, 1
      %v4969 = vrot.slane %v4898, 1
      %v4970 = vsel %vm4506, %v4968, %v4969
      %v4971 = vrot.slane %v4899, 1
      %v4972 = vrot.slane %v4901, 1
      %v4973 = vsel %vm4506, %v4971, %v4972
      %v4974 = vrot.slane %v4900, 1
      %v4975 = vrot.slane %v4902, 1
      %v4976 = vsel %vm4506, %v4974, %v4975
      %v4977 = vrot.slane %v4903, 1
      %v4978 = vrot.slane %v4905, 1
      %v4979 = vsel %vm4506, %v4977, %v4978
      %v4980 = vrot.slane %v4904, 1
      %v4981 = vrot.slane %v4906, 1
      %v4982 = vsel %vm4506, %v4980, %v4981
      %v4983 = vrot.slane %v4907, 1
      %v4984 = vrot.slane %v4909, 1
      %v4985 = vsel %vm4506, %v4983, %v4984
      %v4986 = vrot.slane %v4908, 1
      %v4987 = vrot.slane %v4910, 1
      %v4988 = vsel %vm4506, %v4986, %v4987
      %v4989 = vrot.slane %v4911, 1
      %v4990 = vrot.slane %v4913, 1
      %v4991 = vsel %vm4506, %v4989, %v4990
      %v4992 = vrot.slane %v4912, 1
      %v4993 = vrot.slane %v4914, 1
      %v4994 = vsel %vm4506, %v4992, %v4993
      %v5011 = vadd.f32 %v4822, %v4949
      %v5012 = vadd.f32 %v4823, %v4952
      %v5013 = vadd.f32 %v4824, %v4955
      %v5014 = vadd.f32 %v4825, %v4958
      %v5015 = vadd.f32 %v4826, %v4961
      %v5016 = vadd.f32 %v4827, %v4964
      %v5017 = vadd.f32 %v4828, %v4967
      %v5018 = vadd.f32 %v4829, %v4970
      %v5019 = vadd.f32 %v4830, %v4973
      %v5020 = vadd.f32 %v4831, %v4976
      %v5021 = vadd.f32 %v4832, %v4979
      %v5022 = vadd.f32 %v4833, %v4982
      %v5023 = vadd.f32 %v4834, %v4985
      %v5024 = vadd.f32 %v4835, %v4988
      %v5025 = vadd.f32 %v4836, %v4991
      %v5026 = vadd.f32 %v4837, %v4994
      %v5027 = vld [vmem:[%s4318] sm:$0xfc]
      %v5028 = vld [vmem:[%s4318 + $0x8] sm:$0xfc]
      %v5029 = vld [vmem:[%s4318 + $0x10] sm:$0x3]
      %v5030 = vld [vmem:[%s4318 + $0x18] sm:$0x3]
      %v5031 = vld [vmem:[%s4318 + $0x20] sm:$0xfc]
      %v5032 = vld [vmem:[%s4318 + $0x28] sm:$0xfc]
      %v5033 = vld [vmem:[%s4318 + $0x30] sm:$0x3]
      %v5034 = vld [vmem:[%s4318 + $0x38] sm:$0x3]
      %v5035 = vld [vmem:[%s4318 + $0x40] sm:$0xfc]
      %v5036 = vld [vmem:[%s4318 + $0x48] sm:$0xfc]
      %v5037 = vld [vmem:[%s4318 + $0x50] sm:$0x3]
      %v5038 = vld [vmem:[%s4318 + $0x58] sm:$0x3]
      %v5039 = vld [vmem:[%s4318 + $0x60] sm:$0xfc]
      %v5040 = vld [vmem:[%s4318 + $0x68] sm:$0xfc]
      %v5041 = vld [vmem:[%s4318 + $0x70] sm:$0x3]
      %v5042 = vld [vmem:[%s4318 + $0x78] sm:$0x3]
      %v5043 = vld [vmem:[%s4318 + $0x80] sm:$0xfc]
      %v5044 = vld [vmem:[%s4318 + $0x88] sm:$0xfc]
      %v5045 = vld [vmem:[%s4318 + $0x90] sm:$0x3]
      %v5046 = vld [vmem:[%s4318 + $0x98] sm:$0x3]
      %v5047 = vld [vmem:[%s4318 + $0xa0] sm:$0xfc]
      %v5048 = vld [vmem:[%s4318 + $0xa8] sm:$0xfc]
      %v5049 = vld [vmem:[%s4318 + $0xb0] sm:$0x3]
      %v5050 = vld [vmem:[%s4318 + $0xb8] sm:$0x3]
      %v5051 = vld [vmem:[%s4318 + $0xc0] sm:$0xfc]
      %v5052 = vld [vmem:[%s4318 + $0xc8] sm:$0xfc]
      %v5053 = vld [vmem:[%s4318 + $0xd0] sm:$0x3]
      %v5054 = vld [vmem:[%s4318 + $0xd8] sm:$0x3]
      %v5055 = vld [vmem:[%s4318 + $0xe0] sm:$0xfc]
      %v5056 = vld [vmem:[%s4318 + $0xe8] sm:$0xfc]
      %v5057 = vld [vmem:[%s4318 + $0xf0] sm:$0x3]
      %v5058 = vld [vmem:[%s4318 + $0xf8] sm:$0x3]
      %s5059 = scalar_lea.vmem %s13, 10
      %v5060 = vld [vmem:[%s5059] sm:$0x3]
      %v5062 = vlaneseq
      %v5063 = vshrl.u32 %v5062, 7
      %v5064 = vsub.s32 0, %v5063
      %v5065 = vrot.slane %v5060, %v5064
      %v5066 = vlaneseq
      %v5067 = vshrl.u32 %v5066, 7
      %v5068 = vsub.s32 1, %v5067
      %v5069 = vrot.slane %v5060, %v5068
      %v5072 = vmul.f32 %v5027, %v5065
      %v5073 = vmul.f32 %v5028, %v5069
      %v5074 = vmul.f32 %v5029, %v5065
      %v5075 = vmul.f32 %v5030, %v5069
      %v5076 = vmul.f32 %v5031, %v5065
      %v5077 = vmul.f32 %v5032, %v5069
      %v5078 = vmul.f32 %v5033, %v5065
      %v5079 = vmul.f32 %v5034, %v5069
      %v5080 = vmul.f32 %v5035, %v5065
      %v5081 = vmul.f32 %v5036, %v5069
      %v5082 = vmul.f32 %v5037, %v5065
      %v5083 = vmul.f32 %v5038, %v5069
      %v5084 = vmul.f32 %v5039, %v5065
      %v5085 = vmul.f32 %v5040, %v5069
      %v5086 = vmul.f32 %v5041, %v5065
      %v5087 = vmul.f32 %v5042, %v5069
      %v5088 = vmul.f32 %v5043, %v5065
      %v5089 = vmul.f32 %v5044, %v5069
      %v5090 = vmul.f32 %v5045, %v5065
      %v5091 = vmul.f32 %v5046, %v5069
      %v5092 = vmul.f32 %v5047, %v5065
      %v5093 = vmul.f32 %v5048, %v5069
      %v5094 = vmul.f32 %v5049, %v5065
      %v5095 = vmul.f32 %v5050, %v5069
      %v5096 = vmul.f32 %v5051, %v5065
      %v5097 = vmul.f32 %v5052, %v5069
      %v5098 = vmul.f32 %v5053, %v5065
      %v5099 = vmul.f32 %v5054, %v5069
      %v5100 = vmul.f32 %v5055, %v5065
      %v5101 = vmul.f32 %v5056, %v5069
      %v5102 = vmul.f32 %v5057, %v5065
      %v5103 = vmul.f32 %v5058, %v5069
      %v5136 = vrot.slane %v5072, 2
      %v5137 = vrot.slane %v5074, 2
      %v5138 = vsel %vm4696, %v5136, %v5137
      %v5139 = vrot.slane %v5073, 2
      %v5140 = vrot.slane %v5075, 2
      %v5141 = vsel %vm4696, %v5139, %v5140
      %v5142 = vrot.slane %v5076, 2
      %v5143 = vrot.slane %v5078, 2
      %v5144 = vsel %vm4696, %v5142, %v5143
      %v5145 = vrot.slane %v5077, 2
      %v5146 = vrot.slane %v5079, 2
      %v5147 = vsel %vm4696, %v5145, %v5146
      %v5148 = vrot.slane %v5080, 2
      %v5149 = vrot.slane %v5082, 2
      %v5150 = vsel %vm4696, %v5148, %v5149
      %v5151 = vrot.slane %v5081, 2
      %v5152 = vrot.slane %v5083, 2
      %v5153 = vsel %vm4696, %v5151, %v5152
      %v5154 = vrot.slane %v5084, 2
      %v5155 = vrot.slane %v5086, 2
      %v5156 = vsel %vm4696, %v5154, %v5155
      %v5157 = vrot.slane %v5085, 2
      %v5158 = vrot.slane %v5087, 2
      %v5159 = vsel %vm4696, %v5157, %v5158
      %v5160 = vrot.slane %v5088, 2
      %v5161 = vrot.slane %v5090, 2
      %v5162 = vsel %vm4696, %v5160, %v5161
      %v5163 = vrot.slane %v5089, 2
      %v5164 = vrot.slane %v5091, 2
      %v5165 = vsel %vm4696, %v5163, %v5164
      %v5166 = vrot.slane %v5092, 2
      %v5167 = vrot.slane %v5094, 2
      %v5168 = vsel %vm4696, %v5166, %v5167
      %v5169 = vrot.slane %v5093, 2
      %v5170 = vrot.slane %v5095, 2
      %v5171 = vsel %vm4696, %v5169, %v5170
      %v5172 = vrot.slane %v5096, 2
      %v5173 = vrot.slane %v5098, 2
      %v5174 = vsel %vm4696, %v5172, %v5173
      %v5175 = vrot.slane %v5097, 2
      %v5176 = vrot.slane %v5099, 2
      %v5177 = vsel %vm4696, %v5175, %v5176
      %v5178 = vrot.slane %v5100, 2
      %v5179 = vrot.slane %v5102, 2
      %v5180 = vsel %vm4696, %v5178, %v5179
      %v5181 = vrot.slane %v5101, 2
      %v5182 = vrot.slane %v5103, 2
      %v5183 = vsel %vm4696, %v5181, %v5182
      %v5200 = vadd.f32 %v5011, %v5138
      %v5201 = vadd.f32 %v5012, %v5141
      %v5202 = vadd.f32 %v5013, %v5144
      %v5203 = vadd.f32 %v5014, %v5147
      %v5204 = vadd.f32 %v5015, %v5150
      %v5205 = vadd.f32 %v5016, %v5153
      %v5206 = vadd.f32 %v5017, %v5156
      %v5207 = vadd.f32 %v5018, %v5159
      %v5208 = vadd.f32 %v5019, %v5162
      %v5209 = vadd.f32 %v5020, %v5165
      %v5210 = vadd.f32 %v5021, %v5168
      %v5211 = vadd.f32 %v5022, %v5171
      %v5212 = vadd.f32 %v5023, %v5174
      %v5213 = vadd.f32 %v5024, %v5177
      %v5214 = vadd.f32 %v5025, %v5180
      %v5215 = vadd.f32 %v5026, %v5183
      %s5216 = scalar_lea.vmem [#allocation7], 64
      %v5217 = vld [vmem:[%s5216] sm:$0xff]
      %v5218 = vld [vmem:[%s5216 + $0x8] sm:$0xff]
      %v5219 = vld [vmem:[%s5216 + $0x20] sm:$0xff]
      %v5220 = vld [vmem:[%s5216 + $0x28] sm:$0xff]
      %v5221 = vld [vmem:[%s5216 + $0x40] sm:$0xff]
      %v5222 = vld [vmem:[%s5216 + $0x48] sm:$0xff]
      %v5223 = vld [vmem:[%s5216 + $0x60] sm:$0xff]
      %v5224 = vld [vmem:[%s5216 + $0x68] sm:$0xff]
      %v5225 = vld [vmem:[%s5216 + $0x80] sm:$0xff]
      %v5226 = vld [vmem:[%s5216 + $0x88] sm:$0xff]
      %v5227 = vld [vmem:[%s5216 + $0xa0] sm:$0xff]
      %v5228 = vld [vmem:[%s5216 + $0xa8] sm:$0xff]
      %v5229 = vld [vmem:[%s5216 + $0xc0] sm:$0xff]
      %v5230 = vld [vmem:[%s5216 + $0xc8] sm:$0xff]
      %v5231 = vld [vmem:[%s5216 + $0xe0] sm:$0xff]
      %v5232 = vld [vmem:[%s5216 + $0xe8] sm:$0xff]
      %s5233 = scalar_lea.vmem %s13, 12
      %v5234 = vld [vmem:[%s5233] sm:$0x3]
      %v5236 = vlaneseq
      %v5237 = vshrl.u32 %v5236, 7
      %v5238 = vsub.s32 0, %v5237
      %v5239 = vrot.slane %v5234, %v5238
      %v5240 = vlaneseq
      %v5241 = vshrl.u32 %v5240, 7
      %v5242 = vsub.s32 1, %v5241
      %v5243 = vrot.slane %v5234, %v5242
      %v5246 = vmul.f32 %v5217, %v5239
      %v5247 = vmul.f32 %v5218, %v5243
      %v5248 = vmul.f32 %v5219, %v5239
      %v5249 = vmul.f32 %v5220, %v5243
      %v5250 = vmul.f32 %v5221, %v5239
      %v5251 = vmul.f32 %v5222, %v5243
      %v5252 = vmul.f32 %v5223, %v5239
      %v5253 = vmul.f32 %v5224, %v5243
      %v5254 = vmul.f32 %v5225, %v5239
      %v5255 = vmul.f32 %v5226, %v5243
      %v5256 = vmul.f32 %v5227, %v5239
      %v5257 = vmul.f32 %v5228, %v5243
      %v5258 = vmul.f32 %v5229, %v5239
      %v5259 = vmul.f32 %v5230, %v5243
      %v5260 = vmul.f32 %v5231, %v5239
      %v5261 = vmul.f32 %v5232, %v5243
      %v5262 = vadd.f32 %v5200, %v5246
      %v5263 = vadd.f32 %v5201, %v5247
      %v5264 = vadd.f32 %v5202, %v5248
      %v5265 = vadd.f32 %v5203, %v5249
      %v5266 = vadd.f32 %v5204, %v5250
      %v5267 = vadd.f32 %v5205, %v5251
      %v5268 = vadd.f32 %v5206, %v5252
      %v5269 = vadd.f32 %v5207, %v5253
      %v5270 = vadd.f32 %v5208, %v5254
      %v5271 = vadd.f32 %v5209, %v5255
      %v5272 = vadd.f32 %v5210, %v5256
      %v5273 = vadd.f32 %v5211, %v5257
      %v5274 = vadd.f32 %v5212, %v5258
      %v5275 = vadd.f32 %v5213, %v5259
      %v5276 = vadd.f32 %v5214, %v5260
      %v5277 = vadd.f32 %v5215, %v5261
      %v5278 = vld [vmem:[%s5216] sm:$0xfe]
      %v5279 = vld [vmem:[%s5216 + $0x8] sm:$0xfe]
      %v5280 = vld [vmem:[%s5216 + $0x10] sm:$0x1]
      %v5281 = vld [vmem:[%s5216 + $0x18] sm:$0x1]
      %v5282 = vld [vmem:[%s5216 + $0x20] sm:$0xfe]
      %v5283 = vld [vmem:[%s5216 + $0x28] sm:$0xfe]
      %v5284 = vld [vmem:[%s5216 + $0x30] sm:$0x1]
      %v5285 = vld [vmem:[%s5216 + $0x38] sm:$0x1]
      %v5286 = vld [vmem:[%s5216 + $0x40] sm:$0xfe]
      %v5287 = vld [vmem:[%s5216 + $0x48] sm:$0xfe]
      %v5288 = vld [vmem:[%s5216 + $0x50] sm:$0x1]
      %v5289 = vld [vmem:[%s5216 + $0x58] sm:$0x1]
      %v5290 = vld [vmem:[%s5216 + $0x60] sm:$0xfe]
      %v5291 = vld [vmem:[%s5216 + $0x68] sm:$0xfe]
      %v5292 = vld [vmem:[%s5216 + $0x70] sm:$0x1]
      %v5293 = vld [vmem:[%s5216 + $0x78] sm:$0x1]
      %v5294 = vld [vmem:[%s5216 + $0x80] sm:$0xfe]
      %v5295 = vld [vmem:[%s5216 + $0x88] sm:$0xfe]
      %v5296 = vld [vmem:[%s5216 + $0x90] sm:$0x1]
      %v5297 = vld [vmem:[%s5216 + $0x98] sm:$0x1]
      %v5298 = vld [vmem:[%s5216 + $0xa0] sm:$0xfe]
      %v5299 = vld [vmem:[%s5216 + $0xa8] sm:$0xfe]
      %v5300 = vld [vmem:[%s5216 + $0xb0] sm:$0x1]
      %v5301 = vld [vmem:[%s5216 + $0xb8] sm:$0x1]
      %v5302 = vld [vmem:[%s5216 + $0xc0] sm:$0xfe]
      %v5303 = vld [vmem:[%s5216 + $0xc8] sm:$0xfe]
      %v5304 = vld [vmem:[%s5216 + $0xd0] sm:$0x1]
      %v5305 = vld [vmem:[%s5216 + $0xd8] sm:$0x1]
      %v5306 = vld [vmem:[%s5216 + $0xe0] sm:$0xfe]
      %v5307 = vld [vmem:[%s5216 + $0xe8] sm:$0xfe]
      %v5308 = vld [vmem:[%s5216 + $0xf0] sm:$0x1]
      %v5309 = vld [vmem:[%s5216 + $0xf8] sm:$0x1]
      %s5310 = scalar_lea.vmem %s13, 14
      %v5311 = vld [vmem:[%s5310] sm:$0x3]
      %v5313 = vlaneseq
      %v5314 = vshrl.u32 %v5313, 7
      %v5315 = vsub.s32 0, %v5314
      %v5316 = vrot.slane %v5311, %v5315
      %v5317 = vlaneseq
      %v5318 = vshrl.u32 %v5317, 7
      %v5319 = vsub.s32 1, %v5318
      %v5320 = vrot.slane %v5311, %v5319
      %v5323 = vmul.f32 %v5278, %v5316
      %v5324 = vmul.f32 %v5279, %v5320
      %v5325 = vmul.f32 %v5280, %v5316
      %v5326 = vmul.f32 %v5281, %v5320
      %v5327 = vmul.f32 %v5282, %v5316
      %v5328 = vmul.f32 %v5283, %v5320
      %v5329 = vmul.f32 %v5284, %v5316
      %v5330 = vmul.f32 %v5285, %v5320
      %v5331 = vmul.f32 %v5286, %v5316
      %v5332 = vmul.f32 %v5287, %v5320
      %v5333 = vmul.f32 %v5288, %v5316
      %v5334 = vmul.f32 %v5289, %v5320
      %v5335 = vmul.f32 %v5290, %v5316
      %v5336 = vmul.f32 %v5291, %v5320
      %v5337 = vmul.f32 %v5292, %v5316
      %v5338 = vmul.f32 %v5293, %v5320
      %v5339 = vmul.f32 %v5294, %v5316
      %v5340 = vmul.f32 %v5295, %v5320
      %v5341 = vmul.f32 %v5296, %v5316
      %v5342 = vmul.f32 %v5297, %v5320
      %v5343 = vmul.f32 %v5298, %v5316
      %v5344 = vmul.f32 %v5299, %v5320
      %v5345 = vmul.f32 %v5300, %v5316
      %v5346 = vmul.f32 %v5301, %v5320
      %v5347 = vmul.f32 %v5302, %v5316
      %v5348 = vmul.f32 %v5303, %v5320
      %v5349 = vmul.f32 %v5304, %v5316
      %v5350 = vmul.f32 %v5305, %v5320
      %v5351 = vmul.f32 %v5306, %v5316
      %v5352 = vmul.f32 %v5307, %v5320
      %v5353 = vmul.f32 %v5308, %v5316
      %v5354 = vmul.f32 %v5309, %v5320
      %v5387 = vrot.slane %v5323, 1
      %v5388 = vrot.slane %v5325, 1
      %v5389 = vsel %vm4506, %v5387, %v5388
      %v5390 = vrot.slane %v5324, 1
      %v5391 = vrot.slane %v5326, 1
      %v5392 = vsel %vm4506, %v5390, %v5391
      %v5393 = vrot.slane %v5327, 1
      %v5394 = vrot.slane %v5329, 1
      %v5395 = vsel %vm4506, %v5393, %v5394
      %v5396 = vrot.slane %v5328, 1
      %v5397 = vrot.slane %v5330, 1
      %v5398 = vsel %vm4506, %v5396, %v5397
      %v5399 = vrot.slane %v5331, 1
      %v5400 = vrot.slane %v5333, 1
      %v5401 = vsel %vm4506, %v5399, %v5400
      %v5402 = vrot.slane %v5332, 1
      %v5403 = vrot.slane %v5334, 1
      %v5404 = vsel %vm4506, %v5402, %v5403
      %v5405 = vrot.slane %v5335, 1
      %v5406 = vrot.slane %v5337, 1
      %v5407 = vsel %vm4506, %v5405, %v5406
      %v5408 = vrot.slane %v5336, 1
      %v5409 = vrot.slane %v5338, 1
      %v5410 = vsel %vm4506, %v5408, %v5409
      %v5411 = vrot.slane %v5339, 1
      %v5412 = vrot.slane %v5341, 1
      %v5413 = vsel %vm4506, %v5411, %v5412
      %v5414 = vrot.slane %v5340, 1
      %v5415 = vrot.slane %v5342, 1
      %v5416 = vsel %vm4506, %v5414, %v5415
      %v5417 = vrot.slane %v5343, 1
      %v5418 = vrot.slane %v5345, 1
      %v5419 = vsel %vm4506, %v5417, %v5418
      %v5420 = vrot.slane %v5344, 1
      %v5421 = vrot.slane %v5346, 1
      %v5422 = vsel %vm4506, %v5420, %v5421
      %v5423 = vrot.slane %v5347, 1
      %v5424 = vrot.slane %v5349, 1
      %v5425 = vsel %vm4506, %v5423, %v5424
      %v5426 = vrot.slane %v5348, 1
      %v5427 = vrot.slane %v5350, 1
      %v5428 = vsel %vm4506, %v5426, %v5427
      %v5429 = vrot.slane %v5351, 1
      %v5430 = vrot.slane %v5353, 1
      %v5431 = vsel %vm4506, %v5429, %v5430
      %v5432 = vrot.slane %v5352, 1
      %v5433 = vrot.slane %v5354, 1
      %v5434 = vsel %vm4506, %v5432, %v5433
      %v5451 = vadd.f32 %v5262, %v5389
      %v5452 = vadd.f32 %v5263, %v5392
      %v5453 = vadd.f32 %v5264, %v5395
      %v5454 = vadd.f32 %v5265, %v5398
      %v5455 = vadd.f32 %v5266, %v5401
      %v5456 = vadd.f32 %v5267, %v5404
      %v5457 = vadd.f32 %v5268, %v5407
      %v5458 = vadd.f32 %v5269, %v5410
      %v5459 = vadd.f32 %v5270, %v5413
      %v5460 = vadd.f32 %v5271, %v5416
      %v5461 = vadd.f32 %v5272, %v5419
      %v5462 = vadd.f32 %v5273, %v5422
      %v5463 = vadd.f32 %v5274, %v5425
      %v5464 = vadd.f32 %v5275, %v5428
      %v5465 = vadd.f32 %v5276, %v5431
      %v5466 = vadd.f32 %v5277, %v5434
      %v5467 = vld [vmem:[%s5216] sm:$0xfc]
      %v5468 = vld [vmem:[%s5216 + $0x8] sm:$0xfc]
      %v5469 = vld [vmem:[%s5216 + $0x10] sm:$0x3]
      %v5470 = vld [vmem:[%s5216 + $0x18] sm:$0x3]
      %v5471 = vld [vmem:[%s5216 + $0x20] sm:$0xfc]
      %v5472 = vld [vmem:[%s5216 + $0x28] sm:$0xfc]
      %v5473 = vld [vmem:[%s5216 + $0x30] sm:$0x3]
      %v5474 = vld [vmem:[%s5216 + $0x38] sm:$0x3]
      %v5475 = vld [vmem:[%s5216 + $0x40] sm:$0xfc]
      %v5476 = vld [vmem:[%s5216 + $0x48] sm:$0xfc]
      %v5477 = vld [vmem:[%s5216 + $0x50] sm:$0x3]
      %v5478 = vld [vmem:[%s5216 + $0x58] sm:$0x3]
      %v5479 = vld [vmem:[%s5216 + $0x60] sm:$0xfc]
      %v5480 = vld [vmem:[%s5216 + $0x68] sm:$0xfc]
      %v5481 = vld [vmem:[%s5216 + $0x70] sm:$0x3]
      %v5482 = vld [vmem:[%s5216 + $0x78] sm:$0x3]
      %v5483 = vld [vmem:[%s5216 + $0x80] sm:$0xfc]
      %v5484 = vld [vmem:[%s5216 + $0x88] sm:$0xfc]
      %v5485 = vld [vmem:[%s5216 + $0x90] sm:$0x3]
      %v5486 = vld [vmem:[%s5216 + $0x98] sm:$0x3]
      %v5487 = vld [vmem:[%s5216 + $0xa0] sm:$0xfc]
      %v5488 = vld [vmem:[%s5216 + $0xa8] sm:$0xfc]
      %v5489 = vld [vmem:[%s5216 + $0xb0] sm:$0x3]
      %v5490 = vld [vmem:[%s5216 + $0xb8] sm:$0x3]
      %v5491 = vld [vmem:[%s5216 + $0xc0] sm:$0xfc]
      %v5492 = vld [vmem:[%s5216 + $0xc8] sm:$0xfc]
      %v5493 = vld [vmem:[%s5216 + $0xd0] sm:$0x3]
      %v5494 = vld [vmem:[%s5216 + $0xd8] sm:$0x3]
      %v5495 = vld [vmem:[%s5216 + $0xe0] sm:$0xfc]
      %v5496 = vld [vmem:[%s5216 + $0xe8] sm:$0xfc]
      %v5497 = vld [vmem:[%s5216 + $0xf0] sm:$0x3]
      %v5498 = vld [vmem:[%s5216 + $0xf8] sm:$0x3]
      %s5499 = scalar_lea.vmem %s13, 16
      %v5500 = vld [vmem:[%s5499] sm:$0x3]
      %v5502 = vlaneseq
      %v5503 = vshrl.u32 %v5502, 7
      %v5504 = vsub.s32 0, %v5503
      %v5505 = vrot.slane %v5500, %v5504
      %v5506 = vlaneseq
      %v5507 = vshrl.u32 %v5506, 7
      %v5508 = vsub.s32 1, %v5507
      %v5509 = vrot.slane %v5500, %v5508
      %v5512 = vmul.f32 %v5467, %v5505
      %v5513 = vmul.f32 %v5468, %v5509
      %v5514 = vmul.f32 %v5469, %v5505
      %v5515 = vmul.f32 %v5470, %v5509
      %v5516 = vmul.f32 %v5471, %v5505
      %v5517 = vmul.f32 %v5472, %v5509
      %v5518 = vmul.f32 %v5473, %v5505
      %v5519 = vmul.f32 %v5474, %v5509
      %v5520 = vmul.f32 %v5475, %v5505
      %v5521 = vmul.f32 %v5476, %v5509
      %v5522 = vmul.f32 %v5477, %v5505
      %v5523 = vmul.f32 %v5478, %v5509
      %v5524 = vmul.f32 %v5479, %v5505
      %v5525 = vmul.f32 %v5480, %v5509
      %v5526 = vmul.f32 %v5481, %v5505
      %v5527 = vmul.f32 %v5482, %v5509
      %v5528 = vmul.f32 %v5483, %v5505
      %v5529 = vmul.f32 %v5484, %v5509
      %v5530 = vmul.f32 %v5485, %v5505
      %v5531 = vmul.f32 %v5486, %v5509
      %v5532 = vmul.f32 %v5487, %v5505
      %v5533 = vmul.f32 %v5488, %v5509
      %v5534 = vmul.f32 %v5489, %v5505
      %v5535 = vmul.f32 %v5490, %v5509
      %v5536 = vmul.f32 %v5491, %v5505
      %v5537 = vmul.f32 %v5492, %v5509
      %v5538 = vmul.f32 %v5493, %v5505
      %v5539 = vmul.f32 %v5494, %v5509
      %v5540 = vmul.f32 %v5495, %v5505
      %v5541 = vmul.f32 %v5496, %v5509
      %v5542 = vmul.f32 %v5497, %v5505
      %v5543 = vmul.f32 %v5498, %v5509
      %v5576 = vrot.slane %v5512, 2
      %v5577 = vrot.slane %v5514, 2
      %v5578 = vsel %vm4696, %v5576, %v5577
      %v5579 = vrot.slane %v5513, 2
      %v5580 = vrot.slane %v5515, 2
      %v5581 = vsel %vm4696, %v5579, %v5580
      %v5582 = vrot.slane %v5516, 2
      %v5583 = vrot.slane %v5518, 2
      %v5584 = vsel %vm4696, %v5582, %v5583
      %v5585 = vrot.slane %v5517, 2
      %v5586 = vrot.slane %v5519, 2
      %v5587 = vsel %vm4696, %v5585, %v5586
      %v5588 = vrot.slane %v5520, 2
      %v5589 = vrot.slane %v5522, 2
      %v5590 = vsel %vm4696, %v5588, %v5589
      %v5591 = vrot.slane %v5521, 2
      %v5592 = vrot.slane %v5523, 2
      %v5593 = vsel %vm4696, %v5591, %v5592
      %v5594 = vrot.slane %v5524, 2
      %v5595 = vrot.slane %v5526, 2
      %v5596 = vsel %vm4696, %v5594, %v5595
      %v5597 = vrot.slane %v5525, 2
      %v5598 = vrot.slane %v5527, 2
      %v5599 = vsel %vm4696, %v5597, %v5598
      %v5600 = vrot.slane %v5528, 2
      %v5601 = vrot.slane %v5530, 2
      %v5602 = vsel %vm4696, %v5600, %v5601
      %v5603 = vrot.slane %v5529, 2
      %v5604 = vrot.slane %v5531, 2
      %v5605 = vsel %vm4696, %v5603, %v5604
      %v5606 = vrot.slane %v5532, 2
      %v5607 = vrot.slane %v5534, 2
      %v5608 = vsel %vm4696, %v5606, %v5607
      %v5609 = vrot.slane %v5533, 2
      %v5610 = vrot.slane %v5535, 2
      %v5611 = vsel %vm4696, %v5609, %v5610
      %v5612 = vrot.slane %v5536, 2
      %v5613 = vrot.slane %v5538, 2
      %v5614 = vsel %vm4696, %v5612, %v5613
      %v5615 = vrot.slane %v5537, 2
      %v5616 = vrot.slane %v5539, 2
      %v5617 = vsel %vm4696, %v5615, %v5616
      %v5618 = vrot.slane %v5540, 2
      %v5619 = vrot.slane %v5542, 2
      %v5620 = vsel %vm4696, %v5618, %v5619
      %v5621 = vrot.slane %v5541, 2
      %v5622 = vrot.slane %v5543, 2
      %v5623 = vsel %vm4696, %v5621, %v5622
      %v5640 = vadd.f32 %v5451, %v5578
      %v5641 = vadd.f32 %v5452, %v5581
      %v5642 = vadd.f32 %v5453, %v5584
      %v5643 = vadd.f32 %v5454, %v5587
      %v5644 = vadd.f32 %v5455, %v5590
      %v5645 = vadd.f32 %v5456, %v5593
      %v5646 = vadd.f32 %v5457, %v5596
      %v5647 = vadd.f32 %v5458, %v5599
      %v5648 = vadd.f32 %v5459, %v5602
      %v5649 = vadd.f32 %v5460, %v5605
      %v5650 = vadd.f32 %v5461, %v5608
      %v5651 = vadd.f32 %v5462, %v5611
      %v5652 = vadd.f32 %v5463, %v5614
      %v5653 = vadd.f32 %v5464, %v5617
      %v5654 = vadd.f32 %v5465, %v5620
      %v5655 = vadd.f32 %v5466, %v5623
      %v5656 = vmul.f32 %v5640, 0.1
      %v5657 = vmul.f32 %v5641, 0.1
      %v5658 = vmul.f32 %v5642, 0.1
      %v5659 = vmul.f32 %v5643, 0.1
      %v5660 = vmul.f32 %v5644, 0.1
      %v5661 = vmul.f32 %v5645, 0.1
      %v5662 = vmul.f32 %v5646, 0.1
      %v5663 = vmul.f32 %v5647, 0.1
      %v5664 = vmul.f32 %v5648, 0.1
      %v5665 = vmul.f32 %v5649, 0.1
      %v5666 = vmul.f32 %v5650, 0.1
      %v5667 = vmul.f32 %v5651, 0.1
      %v5668 = vmul.f32 %v5652, 0.1
      %v5669 = vmul.f32 %v5653, 0.1
      %v5670 = vmul.f32 %v5654, 0.1
      %v5671 = vmul.f32 %v5655, 0.1
      %v5672 = vmax.f32 %v5640, %v5656
      %v5673 = vmax.f32 %v5641, %v5657
      %v5674 = vmax.f32 %v5642, %v5658
      %v5675 = vmax.f32 %v5643, %v5659
      %v5676 = vmax.f32 %v5644, %v5660
      %v5677 = vmax.f32 %v5645, %v5661
      %v5678 = vmax.f32 %v5646, %v5662
      %v5679 = vmax.f32 %v5647, %v5663
      %v5680 = vmax.f32 %v5648, %v5664
      %v5681 = vmax.f32 %v5649, %v5665
      %v5682 = vmax.f32 %v5650, %v5666
      %v5683 = vmax.f32 %v5651, %v5667
      %v5684 = vmax.f32 %v5652, %v5668
      %v5685 = vmax.f32 %v5653, %v5669
      %v5686 = vmax.f32 %v5654, %v5670
      %v5687 = vmax.f32 %v5655, %v5671
      %v5688 = vpack.c.bf16 %v5674, %v5672
      %v5689 = vpack.c.bf16 %v5675, %v5673
      %v5690 = vpack.c.bf16 %v5678, %v5676
      %v5691 = vpack.c.bf16 %v5679, %v5677
      %v5692 = vpack.c.bf16 %v5682, %v5680
      %v5693 = vpack.c.bf16 %v5683, %v5681
      %v5694 = vpack.c.bf16 %v5686, %v5684
      %v5695 = vpack.c.bf16 %v5687, %v5685
      %v5696 = vld [vmem:[%s14] sm:$0xff]
      %v5697 = vld [vmem:[%s14 + $0x8] sm:$0xff]
      %v5698 = vld [vmem:[%s14 + $0x10] sm:$0xff]
      %v5699 = vld [vmem:[%s14 + $0x18] sm:$0xff]
      %v5700 = vld [vmem:[%s14 + $0x20] sm:$0xff]
      %v5701 = vld [vmem:[%s14 + $0x28] sm:$0xff]
      %v5702 = vld [vmem:[%s14 + $0x30] sm:$0xff]
      %v5703 = vld [vmem:[%s14 + $0x38] sm:$0xff]
      %v5704 = vld [vmem:[%s14 + $0x40] sm:$0xff]
      %v5705 = vld [vmem:[%s14 + $0x48] sm:$0xff]
      %v5706 = vld [vmem:[%s14 + $0x50] sm:$0xff]
      %v5707 = vld [vmem:[%s14 + $0x58] sm:$0xff]
      %v5708 = vld [vmem:[%s14 + $0x60] sm:$0xff]
      %v5709 = vld [vmem:[%s14 + $0x68] sm:$0xff]
      %v5710 = vld [vmem:[%s14 + $0x70] sm:$0xff]
      %v5711 = vld [vmem:[%s14 + $0x78] sm:$0xff]
      %v5712 = vld [vmem:[%s14 + $0x80] sm:$0xff]
      %v5713 = vld [vmem:[%s14 + $0x88] sm:$0xff]
      %v5714 = vld [vmem:[%s14 + $0x90] sm:$0xff]
      %v5715 = vld [vmem:[%s14 + $0x98] sm:$0xff]
      %v5716 = vld [vmem:[%s14 + $0xa0] sm:$0xff]
      %v5717 = vld [vmem:[%s14 + $0xa8] sm:$0xff]
      %v5718 = vld [vmem:[%s14 + $0xb0] sm:$0xff]
      %v5719 = vld [vmem:[%s14 + $0xb8] sm:$0xff]
      %v5744 = vunpack.c.l.b16 %v5696
      %v5745 = vunpack.c.h.b16 %v5696
      %v5746 = vunpack.c.l.b16 %v5697
      %v5747 = vunpack.c.h.b16 %v5697
      %v5748 = vunpack.c.l.b16 %v5698
      %v5749 = vunpack.c.h.b16 %v5698
      %v5750 = vunpack.c.l.b16 %v5699
      %v5751 = vunpack.c.h.b16 %v5699
      %v5752 = vunpack.c.l.b16 %v5700
      %v5753 = vunpack.c.h.b16 %v5700
      %v5754 = vunpack.c.l.b16 %v5701
      %v5755 = vunpack.c.h.b16 %v5701
      %v5756 = vunpack.c.l.b16 %v5702
      %v5757 = vunpack.c.h.b16 %v5702
      %v5758 = vunpack.c.l.b16 %v5703
      %v5759 = vunpack.c.h.b16 %v5703
      %v5760 = vunpack.c.l.b16 %v5704
      %v5761 = vunpack.c.h.b16 %v5704
      %v5762 = vunpack.c.l.b16 %v5705
      %v5763 = vunpack.c.h.b16 %v5705
      %v5764 = vunpack.c.l.b16 %v5706
      %v5765 = vunpack.c.h.b16 %v5706
      %v5766 = vunpack.c.l.b16 %v5707
      %v5767 = vunpack.c.h.b16 %v5707
      %v5768 = vunpack.c.l.b16 %v5708
      %v5769 = vunpack.c.h.b16 %v5708
      %v5770 = vunpack.c.l.b16 %v5709
      %v5771 = vunpack.c.h.b16 %v5709
      %v5772 = vunpack.c.l.b16 %v5710
      %v5773 = vunpack.c.h.b16 %v5710
      %v5774 = vunpack.c.l.b16 %v5711
      %v5775 = vunpack.c.h.b16 %v5711
      %v5776 = vunpack.c.l.b16 %v5712
      %v5777 = vunpack.c.h.b16 %v5712
      %v5778 = vunpack.c.l.b16 %v5713
      %v5779 = vunpack.c.h.b16 %v5713
      %v5780 = vunpack.c.l.b16 %v5714
      %v5781 = vunpack.c.h.b16 %v5714
      %v5782 = vunpack.c.l.b16 %v5715
      %v5783 = vunpack.c.h.b16 %v5715
      %v5784 = vunpack.c.l.b16 %v5716
      %v5785 = vunpack.c.h.b16 %v5716
      %v5786 = vunpack.c.l.b16 %v5717
      %v5787 = vunpack.c.h.b16 %v5717
      %v5788 = vunpack.c.l.b16 %v5718
      %v5789 = vunpack.c.h.b16 %v5718
      %v5790 = vunpack.c.l.b16 %v5719
      %v5791 = vunpack.c.h.b16 %v5719
      %v5792 = vpack.c.b16 %v5746, %v5744
      %v5793 = vpack.c.b16 %v5747, %v5745
      %v5794 = vpack.c.b16 %v5750, %v5748
      %v5795 = vpack.c.b16 %v5751, %v5749
      %v5796 = vpack.c.b16 %v5754, %v5752
      %v5797 = vpack.c.b16 %v5755, %v5753
      %v5798 = vpack.c.b16 %v5758, %v5756
      %v5799 = vpack.c.b16 %v5759, %v5757
      %v5800 = vpack.c.b16 %v5762, %v5760
      %v5801 = vpack.c.b16 %v5763, %v5761
      %v5802 = vpack.c.b16 %v5766, %v5764
      %v5803 = vpack.c.b16 %v5767, %v5765
      %v5804 = vpack.c.b16 %v5770, %v5768
      %v5805 = vpack.c.b16 %v5771, %v5769
      %v5806 = vpack.c.b16 %v5774, %v5772
      %v5807 = vpack.c.b16 %v5775, %v5773
      %v5808 = vpack.c.b16 %v5778, %v5776
      %v5809 = vpack.c.b16 %v5779, %v5777
      %v5810 = vpack.c.b16 %v5782, %v5780
      %v5811 = vpack.c.b16 %v5783, %v5781
      %v5812 = vpack.c.b16 %v5786, %v5784
      %v5813 = vpack.c.b16 %v5787, %v5785
      %v5814 = vpack.c.b16 %v5790, %v5788
      %v5815 = vpack.c.b16 %v5791, %v5789
      %v5841 = vsel %vm2864, %v5689, 0
      %v5844 = vsel %vm2864, %v5691, 0
      %v5847 = vsel %vm2864, %v5693, 0
      %v5850 = vsel %vm2864, %v5695, 0
      %5852 = vmatprep.subr.bf16.mxu0 %v5793
      %5853 = vmatpush1.bf16.msra.mxu0 %v5792
      %5854 = vmatprep.subr.bf16.mxu0 %v5795
      %5855 = vmatpush1.bf16.msra.mxu0 %v5794
      %5856 = vmatprep.subr.bf16.mxu0 %v5797
      %5857 = vmatpush1.bf16.msra.mxu0 %v5796
      %5858 = vmatprep.subr.bf16.mxu0 %v5799
      %5859 = vmatpush1.bf16.msra.mxu0 %v5798
      %5860 = vmatprep.subr.bf16.mxu0 %v5801
      %5861 = vmatpush1.bf16.msra.mxu0 %v5800
      %5862 = vmatprep.subr.bf16.mxu0 %v5803
      %5863 = vmatpush1.bf16.msra.mxu0 %v5802
      %5864 = vmatprep.subr.bf16.mxu0 %v5805
      %5865 = vmatpush1.bf16.msra.mxu0 %v5804
      %5866 = vmatprep.subr.bf16.mxu0 %v5807
      %5867 = vmatpush1.bf16.msra.mxu0 %v5806
      %5868 = vmatprep.subr.bf16.mxu0 %v5809
      %5869 = vmatpush1.bf16.msra.mxu0 %v5808
      %5870 = vmatprep.subr.bf16.mxu0 %v5811
      %5871 = vmatpush1.bf16.msra.mxu0 %v5810
      %5872 = vmatprep.subr.bf16.mxu0 %v5813
      %5873 = vmatpush1.bf16.msra.mxu0 %v5812
      %5874 = vmatprep.subr.bf16.mxu0 %v5815
      %5875 = vmatpush1.bf16.msra.mxu0 %v5814
      %5876 = vmatprep.subr.bf16.mxu0 0
      %5877 = vmatpush1.bf16.msra.mxu0 0
      %5878 = vmatprep.subr.bf16.mxu0 0
      %5879 = vmatpush1.bf16.msra.mxu0 0
      %5880 = vmatprep.subr.bf16.mxu0 0
      %5881 = vmatpush1.bf16.msra.mxu0 0
      %5882 = vmatprep.subr.bf16.mxu0 0
      %5883 = vmatpush1.bf16.msra.mxu0 0
      %5884 = vmatprep.mubr.bf16.mxu0 %v5841
      %5885 = vmatmul.mubr.bf16.gmra.mrb[0].mxu0 %v5688
      %v5886 = vpop.f32.mrb[0].mxu0
      %v5887 = vadd.f32 0.0, %v5886
      %v5888 = vpop.f32.mrb[0].mxu0
      %v5889 = vadd.f32 0.0, %v5888
      %v5890 = vpop.f32.mrb[0].mxu0
      %v5891 = vadd.f32 0.0, %v5890
      %v5892 = vpop.f32.mrb[0].mxu0
      %v5893 = vadd.f32 0.0, %v5892
      %5894 = vmatprep.mubr.bf16.mxu0 %v5844
      %5895 = vmatmul.mubr.bf16.gmra.mrb[0].mxu0 %v5690
      %v5896 = vpop.f32.mrb[0].mxu0
      %v5897 = vadd.f32 0.0, %v5896
      %v5898 = vpop.f32.mrb[0].mxu0
      %v5899 = vadd.f32 0.0, %v5898
      %v5900 = vpop.f32.mrb[0].mxu0
      %v5901 = vadd.f32 0.0, %v5900
      %v5902 = vpop.f32.mrb[0].mxu0
      %v5903 = vadd.f32 0.0, %v5902
      %5904 = vmatprep.mubr.bf16.mxu0 %v5847
      %5905 = vmatmul.mubr.bf16.gmra.mrb[0].mxu0 %v5692
      %v5906 = vpop.f32.mrb[0].mxu0
      %v5907 = vadd.f32 0.0, %v5906
      %v5908 = vpop.f32.mrb[0].mxu0
      %v5909 = vadd.f32 0.0, %v5908
      %v5910 = vpop.f32.mrb[0].mxu0
      %v5911 = vadd.f32 0.0, %v5910
      %v5912 = vpop.f32.mrb[0].mxu0
      %v5913 = vadd.f32 0.0, %v5912
      %5914 = vmatprep.mubr.bf16.mxu0 %v5850
      %5915 = vmatmul.mubr.bf16.gmra.mrb[0].mxu0 %v5694
      %v5916 = vpop.f32.mrb[0].mxu0
      %v5917 = vadd.f32 0.0, %v5916
      %v5918 = vpop.f32.mrb[0].mxu0
      %v5919 = vadd.f32 0.0, %v5918
      %v5920 = vpop.f32.mrb[0].mxu0
      %v5921 = vadd.f32 0.0, %v5920
      %v5922 = vpop.f32.mrb[0].mxu0
      %v5923 = vadd.f32 0.0, %v5922
      %5924 = vdwg.mxu0
      %v5925 = vmul.f32 %v5887, 0.1
      %v5926 = vmul.f32 %v5889, 0.1
      %v5927 = vmul.f32 %v5891, 0.1
      %v5928 = vmul.f32 %v5893, 0.1
      %v5929 = vmul.f32 %v5897, 0.1
      %v5930 = vmul.f32 %v5899, 0.1
      %v5931 = vmul.f32 %v5901, 0.1
      %v5932 = vmul.f32 %v5903, 0.1
      %v5933 = vmul.f32 %v5907, 0.1
      %v5934 = vmul.f32 %v5909, 0.1
      %v5935 = vmul.f32 %v5911, 0.1
      %v5936 = vmul.f32 %v5913, 0.1
      %v5937 = vmul.f32 %v5917, 0.1
      %v5938 = vmul.f32 %v5919, 0.1
      %v5939 = vmul.f32 %v5921, 0.1
      %v5940 = vmul.f32 %v5923, 0.1
      %v5941 = vmax.f32 %v5887, %v5925
      %v5942 = vmax.f32 %v5889, %v5926
      %v5943 = vmax.f32 %v5891, %v5927
      %v5944 = vmax.f32 %v5893, %v5928
      %v5945 = vmax.f32 %v5897, %v5929
      %v5946 = vmax.f32 %v5899, %v5930
      %v5947 = vmax.f32 %v5901, %v5931
      %v5948 = vmax.f32 %v5903, %v5932
      %v5949 = vmax.f32 %v5907, %v5933
      %v5950 = vmax.f32 %v5909, %v5934
      %v5951 = vmax.f32 %v5911, %v5935
      %v5952 = vmax.f32 %v5913, %v5936
      %v5953 = vmax.f32 %v5917, %v5937
      %v5954 = vmax.f32 %v5919, %v5938
      %v5955 = vmax.f32 %v5921, %v5939
      %v5956 = vmax.f32 %v5923, %v5940
      %5957 = vst [vmem:[#allocation8] sm:$0xff] 0.0
      %5958 = vst.msk [vmem:[#allocation8 + $0x8] sm:$0xff] %vm2864, 0.0
      %5959 = vst [vmem:[#allocation8 + $0x10] sm:$0x3] 0.0
      %5960 = vst.msk [vmem:[#allocation8 + $0x18] sm:$0x3] %vm4232, 0.0
      %5961 = vst [vmem:[#allocation8 + $0x20] sm:$0xff] 0.0
      %5962 = vst.msk [vmem:[#allocation8 + $0x28] sm:$0xff] %vm2864, 0.0
      %5963 = vst [vmem:[#allocation8 + $0x30] sm:$0x3] 0.0
      %5964 = vst.msk [vmem:[#allocation8 + $0x38] sm:$0x3] %vm4232, 0.0
      %5965 = vst [vmem:[#allocation8 + $0x40] sm:$0xff] 0.0
      %5966 = vst.msk [vmem:[#allocation8 + $0x48] sm:$0xff] %vm2864, 0.0
      %5967 = vst [vmem:[#allocation8 + $0x50] sm:$0x3] 0.0
      %5968 = vst.msk [vmem:[#allocation8 + $0x58] sm:$0x3] %vm4232, 0.0
      %5969 = vst [vmem:[#allocation8 + $0x60] sm:$0xff] 0.0
      %5970 = vst.msk [vmem:[#allocation8 + $0x68] sm:$0xff] %vm2864, 0.0
      %5971 = vst [vmem:[#allocation8 + $0x70] sm:$0x3] 0.0
      %5972 = vst.msk [vmem:[#allocation8 + $0x78] sm:$0x3] %vm4232, 0.0
      %5973 = vst [vmem:[#allocation8 + $0x80] sm:$0xff] 0.0
      %5974 = vst.msk [vmem:[#allocation8 + $0x88] sm:$0xff] %vm2864, 0.0
      %5975 = vst [vmem:[#allocation8 + $0x90] sm:$0x3] 0.0
      %5976 = vst.msk [vmem:[#allocation8 + $0x98] sm:$0x3] %vm4232, 0.0
      %5977 = vst [vmem:[#allocation8 + $0xa0] sm:$0xff] 0.0
      %5978 = vst.msk [vmem:[#allocation8 + $0xa8] sm:$0xff] %vm2864, 0.0
      %5979 = vst [vmem:[#allocation8 + $0xb0] sm:$0x3] 0.0
      %5980 = vst.msk [vmem:[#allocation8 + $0xb8] sm:$0x3] %vm4232, 0.0
      %5981 = vst [vmem:[#allocation8 + $0xc0] sm:$0xff] 0.0
      %5982 = vst.msk [vmem:[#allocation8 + $0xc8] sm:$0xff] %vm2864, 0.0
      %5983 = vst [vmem:[#allocation8 + $0xd0] sm:$0x3] 0.0
      %5984 = vst.msk [vmem:[#allocation8 + $0xd8] sm:$0x3] %vm4232, 0.0
      %5985 = vst [vmem:[#allocation8 + $0xe0] sm:$0xff] 0.0
      %5986 = vst.msk [vmem:[#allocation8 + $0xe8] sm:$0xff] %vm2864, 0.0
      %5987 = vst [vmem:[#allocation8 + $0xf0] sm:$0x3] 0.0
      %5988 = vst.msk [vmem:[#allocation8 + $0xf8] sm:$0x3] %vm4232, 0.0
      %5989 = vst [vmem:[#allocation8 + $0x100] sm:$0xff] 0.0
      %5990 = vst.msk [vmem:[#allocation8 + $0x108] sm:$0xff] %vm2864, 0.0
      %5991 = vst [vmem:[#allocation8 + $0x110] sm:$0x3] 0.0
      %5992 = vst.msk [vmem:[#allocation8 + $0x118] sm:$0x3] %vm4232, 0.0
      %5993 = vst [vmem:[#allocation8 + $0x120] sm:$0xff] 0.0
      %5994 = vst.msk [vmem:[#allocation8 + $0x128] sm:$0xff] %vm2864, 0.0
      %5995 = vst [vmem:[#allocation8 + $0x130] sm:$0x3] 0.0
      %5996 = vst.msk [vmem:[#allocation8 + $0x138] sm:$0x3] %vm4232, 0.0
      %v6013 = vrot.slane %v5941, 7
      %v6014 = vrot.slane %v5942, 7
      %v6015 = vrot.slane %v5943, 7
      %v6016 = vrot.slane %v5944, 7
      %v6017 = vrot.slane %v5945, 7
      %v6018 = vrot.slane %v5946, 7
      %v6019 = vrot.slane %v5947, 7
      %v6020 = vrot.slane %v5948, 7
      %v6021 = vrot.slane %v5949, 7
      %v6022 = vrot.slane %v5950, 7
      %v6023 = vrot.slane %v5951, 7
      %v6024 = vrot.slane %v5952, 7
      %v6025 = vrot.slane %v5953, 7
      %v6026 = vrot.slane %v5954, 7
      %v6027 = vrot.slane %v5955, 7
      %v6028 = vrot.slane %v5956, 7
      %s6045 = scalar_lea.vmem [#allocation8], 32
      %6046 = vst [vmem:[%s6045] sm:$0xfe] %v6013
      %6047 = vst.msk [vmem:[%s6045 + $0x8] sm:$0xfe] %vm4320, %v6014
      %6048 = vst [vmem:[%s6045 + $0x10] sm:$0x1] %v6013
      %6049 = vst.msk [vmem:[%s6045 + $0x18] sm:$0x1] %vm4323, %v6014
      %6050 = vst [vmem:[%s6045 + $0x20] sm:$0xfe] %v6015
      %6051 = vst.msk [vmem:[%s6045 + $0x28] sm:$0xfe] %vm4320, %v6016
      %6052 = vst [vmem:[%s6045 + $0x30] sm:$0x1] %v6015
      %6053 = vst.msk [vmem:[%s6045 + $0x38] sm:$0x1] %vm4323, %v6016
      %6054 = vst [vmem:[%s6045 + $0x40] sm:$0xfe] %v6017
      %6055 = vst.msk [vmem:[%s6045 + $0x48] sm:$0xfe] %vm4320, %v6018
      %6056 = vst [vmem:[%s6045 + $0x50] sm:$0x1] %v6017
      %6057 = vst.msk [vmem:[%s6045 + $0x58] sm:$0x1] %vm4323, %v6018
      %6058 = vst [vmem:[%s6045 + $0x60] sm:$0xfe] %v6019
      %6059 = vst.msk [vmem:[%s6045 + $0x68] sm:$0xfe] %vm4320, %v6020
      %6060 = vst [vmem:[%s6045 + $0x70] sm:$0x1] %v6019
      %6061 = vst.msk [vmem:[%s6045 + $0x78] sm:$0x1] %vm4323, %v6020
      %6062 = vst [vmem:[%s6045 + $0x80] sm:$0xfe] %v6021
      %6063 = vst.msk [vmem:[%s6045 + $0x88] sm:$0xfe] %vm4320, %v6022
      %6064 = vst [vmem:[%s6045 + $0x90] sm:$0x1] %v6021
      %6065 = vst.msk [vmem:[%s6045 + $0x98] sm:$0x1] %vm4323, %v6022
      %6066 = vst [vmem:[%s6045 + $0xa0] sm:$0xfe] %v6023
      %6067 = vst.msk [vmem:[%s6045 + $0xa8] sm:$0xfe] %vm4320, %v6024
      %6068 = vst [vmem:[%s6045 + $0xb0] sm:$0x1] %v6023
      %6069 = vst.msk [vmem:[%s6045 + $0xb8] sm:$0x1] %vm4323, %v6024
      %6070 = vst [vmem:[%s6045 + $0xc0] sm:$0xfe] %v6025
      %6071 = vst.msk [vmem:[%s6045 + $0xc8] sm:$0xfe] %vm4320, %v6026
      %6072 = vst [vmem:[%s6045 + $0xd0] sm:$0x1] %v6025
      %6073 = vst.msk [vmem:[%s6045 + $0xd8] sm:$0x1] %vm4323, %v6026
      %6074 = vst [vmem:[%s6045 + $0xe0] sm:$0xfe] %v6027
      %6075 = vst.msk [vmem:[%s6045 + $0xe8] sm:$0xfe] %vm4320, %v6028
      %6076 = vst [vmem:[%s6045 + $0xf0] sm:$0x1] %v6027
      %6077 = vst.msk [vmem:[%s6045 + $0xf8] sm:$0x1] %vm4323, %v6028
      %v6078 = vld [vmem:[#allocation8] sm:$0xff]
      %v6079 = vld [vmem:[#allocation8 + $0x8] sm:$0xff]
      %v6080 = vld [vmem:[#allocation8 + $0x20] sm:$0xff]
      %v6081 = vld [vmem:[#allocation8 + $0x28] sm:$0xff]
      %v6082 = vld [vmem:[#allocation8 + $0x40] sm:$0xff]
      %v6083 = vld [vmem:[#allocation8 + $0x48] sm:$0xff]
      %v6084 = vld [vmem:[#allocation8 + $0x60] sm:$0xff]
      %v6085 = vld [vmem:[#allocation8 + $0x68] sm:$0xff]
      %v6086 = vld [vmem:[#allocation8 + $0x80] sm:$0xff]
      %v6087 = vld [vmem:[#allocation8 + $0x88] sm:$0xff]
      %v6088 = vld [vmem:[#allocation8 + $0xa0] sm:$0xff]
      %v6089 = vld [vmem:[#allocation8 + $0xa8] sm:$0xff]
      %v6090 = vld [vmem:[#allocation8 + $0xc0] sm:$0xff]
      %v6091 = vld [vmem:[#allocation8 + $0xc8] sm:$0xff]
      %v6092 = vld [vmem:[#allocation8 + $0xe0] sm:$0xff]
      %v6093 = vld [vmem:[#allocation8 + $0xe8] sm:$0xff]
      %v6094 = vld [vmem:[%s15] sm:$0x3]
      %v6096 = vlaneseq
      %v6097 = vshrl.u32 %v6096, 7
      %v6098 = vsub.s32 0, %v6097
      %v6099 = vrot.slane %v6094, %v6098
      %v6100 = vlaneseq
      %v6101 = vshrl.u32 %v6100, 7
      %v6102 = vsub.s32 1, %v6101
      %v6103 = vrot.slane %v6094, %v6102
      %v6106 = vmul.f32 %v6078, %v6099
      %v6107 = vmul.f32 %v6079, %v6103
      %v6108 = vmul.f32 %v6080, %v6099
      %v6109 = vmul.f32 %v6081, %v6103
      %v6110 = vmul.f32 %v6082, %v6099
      %v6111 = vmul.f32 %v6083, %v6103
      %v6112 = vmul.f32 %v6084, %v6099
      %v6113 = vmul.f32 %v6085, %v6103
      %v6114 = vmul.f32 %v6086, %v6099
      %v6115 = vmul.f32 %v6087, %v6103
      %v6116 = vmul.f32 %v6088, %v6099
      %v6117 = vmul.f32 %v6089, %v6103
      %v6118 = vmul.f32 %v6090, %v6099
      %v6119 = vmul.f32 %v6091, %v6103
      %v6120 = vmul.f32 %v6092, %v6099
      %v6121 = vmul.f32 %v6093, %v6103
      %v6122 = vld [vmem:[#allocation8] sm:$0xfe]
      %v6123 = vld [vmem:[#allocation8 + $0x8] sm:$0xfe]
      %v6124 = vld [vmem:[#allocation8 + $0x10] sm:$0x1]
      %v6125 = vld [vmem:[#allocation8 + $0x18] sm:$0x1]
      %v6126 = vld [vmem:[#allocation8 + $0x20] sm:$0xfe]
      %v6127 = vld [vmem:[#allocation8 + $0x28] sm:$0xfe]
      %v6128 = vld [vmem:[#allocation8 + $0x30] sm:$0x1]
      %v6129 = vld [vmem:[#allocation8 + $0x38] sm:$0x1]
      %v6130 = vld [vmem:[#allocation8 + $0x40] sm:$0xfe]
      %v6131 = vld [vmem:[#allocation8 + $0x48] sm:$0xfe]
      %v6132 = vld [vmem:[#allocation8 + $0x50] sm:$0x1]
      %v6133 = vld [vmem:[#allocation8 + $0x58] sm:$0x1]
      %v6134 = vld [vmem:[#allocation8 + $0x60] sm:$0xfe]
      %v6135 = vld [vmem:[#allocation8 + $0x68] sm:$0xfe]
      %v6136 = vld [vmem:[#allocation8 + $0x70] sm:$0x1]
      %v6137 = vld [vmem:[#allocation8 + $0x78] sm:$0x1]
      %v6138 = vld [vmem:[#allocation8 + $0x80] sm:$0xfe]
      %v6139 = vld [vmem:[#allocation8 + $0x88] sm:$0xfe]
      %v6140 = vld [vmem:[#allocation8 + $0x90] sm:$0x1]
      %v6141 = vld [vmem:[#allocation8 + $0x98] sm:$0x1]
      %v6142 = vld [vmem:[#allocation8 + $0xa0] sm:$0xfe]
      %v6143 = vld [vmem:[#allocation8 + $0xa8] sm:$0xfe]
      %v6144 = vld [vmem:[#allocation8 + $0xb0] sm:$0x1]
      %v6145 = vld [vmem:[#allocation8 + $0xb8] sm:$0x1]
      %v6146 = vld [vmem:[#allocation8 + $0xc0] sm:$0xfe]
      %v6147 = vld [vmem:[#allocation8 + $0xc8] sm:$0xfe]
      %v6148 = vld [vmem:[#allocation8 + $0xd0] sm:$0x1]
      %v6149 = vld [vmem:[#allocation8 + $0xd8] sm:$0x1]
      %v6150 = vld [vmem:[#allocation8 + $0xe0] sm:$0xfe]
      %v6151 = vld [vmem:[#allocation8 + $0xe8] sm:$0xfe]
      %v6152 = vld [vmem:[#allocation8 + $0xf0] sm:$0x1]
      %v6153 = vld [vmem:[#allocation8 + $0xf8] sm:$0x1]
      %s6154 = scalar_lea.vmem %s15, 2
      %v6155 = vld [vmem:[%s6154] sm:$0x3]
      %v6157 = vlaneseq
      %v6158 = vshrl.u32 %v6157, 7
      %v6159 = vsub.s32 0, %v6158
      %v6160 = vrot.slane %v6155, %v6159
      %v6161 = vlaneseq
      %v6162 = vshrl.u32 %v6161, 7
      %v6163 = vsub.s32 1, %v6162
      %v6164 = vrot.slane %v6155, %v6163
      %v6167 = vmul.f32 %v6122, %v6160
      %v6168 = vmul.f32 %v6123, %v6164
      %v6169 = vmul.f32 %v6124, %v6160
      %v6170 = vmul.f32 %v6125, %v6164
      %v6171 = vmul.f32 %v6126, %v6160
      %v6172 = vmul.f32 %v6127, %v6164
      %v6173 = vmul.f32 %v6128, %v6160
      %v6174 = vmul.f32 %v6129, %v6164
      %v6175 = vmul.f32 %v6130, %v6160
      %v6176 = vmul.f32 %v6131, %v6164
      %v6177 = vmul.f32 %v6132, %v6160
      %v6178 = vmul.f32 %v6133, %v6164
      %v6179 = vmul.f32 %v6134, %v6160
      %v6180 = vmul.f32 %v6135, %v6164
      %v6181 = vmul.f32 %v6136, %v6160
      %v6182 = vmul.f32 %v6137, %v6164
      %v6183 = vmul.f32 %v6138, %v6160
      %v6184 = vmul.f32 %v6139, %v6164
      %v6185 = vmul.f32 %v6140, %v6160
      %v6186 = vmul.f32 %v6141, %v6164
      %v6187 = vmul.f32 %v6142, %v6160
      %v6188 = vmul.f32 %v6143, %v6164
      %v6189 = vmul.f32 %v6144, %v6160
      %v6190 = vmul.f32 %v6145, %v6164
      %v6191 = vmul.f32 %v6146, %v6160
      %v6192 = vmul.f32 %v6147, %v6164
      %v6193 = vmul.f32 %v6148, %v6160
      %v6194 = vmul.f32 %v6149, %v6164
      %v6195 = vmul.f32 %v6150, %v6160
      %v6196 = vmul.f32 %v6151, %v6164
      %v6197 = vmul.f32 %v6152, %v6160
      %v6198 = vmul.f32 %v6153, %v6164
      %v6231 = vrot.slane %v6167, 1
      %v6232 = vrot.slane %v6169, 1
      %v6233 = vsel %vm4506, %v6231, %v6232
      %v6234 = vrot.slane %v6168, 1
      %v6235 = vrot.slane %v6170, 1
      %v6236 = vsel %vm4506, %v6234, %v6235
      %v6237 = vrot.slane %v6171, 1
      %v6238 = vrot.slane %v6173, 1
      %v6239 = vsel %vm4506, %v6237, %v6238
      %v6240 = vrot.slane %v6172, 1
      %v6241 = vrot.slane %v6174, 1
      %v6242 = vsel %vm4506, %v6240, %v6241
      %v6243 = vrot.slane %v6175, 1
      %v6244 = vrot.slane %v6177, 1
      %v6245 = vsel %vm4506, %v6243, %v6244
      %v6246 = vrot.slane %v6176, 1
      %v6247 = vrot.slane %v6178, 1
      %v6248 = vsel %vm4506, %v6246, %v6247
      %v6249 = vrot.slane %v6179, 1
      %v6250 = vrot.slane %v6181, 1
      %v6251 = vsel %vm4506, %v6249, %v6250
      %v6252 = vrot.slane %v6180, 1
      %v6253 = vrot.slane %v6182, 1
      %v6254 = vsel %vm4506, %v6252, %v6253
      %v6255 = vrot.slane %v6183, 1
      %v6256 = vrot.slane %v6185, 1
      %v6257 = vsel %vm4506, %v6255, %v6256
      %v6258 = vrot.slane %v6184, 1
      %v6259 = vrot.slane %v6186, 1
      %v6260 = vsel %vm4506, %v6258, %v6259
      %v6261 = vrot.slane %v6187, 1
      %v6262 = vrot.slane %v6189, 1
      %v6263 = vsel %vm4506, %v6261, %v6262
      %v6264 = vrot.slane %v6188, 1
      %v6265 = vrot.slane %v6190, 1
      %v6266 = vsel %vm4506, %v6264, %v6265
      %v6267 = vrot.slane %v6191, 1
      %v6268 = vrot.slane %v6193, 1
      %v6269 = vsel %vm4506, %v6267, %v6268
      %v6270 = vrot.slane %v6192, 1
      %v6271 = vrot.slane %v6194, 1
      %v6272 = vsel %vm4506, %v6270, %v6271
      %v6273 = vrot.slane %v6195, 1
      %v6274 = vrot.slane %v6197, 1
      %v6275 = vsel %vm4506, %v6273, %v6274
      %v6276 = vrot.slane %v6196, 1
      %v6277 = vrot.slane %v6198, 1
      %v6278 = vsel %vm4506, %v6276, %v6277
      %v6295 = vadd.f32 %v6106, %v6233
      %v6296 = vadd.f32 %v6107, %v6236
      %v6297 = vadd.f32 %v6108, %v6239
      %v6298 = vadd.f32 %v6109, %v6242
      %v6299 = vadd.f32 %v6110, %v6245
      %v6300 = vadd.f32 %v6111, %v6248
      %v6301 = vadd.f32 %v6112, %v6251
      %v6302 = vadd.f32 %v6113, %v6254
      %v6303 = vadd.f32 %v6114, %v6257
      %v6304 = vadd.f32 %v6115, %v6260
      %v6305 = vadd.f32 %v6116, %v6263
      %v6306 = vadd.f32 %v6117, %v6266
      %v6307 = vadd.f32 %v6118, %v6269
      %v6308 = vadd.f32 %v6119, %v6272
      %v6309 = vadd.f32 %v6120, %v6275
      %v6310 = vadd.f32 %v6121, %v6278
      %v6311 = vld [vmem:[#allocation8] sm:$0xfc]
      %v6312 = vld [vmem:[#allocation8 + $0x8] sm:$0xfc]
      %v6313 = vld [vmem:[#allocation8 + $0x10] sm:$0x3]
      %v6314 = vld [vmem:[#allocation8 + $0x18] sm:$0x3]
      %v6315 = vld [vmem:[#allocation8 + $0x20] sm:$0xfc]
      %v6316 = vld [vmem:[#allocation8 + $0x28] sm:$0xfc]
      %v6317 = vld [vmem:[#allocation8 + $0x30] sm:$0x3]
      %v6318 = vld [vmem:[#allocation8 + $0x38] sm:$0x3]
      %v6319 = vld [vmem:[#allocation8 + $0x40] sm:$0xfc]
      %v6320 = vld [vmem:[#allocation8 + $0x48] sm:$0xfc]
      %v6321 = vld [vmem:[#allocation8 + $0x50] sm:$0x3]
      %v6322 = vld [vmem:[#allocation8 + $0x58] sm:$0x3]
      %v6323 = vld [vmem:[#allocation8 + $0x60] sm:$0xfc]
      %v6324 = vld [vmem:[#allocation8 + $0x68] sm:$0xfc]
      %v6325 = vld [vmem:[#allocation8 + $0x70] sm:$0x3]
      %v6326 = vld [vmem:[#allocation8 + $0x78] sm:$0x3]
      %v6327 = vld [vmem:[#allocation8 + $0x80] sm:$0xfc]
      %v6328 = vld [vmem:[#allocation8 + $0x88] sm:$0xfc]
      %v6329 = vld [vmem:[#allocation8 + $0x90] sm:$0x3]
      %v6330 = vld [vmem:[#allocation8 + $0x98] sm:$0x3]
      %v6331 = vld [vmem:[#allocation8 + $0xa0] sm:$0xfc]
      %v6332 = vld [vmem:[#allocation8 + $0xa8] sm:$0xfc]
      %v6333 = vld [vmem:[#allocation8 + $0xb0] sm:$0x3]
      %v6334 = vld [vmem:[#allocation8 + $0xb8] sm:$0x3]
      %v6335 = vld [vmem:[#allocation8 + $0xc0] sm:$0xfc]
      %v6336 = vld [vmem:[#allocation8 + $0xc8] sm:$0xfc]
      %v6337 = vld [vmem:[#allocation8 + $0xd0] sm:$0x3]
      %v6338 = vld [vmem:[#allocation8 + $0xd8] sm:$0x3]
      %v6339 = vld [vmem:[#allocation8 + $0xe0] sm:$0xfc]
      %v6340 = vld [vmem:[#allocation8 + $0xe8] sm:$0xfc]
      %v6341 = vld [vmem:[#allocation8 + $0xf0] sm:$0x3]
      %v6342 = vld [vmem:[#allocation8 + $0xf8] sm:$0x3]
      %s6343 = scalar_lea.vmem %s15, 4
      %v6344 = vld [vmem:[%s6343] sm:$0x3]
      %v6346 = vlaneseq
      %v6347 = vshrl.u32 %v6346, 7
      %v6348 = vsub.s32 0, %v6347
      %v6349 = vrot.slane %v6344, %v6348
      %v6350 = vlaneseq
      %v6351 = vshrl.u32 %v6350, 7
      %v6352 = vsub.s32 1, %v6351
      %v6353 = vrot.slane %v6344, %v6352
      %v6356 = vmul.f32 %v6311, %v6349
      %v6357 = vmul.f32 %v6312, %v6353
      %v6358 = vmul.f32 %v6313, %v6349
      %v6359 = vmul.f32 %v6314, %v6353
      %v6360 = vmul.f32 %v6315, %v6349
      %v6361 = vmul.f32 %v6316, %v6353
      %v6362 = vmul.f32 %v6317, %v6349
      %v6363 = vmul.f32 %v6318, %v6353
      %v6364 = vmul.f32 %v6319, %v6349
      %v6365 = vmul.f32 %v6320, %v6353
      %v6366 = vmul.f32 %v6321, %v6349
      %v6367 = vmul.f32 %v6322, %v6353
      %v6368 = vmul.f32 %v6323, %v6349
      %v6369 = vmul.f32 %v6324, %v6353
      %v6370 = vmul.f32 %v6325, %v6349
      %v6371 = vmul.f32 %v6326, %v6353
      %v6372 = vmul.f32 %v6327, %v6349
      %v6373 = vmul.f32 %v6328, %v6353
      %v6374 = vmul.f32 %v6329, %v6349
      %v6375 = vmul.f32 %v6330, %v6353
      %v6376 = vmul.f32 %v6331, %v6349
      %v6377 = vmul.f32 %v6332, %v6353
      %v6378 = vmul.f32 %v6333, %v6349
      %v6379 = vmul.f32 %v6334, %v6353
      %v6380 = vmul.f32 %v6335, %v6349
      %v6381 = vmul.f32 %v6336, %v6353
      %v6382 = vmul.f32 %v6337, %v6349
      %v6383 = vmul.f32 %v6338, %v6353
      %v6384 = vmul.f32 %v6339, %v6349
      %v6385 = vmul.f32 %v6340, %v6353
      %v6386 = vmul.f32 %v6341, %v6349
      %v6387 = vmul.f32 %v6342, %v6353
      %v6420 = vrot.slane %v6356, 2
      %v6421 = vrot.slane %v6358, 2
      %v6422 = vsel %vm4696, %v6420, %v6421
      %v6423 = vrot.slane %v6357, 2
      %v6424 = vrot.slane %v6359, 2
      %v6425 = vsel %vm4696, %v6423, %v6424
      %v6426 = vrot.slane %v6360, 2
      %v6427 = vrot.slane %v6362, 2
      %v6428 = vsel %vm4696, %v6426, %v6427
      %v6429 = vrot.slane %v6361, 2
      %v6430 = vrot.slane %v6363, 2
      %v6431 = vsel %vm4696, %v6429, %v6430
      %v6432 = vrot.slane %v6364, 2
      %v6433 = vrot.slane %v6366, 2
      %v6434 = vsel %vm4696, %v6432, %v6433
      %v6435 = vrot.slane %v6365, 2
      %v6436 = vrot.slane %v6367, 2
      %v6437 = vsel %vm4696, %v6435, %v6436
      %v6438 = vrot.slane %v6368, 2
      %v6439 = vrot.slane %v6370, 2
      %v6440 = vsel %vm4696, %v6438, %v6439
      %v6441 = vrot.slane %v6369, 2
      %v6442 = vrot.slane %v6371, 2
      %v6443 = vsel %vm4696, %v6441, %v6442
      %v6444 = vrot.slane %v6372, 2
      %v6445 = vrot.slane %v6374, 2
      %v6446 = vsel %vm4696, %v6444, %v6445
      %v6447 = vrot.slane %v6373, 2
      %v6448 = vrot.slane %v6375, 2
      %v6449 = vsel %vm4696, %v6447, %v6448
      %v6450 = vrot.slane %v6376, 2
      %v6451 = vrot.slane %v6378, 2
      %v6452 = vsel %vm4696, %v6450, %v6451
      %v6453 = vrot.slane %v6377, 2
      %v6454 = vrot.slane %v6379, 2
      %v6455 = vsel %vm4696, %v6453, %v6454
      %v6456 = vrot.slane %v6380, 2
      %v6457 = vrot.slane %v6382, 2
      %v6458 = vsel %vm4696, %v6456, %v6457
      %v6459 = vrot.slane %v6381, 2
      %v6460 = vrot.slane %v6383, 2
      %v6461 = vsel %vm4696, %v6459, %v6460
      %v6462 = vrot.slane %v6384, 2
      %v6463 = vrot.slane %v6386, 2
      %v6464 = vsel %vm4696, %v6462, %v6463
      %v6465 = vrot.slane %v6385, 2
      %v6466 = vrot.slane %v6387, 2
      %v6467 = vsel %vm4696, %v6465, %v6466
      %v6484 = vadd.f32 %v6295, %v6422
      %v6485 = vadd.f32 %v6296, %v6425
      %v6486 = vadd.f32 %v6297, %v6428
      %v6487 = vadd.f32 %v6298, %v6431
      %v6488 = vadd.f32 %v6299, %v6434
      %v6489 = vadd.f32 %v6300, %v6437
      %v6490 = vadd.f32 %v6301, %v6440
      %v6491 = vadd.f32 %v6302, %v6443
      %v6492 = vadd.f32 %v6303, %v6446
      %v6493 = vadd.f32 %v6304, %v6449
      %v6494 = vadd.f32 %v6305, %v6452
      %v6495 = vadd.f32 %v6306, %v6455
      %v6496 = vadd.f32 %v6307, %v6458
      %v6497 = vadd.f32 %v6308, %v6461
      %v6498 = vadd.f32 %v6309, %v6464
      %v6499 = vadd.f32 %v6310, %v6467
      %v6500 = vld [vmem:[%s6045] sm:$0xff]
      %v6501 = vld [vmem:[%s6045 + $0x8] sm:$0xff]
      %v6502 = vld [vmem:[%s6045 + $0x20] sm:$0xff]
      %v6503 = vld [vmem:[%s6045 + $0x28] sm:$0xff]
      %v6504 = vld [vmem:[%s6045 + $0x40] sm:$0xff]
      %v6505 = vld [vmem:[%s6045 + $0x48] sm:$0xff]
      %v6506 = vld [vmem:[%s6045 + $0x60] sm:$0xff]
      %v6507 = vld [vmem:[%s6045 + $0x68] sm:$0xff]
      %v6508 = vld [vmem:[%s6045 + $0x80] sm:$0xff]
      %v6509 = vld [vmem:[%s6045 + $0x88] sm:$0xff]
      %v6510 = vld [vmem:[%s6045 + $0xa0] sm:$0xff]
      %v6511 = vld [vmem:[%s6045 + $0xa8] sm:$0xff]
      %v6512 = vld [vmem:[%s6045 + $0xc0] sm:$0xff]
      %v6513 = vld [vmem:[%s6045 + $0xc8] sm:$0xff]
      %v6514 = vld [vmem:[%s6045 + $0xe0] sm:$0xff]
      %v6515 = vld [vmem:[%s6045 + $0xe8] sm:$0xff]
      %s6516 = scalar_lea.vmem %s15, 6
      %v6517 = vld [vmem:[%s6516] sm:$0x3]
      %v6519 = vlaneseq
      %v6520 = vshrl.u32 %v6519, 7
      %v6521 = vsub.s32 0, %v6520
      %v6522 = vrot.slane %v6517, %v6521
      %v6523 = vlaneseq
      %v6524 = vshrl.u32 %v6523, 7
      %v6525 = vsub.s32 1, %v6524
      %v6526 = vrot.slane %v6517, %v6525
      %v6529 = vmul.f32 %v6500, %v6522
      %v6530 = vmul.f32 %v6501, %v6526
      %v6531 = vmul.f32 %v6502, %v6522
      %v6532 = vmul.f32 %v6503, %v6526
      %v6533 = vmul.f32 %v6504, %v6522
      %v6534 = vmul.f32 %v6505, %v6526
      %v6535 = vmul.f32 %v6506, %v6522
      %v6536 = vmul.f32 %v6507, %v6526
      %v6537 = vmul.f32 %v6508, %v6522
      %v6538 = vmul.f32 %v6509, %v6526
      %v6539 = vmul.f32 %v6510, %v6522
      %v6540 = vmul.f32 %v6511, %v6526
      %v6541 = vmul.f32 %v6512, %v6522
      %v6542 = vmul.f32 %v6513, %v6526
      %v6543 = vmul.f32 %v6514, %v6522
      %v6544 = vmul.f32 %v6515, %v6526
      %v6545 = vadd.f32 %v6484, %v6529
      %v6546 = vadd.f32 %v6485, %v6530
      %v6547 = vadd.f32 %v6486, %v6531
      %v6548 = vadd.f32 %v6487, %v6532
      %v6549 = vadd.f32 %v6488, %v6533
      %v6550 = vadd.f32 %v6489, %v6534
      %v6551 = vadd.f32 %v6490, %v6535
      %v6552 = vadd.f32 %v6491, %v6536
      %v6553 = vadd.f32 %v6492, %v6537
      %v6554 = vadd.f32 %v6493, %v6538
      %v6555 = vadd.f32 %v6494, %v6539
      %v6556 = vadd.f32 %v6495, %v6540
      %v6557 = vadd.f32 %v6496, %v6541
      %v6558 = vadd.f32 %v6497, %v6542
      %v6559 = vadd.f32 %v6498, %v6543
      %v6560 = vadd.f32 %v6499, %v6544
      %v6561 = vld [vmem:[%s6045] sm:$0xfe]
      %v6562 = vld [vmem:[%s6045 + $0x8] sm:$0xfe]
      %v6563 = vld [vmem:[%s6045 + $0x10] sm:$0x1]
      %v6564 = vld [vmem:[%s6045 + $0x18] sm:$0x1]
      %v6565 = vld [vmem:[%s6045 + $0x20] sm:$0xfe]
      %v6566 = vld [vmem:[%s6045 + $0x28] sm:$0xfe]
      %v6567 = vld [vmem:[%s6045 + $0x30] sm:$0x1]
      %v6568 = vld [vmem:[%s6045 + $0x38] sm:$0x1]
      %v6569 = vld [vmem:[%s6045 + $0x40] sm:$0xfe]
      %v6570 = vld [vmem:[%s6045 + $0x48] sm:$0xfe]
      %v6571 = vld [vmem:[%s6045 + $0x50] sm:$0x1]
      %v6572 = vld [vmem:[%s6045 + $0x58] sm:$0x1]
      %v6573 = vld [vmem:[%s6045 + $0x60] sm:$0xfe]
      %v6574 = vld [vmem:[%s6045 + $0x68] sm:$0xfe]
      %v6575 = vld [vmem:[%s6045 + $0x70] sm:$0x1]
      %v6576 = vld [vmem:[%s6045 + $0x78] sm:$0x1]
      %v6577 = vld [vmem:[%s6045 + $0x80] sm:$0xfe]
      %v6578 = vld [vmem:[%s6045 + $0x88] sm:$0xfe]
      %v6579 = vld [vmem:[%s6045 + $0x90] sm:$0x1]
      %v6580 = vld [vmem:[%s6045 + $0x98] sm:$0x1]
      %v6581 = vld [vmem:[%s6045 + $0xa0] sm:$0xfe]
      %v6582 = vld [vmem:[%s6045 + $0xa8] sm:$0xfe]
      %v6583 = vld [vmem:[%s6045 + $0xb0] sm:$0x1]
      %v6584 = vld [vmem:[%s6045 + $0xb8] sm:$0x1]
      %v6585 = vld [vmem:[%s6045 + $0xc0] sm:$0xfe]
      %v6586 = vld [vmem:[%s6045 + $0xc8] sm:$0xfe]
      %v6587 = vld [vmem:[%s6045 + $0xd0] sm:$0x1]
      %v6588 = vld [vmem:[%s6045 + $0xd8] sm:$0x1]
      %v6589 = vld [vmem:[%s6045 + $0xe0] sm:$0xfe]
      %v6590 = vld [vmem:[%s6045 + $0xe8] sm:$0xfe]
      %v6591 = vld [vmem:[%s6045 + $0xf0] sm:$0x1]
      %v6592 = vld [vmem:[%s6045 + $0xf8] sm:$0x1]
      %s6593 = scalar_lea.vmem %s15, 8
      %v6594 = vld [vmem:[%s6593] sm:$0x3]
      %v6596 = vlaneseq
      %v6597 = vshrl.u32 %v6596, 7
      %v6598 = vsub.s32 0, %v6597
      %v6599 = vrot.slane %v6594, %v6598
      %v6600 = vlaneseq
      %v6601 = vshrl.u32 %v6600, 7
      %v6602 = vsub.s32 1, %v6601
      %v6603 = vrot.slane %v6594, %v6602
      %v6606 = vmul.f32 %v6561, %v6599
      %v6607 = vmul.f32 %v6562, %v6603
      %v6608 = vmul.f32 %v6563, %v6599
      %v6609 = vmul.f32 %v6564, %v6603
      %v6610 = vmul.f32 %v6565, %v6599
      %v6611 = vmul.f32 %v6566, %v6603
      %v6612 = vmul.f32 %v6567, %v6599
      %v6613 = vmul.f32 %v6568, %v6603
      %v6614 = vmul.f32 %v6569, %v6599
      %v6615 = vmul.f32 %v6570, %v6603
      %v6616 = vmul.f32 %v6571, %v6599
      %v6617 = vmul.f32 %v6572, %v6603
      %v6618 = vmul.f32 %v6573, %v6599
      %v6619 = vmul.f32 %v6574, %v6603
      %v6620 = vmul.f32 %v6575, %v6599
      %v6621 = vmul.f32 %v6576, %v6603
      %v6622 = vmul.f32 %v6577, %v6599
      %v6623 = vmul.f32 %v6578, %v6603
      %v6624 = vmul.f32 %v6579, %v6599
      %v6625 = vmul.f32 %v6580, %v6603
      %v6626 = vmul.f32 %v6581, %v6599
      %v6627 = vmul.f32 %v6582, %v6603
      %v6628 = vmul.f32 %v6583, %v6599
      %v6629 = vmul.f32 %v6584, %v6603
      %v6630 = vmul.f32 %v6585, %v6599
      %v6631 = vmul.f32 %v6586, %v6603
      %v6632 = vmul.f32 %v6587, %v6599
      %v6633 = vmul.f32 %v6588, %v6603
      %v6634 = vmul.f32 %v6589, %v6599
      %v6635 = vmul.f32 %v6590, %v6603
      %v6636 = vmul.f32 %v6591, %v6599
      %v6637 = vmul.f32 %v6592, %v6603
      %v6670 = vrot.slane %v6606, 1
      %v6671 = vrot.slane %v6608, 1
      %v6672 = vsel %vm4506, %v6670, %v6671
      %v6673 = vrot.slane %v6607, 1
      %v6674 = vrot.slane %v6609, 1
      %v6675 = vsel %vm4506, %v6673, %v6674
      %v6676 = vrot.slane %v6610, 1
      %v6677 = vrot.slane %v6612, 1
      %v6678 = vsel %vm4506, %v6676, %v6677
      %v6679 = vrot.slane %v6611, 1
      %v6680 = vrot.slane %v6613, 1
      %v6681 = vsel %vm4506, %v6679, %v6680
      %v6682 = vrot.slane %v6614, 1
      %v6683 = vrot.slane %v6616, 1
      %v6684 = vsel %vm4506, %v6682, %v6683
      %v6685 = vrot.slane %v6615, 1
      %v6686 = vrot.slane %v6617, 1
      %v6687 = vsel %vm4506, %v6685, %v6686
      %v6688 = vrot.slane %v6618, 1
      %v6689 = vrot.slane %v6620, 1
      %v6690 = vsel %vm4506, %v6688, %v6689
      %v6691 = vrot.slane %v6619, 1
      %v6692 = vrot.slane %v6621, 1
      %v6693 = vsel %vm4506, %v6691, %v6692
      %v6694 = vrot.slane %v6622, 1
      %v6695 = vrot.slane %v6624, 1
      %v6696 = vsel %vm4506, %v6694, %v6695
      %v6697 = vrot.slane %v6623, 1
      %v6698 = vrot.slane %v6625, 1
      %v6699 = vsel %vm4506, %v6697, %v6698
      %v6700 = vrot.slane %v6626, 1
      %v6701 = vrot.slane %v6628, 1
      %v6702 = vsel %vm4506, %v6700, %v6701
      %v6703 = vrot.slane %v6627, 1
      %v6704 = vrot.slane %v6629, 1
      %v6705 = vsel %vm4506, %v6703, %v6704
      %v6706 = vrot.slane %v6630, 1
      %v6707 = vrot.slane %v6632, 1
      %v6708 = vsel %vm4506, %v6706, %v6707
      %v6709 = vrot.slane %v6631, 1
      %v6710 = vrot.slane %v6633, 1
      %v6711 = vsel %vm4506, %v6709, %v6710
      %v6712 = vrot.slane %v6634, 1
      %v6713 = vrot.slane %v6636, 1
      %v6714 = vsel %vm4506, %v6712, %v6713
      %v6715 = vrot.slane %v6635, 1
      %v6716 = vrot.slane %v6637, 1
      %v6717 = vsel %vm4506, %v6715, %v6716
      %v6734 = vadd.f32 %v6545, %v6672
      %v6735 = vadd.f32 %v6546, %v6675
      %v6736 = vadd.f32 %v6547, %v6678
      %v6737 = vadd.f32 %v6548, %v6681
      %v6738 = vadd.f32 %v6549, %v6684
      %v6739 = vadd.f32 %v6550, %v6687
      %v6740 = vadd.f32 %v6551, %v6690
      %v6741 = vadd.f32 %v6552, %v6693
      %v6742 = vadd.f32 %v6553, %v6696
      %v6743 = vadd.f32 %v6554, %v6699
      %v6744 = vadd.f32 %v6555, %v6702
      %v6745 = vadd.f32 %v6556, %v6705
      %v6746 = vadd.f32 %v6557, %v6708
      %v6747 = vadd.f32 %v6558, %v6711
      %v6748 = vadd.f32 %v6559, %v6714
      %v6749 = vadd.f32 %v6560, %v6717
      %v6750 = vld [vmem:[%s6045] sm:$0xfc]
      %v6751 = vld [vmem:[%s6045 + $0x8] sm:$0xfc]
      %v6752 = vld [vmem:[%s6045 + $0x10] sm:$0x3]
      %v6753 = vld [vmem:[%s6045 + $0x18] sm:$0x3]
      %v6754 = vld [vmem:[%s6045 + $0x20] sm:$0xfc]
      %v6755 = vld [vmem:[%s6045 + $0x28] sm:$0xfc]
      %v6756 = vld [vmem:[%s6045 + $0x30] sm:$0x3]
      %v6757 = vld [vmem:[%s6045 + $0x38] sm:$0x3]
      %v6758 = vld [vmem:[%s6045 + $0x40] sm:$0xfc]
      %v6759 = vld [vmem:[%s6045 + $0x48] sm:$0xfc]
      %v6760 = vld [vmem:[%s6045 + $0x50] sm:$0x3]
      %v6761 = vld [vmem:[%s6045 + $0x58] sm:$0x3]
      %v6762 = vld [vmem:[%s6045 + $0x60] sm:$0xfc]
      %v6763 = vld [vmem:[%s6045 + $0x68] sm:$0xfc]
      %v6764 = vld [vmem:[%s6045 + $0x70] sm:$0x3]
      %v6765 = vld [vmem:[%s6045 + $0x78] sm:$0x3]
      %v6766 = vld [vmem:[%s6045 + $0x80] sm:$0xfc]
      %v6767 = vld [vmem:[%s6045 + $0x88] sm:$0xfc]
      %v6768 = vld [vmem:[%s6045 + $0x90] sm:$0x3]
      %v6769 = vld [vmem:[%s6045 + $0x98] sm:$0x3]
      %v6770 = vld [vmem:[%s6045 + $0xa0] sm:$0xfc]
      %v6771 = vld [vmem:[%s6045 + $0xa8] sm:$0xfc]
      %v6772 = vld [vmem:[%s6045 + $0xb0] sm:$0x3]
      %v6773 = vld [vmem:[%s6045 + $0xb8] sm:$0x3]
      %v6774 = vld [vmem:[%s6045 + $0xc0] sm:$0xfc]
      %v6775 = vld [vmem:[%s6045 + $0xc8] sm:$0xfc]
      %v6776 = vld [vmem:[%s6045 + $0xd0] sm:$0x3]
      %v6777 = vld [vmem:[%s6045 + $0xd8] sm:$0x3]
      %v6778 = vld [vmem:[%s6045 + $0xe0] sm:$0xfc]
      %v6779 = vld [vmem:[%s6045 + $0xe8] sm:$0xfc]
      %v6780 = vld [vmem:[%s6045 + $0xf0] sm:$0x3]
      %v6781 = vld [vmem:[%s6045 + $0xf8] sm:$0x3]
      %s6782 = scalar_lea.vmem %s15, 10
      %v6783 = vld [vmem:[%s6782] sm:$0x3]
      %v6785 = vlaneseq
      %v6786 = vshrl.u32 %v6785, 7
      %v6787 = vsub.s32 0, %v6786
      %v6788 = vrot.slane %v6783, %v6787
      %v6789 = vlaneseq
      %v6790 = vshrl.u32 %v6789, 7
      %v6791 = vsub.s32 1, %v6790
      %v6792 = vrot.slane %v6783, %v6791
      %v6795 = vmul.f32 %v6750, %v6788
      %v6796 = vmul.f32 %v6751, %v6792
      %v6797 = vmul.f32 %v6752, %v6788
      %v6798 = vmul.f32 %v6753, %v6792
      %v6799 = vmul.f32 %v6754, %v6788
      %v6800 = vmul.f32 %v6755, %v6792
      %v6801 = vmul.f32 %v6756, %v6788
      %v6802 = vmul.f32 %v6757, %v6792
      %v6803 = vmul.f32 %v6758, %v6788
      %v6804 = vmul.f32 %v6759, %v6792
      %v6805 = vmul.f32 %v6760, %v6788
      %v6806 = vmul.f32 %v6761, %v6792
      %v6807 = vmul.f32 %v6762, %v6788
      %v6808 = vmul.f32 %v6763, %v6792
      %v6809 = vmul.f32 %v6764, %v6788
      %v6810 = vmul.f32 %v6765, %v6792
      %v6811 = vmul.f32 %v6766, %v6788
      %v6812 = vmul.f32 %v6767, %v6792
      %v6813 = vmul.f32 %v6768, %v6788
      %v6814 = vmul.f32 %v6769, %v6792
      %v6815 = vmul.f32 %v6770, %v6788
      %v6816 = vmul.f32 %v6771, %v6792
      %v6817 = vmul.f32 %v6772, %v6788
      %v6818 = vmul.f32 %v6773, %v6792
      %v6819 = vmul.f32 %v6774, %v6788
      %v6820 = vmul.f32 %v6775, %v6792
      %v6821 = vmul.f32 %v6776, %v6788
      %v6822 = vmul.f32 %v6777, %v6792
      %v6823 = vmul.f32 %v6778, %v6788
      %v6824 = vmul.f32 %v6779, %v6792
      %v6825 = vmul.f32 %v6780, %v6788
      %v6826 = vmul.f32 %v6781, %v6792
      %v6859 = vrot.slane %v6795, 2
      %v6860 = vrot.slane %v6797, 2
      %v6861 = vsel %vm4696, %v6859, %v6860
      %v6862 = vrot.slane %v6796, 2
      %v6863 = vrot.slane %v6798, 2
      %v6864 = vsel %vm4696, %v6862, %v6863
      %v6865 = vrot.slane %v6799, 2
      %v6866 = vrot.slane %v6801, 2
      %v6867 = vsel %vm4696, %v6865, %v6866
      %v6868 = vrot.slane %v6800, 2
      %v6869 = vrot.slane %v6802, 2
      %v6870 = vsel %vm4696, %v6868, %v6869
      %v6871 = vrot.slane %v6803, 2
      %v6872 = vrot.slane %v6805, 2
      %v6873 = vsel %vm4696, %v6871, %v6872
      %v6874 = vrot.slane %v6804, 2
      %v6875 = vrot.slane %v6806, 2
      %v6876 = vsel %vm4696, %v6874, %v6875
      %v6877 = vrot.slane %v6807, 2
      %v6878 = vrot.slane %v6809, 2
      %v6879 = vsel %vm4696, %v6877, %v6878
      %v6880 = vrot.slane %v6808, 2
      %v6881 = vrot.slane %v6810, 2
      %v6882 = vsel %vm4696, %v6880, %v6881
      %v6883 = vrot.slane %v6811, 2
      %v6884 = vrot.slane %v6813, 2
      %v6885 = vsel %vm4696, %v6883, %v6884
      %v6886 = vrot.slane %v6812, 2
      %v6887 = vrot.slane %v6814, 2
      %v6888 = vsel %vm4696, %v6886, %v6887
      %v6889 = vrot.slane %v6815, 2
      %v6890 = vrot.slane %v6817, 2
      %v6891 = vsel %vm4696, %v6889, %v6890
      %v6892 = vrot.slane %v6816, 2
      %v6893 = vrot.slane %v6818, 2
      %v6894 = vsel %vm4696, %v6892, %v6893
      %v6895 = vrot.slane %v6819, 2
      %v6896 = vrot.slane %v6821, 2
      %v6897 = vsel %vm4696, %v6895, %v6896
      %v6898 = vrot.slane %v6820, 2
      %v6899 = vrot.slane %v6822, 2
      %v6900 = vsel %vm4696, %v6898, %v6899
      %v6901 = vrot.slane %v6823, 2
      %v6902 = vrot.slane %v6825, 2
      %v6903 = vsel %vm4696, %v6901, %v6902
      %v6904 = vrot.slane %v6824, 2
      %v6905 = vrot.slane %v6826, 2
      %v6906 = vsel %vm4696, %v6904, %v6905
      %v6923 = vadd.f32 %v6734, %v6861
      %v6924 = vadd.f32 %v6735, %v6864
      %v6925 = vadd.f32 %v6736, %v6867
      %v6926 = vadd.f32 %v6737, %v6870
      %v6927 = vadd.f32 %v6738, %v6873
      %v6928 = vadd.f32 %v6739, %v6876
      %v6929 = vadd.f32 %v6740, %v6879
      %v6930 = vadd.f32 %v6741, %v6882
      %v6931 = vadd.f32 %v6742, %v6885
      %v6932 = vadd.f32 %v6743, %v6888
      %v6933 = vadd.f32 %v6744, %v6891
      %v6934 = vadd.f32 %v6745, %v6894
      %v6935 = vadd.f32 %v6746, %v6897
      %v6936 = vadd.f32 %v6747, %v6900
      %v6937 = vadd.f32 %v6748, %v6903
      %v6938 = vadd.f32 %v6749, %v6906
      %s6939 = scalar_lea.vmem [#allocation8], 64
      %v6940 = vld [vmem:[%s6939] sm:$0xff]
      %v6941 = vld [vmem:[%s6939 + $0x8] sm:$0xff]
      %v6942 = vld [vmem:[%s6939 + $0x20] sm:$0xff]
      %v6943 = vld [vmem:[%s6939 + $0x28] sm:$0xff]
      %v6944 = vld [vmem:[%s6939 + $0x40] sm:$0xff]
      %v6945 = vld [vmem:[%s6939 + $0x48] sm:$0xff]
      %v6946 = vld [vmem:[%s6939 + $0x60] sm:$0xff]
      %v6947 = vld [vmem:[%s6939 + $0x68] sm:$0xff]
      %v6948 = vld [vmem:[%s6939 + $0x80] sm:$0xff]
      %v6949 = vld [vmem:[%s6939 + $0x88] sm:$0xff]
      %v6950 = vld [vmem:[%s6939 + $0xa0] sm:$0xff]
      %v6951 = vld [vmem:[%s6939 + $0xa8] sm:$0xff]
      %v6952 = vld [vmem:[%s6939 + $0xc0] sm:$0xff]
      %v6953 = vld [vmem:[%s6939 + $0xc8] sm:$0xff]
      %v6954 = vld [vmem:[%s6939 + $0xe0] sm:$0xff]
      %v6955 = vld [vmem:[%s6939 + $0xe8] sm:$0xff]
      %s6956 = scalar_lea.vmem %s15, 12
      %v6957 = vld [vmem:[%s6956] sm:$0x3]
      %v6959 = vlaneseq
      %v6960 = vshrl.u32 %v6959, 7
      %v6961 = vsub.s32 0, %v6960
      %v6962 = vrot.slane %v6957, %v6961
      %v6963 = vlaneseq
      %v6964 = vshrl.u32 %v6963, 7
      %v6965 = vsub.s32 1, %v6964
      %v6966 = vrot.slane %v6957, %v6965
      %v6969 = vmul.f32 %v6940, %v6962
      %v6970 = vmul.f32 %v6941, %v6966
      %v6971 = vmul.f32 %v6942, %v6962
      %v6972 = vmul.f32 %v6943, %v6966
      %v6973 = vmul.f32 %v6944, %v6962
      %v6974 = vmul.f32 %v6945, %v6966
      %v6975 = vmul.f32 %v6946, %v6962
      %v6976 = vmul.f32 %v6947, %v6966
      %v6977 = vmul.f32 %v6948, %v6962
      %v6978 = vmul.f32 %v6949, %v6966
      %v6979 = vmul.f32 %v6950, %v6962
      %v6980 = vmul.f32 %v6951, %v6966
      %v6981 = vmul.f32 %v6952, %v6962
      %v6982 = vmul.f32 %v6953, %v6966
      %v6983 = vmul.f32 %v6954, %v6962
      %v6984 = vmul.f32 %v6955, %v6966
      %v6985 = vadd.f32 %v6923, %v6969
      %v6986 = vadd.f32 %v6924, %v6970
      %v6987 = vadd.f32 %v6925, %v6971
      %v6988 = vadd.f32 %v6926, %v6972
      %v6989 = vadd.f32 %v6927, %v6973
      %v6990 = vadd.f32 %v6928, %v6974
      %v6991 = vadd.f32 %v6929, %v6975
      %v6992 = vadd.f32 %v6930, %v6976
      %v6993 = vadd.f32 %v6931, %v6977
      %v6994 = vadd.f32 %v6932, %v6978
      %v6995 = vadd.f32 %v6933, %v6979
      %v6996 = vadd.f32 %v6934, %v6980
      %v6997 = vadd.f32 %v6935, %v6981
      %v6998 = vadd.f32 %v6936, %v6982
      %v6999 = vadd.f32 %v6937, %v6983
      %v7000 = vadd.f32 %v6938, %v6984
      %v7001 = vld [vmem:[%s6939] sm:$0xfe]
      %v7002 = vld [vmem:[%s6939 + $0x8] sm:$0xfe]
      %v7003 = vld [vmem:[%s6939 + $0x10] sm:$0x1]
      %v7004 = vld [vmem:[%s6939 + $0x18] sm:$0x1]
      %v7005 = vld [vmem:[%s6939 + $0x20] sm:$0xfe]
      %v7006 = vld [vmem:[%s6939 + $0x28] sm:$0xfe]
      %v7007 = vld [vmem:[%s6939 + $0x30] sm:$0x1]
      %v7008 = vld [vmem:[%s6939 + $0x38] sm:$0x1]
      %v7009 = vld [vmem:[%s6939 + $0x40] sm:$0xfe]
      %v7010 = vld [vmem:[%s6939 + $0x48] sm:$0xfe]
      %v7011 = vld [vmem:[%s6939 + $0x50] sm:$0x1]
      %v7012 = vld [vmem:[%s6939 + $0x58] sm:$0x1]
      %v7013 = vld [vmem:[%s6939 + $0x60] sm:$0xfe]
      %v7014 = vld [vmem:[%s6939 + $0x68] sm:$0xfe]
      %v7015 = vld [vmem:[%s6939 + $0x70] sm:$0x1]
      %v7016 = vld [vmem:[%s6939 + $0x78] sm:$0x1]
      %v7017 = vld [vmem:[%s6939 + $0x80] sm:$0xfe]
      %v7018 = vld [vmem:[%s6939 + $0x88] sm:$0xfe]
      %v7019 = vld [vmem:[%s6939 + $0x90] sm:$0x1]
      %v7020 = vld [vmem:[%s6939 + $0x98] sm:$0x1]
      %v7021 = vld [vmem:[%s6939 + $0xa0] sm:$0xfe]
      %v7022 = vld [vmem:[%s6939 + $0xa8] sm:$0xfe]
      %v7023 = vld [vmem:[%s6939 + $0xb0] sm:$0x1]
      %v7024 = vld [vmem:[%s6939 + $0xb8] sm:$0x1]
      %v7025 = vld [vmem:[%s6939 + $0xc0] sm:$0xfe]
      %v7026 = vld [vmem:[%s6939 + $0xc8] sm:$0xfe]
      %v7027 = vld [vmem:[%s6939 + $0xd0] sm:$0x1]
      %v7028 = vld [vmem:[%s6939 + $0xd8] sm:$0x1]
      %v7029 = vld [vmem:[%s6939 + $0xe0] sm:$0xfe]
      %v7030 = vld [vmem:[%s6939 + $0xe8] sm:$0xfe]
      %v7031 = vld [vmem:[%s6939 + $0xf0] sm:$0x1]
      %v7032 = vld [vmem:[%s6939 + $0xf8] sm:$0x1]
      %s7033 = scalar_lea.vmem %s15, 14
      %v7034 = vld [vmem:[%s7033] sm:$0x3]
      %v7036 = vlaneseq
      %v7037 = vshrl.u32 %v7036, 7
      %v7038 = vsub.s32 0, %v7037
      %v7039 = vrot.slane %v7034, %v7038
      %v7040 = vlaneseq
      %v7041 = vshrl.u32 %v7040, 7
      %v7042 = vsub.s32 1, %v7041
      %v7043 = vrot.slane %v7034, %v7042
      %v7046 = vmul.f32 %v7001, %v7039
      %v7047 = vmul.f32 %v7002, %v7043
      %v7048 = vmul.f32 %v7003, %v7039
      %v7049 = vmul.f32 %v7004, %v7043
      %v7050 = vmul.f32 %v7005, %v7039
      %v7051 = vmul.f32 %v7006, %v7043
      %v7052 = vmul.f32 %v7007, %v7039
      %v7053 = vmul.f32 %v7008, %v7043
      %v7054 = vmul.f32 %v7009, %v7039
      %v7055 = vmul.f32 %v7010, %v7043
      %v7056 = vmul.f32 %v7011, %v7039
      %v7057 = vmul.f32 %v7012, %v7043
      %v7058 = vmul.f32 %v7013, %v7039
      %v7059 = vmul.f32 %v7014, %v7043
      %v7060 = vmul.f32 %v7015, %v7039
      %v7061 = vmul.f32 %v7016, %v7043
      %v7062 = vmul.f32 %v7017, %v7039
      %v7063 = vmul.f32 %v7018, %v7043
      %v7064 = vmul.f32 %v7019, %v7039
      %v7065 = vmul.f32 %v7020, %v7043
      %v7066 = vmul.f32 %v7021, %v7039
      %v7067 = vmul.f32 %v7022, %v7043
      %v7068 = vmul.f32 %v7023, %v7039
      %v7069 = vmul.f32 %v7024, %v7043
      %v7070 = vmul.f32 %v7025, %v7039
      %v7071 = vmul.f32 %v7026, %v7043
      %v7072 = vmul.f32 %v7027, %v7039
      %v7073 = vmul.f32 %v7028, %v7043
      %v7074 = vmul.f32 %v7029, %v7039
      %v7075 = vmul.f32 %v7030, %v7043
      %v7076 = vmul.f32 %v7031, %v7039
      %v7077 = vmul.f32 %v7032, %v7043
      %v7110 = vrot.slane %v7046, 1
      %v7111 = vrot.slane %v7048, 1
      %v7112 = vsel %vm4506, %v7110, %v7111
      %v7113 = vrot.slane %v7047, 1
      %v7114 = vrot.slane %v7049, 1
      %v7115 = vsel %vm4506, %v7113, %v7114
      %v7116 = vrot.slane %v7050, 1
      %v7117 = vrot.slane %v7052, 1
      %v7118 = vsel %vm4506, %v7116, %v7117
      %v7119 = vrot.slane %v7051, 1
      %v7120 = vrot.slane %v7053, 1
      %v7121 = vsel %vm4506, %v7119, %v7120
      %v7122 = vrot.slane %v7054, 1
      %v7123 = vrot.slane %v7056, 1
      %v7124 = vsel %vm4506, %v7122, %v7123
      %v7125 = vrot.slane %v7055, 1
      %v7126 = vrot.slane %v7057, 1
      %v7127 = vsel %vm4506, %v7125, %v7126
      %v7128 = vrot.slane %v7058, 1
      %v7129 = vrot.slane %v7060, 1
      %v7130 = vsel %vm4506, %v7128, %v7129
      %v7131 = vrot.slane %v7059, 1
      %v7132 = vrot.slane %v7061, 1
      %v7133 = vsel %vm4506, %v7131, %v7132
      %v7134 = vrot.slane %v7062, 1
      %v7135 = vrot.slane %v7064, 1
      %v7136 = vsel %vm4506, %v7134, %v7135
      %v7137 = vrot.slane %v7063, 1
      %v7138 = vrot.slane %v7065, 1
      %v7139 = vsel %vm4506, %v7137, %v7138
      %v7140 = vrot.slane %v7066, 1
      %v7141 = vrot.slane %v7068, 1
      %v7142 = vsel %vm4506, %v7140, %v7141
      %v7143 = vrot.slane %v7067, 1
      %v7144 = vrot.slane %v7069, 1
      %v7145 = vsel %vm4506, %v7143, %v7144
      %v7146 = vrot.slane %v7070, 1
      %v7147 = vrot.slane %v7072, 1
      %v7148 = vsel %vm4506, %v7146, %v7147
      %v7149 = vrot.slane %v7071, 1
      %v7150 = vrot.slane %v7073, 1
      %v7151 = vsel %vm4506, %v7149, %v7150
      %v7152 = vrot.slane %v7074, 1
      %v7153 = vrot.slane %v7076, 1
      %v7154 = vsel %vm4506, %v7152, %v7153
      %v7155 = vrot.slane %v7075, 1
      %v7156 = vrot.slane %v7077, 1
      %v7157 = vsel %vm4506, %v7155, %v7156
      %v7174 = vadd.f32 %v6985, %v7112
      %v7175 = vadd.f32 %v6986, %v7115
      %v7176 = vadd.f32 %v6987, %v7118
      %v7177 = vadd.f32 %v6988, %v7121
      %v7178 = vadd.f32 %v6989, %v7124
      %v7179 = vadd.f32 %v6990, %v7127
      %v7180 = vadd.f32 %v6991, %v7130
      %v7181 = vadd.f32 %v6992, %v7133
      %v7182 = vadd.f32 %v6993, %v7136
      %v7183 = vadd.f32 %v6994, %v7139
      %v7184 = vadd.f32 %v6995, %v7142
      %v7185 = vadd.f32 %v6996, %v7145
      %v7186 = vadd.f32 %v6997, %v7148
      %v7187 = vadd.f32 %v6998, %v7151
      %v7188 = vadd.f32 %v6999, %v7154
      %v7189 = vadd.f32 %v7000, %v7157
      %v7190 = vld [vmem:[%s6939] sm:$0xfc]
      %v7191 = vld [vmem:[%s6939 + $0x8] sm:$0xfc]
      %v7192 = vld [vmem:[%s6939 + $0x10] sm:$0x3]
      %v7193 = vld [vmem:[%s6939 + $0x18] sm:$0x3]
      %v7194 = vld [vmem:[%s6939 + $0x20] sm:$0xfc]
      %v7195 = vld [vmem:[%s6939 + $0x28] sm:$0xfc]
      %v7196 = vld [vmem:[%s6939 + $0x30] sm:$0x3]
      %v7197 = vld [vmem:[%s6939 + $0x38] sm:$0x3]
      %v7198 = vld [vmem:[%s6939 + $0x40] sm:$0xfc]
      %v7199 = vld [vmem:[%s6939 + $0x48] sm:$0xfc]
      %v7200 = vld [vmem:[%s6939 + $0x50] sm:$0x3]
      %v7201 = vld [vmem:[%s6939 + $0x58] sm:$0x3]
      %v7202 = vld [vmem:[%s6939 + $0x60] sm:$0xfc]
      %v7203 = vld [vmem:[%s6939 + $0x68] sm:$0xfc]
      %v7204 = vld [vmem:[%s6939 + $0x70] sm:$0x3]
      %v7205 = vld [vmem:[%s6939 + $0x78] sm:$0x3]
      %v7206 = vld [vmem:[%s6939 + $0x80] sm:$0xfc]
      %v7207 = vld [vmem:[%s6939 + $0x88] sm:$0xfc]
      %v7208 = vld [vmem:[%s6939 + $0x90] sm:$0x3]
      %v7209 = vld [vmem:[%s6939 + $0x98] sm:$0x3]
      %v7210 = vld [vmem:[%s6939 + $0xa0] sm:$0xfc]
      %v7211 = vld [vmem:[%s6939 + $0xa8] sm:$0xfc]
      %v7212 = vld [vmem:[%s6939 + $0xb0] sm:$0x3]
      %v7213 = vld [vmem:[%s6939 + $0xb8] sm:$0x3]
      %v7214 = vld [vmem:[%s6939 + $0xc0] sm:$0xfc]
      %v7215 = vld [vmem:[%s6939 + $0xc8] sm:$0xfc]
      %v7216 = vld [vmem:[%s6939 + $0xd0] sm:$0x3]
      %v7217 = vld [vmem:[%s6939 + $0xd8] sm:$0x3]
      %v7218 = vld [vmem:[%s6939 + $0xe0] sm:$0xfc]
      %v7219 = vld [vmem:[%s6939 + $0xe8] sm:$0xfc]
      %v7220 = vld [vmem:[%s6939 + $0xf0] sm:$0x3]
      %v7221 = vld [vmem:[%s6939 + $0xf8] sm:$0x3]
      %s7222 = scalar_lea.vmem %s15, 16
      %v7223 = vld [vmem:[%s7222] sm:$0x3]
      %v7225 = vlaneseq
      %v7226 = vshrl.u32 %v7225, 7
      %v7227 = vsub.s32 0, %v7226
      %v7228 = vrot.slane %v7223, %v7227
      %v7229 = vlaneseq
      %v7230 = vshrl.u32 %v7229, 7
      %v7231 = vsub.s32 1, %v7230
      %v7232 = vrot.slane %v7223, %v7231
      %v7235 = vmul.f32 %v7190, %v7228
      %v7236 = vmul.f32 %v7191, %v7232
      %v7237 = vmul.f32 %v7192, %v7228
      %v7238 = vmul.f32 %v7193, %v7232
      %v7239 = vmul.f32 %v7194, %v7228
      %v7240 = vmul.f32 %v7195, %v7232
      %v7241 = vmul.f32 %v7196, %v7228
      %v7242 = vmul.f32 %v7197, %v7232
      %v7243 = vmul.f32 %v7198, %v7228
      %v7244 = vmul.f32 %v7199, %v7232
      %v7245 = vmul.f32 %v7200, %v7228
      %v7246 = vmul.f32 %v7201, %v7232
      %v7247 = vmul.f32 %v7202, %v7228
      %v7248 = vmul.f32 %v7203, %v7232
      %v7249 = vmul.f32 %v7204, %v7228
      %v7250 = vmul.f32 %v7205, %v7232
      %v7251 = vmul.f32 %v7206, %v7228
      %v7252 = vmul.f32 %v7207, %v7232
      %v7253 = vmul.f32 %v7208, %v7228
      %v7254 = vmul.f32 %v7209, %v7232
      %v7255 = vmul.f32 %v7210, %v7228
      %v7256 = vmul.f32 %v7211, %v7232
      %v7257 = vmul.f32 %v7212, %v7228
      %v7258 = vmul.f32 %v7213, %v7232
      %v7259 = vmul.f32 %v7214, %v7228
      %v7260 = vmul.f32 %v7215, %v7232
      %v7261 = vmul.f32 %v7216, %v7228
      %v7262 = vmul.f32 %v7217, %v7232
      %v7263 = vmul.f32 %v7218, %v7228
      %v7264 = vmul.f32 %v7219, %v7232
      %v7265 = vmul.f32 %v7220, %v7228
      %v7266 = vmul.f32 %v7221, %v7232
      %v7299 = vrot.slane %v7235, 2
      %v7300 = vrot.slane %v7237, 2
      %v7301 = vsel %vm4696, %v7299, %v7300
      %v7302 = vrot.slane %v7236, 2
      %v7303 = vrot.slane %v7238, 2
      %v7304 = vsel %vm4696, %v7302, %v7303
      %v7305 = vrot.slane %v7239, 2
      %v7306 = vrot.slane %v7241, 2
      %v7307 = vsel %vm4696, %v7305, %v7306
      %v7308 = vrot.slane %v7240, 2
      %v7309 = vrot.slane %v7242, 2
      %v7310 = vsel %vm4696, %v7308, %v7309
      %v7311 = vrot.slane %v7243, 2
      %v7312 = vrot.slane %v7245, 2
      %v7313 = vsel %vm4696, %v7311, %v7312
      %v7314 = vrot.slane %v7244, 2
      %v7315 = vrot.slane %v7246, 2
      %v7316 = vsel %vm4696, %v7314, %v7315
      %v7317 = vrot.slane %v7247, 2
      %v7318 = vrot.slane %v7249, 2
      %v7319 = vsel %vm4696, %v7317, %v7318
      %v7320 = vrot.slane %v7248, 2
      %v7321 = vrot.slane %v7250, 2
      %v7322 = vsel %vm4696, %v7320, %v7321
      %v7323 = vrot.slane %v7251, 2
      %v7324 = vrot.slane %v7253, 2
      %v7325 = vsel %vm4696, %v7323, %v7324
      %v7326 = vrot.slane %v7252, 2
      %v7327 = vrot.slane %v7254, 2
      %v7328 = vsel %vm4696, %v7326, %v7327
      %v7329 = vrot.slane %v7255, 2
      %v7330 = vrot.slane %v7257, 2
      %v7331 = vsel %vm4696, %v7329, %v7330
      %v7332 = vrot.slane %v7256, 2
      %v7333 = vrot.slane %v7258, 2
      %v7334 = vsel %vm4696, %v7332, %v7333
      %v7335 = vrot.slane %v7259, 2
      %v7336 = vrot.slane %v7261, 2
      %v7337 = vsel %vm4696, %v7335, %v7336
      %v7338 = vrot.slane %v7260, 2
      %v7339 = vrot.slane %v7262, 2
      %v7340 = vsel %vm4696, %v7338, %v7339
      %v7341 = vrot.slane %v7263, 2
      %v7342 = vrot.slane %v7265, 2
      %v7343 = vsel %vm4696, %v7341, %v7342
      %v7344 = vrot.slane %v7264, 2
      %v7345 = vrot.slane %v7266, 2
      %v7346 = vsel %vm4696, %v7344, %v7345
      %v7363 = vadd.f32 %v7174, %v7301
      %v7364 = vadd.f32 %v7175, %v7304
      %v7365 = vadd.f32 %v7176, %v7307
      %v7366 = vadd.f32 %v7177, %v7310
      %v7367 = vadd.f32 %v7178, %v7313
      %v7368 = vadd.f32 %v7179, %v7316
      %v7369 = vadd.f32 %v7180, %v7319
      %v7370 = vadd.f32 %v7181, %v7322
      %v7371 = vadd.f32 %v7182, %v7325
      %v7372 = vadd.f32 %v7183, %v7328
      %v7373 = vadd.f32 %v7184, %v7331
      %v7374 = vadd.f32 %v7185, %v7334
      %v7375 = vadd.f32 %v7186, %v7337
      %v7376 = vadd.f32 %v7187, %v7340
      %v7377 = vadd.f32 %v7188, %v7343
      %v7378 = vadd.f32 %v7189, %v7346
      %v7379 = vmul.f32 %v7363, 0.1
      %v7380 = vmul.f32 %v7364, 0.1
      %v7381 = vmul.f32 %v7365, 0.1
      %v7382 = vmul.f32 %v7366, 0.1
      %v7383 = vmul.f32 %v7367, 0.1
      %v7384 = vmul.f32 %v7368, 0.1
      %v7385 = vmul.f32 %v7369, 0.1
      %v7386 = vmul.f32 %v7370, 0.1
      %v7387 = vmul.f32 %v7371, 0.1
      %v7388 = vmul.f32 %v7372, 0.1
      %v7389 = vmul.f32 %v7373, 0.1
      %v7390 = vmul.f32 %v7374, 0.1
      %v7391 = vmul.f32 %v7375, 0.1
      %v7392 = vmul.f32 %v7376, 0.1
      %v7393 = vmul.f32 %v7377, 0.1
      %v7394 = vmul.f32 %v7378, 0.1
      %v7395 = vmax.f32 %v7363, %v7379
      %v7396 = vmax.f32 %v7364, %v7380
      %v7397 = vmax.f32 %v7365, %v7381
      %v7398 = vmax.f32 %v7366, %v7382
      %v7399 = vmax.f32 %v7367, %v7383
      %v7400 = vmax.f32 %v7368, %v7384
      %v7401 = vmax.f32 %v7369, %v7385
      %v7402 = vmax.f32 %v7370, %v7386
      %v7403 = vmax.f32 %v7371, %v7387
      %v7404 = vmax.f32 %v7372, %v7388
      %v7405 = vmax.f32 %v7373, %v7389
      %v7406 = vmax.f32 %v7374, %v7390
      %v7407 = vmax.f32 %v7375, %v7391
      %v7408 = vmax.f32 %v7376, %v7392
      %v7409 = vmax.f32 %v7377, %v7393
      %v7410 = vmax.f32 %v7378, %v7394
      %v7411 = vpack.c.bf16 %v7397, %v7395
      %v7412 = vpack.c.bf16 %v7398, %v7396
      %v7413 = vpack.c.bf16 %v7401, %v7399
      %v7414 = vpack.c.bf16 %v7402, %v7400
      %v7415 = vpack.c.bf16 %v7405, %v7403
      %v7416 = vpack.c.bf16 %v7406, %v7404
      %v7417 = vpack.c.bf16 %v7409, %v7407
      %v7418 = vpack.c.bf16 %v7410, %v7408
      %v7419 = vld [vmem:[%s16] sm:$0xff]
      %v7420 = vld [vmem:[%s16 + $0x8] sm:$0xff]
      %v7421 = vld [vmem:[%s16 + $0x10] sm:$0xff]
      %v7422 = vld [vmem:[%s16 + $0x18] sm:$0xff]
      %v7423 = vld [vmem:[%s16 + $0x20] sm:$0xff]
      %v7424 = vld [vmem:[%s16 + $0x28] sm:$0xff]
      %v7425 = vld [vmem:[%s16 + $0x30] sm:$0xff]
      %v7426 = vld [vmem:[%s16 + $0x38] sm:$0xff]
      %v7427 = vld [vmem:[%s16 + $0x40] sm:$0xff]
      %v7428 = vld [vmem:[%s16 + $0x48] sm:$0xff]
      %v7429 = vld [vmem:[%s16 + $0x50] sm:$0xff]
      %v7430 = vld [vmem:[%s16 + $0x58] sm:$0xff]
      %v7431 = vld [vmem:[%s16 + $0x60] sm:$0xff]
      %v7432 = vld [vmem:[%s16 + $0x68] sm:$0xff]
      %v7433 = vld [vmem:[%s16 + $0x70] sm:$0xff]
      %v7434 = vld [vmem:[%s16 + $0x78] sm:$0xff]
      %v7435 = vld [vmem:[%s16 + $0x80] sm:$0xff]
      %v7436 = vld [vmem:[%s16 + $0x88] sm:$0xff]
      %v7437 = vld [vmem:[%s16 + $0x90] sm:$0xff]
      %v7438 = vld [vmem:[%s16 + $0x98] sm:$0xff]
      %v7439 = vld [vmem:[%s16 + $0xa0] sm:$0xff]
      %v7440 = vld [vmem:[%s16 + $0xa8] sm:$0xff]
      %v7441 = vld [vmem:[%s16 + $0xb0] sm:$0xff]
      %v7442 = vld [vmem:[%s16 + $0xb8] sm:$0xff]
      %v7467 = vunpack.c.l.b16 %v7419
      %v7468 = vunpack.c.h.b16 %v7419
      %v7469 = vunpack.c.l.b16 %v7420
      %v7470 = vunpack.c.h.b16 %v7420
      %v7471 = vunpack.c.l.b16 %v7421
      %v7472 = vunpack.c.h.b16 %v7421
      %v7473 = vunpack.c.l.b16 %v7422
      %v7474 = vunpack.c.h.b16 %v7422
      %v7475 = vunpack.c.l.b16 %v7423
      %v7476 = vunpack.c.h.b16 %v7423
      %v7477 = vunpack.c.l.b16 %v7424
      %v7478 = vunpack.c.h.b16 %v7424
      %v7479 = vunpack.c.l.b16 %v7425
      %v7480 = vunpack.c.h.b16 %v7425
      %v7481 = vunpack.c.l.b16 %v7426
      %v7482 = vunpack.c.h.b16 %v7426
      %v7483 = vunpack.c.l.b16 %v7427
      %v7484 = vunpack.c.h.b16 %v7427
      %v7485 = vunpack.c.l.b16 %v7428
      %v7486 = vunpack.c.h.b16 %v7428
      %v7487 = vunpack.c.l.b16 %v7429
      %v7488 = vunpack.c.h.b16 %v7429
      %v7489 = vunpack.c.l.b16 %v7430
      %v7490 = vunpack.c.h.b16 %v7430
      %v7491 = vunpack.c.l.b16 %v7431
      %v7492 = vunpack.c.h.b16 %v7431
      %v7493 = vunpack.c.l.b16 %v7432
      %v7494 = vunpack.c.h.b16 %v7432
      %v7495 = vunpack.c.l.b16 %v7433
      %v7496 = vunpack.c.h.b16 %v7433
      %v7497 = vunpack.c.l.b16 %v7434
      %v7498 = vunpack.c.h.b16 %v7434
      %v7499 = vunpack.c.l.b16 %v7435
      %v7500 = vunpack.c.h.b16 %v7435
      %v7501 = vunpack.c.l.b16 %v7436
      %v7502 = vunpack.c.h.b16 %v7436
      %v7503 = vunpack.c.l.b16 %v7437
      %v7504 = vunpack.c.h.b16 %v7437
      %v7505 = vunpack.c.l.b16 %v7438
      %v7506 = vunpack.c.h.b16 %v7438
      %v7507 = vunpack.c.l.b16 %v7439
      %v7508 = vunpack.c.h.b16 %v7439
      %v7509 = vunpack.c.l.b16 %v7440
      %v7510 = vunpack.c.h.b16 %v7440
      %v7511 = vunpack.c.l.b16 %v7441
      %v7512 = vunpack.c.h.b16 %v7441
      %v7513 = vunpack.c.l.b16 %v7442
      %v7514 = vunpack.c.h.b16 %v7442
      %v7515 = vpack.c.b16 %v7469, %v7467
      %v7516 = vpack.c.b16 %v7470, %v7468
      %v7517 = vpack.c.b16 %v7473, %v7471
      %v7518 = vpack.c.b16 %v7474, %v7472
      %v7519 = vpack.c.b16 %v7477, %v7475
      %v7520 = vpack.c.b16 %v7478, %v7476
      %v7521 = vpack.c.b16 %v7481, %v7479
      %v7522 = vpack.c.b16 %v7482, %v7480
      %v7523 = vpack.c.b16 %v7485, %v7483
      %v7524 = vpack.c.b16 %v7486, %v7484
      %v7525 = vpack.c.b16 %v7489, %v7487
      %v7526 = vpack.c.b16 %v7490, %v7488
      %v7527 = vpack.c.b16 %v7493, %v7491
      %v7528 = vpack.c.b16 %v7494, %v7492
      %v7529 = vpack.c.b16 %v7497, %v7495
      %v7530 = vpack.c.b16 %v7498, %v7496
      %v7531 = vpack.c.b16 %v7501, %v7499
      %v7532 = vpack.c.b16 %v7502, %v7500
      %v7533 = vpack.c.b16 %v7505, %v7503
      %v7534 = vpack.c.b16 %v7506, %v7504
      %v7535 = vpack.c.b16 %v7509, %v7507
      %v7536 = vpack.c.b16 %v7510, %v7508
      %v7537 = vpack.c.b16 %v7513, %v7511
      %v7538 = vpack.c.b16 %v7514, %v7512
      %v7564 = vsel %vm2864, %v7412, 0
      %v7567 = vsel %vm2864, %v7414, 0
      %v7570 = vsel %vm2864, %v7416, 0
      %v7573 = vsel %vm2864, %v7418, 0
      %7575 = vmatprep.subr.bf16.mxu0 %v7516
      %7576 = vmatpush1.bf16.msra.mxu0 %v7515
      %7577 = vmatprep.subr.bf16.mxu0 %v7518
      %7578 = vmatpush1.bf16.msra.mxu0 %v7517
      %7579 = vmatprep.subr.bf16.mxu0 %v7520
      %7580 = vmatpush1.bf16.msra.mxu0 %v7519
      %7581 = vmatprep.subr.bf16.mxu0 %v7522
      %7582 = vmatpush1.bf16.msra.mxu0 %v7521
      %7583 = vmatprep.subr.bf16.mxu0 %v7524
      %7584 = vmatpush1.bf16.msra.mxu0 %v7523
      %7585 = vmatprep.subr.bf16.mxu0 %v7526
      %7586 = vmatpush1.bf16.msra.mxu0 %v7525
      %7587 = vmatprep.subr.bf16.mxu0 %v7528
      %7588 = vmatpush1.bf16.msra.mxu0 %v7527
      %7589 = vmatprep.subr.bf16.mxu0 %v7530
      %7590 = vmatpush1.bf16.msra.mxu0 %v7529
      %7591 = vmatprep.subr.bf16.mxu0 %v7532
      %7592 = vmatpush1.bf16.msra.mxu0 %v7531
      %7593 = vmatprep.subr.bf16.mxu0 %v7534
      %7594 = vmatpush1.bf16.msra.mxu0 %v7533
      %7595 = vmatprep.subr.bf16.mxu0 %v7536
      %7596 = vmatpush1.bf16.msra.mxu0 %v7535
      %7597 = vmatprep.subr.bf16.mxu0 %v7538
      %7598 = vmatpush1.bf16.msra.mxu0 %v7537
      %7599 = vmatprep.subr.bf16.mxu0 0
      %7600 = vmatpush1.bf16.msra.mxu0 0
      %7601 = vmatprep.subr.bf16.mxu0 0
      %7602 = vmatpush1.bf16.msra.mxu0 0
      %7603 = vmatprep.subr.bf16.mxu0 0
      %7604 = vmatpush1.bf16.msra.mxu0 0
      %7605 = vmatprep.subr.bf16.mxu0 0
      %7606 = vmatpush1.bf16.msra.mxu0 0
      %7607 = vmatprep.mubr.bf16.mxu0 %v7564
      %7608 = vmatmul.mubr.bf16.gmra.mrb[0].mxu0 %v7411
      %v7609 = vpop.f32.mrb[0].mxu0
      %v7610 = vadd.f32 0.0, %v7609
      %v7611 = vpop.f32.mrb[0].mxu0
      %v7612 = vadd.f32 0.0, %v7611
      %v7613 = vpop.f32.mrb[0].mxu0
      %v7614 = vadd.f32 0.0, %v7613
      %v7615 = vpop.f32.mrb[0].mxu0
      %v7616 = vadd.f32 0.0, %v7615
      %7617 = vmatprep.mubr.bf16.mxu0 %v7567
      %7618 = vmatmul.mubr.bf16.gmra.mrb[0].mxu0 %v7413
      %v7619 = vpop.f32.mrb[0].mxu0
      %v7620 = vadd.f32 0.0, %v7619
      %v7621 = vpop.f32.mrb[0].mxu0
      %v7622 = vadd.f32 0.0, %v7621
      %v7623 = vpop.f32.mrb[0].mxu0
      %v7624 = vadd.f32 0.0, %v7623
      %v7625 = vpop.f32.mrb[0].mxu0
      %v7626 = vadd.f32 0.0, %v7625
      %7627 = vmatprep.mubr.bf16.mxu0 %v7570
      %7628 = vmatmul.mubr.bf16.gmra.mrb[0].mxu0 %v7415
      %v7629 = vpop.f32.mrb[0].mxu0
      %v7630 = vadd.f32 0.0, %v7629
      %v7631 = vpop.f32.mrb[0].mxu0
      %v7632 = vadd.f32 0.0, %v7631
      %v7633 = vpop.f32.mrb[0].mxu0
      %v7634 = vadd.f32 0.0, %v7633
      %v7635 = vpop.f32.mrb[0].mxu0
      %v7636 = vadd.f32 0.0, %v7635
      %7637 = vmatprep.mubr.bf16.mxu0 %v7573
      %7638 = vmatmul.mubr.bf16.gmra.mrb[0].mxu0 %v7417
      %v7639 = vpop.f32.mrb[0].mxu0
      %v7640 = vadd.f32 0.0, %v7639
      %v7641 = vpop.f32.mrb[0].mxu0
      %v7642 = vadd.f32 0.0, %v7641
      %v7643 = vpop.f32.mrb[0].mxu0
      %v7644 = vadd.f32 0.0, %v7643
      %v7645 = vpop.f32.mrb[0].mxu0
      %v7646 = vadd.f32 0.0, %v7645
      %7647 = vdwg.mxu0
      %v7648 = vmul.f32 %v7610, 0.1
      %v7649 = vmul.f32 %v7612, 0.1
      %v7650 = vmul.f32 %v7614, 0.1
      %v7651 = vmul.f32 %v7616, 0.1
      %v7652 = vmul.f32 %v7620, 0.1
      %v7653 = vmul.f32 %v7622, 0.1
      %v7654 = vmul.f32 %v7624, 0.1
      %v7655 = vmul.f32 %v7626, 0.1
      %v7656 = vmul.f32 %v7630, 0.1
      %v7657 = vmul.f32 %v7632, 0.1
      %v7658 = vmul.f32 %v7634, 0.1
      %v7659 = vmul.f32 %v7636, 0.1
      %v7660 = vmul.f32 %v7640, 0.1
      %v7661 = vmul.f32 %v7642, 0.1
      %v7662 = vmul.f32 %v7644, 0.1
      %v7663 = vmul.f32 %v7646, 0.1
      %v7664 = vmax.f32 %v7610, %v7648
      %v7665 = vmax.f32 %v7612, %v7649
      %v7666 = vmax.f32 %v7614, %v7650
      %v7667 = vmax.f32 %v7616, %v7651
      %v7668 = vmax.f32 %v7620, %v7652
      %v7669 = vmax.f32 %v7622, %v7653
      %v7670 = vmax.f32 %v7624, %v7654
      %v7671 = vmax.f32 %v7626, %v7655
      %v7672 = vmax.f32 %v7630, %v7656
      %v7673 = vmax.f32 %v7632, %v7657
      %v7674 = vmax.f32 %v7634, %v7658
      %v7675 = vmax.f32 %v7636, %v7659
      %v7676 = vmax.f32 %v7640, %v7660
      %v7677 = vmax.f32 %v7642, %v7661
      %v7678 = vmax.f32 %v7644, %v7662
      %v7679 = vmax.f32 %v7646, %v7663
      %7680 = vst [vmem:[#allocation9] sm:$0xff] 0.0
      %7681 = vst.msk [vmem:[#allocation9 + $0x8] sm:$0xff] %vm2864, 0.0
      %7682 = vst [vmem:[#allocation9 + $0x10] sm:$0x3] 0.0
      %7683 = vst.msk [vmem:[#allocation9 + $0x18] sm:$0x3] %vm4232, 0.0
      %7684 = vst [vmem:[#allocation9 + $0x20] sm:$0xff] 0.0
      %7685 = vst.msk [vmem:[#allocation9 + $0x28] sm:$0xff] %vm2864, 0.0
      %7686 = vst [vmem:[#allocation9 + $0x30] sm:$0x3] 0.0
      %7687 = vst.msk [vmem:[#allocation9 + $0x38] sm:$0x3] %vm4232, 0.0
      %7688 = vst [vmem:[#allocation9 + $0x40] sm:$0xff] 0.0
      %7689 = vst.msk [vmem:[#allocation9 + $0x48] sm:$0xff] %vm2864, 0.0
      %7690 = vst [vmem:[#allocation9 + $0x50] sm:$0x3] 0.0
      %7691 = vst.msk [vmem:[#allocation9 + $0x58] sm:$0x3] %vm4232, 0.0
      %7692 = vst [vmem:[#allocation9 + $0x60] sm:$0xff] 0.0
      %7693 = vst.msk [vmem:[#allocation9 + $0x68] sm:$0xff] %vm2864, 0.0
      %7694 = vst [vmem:[#allocation9 + $0x70] sm:$0x3] 0.0
      %7695 = vst.msk [vmem:[#allocation9 + $0x78] sm:$0x3] %vm4232, 0.0
      %7696 = vst [vmem:[#allocation9 + $0x80] sm:$0xff] 0.0
      %7697 = vst.msk [vmem:[#allocation9 + $0x88] sm:$0xff] %vm2864, 0.0
      %7698 = vst [vmem:[#allocation9 + $0x90] sm:$0x3] 0.0
      %7699 = vst.msk [vmem:[#allocation9 + $0x98] sm:$0x3] %vm4232, 0.0
      %7700 = vst [vmem:[#allocation9 + $0xa0] sm:$0xff] 0.0
      %7701 = vst.msk [vmem:[#allocation9 + $0xa8] sm:$0xff] %vm2864, 0.0
      %7702 = vst [vmem:[#allocation9 + $0xb0] sm:$0x3] 0.0
      %7703 = vst.msk [vmem:[#allocation9 + $0xb8] sm:$0x3] %vm4232, 0.0
      %7704 = vst [vmem:[#allocation9 + $0xc0] sm:$0xff] 0.0
      %7705 = vst.msk [vmem:[#allocation9 + $0xc8] sm:$0xff] %vm2864, 0.0
      %7706 = vst [vmem:[#allocation9 + $0xd0] sm:$0x3] 0.0
      %7707 = vst.msk [vmem:[#allocation9 + $0xd8] sm:$0x3] %vm4232, 0.0
      %7708 = vst [vmem:[#allocation9 + $0xe0] sm:$0xff] 0.0
      %7709 = vst.msk [vmem:[#allocation9 + $0xe8] sm:$0xff] %vm2864, 0.0
      %7710 = vst [vmem:[#allocation9 + $0xf0] sm:$0x3] 0.0
      %7711 = vst.msk [vmem:[#allocation9 + $0xf8] sm:$0x3] %vm4232, 0.0
      %7712 = vst [vmem:[#allocation9 + $0x100] sm:$0xff] 0.0
      %7713 = vst.msk [vmem:[#allocation9 + $0x108] sm:$0xff] %vm2864, 0.0
      %7714 = vst [vmem:[#allocation9 + $0x110] sm:$0x3] 0.0
      %7715 = vst.msk [vmem:[#allocation9 + $0x118] sm:$0x3] %vm4232, 0.0
      %7716 = vst [vmem:[#allocation9 + $0x120] sm:$0xff] 0.0
      %7717 = vst.msk [vmem:[#allocation9 + $0x128] sm:$0xff] %vm2864, 0.0
      %7718 = vst [vmem:[#allocation9 + $0x130] sm:$0x3] 0.0
      %7719 = vst.msk [vmem:[#allocation9 + $0x138] sm:$0x3] %vm4232, 0.0
      %v7736 = vrot.slane %v7664, 7
      %v7737 = vrot.slane %v7665, 7
      %v7738 = vrot.slane %v7666, 7
      %v7739 = vrot.slane %v7667, 7
      %v7740 = vrot.slane %v7668, 7
      %v7741 = vrot.slane %v7669, 7
      %v7742 = vrot.slane %v7670, 7
      %v7743 = vrot.slane %v7671, 7
      %v7744 = vrot.slane %v7672, 7
      %v7745 = vrot.slane %v7673, 7
      %v7746 = vrot.slane %v7674, 7
      %v7747 = vrot.slane %v7675, 7
      %v7748 = vrot.slane %v7676, 7
      %v7749 = vrot.slane %v7677, 7
      %v7750 = vrot.slane %v7678, 7
      %v7751 = vrot.slane %v7679, 7
      %s7768 = scalar_lea.vmem [#allocation9], 32
      %7769 = vst [vmem:[%s7768] sm:$0xfe] %v7736
      %7770 = vst.msk [vmem:[%s7768 + $0x8] sm:$0xfe] %vm4320, %v7737
      %7771 = vst [vmem:[%s7768 + $0x10] sm:$0x1] %v7736
      %7772 = vst.msk [vmem:[%s7768 + $0x18] sm:$0x1] %vm4323, %v7737
      %7773 = vst [vmem:[%s7768 + $0x20] sm:$0xfe] %v7738
      %7774 = vst.msk [vmem:[%s7768 + $0x28] sm:$0xfe] %vm4320, %v7739
      %7775 = vst [vmem:[%s7768 + $0x30] sm:$0x1] %v7738
      %7776 = vst.msk [vmem:[%s7768 + $0x38] sm:$0x1] %vm4323, %v7739
      %7777 = vst [vmem:[%s7768 + $0x40] sm:$0xfe] %v7740
      %7778 = vst.msk [vmem:[%s7768 + $0x48] sm:$0xfe] %vm4320, %v7741
      %7779 = vst [vmem:[%s7768 + $0x50] sm:$0x1] %v7740
      %7780 = vst.msk [vmem:[%s7768 + $0x58] sm:$0x1] %vm4323, %v7741
      %7781 = vst [vmem:[%s7768 + $0x60] sm:$0xfe] %v7742
      %7782 = vst.msk [vmem:[%s7768 + $0x68] sm:$0xfe] %vm4320, %v7743
      %7783 = vst [vmem:[%s7768 + $0x70] sm:$0x1] %v7742
      %7784 = vst.msk [vmem:[%s7768 + $0x78] sm:$0x1] %vm4323, %v7743
      %7785 = vst [vmem:[%s7768 + $0x80] sm:$0xfe] %v7744
      %7786 = vst.msk [vmem:[%s7768 + $0x88] sm:$0xfe] %vm4320, %v7745
      %7787 = vst [vmem:[%s7768 + $0x90] sm:$0x1] %v7744
      %7788 = vst.msk [vmem:[%s7768 + $0x98] sm:$0x1] %vm4323, %v7745
      %7789 = vst [vmem:[%s7768 + $0xa0] sm:$0xfe] %v7746
      %7790 = vst.msk [vmem:[%s7768 + $0xa8] sm:$0xfe] %vm4320, %v7747
      %7791 = vst [vmem:[%s7768 + $0xb0] sm:$0x1] %v7746
      %7792 = vst.msk [vmem:[%s7768 + $0xb8] sm:$0x1] %vm4323, %v7747
      %7793 = vst [vmem:[%s7768 + $0xc0] sm:$0xfe] %v7748
      %7794 = vst.msk [vmem:[%s7768 + $0xc8] sm:$0xfe] %vm4320, %v7749
      %7795 = vst [vmem:[%s7768 + $0xd0] sm:$0x1] %v7748
      %7796 = vst.msk [vmem:[%s7768 + $0xd8] sm:$0x1] %vm4323, %v7749
      %7797 = vst [vmem:[%s7768 + $0xe0] sm:$0xfe] %v7750
      %7798 = vst.msk [vmem:[%s7768 + $0xe8] sm:$0xfe] %vm4320, %v7751
      %7799 = vst [vmem:[%s7768 + $0xf0] sm:$0x1] %v7750
      %7800 = vst.msk [vmem:[%s7768 + $0xf8] sm:$0x1] %vm4323, %v7751
      %v7801 = vld [vmem:[#allocation9] sm:$0xff]
      %v7802 = vld [vmem:[#allocation9 + $0x8] sm:$0xff]
      %v7803 = vld [vmem:[#allocation9 + $0x20] sm:$0xff]
      %v7804 = vld [vmem:[#allocation9 + $0x28] sm:$0xff]
      %v7805 = vld [vmem:[#allocation9 + $0x40] sm:$0xff]
      %v7806 = vld [vmem:[#allocation9 + $0x48] sm:$0xff]
      %v7807 = vld [vmem:[#allocation9 + $0x60] sm:$0xff]
      %v7808 = vld [vmem:[#allocation9 + $0x68] sm:$0xff]
      %v7809 = vld [vmem:[#allocation9 + $0x80] sm:$0xff]
      %v7810 = vld [vmem:[#allocation9 + $0x88] sm:$0xff]
      %v7811 = vld [vmem:[#allocation9 + $0xa0] sm:$0xff]
      %v7812 = vld [vmem:[#allocation9 + $0xa8] sm:$0xff]
      %v7813 = vld [vmem:[#allocation9 + $0xc0] sm:$0xff]
      %v7814 = vld [vmem:[#allocation9 + $0xc8] sm:$0xff]
      %v7815 = vld [vmem:[#allocation9 + $0xe0] sm:$0xff]
      %v7816 = vld [vmem:[#allocation9 + $0xe8] sm:$0xff]
      %v7817 = vpack.c.bf16 %v7803, %v7801
      %v7818 = vpack.c.bf16 %v7804, %v7802
      %v7819 = vpack.c.bf16 %v7807, %v7805
      %v7820 = vpack.c.bf16 %v7808, %v7806
      %v7821 = vpack.c.bf16 %v7811, %v7809
      %v7822 = vpack.c.bf16 %v7812, %v7810
      %v7823 = vpack.c.bf16 %v7815, %v7813
      %v7824 = vpack.c.bf16 %v7816, %v7814
      %v7825 = vld [vmem:[%s17] sm:$0xf]
      %v7826 = vld [vmem:[%s17 + $0x4] sm:$0xf]
      %v7827 = vld [vmem:[%s17 + $0x8] sm:$0xf]
      %v7828 = vld [vmem:[%s17 + $0xc] sm:$0xf]
      %v7829 = vld [vmem:[%s17 + $0x10] sm:$0xf]
      %v7830 = vld [vmem:[%s17 + $0x14] sm:$0xf]
      %v7831 = vld [vmem:[%s17 + $0x18] sm:$0xf]
      %v7832 = vld [vmem:[%s17 + $0x1c] sm:$0xf]
      %v7833 = vld [vmem:[%s17 + $0x20] sm:$0xf]
      %v7834 = vld [vmem:[%s17 + $0x24] sm:$0xf]
      %v7835 = vld [vmem:[%s17 + $0x28] sm:$0xf]
      %v7836 = vld [vmem:[%s17 + $0x2c] sm:$0xf]
      %v7837 = vld [vmem:[%s17 + $0x30] sm:$0xf]
      %v7838 = vld [vmem:[%s17 + $0x34] sm:$0xf]
      %v7839 = vld [vmem:[%s17 + $0x38] sm:$0xf]
      %v7840 = vld [vmem:[%s17 + $0x3c] sm:$0xf]
      %v7841 = vld [vmem:[%s17 + $0x40] sm:$0xf]
      %v7842 = vld [vmem:[%s17 + $0x44] sm:$0xf]
      %v7843 = vld [vmem:[%s17 + $0x48] sm:$0xf]
      %v7844 = vld [vmem:[%s17 + $0x4c] sm:$0xf]
      %v7845 = vld [vmem:[%s17 + $0x50] sm:$0xf]
      %v7846 = vld [vmem:[%s17 + $0x54] sm:$0xf]
      %v7847 = vld [vmem:[%s17 + $0x58] sm:$0xf]
      %v7848 = vld [vmem:[%s17 + $0x5c] sm:$0xf]
      %v7849 = vld [vmem:[#allocation9] sm:$0xfe]
      %v7850 = vld [vmem:[#allocation9 + $0x8] sm:$0xfe]
      %v7851 = vld [vmem:[#allocation9 + $0x10] sm:$0x1]
      %v7852 = vld [vmem:[#allocation9 + $0x18] sm:$0x1]
      %v7853 = vld [vmem:[#allocation9 + $0x20] sm:$0xfe]
      %v7854 = vld [vmem:[#allocation9 + $0x28] sm:$0xfe]
      %v7855 = vld [vmem:[#allocation9 + $0x30] sm:$0x1]
      %v7856 = vld [vmem:[#allocation9 + $0x38] sm:$0x1]
      %v7857 = vld [vmem:[#allocation9 + $0x40] sm:$0xfe]
      %v7858 = vld [vmem:[#allocation9 + $0x48] sm:$0xfe]
      %v7859 = vld [vmem:[#allocation9 + $0x50] sm:$0x1]
      %v7860 = vld [vmem:[#allocation9 + $0x58] sm:$0x1]
      %v7861 = vld [vmem:[#allocation9 + $0x60] sm:$0xfe]
      %v7862 = vld [vmem:[#allocation9 + $0x68] sm:$0xfe]
      %v7863 = vld [vmem:[#allocation9 + $0x70] sm:$0x1]
      %v7864 = vld [vmem:[#allocation9 + $0x78] sm:$0x1]
      %v7865 = vld [vmem:[#allocation9 + $0x80] sm:$0xfe]
      %v7866 = vld [vmem:[#allocation9 + $0x88] sm:$0xfe]
      %v7867 = vld [vmem:[#allocation9 + $0x90] sm:$0x1]
      %v7868 = vld [vmem:[#allocation9 + $0x98] sm:$0x1]
      %v7869 = vld [vmem:[#allocation9 + $0xa0] sm:$0xfe]
      %v7870 = vld [vmem:[#allocation9 + $0xa8] sm:$0xfe]
      %v7871 = vld [vmem:[#allocation9 + $0xb0] sm:$0x1]
      %v7872 = vld [vmem:[#allocation9 + $0xb8] sm:$0x1]
      %v7873 = vld [vmem:[#allocation9 + $0xc0] sm:$0xfe]
      %v7874 = vld [vmem:[#allocation9 + $0xc8] sm:$0xfe]
      %v7875 = vld [vmem:[#allocation9 + $0xd0] sm:$0x1]
      %v7876 = vld [vmem:[#allocation9 + $0xd8] sm:$0x1]
      %v7877 = vld [vmem:[#allocation9 + $0xe0] sm:$0xfe]
      %v7878 = vld [vmem:[#allocation9 + $0xe8] sm:$0xfe]
      %v7879 = vld [vmem:[#allocation9 + $0xf0] sm:$0x1]
      %v7880 = vld [vmem:[#allocation9 + $0xf8] sm:$0x1]
      %v7913 = vrot.slane %v7849, 1
      %v7914 = vrot.slane %v7851, 1
      %v7915 = vsel %vm4506, %v7913, %v7914
      %v7916 = vrot.slane %v7850, 1
      %v7917 = vrot.slane %v7852, 1
      %v7918 = vsel %vm4506, %v7916, %v7917
      %v7919 = vrot.slane %v7853, 1
      %v7920 = vrot.slane %v7855, 1
      %v7921 = vsel %vm4506, %v7919, %v7920
      %v7922 = vrot.slane %v7854, 1
      %v7923 = vrot.slane %v7856, 1
      %v7924 = vsel %vm4506, %v7922, %v7923
      %v7925 = vrot.slane %v7857, 1
      %v7926 = vrot.slane %v7859, 1
      %v7927 = vsel %vm4506, %v7925, %v7926
      %v7928 = vrot.slane %v7858, 1
      %v7929 = vrot.slane %v7860, 1
      %v7930 = vsel %vm4506, %v7928, %v7929
      %v7931 = vrot.slane %v7861, 1
      %v7932 = vrot.slane %v7863, 1
      %v7933 = vsel %vm4506, %v7931, %v7932
      %v7934 = vrot.slane %v7862, 1
      %v7935 = vrot.slane %v7864, 1
      %v7936 = vsel %vm4506, %v7934, %v7935
      %v7937 = vrot.slane %v7865, 1
      %v7938 = vrot.slane %v7867, 1
      %v7939 = vsel %vm4506, %v7937, %v7938
      %v7940 = vrot.slane %v7866, 1
      %v7941 = vrot.slane %v7868, 1
      %v7942 = vsel %vm4506, %v7940, %v7941
      %v7943 = vrot.slane %v7869, 1
      %v7944 = vrot.slane %v7871, 1
      %v7945 = vsel %vm4506, %v7943, %v7944
      %v7946 = vrot.slane %v7870, 1
      %v7947 = vrot.slane %v7872, 1
      %v7948 = vsel %vm4506, %v7946, %v7947
      %v7949 = vrot.slane %v7873, 1
      %v7950 = vrot.slane %v7875, 1
      %v7951 = vsel %vm4506, %v7949, %v7950
      %v7952 = vrot.slane %v7874, 1
      %v7953 = vrot.slane %v7876, 1
      %v7954 = vsel %vm4506, %v7952, %v7953
      %v7955 = vrot.slane %v7877, 1
      %v7956 = vrot.slane %v7879, 1
      %v7957 = vsel %vm4506, %v7955, %v7956
      %v7958 = vrot.slane %v7878, 1
      %v7959 = vrot.slane %v7880, 1
      %v7960 = vsel %vm4506, %v7958, %v7959
      %v7977 = vpack.c.bf16 %v7921, %v7915
      %v7978 = vpack.c.bf16 %v7924, %v7918
      %v7979 = vpack.c.bf16 %v7933, %v7927
      %v7980 = vpack.c.bf16 %v7936, %v7930
      %v7981 = vpack.c.bf16 %v7945, %v7939
      %v7982 = vpack.c.bf16 %v7948, %v7942
      %v7983 = vpack.c.bf16 %v7957, %v7951
      %v7984 = vpack.c.bf16 %v7960, %v7954
      %s7985 = scalar_lea.vmem %s17, 96
      %v7986 = vld [vmem:[%s7985] sm:$0xf]
      %v7987 = vld [vmem:[%s7985 + $0x4] sm:$0xf]
      %v7988 = vld [vmem:[%s7985 + $0x8] sm:$0xf]
      %v7989 = vld [vmem:[%s7985 + $0xc] sm:$0xf]
      %v7990 = vld [vmem:[%s7985 + $0x10] sm:$0xf]
      %v7991 = vld [vmem:[%s7985 + $0x14] sm:$0xf]
      %v7992 = vld [vmem:[%s7985 + $0x18] sm:$0xf]
      %v7993 = vld [vmem:[%s7985 + $0x1c] sm:$0xf]
      %v7994 = vld [vmem:[%s7985 + $0x20] sm:$0xf]
      %v7995 = vld [vmem:[%s7985 + $0x24] sm:$0xf]
      %v7996 = vld [vmem:[%s7985 + $0x28] sm:$0xf]
      %v7997 = vld [vmem:[%s7985 + $0x2c] sm:$0xf]
      %v7998 = vld [vmem:[%s7985 + $0x30] sm:$0xf]
      %v7999 = vld [vmem:[%s7985 + $0x34] sm:$0xf]
      %v8000 = vld [vmem:[%s7985 + $0x38] sm:$0xf]
      %v8001 = vld [vmem:[%s7985 + $0x3c] sm:$0xf]
      %v8002 = vld [vmem:[%s7985 + $0x40] sm:$0xf]
      %v8003 = vld [vmem:[%s7985 + $0x44] sm:$0xf]
      %v8004 = vld [vmem:[%s7985 + $0x48] sm:$0xf]
      %v8005 = vld [vmem:[%s7985 + $0x4c] sm:$0xf]
      %v8006 = vld [vmem:[%s7985 + $0x50] sm:$0xf]
      %v8007 = vld [vmem:[%s7985 + $0x54] sm:$0xf]
      %v8008 = vld [vmem:[%s7985 + $0x58] sm:$0xf]
      %v8009 = vld [vmem:[%s7985 + $0x5c] sm:$0xf]
      %v8034 = vunpack.c.l.b16 %v7986
      %v8035 = vunpack.c.l.b16 %v7987
      %v8036 = vunpack.c.l.b16 %v7988
      %v8037 = vunpack.c.l.b16 %v7989
      %v8038 = vunpack.c.l.b16 %v7990
      %v8039 = vunpack.c.l.b16 %v7991
      %v8040 = vunpack.c.l.b16 %v7992
      %v8041 = vunpack.c.l.b16 %v7993
      %v8042 = vunpack.c.l.b16 %v7994
      %v8043 = vunpack.c.l.b16 %v7995
      %v8044 = vunpack.c.l.b16 %v7996
      %v8045 = vunpack.c.l.b16 %v7997
      %v8046 = vunpack.c.l.b16 %v7998
      %v8047 = vunpack.c.l.b16 %v7999
      %v8048 = vunpack.c.l.b16 %v8000
      %v8049 = vunpack.c.l.b16 %v8001
      %v8050 = vunpack.c.l.b16 %v8002
      %v8051 = vunpack.c.l.b16 %v8003
      %v8052 = vunpack.c.l.b16 %v8004
      %v8053 = vunpack.c.l.b16 %v8005
      %v8054 = vunpack.c.l.b16 %v8006
      %v8055 = vunpack.c.l.b16 %v8007
      %v8056 = vunpack.c.l.b16 %v8008
      %v8057 = vunpack.c.l.b16 %v8009
      %v8058 = vpack.c.b16 %v8035, %v8034
      %v8059 = vpack.c.b16 %v8037, %v8036
      %v8060 = vpack.c.b16 %v8039, %v8038
      %v8061 = vpack.c.b16 %v8041, %v8040
      %v8062 = vpack.c.b16 %v8043, %v8042
      %v8063 = vpack.c.b16 %v8045, %v8044
      %v8064 = vpack.c.b16 %v8047, %v8046
      %v8065 = vpack.c.b16 %v8049, %v8048
      %v8066 = vpack.c.b16 %v8051, %v8050
      %v8067 = vpack.c.b16 %v8053, %v8052
      %v8068 = vpack.c.b16 %v8055, %v8054
      %v8069 = vpack.c.b16 %v8057, %v8056
      %v8083 = vsel %vm2864, %v7978, 0
      %v8086 = vsel %vm2864, %v7980, 0
      %v8089 = vsel %vm2864, %v7982, 0
      %v8092 = vsel %vm2864, %v7984, 0
      %8094 = vmatprep.subr.bf16.mxu0 0
      %8095 = vmatpush1.bf16.msra.mxu0 %v8058
      %8096 = vmatprep.subr.bf16.mxu0 0
      %8097 = vmatpush1.bf16.msra.mxu0 %v8059
      %8098 = vmatprep.subr.bf16.mxu0 0
      %8099 = vmatpush1.bf16.msra.mxu0 %v8060
      %8100 = vmatprep.subr.bf16.mxu0 0
      %8101 = vmatpush1.bf16.msra.mxu0 %v8061
      %8102 = vmatprep.subr.bf16.mxu0 0
      %8103 = vmatpush1.bf16.msra.mxu0 %v8062
      %8104 = vmatprep.subr.bf16.mxu0 0
      %8105 = vmatpush1.bf16.msra.mxu0 %v8063
      %8106 = vmatprep.subr.bf16.mxu0 0
      %8107 = vmatpush1.bf16.msra.mxu0 %v8064
      %8108 = vmatprep.subr.bf16.mxu0 0
      %8109 = vmatpush1.bf16.msra.mxu0 %v8065
      %8110 = vmatprep.subr.bf16.mxu0 0
      %8111 = vmatpush1.bf16.msra.mxu0 %v8066
      %8112 = vmatprep.subr.bf16.mxu0 0
      %8113 = vmatpush1.bf16.msra.mxu0 %v8067
      %8114 = vmatprep.subr.bf16.mxu0 0
      %8115 = vmatpush1.bf16.msra.mxu0 %v8068
      %8116 = vmatprep.subr.bf16.mxu0 0
      %8117 = vmatpush1.bf16.msra.mxu0 %v8069
      %8118 = vmatprep.subr.bf16.mxu0 0
      %8119 = vmatpush1.bf16.msra.mxu0 0
      %8120 = vmatprep.subr.bf16.mxu0 0
      %8121 = vmatpush1.bf16.msra.mxu0 0
      %8122 = vmatprep.subr.bf16.mxu0 0
      %8123 = vmatpush1.bf16.msra.mxu0 0
      %8124 = vmatprep.subr.bf16.mxu0 0
      %8125 = vmatpush1.bf16.msra.mxu0 0
      %8126 = vmatprep.mubr.bf16.mxu0 %v8083
      %8127 = vmatmul.mubr.bf16.gmra.mrb[0].mxu0 %v7977
      %v8128 = vpop.f32.mrb[0].mxu0
      %v8129 = vadd.f32 0.0, %v8128
      %v8130 = vpop.f32.mrb[0].mxu0
      %v8131 = vpop.f32.mrb[0].mxu0
      %v8132 = vadd.f32 0.0, %v8131
      %v8133 = vpop.f32.mrb[0].mxu0
      %8134 = vmatprep.mubr.bf16.mxu0 %v8086
      %8135 = vmatmul.mubr.bf16.gmra.mrb[0].mxu0 %v7979
      %v8136 = vpop.f32.mrb[0].mxu0
      %v8137 = vadd.f32 0.0, %v8136
      %v8138 = vpop.f32.mrb[0].mxu0
      %v8139 = vpop.f32.mrb[0].mxu0
      %v8140 = vadd.f32 0.0, %v8139
      %v8141 = vpop.f32.mrb[0].mxu0
      %8142 = vmatprep.mubr.bf16.mxu0 %v8089
      %8143 = vmatmul.mubr.bf16.gmra.mrb[0].mxu0 %v7981
      %v8144 = vpop.f32.mrb[0].mxu0
      %v8145 = vadd.f32 0.0, %v8144
      %v8146 = vpop.f32.mrb[0].mxu0
      %v8147 = vpop.f32.mrb[0].mxu0
      %v8148 = vadd.f32 0.0, %v8147
      %v8149 = vpop.f32.mrb[0].mxu0
      %8150 = vmatprep.mubr.bf16.mxu0 %v8092
      %8151 = vmatmul.mubr.bf16.gmra.mrb[0].mxu0 %v7983
      %v8152 = vpop.f32.mrb[0].mxu0
      %v8153 = vadd.f32 0.0, %v8152
      %v8154 = vpop.f32.mrb[0].mxu0
      %v8155 = vpop.f32.mrb[0].mxu0
      %v8156 = vadd.f32 0.0, %v8155
      %v8157 = vpop.f32.mrb[0].mxu0
      %8158 = vdwg.mxu0
      %v8183 = vunpack.c.l.b16 %v7825
      %v8184 = vunpack.c.l.b16 %v7826
      %v8185 = vunpack.c.l.b16 %v7827
      %v8186 = vunpack.c.l.b16 %v7828
      %v8187 = vunpack.c.l.b16 %v7829
      %v8188 = vunpack.c.l.b16 %v7830
      %v8189 = vunpack.c.l.b16 %v7831
      %v8190 = vunpack.c.l.b16 %v7832
      %v8191 = vunpack.c.l.b16 %v7833
      %v8192 = vunpack.c.l.b16 %v7834
      %v8193 = vunpack.c.l.b16 %v7835
      %v8194 = vunpack.c.l.b16 %v7836
      %v8195 = vunpack.c.l.b16 %v7837
      %v8196 = vunpack.c.l.b16 %v7838
      %v8197 = vunpack.c.l.b16 %v7839
      %v8198 = vunpack.c.l.b16 %v7840
      %v8199 = vunpack.c.l.b16 %v7841
      %v8200 = vunpack.c.l.b16 %v7842
      %v8201 = vunpack.c.l.b16 %v7843
      %v8202 = vunpack.c.l.b16 %v7844
      %v8203 = vunpack.c.l.b16 %v7845
      %v8204 = vunpack.c.l.b16 %v7846
      %v8205 = vunpack.c.l.b16 %v7847
      %v8206 = vunpack.c.l.b16 %v7848
      %v8207 = vpack.c.b16 %v8184, %v8183
      %v8208 = vpack.c.b16 %v8186, %v8185
      %v8209 = vpack.c.b16 %v8188, %v8187
      %v8210 = vpack.c.b16 %v8190, %v8189
      %v8211 = vpack.c.b16 %v8192, %v8191
      %v8212 = vpack.c.b16 %v8194, %v8193
      %v8213 = vpack.c.b16 %v8196, %v8195
      %v8214 = vpack.c.b16 %v8198, %v8197
      %v8215 = vpack.c.b16 %v8200, %v8199
      %v8216 = vpack.c.b16 %v8202, %v8201
      %v8217 = vpack.c.b16 %v8204, %v8203
      %v8218 = vpack.c.b16 %v8206, %v8205
      %v8232 = vsel %vm2864, %v7818, 0
      %v8235 = vsel %vm2864, %v7820, 0
      %v8238 = vsel %vm2864, %v7822, 0
      %v8241 = vsel %vm2864, %v7824, 0
      %8243 = vmatprep.subr.bf16.mxu0 0
      %8244 = vmatpush1.bf16.msra.mxu0 %v8207
      %8245 = vmatprep.subr.bf16.mxu0 0
      %8246 = vmatpush1.bf16.msra.mxu0 %v8208
      %8247 = vmatprep.subr.bf16.mxu0 0
      %8248 = vmatpush1.bf16.msra.mxu0 %v8209
      %8249 = vmatprep.subr.bf16.mxu0 0
      %8250 = vmatpush1.bf16.msra.mxu0 %v8210
      %8251 = vmatprep.subr.bf16.mxu0 0
      %8252 = vmatpush1.bf16.msra.mxu0 %v8211
      %8253 = vmatprep.subr.bf16.mxu0 0
      %8254 = vmatpush1.bf16.msra.mxu0 %v8212
      %8255 = vmatprep.subr.bf16.mxu0 0
      %8256 = vmatpush1.bf16.msra.mxu0 %v8213
      %8257 = vmatprep.subr.bf16.mxu0 0
      %8258 = vmatpush1.bf16.msra.mxu0 %v8214
      %8259 = vmatprep.subr.bf16.mxu0 0
      %8260 = vmatpush1.bf16.msra.mxu0 %v8215
      %8261 = vmatprep.subr.bf16.mxu0 0
      %8262 = vmatpush1.bf16.msra.mxu0 %v8216
      %8263 = vmatprep.subr.bf16.mxu0 0
      %8264 = vmatpush1.bf16.msra.mxu0 %v8217
      %8265 = vmatprep.subr.bf16.mxu0 0
      %8266 = vmatpush1.bf16.msra.mxu0 %v8218
      %8267 = vmatprep.subr.bf16.mxu0 0
      %8268 = vmatpush1.bf16.msra.mxu0 0
      %8269 = vmatprep.subr.bf16.mxu0 0
      %8270 = vmatpush1.bf16.msra.mxu0 0
      %8271 = vmatprep.subr.bf16.mxu0 0
      %8272 = vmatpush1.bf16.msra.mxu0 0
      %8273 = vmatprep.subr.bf16.mxu0 0
      %8274 = vmatpush1.bf16.msra.mxu0 0
      %8275 = vmatprep.mubr.bf16.mxu0 %v8232
      %8276 = vmatmul.mubr.bf16.gmra.mrb[0].mxu0 %v7817
      %v8277 = vpop.f32.mrb[0].mxu0
      %v8278 = vadd.f32 %v8129, %v8277
      %v8279 = vpop.f32.mrb[0].mxu0
      %v8280 = vpop.f32.mrb[0].mxu0
      %v8281 = vadd.f32 %v8132, %v8280
      %v8282 = vpop.f32.mrb[0].mxu0
      %8283 = vmatprep.mubr.bf16.mxu0 %v8235
      %8284 = vmatmul.mubr.bf16.gmra.mrb[0].mxu0 %v7819
      %v8285 = vpop.f32.mrb[0].mxu0
      %v8286 = vadd.f32 %v8137, %v8285
      %v8287 = vpop.f32.mrb[0].mxu0
      %v8288 = vpop.f32.mrb[0].mxu0
      %v8289 = vadd.f32 %v8140, %v8288
      %v8290 = vpop.f32.mrb[0].mxu0
      %8291 = vmatprep.mubr.bf16.mxu0 %v8238
      %8292 = vmatmul.mubr.bf16.gmra.mrb[0].mxu0 %v7821
      %v8293 = vpop.f32.mrb[0].mxu0
      %v8294 = vadd.f32 %v8145, %v8293
      %v8295 = vpop.f32.mrb[0].mxu0
      %v8296 = vpop.f32.mrb[0].mxu0
      %v8297 = vadd.f32 %v8148, %v8296
      %v8298 = vpop.f32.mrb[0].mxu0
      %8299 = vmatprep.mubr.bf16.mxu0 %v8241
      %8300 = vmatmul.mubr.bf16.gmra.mrb[0].mxu0 %v7823
      %v8301 = vpop.f32.mrb[0].mxu0
      %v8302 = vadd.f32 %v8153, %v8301
      %v8303 = vpop.f32.mrb[0].mxu0
      %v8304 = vpop.f32.mrb[0].mxu0
      %v8305 = vadd.f32 %v8156, %v8304
      %v8306 = vpop.f32.mrb[0].mxu0
      %8307 = vdwg.mxu0
      %v8308 = vld [vmem:[#allocation9] sm:$0xfc]
      %v8309 = vld [vmem:[#allocation9 + $0x8] sm:$0xfc]
      %v8310 = vld [vmem:[#allocation9 + $0x10] sm:$0x3]
      %v8311 = vld [vmem:[#allocation9 + $0x18] sm:$0x3]
      %v8312 = vld [vmem:[#allocation9 + $0x20] sm:$0xfc]
      %v8313 = vld [vmem:[#allocation9 + $0x28] sm:$0xfc]
      %v8314 = vld [vmem:[#allocation9 + $0x30] sm:$0x3]
      %v8315 = vld [vmem:[#allocation9 + $0x38] sm:$0x3]
      %v8316 = vld [vmem:[#allocation9 + $0x40] sm:$0xfc]
      %v8317 = vld [vmem:[#allocation9 + $0x48] sm:$0xfc]
      %v8318 = vld [vmem:[#allocation9 + $0x50] sm:$0x3]
      %v8319 = vld [vmem:[#allocation9 + $0x58] sm:$0x3]
      %v8320 = vld [vmem:[#allocation9 + $0x60] sm:$0xfc]
      %v8321 = vld [vmem:[#allocation9 + $0x68] sm:$0xfc]
      %v8322 = vld [vmem:[#allocation9 + $0x70] sm:$0x3]
      %v8323 = vld [vmem:[#allocation9 + $0x78] sm:$0x3]
      %v8324 = vld [vmem:[#allocation9 + $0x80] sm:$0xfc]
      %v8325 = vld [vmem:[#allocation9 + $0x88] sm:$0xfc]
      %v8326 = vld [vmem:[#allocation9 + $0x90] sm:$0x3]
      %v8327 = vld [vmem:[#allocation9 + $0x98] sm:$0x3]
      %v8328 = vld [vmem:[#allocation9 + $0xa0] sm:$0xfc]
      %v8329 = vld [vmem:[#allocation9 + $0xa8] sm:$0xfc]
      %v8330 = vld [vmem:[#allocation9 + $0xb0] sm:$0x3]
      %v8331 = vld [vmem:[#allocation9 + $0xb8] sm:$0x3]
      %v8332 = vld [vmem:[#allocation9 + $0xc0] sm:$0xfc]
      %v8333 = vld [vmem:[#allocation9 + $0xc8] sm:$0xfc]
      %v8334 = vld [vmem:[#allocation9 + $0xd0] sm:$0x3]
      %v8335 = vld [vmem:[#allocation9 + $0xd8] sm:$0x3]
      %v8336 = vld [vmem:[#allocation9 + $0xe0] sm:$0xfc]
      %v8337 = vld [vmem:[#allocation9 + $0xe8] sm:$0xfc]
      %v8338 = vld [vmem:[#allocation9 + $0xf0] sm:$0x3]
      %v8339 = vld [vmem:[#allocation9 + $0xf8] sm:$0x3]
      %v8372 = vrot.slane %v8308, 2
      %v8373 = vrot.slane %v8310, 2
      %v8374 = vsel %vm4696, %v8372, %v8373
      %v8375 = vrot.slane %v8309, 2
      %v8376 = vrot.slane %v8311, 2
      %v8377 = vsel %vm4696, %v8375, %v8376
      %v8378 = vrot.slane %v8312, 2
      %v8379 = vrot.slane %v8314, 2
      %v8380 = vsel %vm4696, %v8378, %v8379
      %v8381 = vrot.slane %v8313, 2
      %v8382 = vrot.slane %v8315, 2
      %v8383 = vsel %vm4696, %v8381, %v8382
      %v8384 = vrot.slane %v8316, 2
      %v8385 = vrot.slane %v8318, 2
      %v8386 = vsel %vm4696, %v8384, %v8385
      %v8387 = vrot.slane %v8317, 2
      %v8388 = vrot.slane %v8319, 2
      %v8389 = vsel %vm4696, %v8387, %v8388
      %v8390 = vrot.slane %v8320, 2
      %v8391 = vrot.slane %v8322, 2
      %v8392 = vsel %vm4696, %v8390, %v8391
      %v8393 = vrot.slane %v8321, 2
      %v8394 = vrot.slane %v8323, 2
      %v8395 = vsel %vm4696, %v8393, %v8394
      %v8396 = vrot.slane %v8324, 2
      %v8397 = vrot.slane %v8326, 2
      %v8398 = vsel %vm4696, %v8396, %v8397
      %v8399 = vrot.slane %v8325, 2
      %v8400 = vrot.slane %v8327, 2
      %v8401 = vsel %vm4696, %v8399, %v8400
      %v8402 = vrot.slane %v8328, 2
      %v8403 = vrot.slane %v8330, 2
      %v8404 = vsel %vm4696, %v8402, %v8403
      %v8405 = vrot.slane %v8329, 2
      %v8406 = vrot.slane %v8331, 2
      %v8407 = vsel %vm4696, %v8405, %v8406
      %v8408 = vrot.slane %v8332, 2
      %v8409 = vrot.slane %v8334, 2
      %v8410 = vsel %vm4696, %v8408, %v8409
      %v8411 = vrot.slane %v8333, 2
      %v8412 = vrot.slane %v8335, 2
      %v8413 = vsel %vm4696, %v8411, %v8412
      %v8414 = vrot.slane %v8336, 2
      %v8415 = vrot.slane %v8338, 2
      %v8416 = vsel %vm4696, %v8414, %v8415
      %v8417 = vrot.slane %v8337, 2
      %v8418 = vrot.slane %v8339, 2
      %v8419 = vsel %vm4696, %v8417, %v8418
      %v8436 = vpack.c.bf16 %v8380, %v8374
      %v8437 = vpack.c.bf16 %v8383, %v8377
      %v8438 = vpack.c.bf16 %v8392, %v8386
      %v8439 = vpack.c.bf16 %v8395, %v8389
      %v8440 = vpack.c.bf16 %v8404, %v8398
      %v8441 = vpack.c.bf16 %v8407, %v8401
      %v8442 = vpack.c.bf16 %v8416, %v8410
      %v8443 = vpack.c.bf16 %v8419, %v8413
      %s8444 = scalar_lea.vmem %s17, 192
      %v8445 = vld [vmem:[%s8444] sm:$0xf]
      %v8446 = vld [vmem:[%s8444 + $0x4] sm:$0xf]
      %v8447 = vld [vmem:[%s8444 + $0x8] sm:$0xf]
      %v8448 = vld [vmem:[%s8444 + $0xc] sm:$0xf]
      %v8449 = vld [vmem:[%s8444 + $0x10] sm:$0xf]
      %v8450 = vld [vmem:[%s8444 + $0x14] sm:$0xf]
      %v8451 = vld [vmem:[%s8444 + $0x18] sm:$0xf]
      %v8452 = vld [vmem:[%s8444 + $0x1c] sm:$0xf]
      %v8453 = vld [vmem:[%s8444 + $0x20] sm:$0xf]
      %v8454 = vld [vmem:[%s8444 + $0x24] sm:$0xf]
      %v8455 = vld [vmem:[%s8444 + $0x28] sm:$0xf]
      %v8456 = vld [vmem:[%s8444 + $0x2c] sm:$0xf]
      %v8457 = vld [vmem:[%s8444 + $0x30] sm:$0xf]
      %v8458 = vld [vmem:[%s8444 + $0x34] sm:$0xf]
      %v8459 = vld [vmem:[%s8444 + $0x38] sm:$0xf]
      %v8460 = vld [vmem:[%s8444 + $0x3c] sm:$0xf]
      %v8461 = vld [vmem:[%s8444 + $0x40] sm:$0xf]
      %v8462 = vld [vmem:[%s8444 + $0x44] sm:$0xf]
      %v8463 = vld [vmem:[%s8444 + $0x48] sm:$0xf]
      %v8464 = vld [vmem:[%s8444 + $0x4c] sm:$0xf]
      %v8465 = vld [vmem:[%s8444 + $0x50] sm:$0xf]
      %v8466 = vld [vmem:[%s8444 + $0x54] sm:$0xf]
      %v8467 = vld [vmem:[%s8444 + $0x58] sm:$0xf]
      %v8468 = vld [vmem:[%s8444 + $0x5c] sm:$0xf]
      %v8493 = vunpack.c.l.b16 %v8445
      %v8494 = vunpack.c.l.b16 %v8446
      %v8495 = vunpack.c.l.b16 %v8447
      %v8496 = vunpack.c.l.b16 %v8448
      %v8497 = vunpack.c.l.b16 %v8449
      %v8498 = vunpack.c.l.b16 %v8450
      %v8499 = vunpack.c.l.b16 %v8451
      %v8500 = vunpack.c.l.b16 %v8452
      %v8501 = vunpack.c.l.b16 %v8453
      %v8502 = vunpack.c.l.b16 %v8454
      %v8503 = vunpack.c.l.b16 %v8455
      %v8504 = vunpack.c.l.b16 %v8456
      %v8505 = vunpack.c.l.b16 %v8457
      %v8506 = vunpack.c.l.b16 %v8458
      %v8507 = vunpack.c.l.b16 %v8459
      %v8508 = vunpack.c.l.b16 %v8460
      %v8509 = vunpack.c.l.b16 %v8461
      %v8510 = vunpack.c.l.b16 %v8462
      %v8511 = vunpack.c.l.b16 %v8463
      %v8512 = vunpack.c.l.b16 %v8464
      %v8513 = vunpack.c.l.b16 %v8465
      %v8514 = vunpack.c.l.b16 %v8466
      %v8515 = vunpack.c.l.b16 %v8467
      %v8516 = vunpack.c.l.b16 %v8468
      %v8517 = vpack.c.b16 %v8494, %v8493
      %v8518 = vpack.c.b16 %v8496, %v8495
      %v8519 = vpack.c.b16 %v8498, %v8497
      %v8520 = vpack.c.b16 %v8500, %v8499
      %v8521 = vpack.c.b16 %v8502, %v8501
      %v8522 = vpack.c.b16 %v8504, %v8503
      %v8523 = vpack.c.b16 %v8506, %v8505
      %v8524 = vpack.c.b16 %v8508, %v8507
      %v8525 = vpack.c.b16 %v8510, %v8509
      %v8526 = vpack.c.b16 %v8512, %v8511
      %v8527 = vpack.c.b16 %v8514, %v8513
      %v8528 = vpack.c.b16 %v8516, %v8515
      %v8542 = vsel %vm2864, %v8437, 0
      %v8545 = vsel %vm2864, %v8439, 0
      %v8548 = vsel %vm2864, %v8441, 0
      %v8551 = vsel %vm2864, %v8443, 0
      %8553 = vmatprep.subr.bf16.mxu0 0
      %8554 = vmatpush1.bf16.msra.mxu0 %v8517
      %8555 = vmatprep.subr.bf16.mxu0 0
      %8556 = vmatpush1.bf16.msra.mxu0 %v8518
      %8557 = vmatprep.subr.bf16.mxu0 0
      %8558 = vmatpush1.bf16.msra.mxu0 %v8519
      %8559 = vmatprep.subr.bf16.mxu0 0
      %8560 = vmatpush1.bf16.msra.mxu0 %v8520
      %8561 = vmatprep.subr.bf16.mxu0 0
      %8562 = vmatpush1.bf16.msra.mxu0 %v8521
      %8563 = vmatprep.subr.bf16.mxu0 0
      %8564 = vmatpush1.bf16.msra.mxu0 %v8522
      %8565 = vmatprep.subr.bf16.mxu0 0
      %8566 = vmatpush1.bf16.msra.mxu0 %v8523
      %8567 = vmatprep.subr.bf16.mxu0 0
      %8568 = vmatpush1.bf16.msra.mxu0 %v8524
      %8569 = vmatprep.subr.bf16.mxu0 0
      %8570 = vmatpush1.bf16.msra.mxu0 %v8525
      %8571 = vmatprep.subr.bf16.mxu0 0
      %8572 = vmatpush1.bf16.msra.mxu0 %v8526
      %8573 = vmatprep.subr.bf16.mxu0 0
      %8574 = vmatpush1.bf16.msra.mxu0 %v8527
      %8575 = vmatprep.subr.bf16.mxu0 0
      %8576 = vmatpush1.bf16.msra.mxu0 %v8528
      %8577 = vmatprep.subr.bf16.mxu0 0
      %8578 = vmatpush1.bf16.msra.mxu0 0
      %8579 = vmatprep.subr.bf16.mxu0 0
      %8580 = vmatpush1.bf16.msra.mxu0 0
      %8581 = vmatprep.subr.bf16.mxu0 0
      %8582 = vmatpush1.bf16.msra.mxu0 0
      %8583 = vmatprep.subr.bf16.mxu0 0
      %8584 = vmatpush1.bf16.msra.mxu0 0
      %8585 = vmatprep.mubr.bf16.mxu0 %v8542
      %8586 = vmatmul.mubr.bf16.gmra.mrb[0].mxu0 %v8436
      %v8587 = vpop.f32.mrb[0].mxu0
      %v8588 = vadd.f32 0.0, %v8587
      %v8589 = vpop.f32.mrb[0].mxu0
      %v8590 = vpop.f32.mrb[0].mxu0
      %v8591 = vadd.f32 0.0, %v8590
      %v8592 = vpop.f32.mrb[0].mxu0
      %8593 = vmatprep.mubr.bf16.mxu0 %v8545
      %8594 = vmatmul.mubr.bf16.gmra.mrb[0].mxu0 %v8438
      %v8595 = vpop.f32.mrb[0].mxu0
      %v8596 = vadd.f32 0.0, %v8595
      %v8597 = vpop.f32.mrb[0].mxu0
      %v8598 = vpop.f32.mrb[0].mxu0
      %v8599 = vadd.f32 0.0, %v8598
      %v8600 = vpop.f32.mrb[0].mxu0
      %8601 = vmatprep.mubr.bf16.mxu0 %v8548
      %8602 = vmatmul.mubr.bf16.gmra.mrb[0].mxu0 %v8440
      %v8603 = vpop.f32.mrb[0].mxu0
      %v8604 = vadd.f32 0.0, %v8603
      %v8605 = vpop.f32.mrb[0].mxu0
      %v8606 = vpop.f32.mrb[0].mxu0
      %v8607 = vadd.f32 0.0, %v8606
      %v8608 = vpop.f32.mrb[0].mxu0
      %8609 = vmatprep.mubr.bf16.mxu0 %v8551
      %8610 = vmatmul.mubr.bf16.gmra.mrb[0].mxu0 %v8442
      %v8611 = vpop.f32.mrb[0].mxu0
      %v8612 = vadd.f32 0.0, %v8611
      %v8613 = vpop.f32.mrb[0].mxu0
      %v8614 = vpop.f32.mrb[0].mxu0
      %v8615 = vadd.f32 0.0, %v8614
      %v8616 = vpop.f32.mrb[0].mxu0
      %8617 = vdwg.mxu0
      %v8618 = vadd.f32 %v8278, %v8588
      %v8619 = vadd.f32 %v8281, %v8591
      %v8620 = vadd.f32 %v8286, %v8596
      %v8621 = vadd.f32 %v8289, %v8599
      %v8622 = vadd.f32 %v8294, %v8604
      %v8623 = vadd.f32 %v8297, %v8607
      %v8624 = vadd.f32 %v8302, %v8612
      %v8625 = vadd.f32 %v8305, %v8615
      %v8626 = vld [vmem:[%s7768] sm:$0xff]
      %v8627 = vld [vmem:[%s7768 + $0x8] sm:$0xff]
      %v8628 = vld [vmem:[%s7768 + $0x20] sm:$0xff]
      %v8629 = vld [vmem:[%s7768 + $0x28] sm:$0xff]
      %v8630 = vld [vmem:[%s7768 + $0x40] sm:$0xff]
      %v8631 = vld [vmem:[%s7768 + $0x48] sm:$0xff]
      %v8632 = vld [vmem:[%s7768 + $0x60] sm:$0xff]
      %v8633 = vld [vmem:[%s7768 + $0x68] sm:$0xff]
      %v8634 = vld [vmem:[%s7768 + $0x80] sm:$0xff]
      %v8635 = vld [vmem:[%s7768 + $0x88] sm:$0xff]
      %v8636 = vld [vmem:[%s7768 + $0xa0] sm:$0xff]
      %v8637 = vld [vmem:[%s7768 + $0xa8] sm:$0xff]
      %v8638 = vld [vmem:[%s7768 + $0xc0] sm:$0xff]
      %v8639 = vld [vmem:[%s7768 + $0xc8] sm:$0xff]
      %v8640 = vld [vmem:[%s7768 + $0xe0] sm:$0xff]
      %v8641 = vld [vmem:[%s7768 + $0xe8] sm:$0xff]
      %v8642 = vpack.c.bf16 %v8628, %v8626
      %v8643 = vpack.c.bf16 %v8629, %v8627
      %v8644 = vpack.c.bf16 %v8632, %v8630
      %v8645 = vpack.c.bf16 %v8633, %v8631
      %v8646 = vpack.c.bf16 %v8636, %v8634
      %v8647 = vpack.c.bf16 %v8637, %v8635
      %v8648 = vpack.c.bf16 %v8640, %v8638
      %v8649 = vpack.c.bf16 %v8641, %v8639
      %s8650 = scalar_lea.vmem %s17, 288
      %v8651 = vld [vmem:[%s8650] sm:$0xf]
      %v8652 = vld [vmem:[%s8650 + $0x4] sm:$0xf]
      %v8653 = vld [vmem:[%s8650 + $0x8] sm:$0xf]
      %v8654 = vld [vmem:[%s8650 + $0xc] sm:$0xf]
      %v8655 = vld [vmem:[%s8650 + $0x10] sm:$0xf]
      %v8656 = vld [vmem:[%s8650 + $0x14] sm:$0xf]
      %v8657 = vld [vmem:[%s8650 + $0x18] sm:$0xf]
      %v8658 = vld [vmem:[%s8650 + $0x1c] sm:$0xf]
      %v8659 = vld [vmem:[%s8650 + $0x20] sm:$0xf]
      %v8660 = vld [vmem:[%s8650 + $0x24] sm:$0xf]
      %v8661 = vld [vmem:[%s8650 + $0x28] sm:$0xf]
      %v8662 = vld [vmem:[%s8650 + $0x2c] sm:$0xf]
      %v8663 = vld [vmem:[%s8650 + $0x30] sm:$0xf]
      %v8664 = vld [vmem:[%s8650 + $0x34] sm:$0xf]
      %v8665 = vld [vmem:[%s8650 + $0x38] sm:$0xf]
      %v8666 = vld [vmem:[%s8650 + $0x3c] sm:$0xf]
      %v8667 = vld [vmem:[%s8650 + $0x40] sm:$0xf]
      %v8668 = vld [vmem:[%s8650 + $0x44] sm:$0xf]
      %v8669 = vld [vmem:[%s8650 + $0x48] sm:$0xf]
      %v8670 = vld [vmem:[%s8650 + $0x4c] sm:$0xf]
      %v8671 = vld [vmem:[%s8650 + $0x50] sm:$0xf]
      %v8672 = vld [vmem:[%s8650 + $0x54] sm:$0xf]
      %v8673 = vld [vmem:[%s8650 + $0x58] sm:$0xf]
      %v8674 = vld [vmem:[%s8650 + $0x5c] sm:$0xf]
      %v8699 = vunpack.c.l.b16 %v8651
      %v8700 = vunpack.c.l.b16 %v8652
      %v8701 = vunpack.c.l.b16 %v8653
      %v8702 = vunpack.c.l.b16 %v8654
      %v8703 = vunpack.c.l.b16 %v8655
      %v8704 = vunpack.c.l.b16 %v8656
      %v8705 = vunpack.c.l.b16 %v8657
      %v8706 = vunpack.c.l.b16 %v8658
      %v8707 = vunpack.c.l.b16 %v8659
      %v8708 = vunpack.c.l.b16 %v8660
      %v8709 = vunpack.c.l.b16 %v8661
      %v8710 = vunpack.c.l.b16 %v8662
      %v8711 = vunpack.c.l.b16 %v8663
      %v8712 = vunpack.c.l.b16 %v8664
      %v8713 = vunpack.c.l.b16 %v8665
      %v8714 = vunpack.c.l.b16 %v8666
      %v8715 = vunpack.c.l.b16 %v8667
      %v8716 = vunpack.c.l.b16 %v8668
      %v8717 = vunpack.c.l.b16 %v8669
      %v8718 = vunpack.c.l.b16 %v8670
      %v8719 = vunpack.c.l.b16 %v8671
      %v8720 = vunpack.c.l.b16 %v8672
      %v8721 = vunpack.c.l.b16 %v8673
      %v8722 = vunpack.c.l.b16 %v8674
      %v8723 = vpack.c.b16 %v8700, %v8699
      %v8724 = vpack.c.b16 %v8702, %v8701
      %v8725 = vpack.c.b16 %v8704, %v8703
      %v8726 = vpack.c.b16 %v8706, %v8705
      %v8727 = vpack.c.b16 %v8708, %v8707
      %v8728 = vpack.c.b16 %v8710, %v8709
      %v8729 = vpack.c.b16 %v8712, %v8711
      %v8730 = vpack.c.b16 %v8714, %v8713
      %v8731 = vpack.c.b16 %v8716, %v8715
      %v8732 = vpack.c.b16 %v8718, %v8717
      %v8733 = vpack.c.b16 %v8720, %v8719
      %v8734 = vpack.c.b16 %v8722, %v8721
      %v8748 = vsel %vm2864, %v8643, 0
      %v8751 = vsel %vm2864, %v8645, 0
      %v8754 = vsel %vm2864, %v8647, 0
      %v8757 = vsel %vm2864, %v8649, 0
      %8759 = vmatprep.subr.bf16.mxu0 0
      %8760 = vmatpush1.bf16.msra.mxu0 %v8723
      %8761 = vmatprep.subr.bf16.mxu0 0
      %8762 = vmatpush1.bf16.msra.mxu0 %v8724
      %8763 = vmatprep.subr.bf16.mxu0 0
      %8764 = vmatpush1.bf16.msra.mxu0 %v8725
      %8765 = vmatprep.subr.bf16.mxu0 0
      %8766 = vmatpush1.bf16.msra.mxu0 %v8726
      %8767 = vmatprep.subr.bf16.mxu0 0
      %8768 = vmatpush1.bf16.msra.mxu0 %v8727
      %8769 = vmatprep.subr.bf16.mxu0 0
      %8770 = vmatpush1.bf16.msra.mxu0 %v8728
      %8771 = vmatprep.subr.bf16.mxu0 0
      %8772 = vmatpush1.bf16.msra.mxu0 %v8729
      %8773 = vmatprep.subr.bf16.mxu0 0
      %8774 = vmatpush1.bf16.msra.mxu0 %v8730
      %8775 = vmatprep.subr.bf16.mxu0 0
      %8776 = vmatpush1.bf16.msra.mxu0 %v8731
      %8777 = vmatprep.subr.bf16.mxu0 0
      %8778 = vmatpush1.bf16.msra.mxu0 %v8732
      %8779 = vmatprep.subr.bf16.mxu0 0
      %8780 = vmatpush1.bf16.msra.mxu0 %v8733
      %8781 = vmatprep.subr.bf16.mxu0 0
      %8782 = vmatpush1.bf16.msra.mxu0 %v8734
      %8783 = vmatprep.subr.bf16.mxu0 0
      %8784 = vmatpush1.bf16.msra.mxu0 0
      %8785 = vmatprep.subr.bf16.mxu0 0
      %8786 = vmatpush1.bf16.msra.mxu0 0
      %8787 = vmatprep.subr.bf16.mxu0 0
      %8788 = vmatpush1.bf16.msra.mxu0 0
      %8789 = vmatprep.subr.bf16.mxu0 0
      %8790 = vmatpush1.bf16.msra.mxu0 0
      %8791 = vmatprep.mubr.bf16.mxu0 %v8748
      %8792 = vmatmul.mubr.bf16.gmra.mrb[0].mxu0 %v8642
      %v8793 = vpop.f32.mrb[0].mxu0
      %v8794 = vadd.f32 0.0, %v8793
      %v8795 = vpop.f32.mrb[0].mxu0
      %v8796 = vpop.f32.mrb[0].mxu0
      %v8797 = vadd.f32 0.0, %v8796
      %v8798 = vpop.f32.mrb[0].mxu0
      %8799 = vmatprep.mubr.bf16.mxu0 %v8751
      %8800 = vmatmul.mubr.bf16.gmra.mrb[0].mxu0 %v8644
      %v8801 = vpop.f32.mrb[0].mxu0
      %v8802 = vadd.f32 0.0, %v8801
      %v8803 = vpop.f32.mrb[0].mxu0
      %v8804 = vpop.f32.mrb[0].mxu0
      %v8805 = vadd.f32 0.0, %v8804
      %v8806 = vpop.f32.mrb[0].mxu0
      %8807 = vmatprep.mubr.bf16.mxu0 %v8754
      %8808 = vmatmul.mubr.bf16.gmra.mrb[0].mxu0 %v8646
      %v8809 = vpop.f32.mrb[0].mxu0
      %v8810 = vadd.f32 0.0, %v8809
      %v8811 = vpop.f32.mrb[0].mxu0
      %v8812 = vpop.f32.mrb[0].mxu0
      %v8813 = vadd.f32 0.0, %v8812
      %v8814 = vpop.f32.mrb[0].mxu0
      %8815 = vmatprep.mubr.bf16.mxu0 %v8757
      %8816 = vmatmul.mubr.bf16.gmra.mrb[0].mxu0 %v8648
      %v8817 = vpop.f32.mrb[0].mxu0
      %v8818 = vadd.f32 0.0, %v8817
      %v8819 = vpop.f32.mrb[0].mxu0
      %v8820 = vpop.f32.mrb[0].mxu0
      %v8821 = vadd.f32 0.0, %v8820
      %v8822 = vpop.f32.mrb[0].mxu0
      %8823 = vdwg.mxu0
      %v8824 = vadd.f32 %v8618, %v8794
      %v8825 = vadd.f32 %v8619, %v8797
      %v8826 = vadd.f32 %v8620, %v8802
      %v8827 = vadd.f32 %v8621, %v8805
      %v8828 = vadd.f32 %v8622, %v8810
      %v8829 = vadd.f32 %v8623, %v8813
      %v8830 = vadd.f32 %v8624, %v8818
      %v8831 = vadd.f32 %v8625, %v8821
      %v8832 = vld [vmem:[%s7768] sm:$0xfe]
      %v8833 = vld [vmem:[%s7768 + $0x8] sm:$0xfe]
      %v8834 = vld [vmem:[%s7768 + $0x10] sm:$0x1]
      %v8835 = vld [vmem:[%s7768 + $0x18] sm:$0x1]
      %v8836 = vld [vmem:[%s7768 + $0x20] sm:$0xfe]
      %v8837 = vld [vmem:[%s7768 + $0x28] sm:$0xfe]
      %v8838 = vld [vmem:[%s7768 + $0x30] sm:$0x1]
      %v8839 = vld [vmem:[%s7768 + $0x38] sm:$0x1]
      %v8840 = vld [vmem:[%s7768 + $0x40] sm:$0xfe]
      %v8841 = vld [vmem:[%s7768 + $0x48] sm:$0xfe]
      %v8842 = vld [vmem:[%s7768 + $0x50] sm:$0x1]
      %v8843 = vld [vmem:[%s7768 + $0x58] sm:$0x1]
      %v8844 = vld [vmem:[%s7768 + $0x60] sm:$0xfe]
      %v8845 = vld [vmem:[%s7768 + $0x68] sm:$0xfe]
      %v8846 = vld [vmem:[%s7768 + $0x70] sm:$0x1]
      %v8847 = vld [vmem:[%s7768 + $0x78] sm:$0x1]
      %v8848 = vld [vmem:[%s7768 + $0x80] sm:$0xfe]
      %v8849 = vld [vmem:[%s7768 + $0x88] sm:$0xfe]
      %v8850 = vld [vmem:[%s7768 + $0x90] sm:$0x1]
      %v8851 = vld [vmem:[%s7768 + $0x98] sm:$0x1]
      %v8852 = vld [vmem:[%s7768 + $0xa0] sm:$0xfe]
      %v8853 = vld [vmem:[%s7768 + $0xa8] sm:$0xfe]
      %v8854 = vld [vmem:[%s7768 + $0xb0] sm:$0x1]
      %v8855 = vld [vmem:[%s7768 + $0xb8] sm:$0x1]
      %v8856 = vld [vmem:[%s7768 + $0xc0] sm:$0xfe]
      %v8857 = vld [vmem:[%s7768 + $0xc8] sm:$0xfe]
      %v8858 = vld [vmem:[%s7768 + $0xd0] sm:$0x1]
      %v8859 = vld [vmem:[%s7768 + $0xd8] sm:$0x1]
      %v8860 = vld [vmem:[%s7768 + $0xe0] sm:$0xfe]
      %v8861 = vld [vmem:[%s7768 + $0xe8] sm:$0xfe]
      %v8862 = vld [vmem:[%s7768 + $0xf0] sm:$0x1]
      %v8863 = vld [vmem:[%s7768 + $0xf8] sm:$0x1]
      %v8896 = vrot.slane %v8832, 1
      %v8897 = vrot.slane %v8834, 1
      %v8898 = vsel %vm4506, %v8896, %v8897
      %v8899 = vrot.slane %v8833, 1
      %v8900 = vrot.slane %v8835, 1
      %v8901 = vsel %vm4506, %v8899, %v8900
      %v8902 = vrot.slane %v8836, 1
      %v8903 = vrot.slane %v8838, 1
      %v8904 = vsel %vm4506, %v8902, %v8903
      %v8905 = vrot.slane %v8837, 1
      %v8906 = vrot.slane %v8839, 1
      %v8907 = vsel %vm4506, %v8905, %v8906
      %v8908 = vrot.slane %v8840, 1
      %v8909 = vrot.slane %v8842, 1
      %v8910 = vsel %vm4506, %v8908, %v8909
      %v8911 = vrot.slane %v8841, 1
      %v8912 = vrot.slane %v8843, 1
      %v8913 = vsel %vm4506, %v8911, %v8912
      %v8914 = vrot.slane %v8844, 1
      %v8915 = vrot.slane %v8846, 1
      %v8916 = vsel %vm4506, %v8914, %v8915
      %v8917 = vrot.slane %v8845, 1
      %v8918 = vrot.slane %v8847, 1
      %v8919 = vsel %vm4506, %v8917, %v8918
      %v8920 = vrot.slane %v8848, 1
      %v8921 = vrot.slane %v8850, 1
      %v8922 = vsel %vm4506, %v8920, %v8921
      %v8923 = vrot.slane %v8849, 1
      %v8924 = vrot.slane %v8851, 1
      %v8925 = vsel %vm4506, %v8923, %v8924
      %v8926 = vrot.slane %v8852, 1
      %v8927 = vrot.slane %v8854, 1
      %v8928 = vsel %vm4506, %v8926, %v8927
      %v8929 = vrot.slane %v8853, 1
      %v8930 = vrot.slane %v8855, 1
      %v8931 = vsel %vm4506, %v8929, %v8930
      %v8932 = vrot.slane %v8856, 1
      %v8933 = vrot.slane %v8858, 1
      %v8934 = vsel %vm4506, %v8932, %v8933
      %v8935 = vrot.slane %v8857, 1
      %v8936 = vrot.slane %v8859, 1
      %v8937 = vsel %vm4506, %v8935, %v8936
      %v8938 = vrot.slane %v8860, 1
      %v8939 = vrot.slane %v8862, 1
      %v8940 = vsel %vm4506, %v8938, %v8939
      %v8941 = vrot.slane %v8861, 1
      %v8942 = vrot.slane %v8863, 1
      %v8943 = vsel %vm4506, %v8941, %v8942
      %v8960 = vpack.c.bf16 %v8904, %v8898
      %v8961 = vpack.c.bf16 %v8907, %v8901
      %v8962 = vpack.c.bf16 %v8916, %v8910
      %v8963 = vpack.c.bf16 %v8919, %v8913
      %v8964 = vpack.c.bf16 %v8928, %v8922
      %v8965 = vpack.c.bf16 %v8931, %v8925
      %v8966 = vpack.c.bf16 %v8940, %v8934
      %v8967 = vpack.c.bf16 %v8943, %v8937
      %s8968 = scalar_lea.vmem %s17, 384
      %v8969 = vld [vmem:[%s8968] sm:$0xf]
      %v8970 = vld [vmem:[%s8968 + $0x4] sm:$0xf]
      %v8971 = vld [vmem:[%s8968 + $0x8] sm:$0xf]
      %v8972 = vld [vmem:[%s8968 + $0xc] sm:$0xf]
      %v8973 = vld [vmem:[%s8968 + $0x10] sm:$0xf]
      %v8974 = vld [vmem:[%s8968 + $0x14] sm:$0xf]
      %v8975 = vld [vmem:[%s8968 + $0x18] sm:$0xf]
      %v8976 = vld [vmem:[%s8968 + $0x1c] sm:$0xf]
      %v8977 = vld [vmem:[%s8968 + $0x20] sm:$0xf]
      %v8978 = vld [vmem:[%s8968 + $0x24] sm:$0xf]
      %v8979 = vld [vmem:[%s8968 + $0x28] sm:$0xf]
      %v8980 = vld [vmem:[%s8968 + $0x2c] sm:$0xf]
      %v8981 = vld [vmem:[%s8968 + $0x30] sm:$0xf]
      %v8982 = vld [vmem:[%s8968 + $0x34] sm:$0xf]
      %v8983 = vld [vmem:[%s8968 + $0x38] sm:$0xf]
      %v8984 = vld [vmem:[%s8968 + $0x3c] sm:$0xf]
      %v8985 = vld [vmem:[%s8968 + $0x40] sm:$0xf]
      %v8986 = vld [vmem:[%s8968 + $0x44] sm:$0xf]
      %v8987 = vld [vmem:[%s8968 + $0x48] sm:$0xf]
      %v8988 = vld [vmem:[%s8968 + $0x4c] sm:$0xf]
      %v8989 = vld [vmem:[%s8968 + $0x50] sm:$0xf]
      %v8990 = vld [vmem:[%s8968 + $0x54] sm:$0xf]
      %v8991 = vld [vmem:[%s8968 + $0x58] sm:$0xf]
      %v8992 = vld [vmem:[%s8968 + $0x5c] sm:$0xf]
      %v9017 = vunpack.c.l.b16 %v8969
      %v9018 = vunpack.c.l.b16 %v8970
      %v9019 = vunpack.c.l.b16 %v8971
      %v9020 = vunpack.c.l.b16 %v8972
      %v9021 = vunpack.c.l.b16 %v8973
      %v9022 = vunpack.c.l.b16 %v8974
      %v9023 = vunpack.c.l.b16 %v8975
      %v9024 = vunpack.c.l.b16 %v8976
      %v9025 = vunpack.c.l.b16 %v8977
      %v9026 = vunpack.c.l.b16 %v8978
      %v9027 = vunpack.c.l.b16 %v8979
      %v9028 = vunpack.c.l.b16 %v8980
      %v9029 = vunpack.c.l.b16 %v8981
      %v9030 = vunpack.c.l.b16 %v8982
      %v9031 = vunpack.c.l.b16 %v8983
      %v9032 = vunpack.c.l.b16 %v8984
      %v9033 = vunpack.c.l.b16 %v8985
      %v9034 = vunpack.c.l.b16 %v8986
      %v9035 = vunpack.c.l.b16 %v8987
      %v9036 = vunpack.c.l.b16 %v8988
      %v9037 = vunpack.c.l.b16 %v8989
      %v9038 = vunpack.c.l.b16 %v8990
      %v9039 = vunpack.c.l.b16 %v8991
      %v9040 = vunpack.c.l.b16 %v8992
      %v9041 = vpack.c.b16 %v9018, %v9017
      %v9042 = vpack.c.b16 %v9020, %v9019
      %v9043 = vpack.c.b16 %v9022, %v9021
      %v9044 = vpack.c.b16 %v9024, %v9023
      %v9045 = vpack.c.b16 %v9026, %v9025
      %v9046 = vpack.c.b16 %v9028, %v9027
      %v9047 = vpack.c.b16 %v9030, %v9029
      %v9048 = vpack.c.b16 %v9032, %v9031
      %v9049 = vpack.c.b16 %v9034, %v9033
      %v9050 = vpack.c.b16 %v9036, %v9035
      %v9051 = vpack.c.b16 %v9038, %v9037
      %v9052 = vpack.c.b16 %v9040, %v9039
      %v9066 = vsel %vm2864, %v8961, 0
      %v9069 = vsel %vm2864, %v8963, 0
      %v9072 = vsel %vm2864, %v8965, 0
      %v9075 = vsel %vm2864, %v8967, 0
      %9077 = vmatprep.subr.bf16.mxu0 0
      %9078 = vmatpush1.bf16.msra.mxu0 %v9041
      %9079 = vmatprep.subr.bf16.mxu0 0
      %9080 = vmatpush1.bf16.msra.mxu0 %v9042
      %9081 = vmatprep.subr.bf16.mxu0 0
      %9082 = vmatpush1.bf16.msra.mxu0 %v9043
      %9083 = vmatprep.subr.bf16.mxu0 0
      %9084 = vmatpush1.bf16.msra.mxu0 %v9044
      %9085 = vmatprep.subr.bf16.mxu0 0
      %9086 = vmatpush1.bf16.msra.mxu0 %v9045
      %9087 = vmatprep.subr.bf16.mxu0 0
      %9088 = vmatpush1.bf16.msra.mxu0 %v9046
      %9089 = vmatprep.subr.bf16.mxu0 0
      %9090 = vmatpush1.bf16.msra.mxu0 %v9047
      %9091 = vmatprep.subr.bf16.mxu0 0
      %9092 = vmatpush1.bf16.msra.mxu0 %v9048
      %9093 = vmatprep.subr.bf16.mxu0 0
      %9094 = vmatpush1.bf16.msra.mxu0 %v9049
      %9095 = vmatprep.subr.bf16.mxu0 0
      %9096 = vmatpush1.bf16.msra.mxu0 %v9050
      %9097 = vmatprep.subr.bf16.mxu0 0
      %9098 = vmatpush1.bf16.msra.mxu0 %v9051
      %9099 = vmatprep.subr.bf16.mxu0 0
      %9100 = vmatpush1.bf16.msra.mxu0 %v9052
      %9101 = vmatprep.subr.bf16.mxu0 0
      %9102 = vmatpush1.bf16.msra.mxu0 0
      %9103 = vmatprep.subr.bf16.mxu0 0
      %9104 = vmatpush1.bf16.msra.mxu0 0
      %9105 = vmatprep.subr.bf16.mxu0 0
      %9106 = vmatpush1.bf16.msra.mxu0 0
      %9107 = vmatprep.subr.bf16.mxu0 0
      %9108 = vmatpush1.bf16.msra.mxu0 0
      %9109 = vmatprep.mubr.bf16.mxu0 %v9066
      %9110 = vmatmul.mubr.bf16.gmra.mrb[0].mxu0 %v8960
      %v9111 = vpop.f32.mrb[0].mxu0
      %v9112 = vadd.f32 0.0, %v9111
      %v9113 = vpop.f32.mrb[0].mxu0
      %v9114 = vpop.f32.mrb[0].mxu0
      %v9115 = vadd.f32 0.0, %v9114
      %v9116 = vpop.f32.mrb[0].mxu0
      %9117 = vmatprep.mubr.bf16.mxu0 %v9069
      %9118 = vmatmul.mubr.bf16.gmra.mrb[0].mxu0 %v8962
      %v9119 = vpop.f32.mrb[0].mxu0
      %v9120 = vadd.f32 0.0, %v9119
      %v9121 = vpop.f32.mrb[0].mxu0
      %v9122 = vpop.f32.mrb[0].mxu0
      %v9123 = vadd.f32 0.0, %v9122
      %v9124 = vpop.f32.mrb[0].mxu0
      %9125 = vmatprep.mubr.bf16.mxu0 %v9072
      %9126 = vmatmul.mubr.bf16.gmra.mrb[0].mxu0 %v8964
      %v9127 = vpop.f32.mrb[0].mxu0
      %v9128 = vadd.f32 0.0, %v9127
      %v9129 = vpop.f32.mrb[0].mxu0
      %v9130 = vpop.f32.mrb[0].mxu0
      %v9131 = vadd.f32 0.0, %v9130
      %v9132 = vpop.f32.mrb[0].mxu0
      %9133 = vmatprep.mubr.bf16.mxu0 %v9075
      %9134 = vmatmul.mubr.bf16.gmra.mrb[0].mxu0 %v8966
      %v9135 = vpop.f32.mrb[0].mxu0
      %v9136 = vadd.f32 0.0, %v9135
      %v9137 = vpop.f32.mrb[0].mxu0
      %v9138 = vpop.f32.mrb[0].mxu0
      %v9139 = vadd.f32 0.0, %v9138
      %v9140 = vpop.f32.mrb[0].mxu0
      %9141 = vdwg.mxu0
      %v9142 = vadd.f32 %v8824, %v9112
      %v9143 = vadd.f32 %v8825, %v9115
      %v9144 = vadd.f32 %v8826, %v9120
      %v9145 = vadd.f32 %v8827, %v9123
      %v9146 = vadd.f32 %v8828, %v9128
      %v9147 = vadd.f32 %v8829, %v9131
      %v9148 = vadd.f32 %v8830, %v9136
      %v9149 = vadd.f32 %v8831, %v9139
      %v9150 = vld [vmem:[%s7768] sm:$0xfc]
      %v9151 = vld [vmem:[%s7768 + $0x8] sm:$0xfc]
      %v9152 = vld [vmem:[%s7768 + $0x10] sm:$0x3]
      %v9153 = vld [vmem:[%s7768 + $0x18] sm:$0x3]
      %v9154 = vld [vmem:[%s7768 + $0x20] sm:$0xfc]
      %v9155 = vld [vmem:[%s7768 + $0x28] sm:$0xfc]
      %v9156 = vld [vmem:[%s7768 + $0x30] sm:$0x3]
      %v9157 = vld [vmem:[%s7768 + $0x38] sm:$0x3]
      %v9158 = vld [vmem:[%s7768 + $0x40] sm:$0xfc]
      %v9159 = vld [vmem:[%s7768 + $0x48] sm:$0xfc]
      %v9160 = vld [vmem:[%s7768 + $0x50] sm:$0x3]
      %v9161 = vld [vmem:[%s7768 + $0x58] sm:$0x3]
      %v9162 = vld [vmem:[%s7768 + $0x60] sm:$0xfc]
      %v9163 = vld [vmem:[%s7768 + $0x68] sm:$0xfc]
      %v9164 = vld [vmem:[%s7768 + $0x70] sm:$0x3]
      %v9165 = vld [vmem:[%s7768 + $0x78] sm:$0x3]
      %v9166 = vld [vmem:[%s7768 + $0x80] sm:$0xfc]
      %v9167 = vld [vmem:[%s7768 + $0x88] sm:$0xfc]
      %v9168 = vld [vmem:[%s7768 + $0x90] sm:$0x3]
      %v9169 = vld [vmem:[%s7768 + $0x98] sm:$0x3]
      %v9170 = vld [vmem:[%s7768 + $0xa0] sm:$0xfc]
      %v9171 = vld [vmem:[%s7768 + $0xa8] sm:$0xfc]
      %v9172 = vld [vmem:[%s7768 + $0xb0] sm:$0x3]
      %v9173 = vld [vmem:[%s7768 + $0xb8] sm:$0x3]
      %v9174 = vld [vmem:[%s7768 + $0xc0] sm:$0xfc]
      %v9175 = vld [vmem:[%s7768 + $0xc8] sm:$0xfc]
      %v9176 = vld [vmem:[%s7768 + $0xd0] sm:$0x3]
      %v9177 = vld [vmem:[%s7768 + $0xd8] sm:$0x3]
      %v9178 = vld [vmem:[%s7768 + $0xe0] sm:$0xfc]
      %v9179 = vld [vmem:[%s7768 + $0xe8] sm:$0xfc]
      %v9180 = vld [vmem:[%s7768 + $0xf0] sm:$0x3]
      %v9181 = vld [vmem:[%s7768 + $0xf8] sm:$0x3]
      %v9214 = vrot.slane %v9150, 2
      %v9215 = vrot.slane %v9152, 2
      %v9216 = vsel %vm4696, %v9214, %v9215
      %v9217 = vrot.slane %v9151, 2
      %v9218 = vrot.slane %v9153, 2
      %v9219 = vsel %vm4696, %v9217, %v9218
      %v9220 = vrot.slane %v9154, 2
      %v9221 = vrot.slane %v9156, 2
      %v9222 = vsel %vm4696, %v9220, %v9221
      %v9223 = vrot.slane %v9155, 2
      %v9224 = vrot.slane %v9157, 2
      %v9225 = vsel %vm4696, %v9223, %v9224
      %v9226 = vrot.slane %v9158, 2
      %v9227 = vrot.slane %v9160, 2
      %v9228 = vsel %vm4696, %v9226, %v9227
      %v9229 = vrot.slane %v9159, 2
      %v9230 = vrot.slane %v9161, 2
      %v9231 = vsel %vm4696, %v9229, %v9230
      %v9232 = vrot.slane %v9162, 2
      %v9233 = vrot.slane %v9164, 2
      %v9234 = vsel %vm4696, %v9232, %v9233
      %v9235 = vrot.slane %v9163, 2
      %v9236 = vrot.slane %v9165, 2
      %v9237 = vsel %vm4696, %v9235, %v9236
      %v9238 = vrot.slane %v9166, 2
      %v9239 = vrot.slane %v9168, 2
      %v9240 = vsel %vm4696, %v9238, %v9239
      %v9241 = vrot.slane %v9167, 2
      %v9242 = vrot.slane %v9169, 2
      %v9243 = vsel %vm4696, %v9241, %v9242
      %v9244 = vrot.slane %v9170, 2
      %v9245 = vrot.slane %v9172, 2
      %v9246 = vsel %vm4696, %v9244, %v9245
      %v9247 = vrot.slane %v9171, 2
      %v9248 = vrot.slane %v9173, 2
      %v9249 = vsel %vm4696, %v9247, %v9248
      %v9250 = vrot.slane %v9174, 2
      %v9251 = vrot.slane %v9176, 2
      %v9252 = vsel %vm4696, %v9250, %v9251
      %v9253 = vrot.slane %v9175, 2
      %v9254 = vrot.slane %v9177, 2
      %v9255 = vsel %vm4696, %v9253, %v9254
      %v9256 = vrot.slane %v9178, 2
      %v9257 = vrot.slane %v9180, 2
      %v9258 = vsel %vm4696, %v9256, %v9257
      %v9259 = vrot.slane %v9179, 2
      %v9260 = vrot.slane %v9181, 2
      %v9261 = vsel %vm4696, %v9259, %v9260
      %v9278 = vpack.c.bf16 %v9222, %v9216
      %v9279 = vpack.c.bf16 %v9225, %v9219
      %v9280 = vpack.c.bf16 %v9234, %v9228
      %v9281 = vpack.c.bf16 %v9237, %v9231
      %v9282 = vpack.c.bf16 %v9246, %v9240
      %v9283 = vpack.c.bf16 %v9249, %v9243
      %v9284 = vpack.c.bf16 %v9258, %v9252
      %v9285 = vpack.c.bf16 %v9261, %v9255
      %s9286 = scalar_lea.vmem %s17, 480
      %v9287 = vld [vmem:[%s9286] sm:$0xf]
      %v9288 = vld [vmem:[%s9286 + $0x4] sm:$0xf]
      %v9289 = vld [vmem:[%s9286 + $0x8] sm:$0xf]
      %v9290 = vld [vmem:[%s9286 + $0xc] sm:$0xf]
      %v9291 = vld [vmem:[%s9286 + $0x10] sm:$0xf]
      %v9292 = vld [vmem:[%s9286 + $0x14] sm:$0xf]
      %v9293 = vld [vmem:[%s9286 + $0x18] sm:$0xf]
      %v9294 = vld [vmem:[%s9286 + $0x1c] sm:$0xf]
      %v9295 = vld [vmem:[%s9286 + $0x20] sm:$0xf]
      %v9296 = vld [vmem:[%s9286 + $0x24] sm:$0xf]
      %v9297 = vld [vmem:[%s9286 + $0x28] sm:$0xf]
      %v9298 = vld [vmem:[%s9286 + $0x2c] sm:$0xf]
      %v9299 = vld [vmem:[%s9286 + $0x30] sm:$0xf]
      %v9300 = vld [vmem:[%s9286 + $0x34] sm:$0xf]
      %v9301 = vld [vmem:[%s9286 + $0x38] sm:$0xf]
      %v9302 = vld [vmem:[%s9286 + $0x3c] sm:$0xf]
      %v9303 = vld [vmem:[%s9286 + $0x40] sm:$0xf]
      %v9304 = vld [vmem:[%s9286 + $0x44] sm:$0xf]
      %v9305 = vld [vmem:[%s9286 + $0x48] sm:$0xf]
      %v9306 = vld [vmem:[%s9286 + $0x4c] sm:$0xf]
      %v9307 = vld [vmem:[%s9286 + $0x50] sm:$0xf]
      %v9308 = vld [vmem:[%s9286 + $0x54] sm:$0xf]
      %v9309 = vld [vmem:[%s9286 + $0x58] sm:$0xf]
      %v9310 = vld [vmem:[%s9286 + $0x5c] sm:$0xf]
      %v9335 = vunpack.c.l.b16 %v9287
      %v9336 = vunpack.c.l.b16 %v9288
      %v9337 = vunpack.c.l.b16 %v9289
      %v9338 = vunpack.c.l.b16 %v9290
      %v9339 = vunpack.c.l.b16 %v9291
      %v9340 = vunpack.c.l.b16 %v9292
      %v9341 = vunpack.c.l.b16 %v9293
      %v9342 = vunpack.c.l.b16 %v9294
      %v9343 = vunpack.c.l.b16 %v9295
      %v9344 = vunpack.c.l.b16 %v9296
      %v9345 = vunpack.c.l.b16 %v9297
      %v9346 = vunpack.c.l.b16 %v9298
      %v9347 = vunpack.c.l.b16 %v9299
      %v9348 = vunpack.c.l.b16 %v9300
      %v9349 = vunpack.c.l.b16 %v9301
      %v9350 = vunpack.c.l.b16 %v9302
      %v9351 = vunpack.c.l.b16 %v9303
      %v9352 = vunpack.c.l.b16 %v9304
      %v9353 = vunpack.c.l.b16 %v9305
      %v9354 = vunpack.c.l.b16 %v9306
      %v9355 = vunpack.c.l.b16 %v9307
      %v9356 = vunpack.c.l.b16 %v9308
      %v9357 = vunpack.c.l.b16 %v9309
      %v9358 = vunpack.c.l.b16 %v9310
      %v9359 = vpack.c.b16 %v9336, %v9335
      %v9360 = vpack.c.b16 %v9338, %v9337
      %v9361 = vpack.c.b16 %v9340, %v9339
      %v9362 = vpack.c.b16 %v9342, %v9341
      %v9363 = vpack.c.b16 %v9344, %v9343
      %v9364 = vpack.c.b16 %v9346, %v9345
      %v9365 = vpack.c.b16 %v9348, %v9347
      %v9366 = vpack.c.b16 %v9350, %v9349
      %v9367 = vpack.c.b16 %v9352, %v9351
      %v9368 = vpack.c.b16 %v9354, %v9353
      %v9369 = vpack.c.b16 %v9356, %v9355
      %v9370 = vpack.c.b16 %v9358, %v9357
      %v9384 = vsel %vm2864, %v9279, 0
      %v9387 = vsel %vm2864, %v9281, 0
      %v9390 = vsel %vm2864, %v9283, 0
      %v9393 = vsel %vm2864, %v9285, 0
      %9395 = vmatprep.subr.bf16.mxu0 0
      %9396 = vmatpush1.bf16.msra.mxu0 %v9359
      %9397 = vmatprep.subr.bf16.mxu0 0
      %9398 = vmatpush1.bf16.msra.mxu0 %v9360
      %9399 = vmatprep.subr.bf16.mxu0 0
      %9400 = vmatpush1.bf16.msra.mxu0 %v9361
      %9401 = vmatprep.subr.bf16.mxu0 0
      %9402 = vmatpush1.bf16.msra.mxu0 %v9362
      %9403 = vmatprep.subr.bf16.mxu0 0
      %9404 = vmatpush1.bf16.msra.mxu0 %v9363
      %9405 = vmatprep.subr.bf16.mxu0 0
      %9406 = vmatpush1.bf16.msra.mxu0 %v9364
      %9407 = vmatprep.subr.bf16.mxu0 0
      %9408 = vmatpush1.bf16.msra.mxu0 %v9365
      %9409 = vmatprep.subr.bf16.mxu0 0
      %9410 = vmatpush1.bf16.msra.mxu0 %v9366
      %9411 = vmatprep.subr.bf16.mxu0 0
      %9412 = vmatpush1.bf16.msra.mxu0 %v9367
      %9413 = vmatprep.subr.bf16.mxu0 0
      %9414 = vmatpush1.bf16.msra.mxu0 %v9368
      %9415 = vmatprep.subr.bf16.mxu0 0
      %9416 = vmatpush1.bf16.msra.mxu0 %v9369
      %9417 = vmatprep.subr.bf16.mxu0 0
      %9418 = vmatpush1.bf16.msra.mxu0 %v9370
      %9419 = vmatprep.subr.bf16.mxu0 0
      %9420 = vmatpush1.bf16.msra.mxu0 0
      %9421 = vmatprep.subr.bf16.mxu0 0
      %9422 = vmatpush1.bf16.msra.mxu0 0
      %9423 = vmatprep.subr.bf16.mxu0 0
      %9424 = vmatpush1.bf16.msra.mxu0 0
      %9425 = vmatprep.subr.bf16.mxu0 0
      %9426 = vmatpush1.bf16.msra.mxu0 0
      %9427 = vmatprep.mubr.bf16.mxu0 %v9384
      %9428 = vmatmul.mubr.bf16.gmra.mrb[0].mxu0 %v9278
      %v9429 = vpop.f32.mrb[0].mxu0
      %v9430 = vadd.f32 0.0, %v9429
      %v9431 = vpop.f32.mrb[0].mxu0
      %v9432 = vpop.f32.mrb[0].mxu0
      %v9433 = vadd.f32 0.0, %v9432
      %v9434 = vpop.f32.mrb[0].mxu0
      %9435 = vmatprep.mubr.bf16.mxu0 %v9387
      %9436 = vmatmul.mubr.bf16.gmra.mrb[0].mxu0 %v9280
      %v9437 = vpop.f32.mrb[0].mxu0
      %v9438 = vadd.f32 0.0, %v9437
      %v9439 = vpop.f32.mrb[0].mxu0
      %v9440 = vpop.f32.mrb[0].mxu0
      %v9441 = vadd.f32 0.0, %v9440
      %v9442 = vpop.f32.mrb[0].mxu0
      %9443 = vmatprep.mubr.bf16.mxu0 %v9390
      %9444 = vmatmul.mubr.bf16.gmra.mrb[0].mxu0 %v9282
      %v9445 = vpop.f32.mrb[0].mxu0
      %v9446 = vadd.f32 0.0, %v9445
      %v9447 = vpop.f32.mrb[0].mxu0
      %v9448 = vpop.f32.mrb[0].mxu0
      %v9449 = vadd.f32 0.0, %v9448
      %v9450 = vpop.f32.mrb[0].mxu0
      %9451 = vmatprep.mubr.bf16.mxu0 %v9393
      %9452 = vmatmul.mubr.bf16.gmra.mrb[0].mxu0 %v9284
      %v9453 = vpop.f32.mrb[0].mxu0
      %v9454 = vadd.f32 0.0, %v9453
      %v9455 = vpop.f32.mrb[0].mxu0
      %v9456 = vpop.f32.mrb[0].mxu0
      %v9457 = vadd.f32 0.0, %v9456
      %v9458 = vpop.f32.mrb[0].mxu0
      %9459 = vdwg.mxu0
      %v9460 = vadd.f32 %v9142, %v9430
      %v9461 = vadd.f32 %v9143, %v9433
      %v9462 = vadd.f32 %v9144, %v9438
      %v9463 = vadd.f32 %v9145, %v9441
      %v9464 = vadd.f32 %v9146, %v9446
      %v9465 = vadd.f32 %v9147, %v9449
      %v9466 = vadd.f32 %v9148, %v9454
      %v9467 = vadd.f32 %v9149, %v9457
      %s9468 = scalar_lea.vmem [#allocation9], 64
      %v9469 = vld [vmem:[%s9468] sm:$0xff]
      %v9470 = vld [vmem:[%s9468 + $0x8] sm:$0xff]
      %v9471 = vld [vmem:[%s9468 + $0x20] sm:$0xff]
      %v9472 = vld [vmem:[%s9468 + $0x28] sm:$0xff]
      %v9473 = vld [vmem:[%s9468 + $0x40] sm:$0xff]
      %v9474 = vld [vmem:[%s9468 + $0x48] sm:$0xff]
      %v9475 = vld [vmem:[%s9468 + $0x60] sm:$0xff]
      %v9476 = vld [vmem:[%s9468 + $0x68] sm:$0xff]
      %v9477 = vld [vmem:[%s9468 + $0x80] sm:$0xff]
      %v9478 = vld [vmem:[%s9468 + $0x88] sm:$0xff]
      %v9479 = vld [vmem:[%s9468 + $0xa0] sm:$0xff]
      %v9480 = vld [vmem:[%s9468 + $0xa8] sm:$0xff]
      %v9481 = vld [vmem:[%s9468 + $0xc0] sm:$0xff]
      %v9482 = vld [vmem:[%s9468 + $0xc8] sm:$0xff]
      %v9483 = vld [vmem:[%s9468 + $0xe0] sm:$0xff]
      %v9484 = vld [vmem:[%s9468 + $0xe8] sm:$0xff]
      %v9485 = vpack.c.bf16 %v9471, %v9469
      %v9486 = vpack.c.bf16 %v9472, %v9470
      %v9487 = vpack.c.bf16 %v9475, %v9473
      %v9488 = vpack.c.bf16 %v9476, %v9474
      %v9489 = vpack.c.bf16 %v9479, %v9477
      %v9490 = vpack.c.bf16 %v9480, %v9478
      %v9491 = vpack.c.bf16 %v9483, %v9481
      %v9492 = vpack.c.bf16 %v9484, %v9482
      %s9493 = scalar_lea.vmem %s17, 576
      %v9494 = vld [vmem:[%s9493] sm:$0xf]
      %v9495 = vld [vmem:[%s9493 + $0x4] sm:$0xf]
      %v9496 = vld [vmem:[%s9493 + $0x8] sm:$0xf]
      %v9497 = vld [vmem:[%s9493 + $0xc] sm:$0xf]
      %v9498 = vld [vmem:[%s9493 + $0x10] sm:$0xf]
      %v9499 = vld [vmem:[%s9493 + $0x14] sm:$0xf]
      %v9500 = vld [vmem:[%s9493 + $0x18] sm:$0xf]
      %v9501 = vld [vmem:[%s9493 + $0x1c] sm:$0xf]
      %v9502 = vld [vmem:[%s9493 + $0x20] sm:$0xf]
      %v9503 = vld [vmem:[%s9493 + $0x24] sm:$0xf]
      %v9504 = vld [vmem:[%s9493 + $0x28] sm:$0xf]
      %v9505 = vld [vmem:[%s9493 + $0x2c] sm:$0xf]
      %v9506 = vld [vmem:[%s9493 + $0x30] sm:$0xf]
      %v9507 = vld [vmem:[%s9493 + $0x34] sm:$0xf]
      %v9508 = vld [vmem:[%s9493 + $0x38] sm:$0xf]
      %v9509 = vld [vmem:[%s9493 + $0x3c] sm:$0xf]
      %v9510 = vld [vmem:[%s9493 + $0x40] sm:$0xf]
      %v9511 = vld [vmem:[%s9493 + $0x44] sm:$0xf]
      %v9512 = vld [vmem:[%s9493 + $0x48] sm:$0xf]
      %v9513 = vld [vmem:[%s9493 + $0x4c] sm:$0xf]
      %v9514 = vld [vmem:[%s9493 + $0x50] sm:$0xf]
      %v9515 = vld [vmem:[%s9493 + $0x54] sm:$0xf]
      %v9516 = vld [vmem:[%s9493 + $0x58] sm:$0xf]
      %v9517 = vld [vmem:[%s9493 + $0x5c] sm:$0xf]
      %v9542 = vunpack.c.l.b16 %v9494
      %v9543 = vunpack.c.l.b16 %v9495
      %v9544 = vunpack.c.l.b16 %v9496
      %v9545 = vunpack.c.l.b16 %v9497
      %v9546 = vunpack.c.l.b16 %v9498
      %v9547 = vunpack.c.l.b16 %v9499
      %v9548 = vunpack.c.l.b16 %v9500
      %v9549 = vunpack.c.l.b16 %v9501
      %v9550 = vunpack.c.l.b16 %v9502
      %v9551 = vunpack.c.l.b16 %v9503
      %v9552 = vunpack.c.l.b16 %v9504
      %v9553 = vunpack.c.l.b16 %v9505
      %v9554 = vunpack.c.l.b16 %v9506
      %v9555 = vunpack.c.l.b16 %v9507
      %v9556 = vunpack.c.l.b16 %v9508
      %v9557 = vunpack.c.l.b16 %v9509
      %v9558 = vunpack.c.l.b16 %v9510
      %v9559 = vunpack.c.l.b16 %v9511
      %v9560 = vunpack.c.l.b16 %v9512
      %v9561 = vunpack.c.l.b16 %v9513
      %v9562 = vunpack.c.l.b16 %v9514
      %v9563 = vunpack.c.l.b16 %v9515
      %v9564 = vunpack.c.l.b16 %v9516
      %v9565 = vunpack.c.l.b16 %v9517
      %v9566 = vpack.c.b16 %v9543, %v9542
      %v9567 = vpack.c.b16 %v9545, %v9544
      %v9568 = vpack.c.b16 %v9547, %v9546
      %v9569 = vpack.c.b16 %v9549, %v9548
      %v9570 = vpack.c.b16 %v9551, %v9550
      %v9571 = vpack.c.b16 %v9553, %v9552
      %v9572 = vpack.c.b16 %v9555, %v9554
      %v9573 = vpack.c.b16 %v9557, %v9556
      %v9574 = vpack.c.b16 %v9559, %v9558
      %v9575 = vpack.c.b16 %v9561, %v9560
      %v9576 = vpack.c.b16 %v9563, %v9562
      %v9577 = vpack.c.b16 %v9565, %v9564
      %v9591 = vsel %vm2864, %v9486, 0
      %v9594 = vsel %vm2864, %v9488, 0
      %v9597 = vsel %vm2864, %v9490, 0
      %v9600 = vsel %vm2864, %v9492, 0
      %9602 = vmatprep.subr.bf16.mxu0 0
      %9603 = vmatpush1.bf16.msra.mxu0 %v9566
      %9604 = vmatprep.subr.bf16.mxu0 0
      %9605 = vmatpush1.bf16.msra.mxu0 %v9567
      %9606 = vmatprep.subr.bf16.mxu0 0
      %9607 = vmatpush1.bf16.msra.mxu0 %v9568
      %9608 = vmatprep.subr.bf16.mxu0 0
      %9609 = vmatpush1.bf16.msra.mxu0 %v9569
      %9610 = vmatprep.subr.bf16.mxu0 0
      %9611 = vmatpush1.bf16.msra.mxu0 %v9570
      %9612 = vmatprep.subr.bf16.mxu0 0
      %9613 = vmatpush1.bf16.msra.mxu0 %v9571
      %9614 = vmatprep.subr.bf16.mxu0 0
      %9615 = vmatpush1.bf16.msra.mxu0 %v9572
      %9616 = vmatprep.subr.bf16.mxu0 0
      %9617 = vmatpush1.bf16.msra.mxu0 %v9573
      %9618 = vmatprep.subr.bf16.mxu0 0
      %9619 = vmatpush1.bf16.msra.mxu0 %v9574
      %9620 = vmatprep.subr.bf16.mxu0 0
      %9621 = vmatpush1.bf16.msra.mxu0 %v9575
      %9622 = vmatprep.subr.bf16.mxu0 0
      %9623 = vmatpush1.bf16.msra.mxu0 %v9576
      %9624 = vmatprep.subr.bf16.mxu0 0
      %9625 = vmatpush1.bf16.msra.mxu0 %v9577
      %9626 = vmatprep.subr.bf16.mxu0 0
      %9627 = vmatpush1.bf16.msra.mxu0 0
      %9628 = vmatprep.subr.bf16.mxu0 0
      %9629 = vmatpush1.bf16.msra.mxu0 0
      %9630 = vmatprep.subr.bf16.mxu0 0
      %9631 = vmatpush1.bf16.msra.mxu0 0
      %9632 = vmatprep.subr.bf16.mxu0 0
      %9633 = vmatpush1.bf16.msra.mxu0 0
      %9634 = vmatprep.mubr.bf16.mxu0 %v9591
      %9635 = vmatmul.mubr.bf16.gmra.mrb[0].mxu0 %v9485
      %v9636 = vpop.f32.mrb[0].mxu0
      %v9637 = vadd.f32 0.0, %v9636
      %v9638 = vpop.f32.mrb[0].mxu0
      %v9639 = vpop.f32.mrb[0].mxu0
      %v9640 = vadd.f32 0.0, %v9639
      %v9641 = vpop.f32.mrb[0].mxu0
      %9642 = vmatprep.mubr.bf16.mxu0 %v9594
      %9643 = vmatmul.mubr.bf16.gmra.mrb[0].mxu0 %v9487
      %v9644 = vpop.f32.mrb[0].mxu0
      %v9645 = vadd.f32 0.0, %v9644
      %v9646 = vpop.f32.mrb[0].mxu0
      %v9647 = vpop.f32.mrb[0].mxu0
      %v9648 = vadd.f32 0.0, %v9647
      %v9649 = vpop.f32.mrb[0].mxu0
      %9650 = vmatprep.mubr.bf16.mxu0 %v9597
      %9651 = vmatmul.mubr.bf16.gmra.mrb[0].mxu0 %v9489
      %v9652 = vpop.f32.mrb[0].mxu0
      %v9653 = vadd.f32 0.0, %v9652
      %v9654 = vpop.f32.mrb[0].mxu0
      %v9655 = vpop.f32.mrb[0].mxu0
      %v9656 = vadd.f32 0.0, %v9655
      %v9657 = vpop.f32.mrb[0].mxu0
      %9658 = vmatprep.mubr.bf16.mxu0 %v9600
      %9659 = vmatmul.mubr.bf16.gmra.mrb[0].mxu0 %v9491
      %v9660 = vpop.f32.mrb[0].mxu0
      %v9661 = vadd.f32 0.0, %v9660
      %v9662 = vpop.f32.mrb[0].mxu0
      %v9663 = vpop.f32.mrb[0].mxu0
      %v9664 = vadd.f32 0.0, %v9663
      %v9665 = vpop.f32.mrb[0].mxu0
      %9666 = vdwg.mxu0
      %v9667 = vadd.f32 %v9460, %v9637
      %v9668 = vadd.f32 %v9461, %v9640
      %v9669 = vadd.f32 %v9462, %v9645
      %v9670 = vadd.f32 %v9463, %v9648
      %v9671 = vadd.f32 %v9464, %v9653
      %v9672 = vadd.f32 %v9465, %v9656
      %v9673 = vadd.f32 %v9466, %v9661
      %v9674 = vadd.f32 %v9467, %v9664
      %v9675 = vld [vmem:[%s9468] sm:$0xfe]
      %v9676 = vld [vmem:[%s9468 + $0x8] sm:$0xfe]
      %v9677 = vld [vmem:[%s9468 + $0x10] sm:$0x1]
      %v9678 = vld [vmem:[%s9468 + $0x18] sm:$0x1]
      %v9679 = vld [vmem:[%s9468 + $0x20] sm:$0xfe]
      %v9680 = vld [vmem:[%s9468 + $0x28] sm:$0xfe]
      %v9681 = vld [vmem:[%s9468 + $0x30] sm:$0x1]
      %v9682 = vld [vmem:[%s9468 + $0x38] sm:$0x1]
      %v9683 = vld [vmem:[%s9468 + $0x40] sm:$0xfe]
      %v9684 = vld [vmem:[%s9468 + $0x48] sm:$0xfe]
      %v9685 = vld [vmem:[%s9468 + $0x50] sm:$0x1]
      %v9686 = vld [vmem:[%s9468 + $0x58] sm:$0x1]
      %v9687 = vld [vmem:[%s9468 + $0x60] sm:$0xfe]
      %v9688 = vld [vmem:[%s9468 + $0x68] sm:$0xfe]
      %v9689 = vld [vmem:[%s9468 + $0x70] sm:$0x1]
      %v9690 = vld [vmem:[%s9468 + $0x78] sm:$0x1]
      %v9691 = vld [vmem:[%s9468 + $0x80] sm:$0xfe]
      %v9692 = vld [vmem:[%s9468 + $0x88] sm:$0xfe]
      %v9693 = vld [vmem:[%s9468 + $0x90] sm:$0x1]
      %v9694 = vld [vmem:[%s9468 + $0x98] sm:$0x1]
      %v9695 = vld [vmem:[%s9468 + $0xa0] sm:$0xfe]
      %v9696 = vld [vmem:[%s9468 + $0xa8] sm:$0xfe]
      %v9697 = vld [vmem:[%s9468 + $0xb0] sm:$0x1]
      %v9698 = vld [vmem:[%s9468 + $0xb8] sm:$0x1]
      %v9699 = vld [vmem:[%s9468 + $0xc0] sm:$0xfe]
      %v9700 = vld [vmem:[%s9468 + $0xc8] sm:$0xfe]
      %v9701 = vld [vmem:[%s9468 + $0xd0] sm:$0x1]
      %v9702 = vld [vmem:[%s9468 + $0xd8] sm:$0x1]
      %v9703 = vld [vmem:[%s9468 + $0xe0] sm:$0xfe]
      %v9704 = vld [vmem:[%s9468 + $0xe8] sm:$0xfe]
      %v9705 = vld [vmem:[%s9468 + $0xf0] sm:$0x1]
      %v9706 = vld [vmem:[%s9468 + $0xf8] sm:$0x1]
      %v9739 = vrot.slane %v9675, 1
      %v9740 = vrot.slane %v9677, 1
      %v9741 = vsel %vm4506, %v9739, %v9740
      %v9742 = vrot.slane %v9676, 1
      %v9743 = vrot.slane %v9678, 1
      %v9744 = vsel %vm4506, %v9742, %v9743
      %v9745 = vrot.slane %v9679, 1
      %v9746 = vrot.slane %v9681, 1
      %v9747 = vsel %vm4506, %v9745, %v9746
      %v9748 = vrot.slane %v9680, 1
      %v9749 = vrot.slane %v9682, 1
      %v9750 = vsel %vm4506, %v9748, %v9749
      %v9751 = vrot.slane %v9683, 1
      %v9752 = vrot.slane %v9685, 1
      %v9753 = vsel %vm4506, %v9751, %v9752
      %v9754 = vrot.slane %v9684, 1
      %v9755 = vrot.slane %v9686, 1
      %v9756 = vsel %vm4506, %v9754, %v9755
      %v9757 = vrot.slane %v9687, 1
      %v9758 = vrot.slane %v9689, 1
      %v9759 = vsel %vm4506, %v9757, %v9758
      %v9760 = vrot.slane %v9688, 1
      %v9761 = vrot.slane %v9690, 1
      %v9762 = vsel %vm4506, %v9760, %v9761
      %v9763 = vrot.slane %v9691, 1
      %v9764 = vrot.slane %v9693, 1
      %v9765 = vsel %vm4506, %v9763, %v9764
      %v9766 = vrot.slane %v9692, 1
      %v9767 = vrot.slane %v9694, 1
      %v9768 = vsel %vm4506, %v9766, %v9767
      %v9769 = vrot.slane %v9695, 1
      %v9770 = vrot.slane %v9697, 1
      %v9771 = vsel %vm4506, %v9769, %v9770
      %v9772 = vrot.slane %v9696, 1
      %v9773 = vrot.slane %v9698, 1
      %v9774 = vsel %vm4506, %v9772, %v9773
      %v9775 = vrot.slane %v9699, 1
      %v9776 = vrot.slane %v9701, 1
      %v9777 = vsel %vm4506, %v9775, %v9776
      %v9778 = vrot.slane %v9700, 1
      %v9779 = vrot.slane %v9702, 1
      %v9780 = vsel %vm4506, %v9778, %v9779
      %v9781 = vrot.slane %v9703, 1
      %v9782 = vrot.slane %v9705, 1
      %v9783 = vsel %vm4506, %v9781, %v9782
      %v9784 = vrot.slane %v9704, 1
      %v9785 = vrot.slane %v9706, 1
      %v9786 = vsel %vm4506, %v9784, %v9785
      %v9803 = vpack.c.bf16 %v9747, %v9741
      %v9804 = vpack.c.bf16 %v9750, %v9744
      %v9805 = vpack.c.bf16 %v9759, %v9753
      %v9806 = vpack.c.bf16 %v9762, %v9756
      %v9807 = vpack.c.bf16 %v9771, %v9765
      %v9808 = vpack.c.bf16 %v9774, %v9768
      %v9809 = vpack.c.bf16 %v9783, %v9777
      %v9810 = vpack.c.bf16 %v9786, %v9780
      %s9811 = scalar_lea.vmem %s17, 672
      %v9812 = vld [vmem:[%s9811] sm:$0xf]
      %v9813 = vld [vmem:[%s9811 + $0x4] sm:$0xf]
      %v9814 = vld [vmem:[%s9811 + $0x8] sm:$0xf]
      %v9815 = vld [vmem:[%s9811 + $0xc] sm:$0xf]
      %v9816 = vld [vmem:[%s9811 + $0x10] sm:$0xf]
      %v9817 = vld [vmem:[%s9811 + $0x14] sm:$0xf]
      %v9818 = vld [vmem:[%s9811 + $0x18] sm:$0xf]
      %v9819 = vld [vmem:[%s9811 + $0x1c] sm:$0xf]
      %v9820 = vld [vmem:[%s9811 + $0x20] sm:$0xf]
      %v9821 = vld [vmem:[%s9811 + $0x24] sm:$0xf]
      %v9822 = vld [vmem:[%s9811 + $0x28] sm:$0xf]
      %v9823 = vld [vmem:[%s9811 + $0x2c] sm:$0xf]
      %v9824 = vld [vmem:[%s9811 + $0x30] sm:$0xf]
      %v9825 = vld [vmem:[%s9811 + $0x34] sm:$0xf]
      %v9826 = vld [vmem:[%s9811 + $0x38] sm:$0xf]
      %v9827 = vld [vmem:[%s9811 + $0x3c] sm:$0xf]
      %v9828 = vld [vmem:[%s9811 + $0x40] sm:$0xf]
      %v9829 = vld [vmem:[%s9811 + $0x44] sm:$0xf]
      %v9830 = vld [vmem:[%s9811 + $0x48] sm:$0xf]
      %v9831 = vld [vmem:[%s9811 + $0x4c] sm:$0xf]
      %v9832 = vld [vmem:[%s9811 + $0x50] sm:$0xf]
      %v9833 = vld [vmem:[%s9811 + $0x54] sm:$0xf]
      %v9834 = vld [vmem:[%s9811 + $0x58] sm:$0xf]
      %v9835 = vld [vmem:[%s9811 + $0x5c] sm:$0xf]
      %v9860 = vunpack.c.l.b16 %v9812
      %v9861 = vunpack.c.l.b16 %v9813
      %v9862 = vunpack.c.l.b16 %v9814
      %v9863 = vunpack.c.l.b16 %v9815
      %v9864 = vunpack.c.l.b16 %v9816
      %v9865 = vunpack.c.l.b16 %v9817
      %v9866 = vunpack.c.l.b16 %v9818
      %v9867 = vunpack.c.l.b16 %v9819
      %v9868 = vunpack.c.l.b16 %v9820
      %v9869 = vunpack.c.l.b16 %v9821
      %v9870 = vunpack.c.l.b16 %v9822
      %v9871 = vunpack.c.l.b16 %v9823
      %v9872 = vunpack.c.l.b16 %v9824
      %v9873 = vunpack.c.l.b16 %v9825
      %v9874 = vunpack.c.l.b16 %v9826
      %v9875 = vunpack.c.l.b16 %v9827
      %v9876 = vunpack.c.l.b16 %v9828
      %v9877 = vunpack.c.l.b16 %v9829
      %v9878 = vunpack.c.l.b16 %v9830
      %v9879 = vunpack.c.l.b16 %v9831
      %v9880 = vunpack.c.l.b16 %v9832
      %v9881 = vunpack.c.l.b16 %v9833
      %v9882 = vunpack.c.l.b16 %v9834
      %v9883 = vunpack.c.l.b16 %v9835
      %v9884 = vpack.c.b16 %v9861, %v9860
      %v9885 = vpack.c.b16 %v9863, %v9862
      %v9886 = vpack.c.b16 %v9865, %v9864
      %v9887 = vpack.c.b16 %v9867, %v9866
      %v9888 = vpack.c.b16 %v9869, %v9868
      %v9889 = vpack.c.b16 %v9871, %v9870
      %v9890 = vpack.c.b16 %v9873, %v9872
      %v9891 = vpack.c.b16 %v9875, %v9874
      %v9892 = vpack.c.b16 %v9877, %v9876
      %v9893 = vpack.c.b16 %v9879, %v9878
      %v9894 = vpack.c.b16 %v9881, %v9880
      %v9895 = vpack.c.b16 %v9883, %v9882
      %v9909 = vsel %vm2864, %v9804, 0
      %v9912 = vsel %vm2864, %v9806, 0
      %v9915 = vsel %vm2864, %v9808, 0
      %v9918 = vsel %vm2864, %v9810, 0
      %9920 = vmatprep.subr.bf16.mxu0 0
      %9921 = vmatpush1.bf16.msra.mxu0 %v9884
      %9922 = vmatprep.subr.bf16.mxu0 0
      %9923 = vmatpush1.bf16.msra.mxu0 %v9885
      %9924 = vmatprep.subr.bf16.mxu0 0
      %9925 = vmatpush1.bf16.msra.mxu0 %v9886
      %9926 = vmatprep.subr.bf16.mxu0 0
      %9927 = vmatpush1.bf16.msra.mxu0 %v9887
      %9928 = vmatprep.subr.bf16.mxu0 0
      %9929 = vmatpush1.bf16.msra.mxu0 %v9888
      %9930 = vmatprep.subr.bf16.mxu0 0
      %9931 = vmatpush1.bf16.msra.mxu0 %v9889
      %9932 = vmatprep.subr.bf16.mxu0 0
      %9933 = vmatpush1.bf16.msra.mxu0 %v9890
      %9934 = vmatprep.subr.bf16.mxu0 0
      %9935 = vmatpush1.bf16.msra.mxu0 %v9891
      %9936 = vmatprep.subr.bf16.mxu0 0
      %9937 = vmatpush1.bf16.msra.mxu0 %v9892
      %9938 = vmatprep.subr.bf16.mxu0 0
      %9939 = vmatpush1.bf16.msra.mxu0 %v9893
      %9940 = vmatprep.subr.bf16.mxu0 0
      %9941 = vmatpush1.bf16.msra.mxu0 %v9894
      %9942 = vmatprep.subr.bf16.mxu0 0
      %9943 = vmatpush1.bf16.msra.mxu0 %v9895
      %9944 = vmatprep.subr.bf16.mxu0 0
      %9945 = vmatpush1.bf16.msra.mxu0 0
      %9946 = vmatprep.subr.bf16.mxu0 0
      %9947 = vmatpush1.bf16.msra.mxu0 0
      %9948 = vmatprep.subr.bf16.mxu0 0
      %9949 = vmatpush1.bf16.msra.mxu0 0
      %9950 = vmatprep.subr.bf16.mxu0 0
      %9951 = vmatpush1.bf16.msra.mxu0 0
      %9952 = vmatprep.mubr.bf16.mxu0 %v9909
      %9953 = vmatmul.mubr.bf16.gmra.mrb[0].mxu0 %v9803
      %v9954 = vpop.f32.mrb[0].mxu0
      %v9955 = vadd.f32 0.0, %v9954
      %v9956 = vpop.f32.mrb[0].mxu0
      %v9957 = vpop.f32.mrb[0].mxu0
      %v9958 = vadd.f32 0.0, %v9957
      %v9959 = vpop.f32.mrb[0].mxu0
      %9960 = vmatprep.mubr.bf16.mxu0 %v9912
      %9961 = vmatmul.mubr.bf16.gmra.mrb[0].mxu0 %v9805
      %v9962 = vpop.f32.mrb[0].mxu0
      %v9963 = vadd.f32 0.0, %v9962
      %v9964 = vpop.f32.mrb[0].mxu0
      %v9965 = vpop.f32.mrb[0].mxu0
      %v9966 = vadd.f32 0.0, %v9965
      %v9967 = vpop.f32.mrb[0].mxu0
      %9968 = vmatprep.mubr.bf16.mxu0 %v9915
      %9969 = vmatmul.mubr.bf16.gmra.mrb[0].mxu0 %v9807
      %v9970 = vpop.f32.mrb[0].mxu0
      %v9971 = vadd.f32 0.0, %v9970
      %v9972 = vpop.f32.mrb[0].mxu0
      %v9973 = vpop.f32.mrb[0].mxu0
      %v9974 = vadd.f32 0.0, %v9973
      %v9975 = vpop.f32.mrb[0].mxu0
      %9976 = vmatprep.mubr.bf16.mxu0 %v9918
      %9977 = vmatmul.mubr.bf16.gmra.mrb[0].mxu0 %v9809
      %v9978 = vpop.f32.mrb[0].mxu0
      %v9979 = vadd.f32 0.0, %v9978
      %v9980 = vpop.f32.mrb[0].mxu0
      %v9981 = vpop.f32.mrb[0].mxu0
      %v9982 = vadd.f32 0.0, %v9981
      %v9983 = vpop.f32.mrb[0].mxu0
      %9984 = vdwg.mxu0
      %v9985 = vadd.f32 %v9667, %v9955
      %v9986 = vadd.f32 %v9668, %v9958
      %v9987 = vadd.f32 %v9669, %v9963
      %v9988 = vadd.f32 %v9670, %v9966
      %v9989 = vadd.f32 %v9671, %v9971
      %v9990 = vadd.f32 %v9672, %v9974
      %v9991 = vadd.f32 %v9673, %v9979
      %v9992 = vadd.f32 %v9674, %v9982
      %v9993 = vld [vmem:[%s9468] sm:$0xfc]
      %v9994 = vld [vmem:[%s9468 + $0x8] sm:$0xfc]
      %v9995 = vld [vmem:[%s9468 + $0x10] sm:$0x3]
      %v9996 = vld [vmem:[%s9468 + $0x18] sm:$0x3]
      %v9997 = vld [vmem:[%s9468 + $0x20] sm:$0xfc]
      %v9998 = vld [vmem:[%s9468 + $0x28] sm:$0xfc]
      %v9999 = vld [vmem:[%s9468 + $0x30] sm:$0x3]
      %v10000 = vld [vmem:[%s9468 + $0x38] sm:$0x3]
      %v10001 = vld [vmem:[%s9468 + $0x40] sm:$0xfc]
      %v10002 = vld [vmem:[%s9468 + $0x48] sm:$0xfc]
      %v10003 = vld [vmem:[%s9468 + $0x50] sm:$0x3]
      %v10004 = vld [vmem:[%s9468 + $0x58] sm:$0x3]
      %v10005 = vld [vmem:[%s9468 + $0x60] sm:$0xfc]
      %v10006 = vld [vmem:[%s9468 + $0x68] sm:$0xfc]
      %v10007 = vld [vmem:[%s9468 + $0x70] sm:$0x3]
      %v10008 = vld [vmem:[%s9468 + $0x78] sm:$0x3]
      %v10009 = vld [vmem:[%s9468 + $0x80] sm:$0xfc]
      %v10010 = vld [vmem:[%s9468 + $0x88] sm:$0xfc]
      %v10011 = vld [vmem:[%s9468 + $0x90] sm:$0x3]
      %v10012 = vld [vmem:[%s9468 + $0x98] sm:$0x3]
      %v10013 = vld [vmem:[%s9468 + $0xa0] sm:$0xfc]
      %v10014 = vld [vmem:[%s9468 + $0xa8] sm:$0xfc]
      %v10015 = vld [vmem:[%s9468 + $0xb0] sm:$0x3]
      %v10016 = vld [vmem:[%s9468 + $0xb8] sm:$0x3]
      %v10017 = vld [vmem:[%s9468 + $0xc0] sm:$0xfc]
      %v10018 = vld [vmem:[%s9468 + $0xc8] sm:$0xfc]
      %v10019 = vld [vmem:[%s9468 + $0xd0] sm:$0x3]
      %v10020 = vld [vmem:[%s9468 + $0xd8] sm:$0x3]
      %v10021 = vld [vmem:[%s9468 + $0xe0] sm:$0xfc]
      %v10022 = vld [vmem:[%s9468 + $0xe8] sm:$0xfc]
      %v10023 = vld [vmem:[%s9468 + $0xf0] sm:$0x3]
      %v10024 = vld [vmem:[%s9468 + $0xf8] sm:$0x3]
      %v10057 = vrot.slane %v9993, 2
      %v10058 = vrot.slane %v9995, 2
      %v10059 = vsel %vm4696, %v10057, %v10058
      %v10060 = vrot.slane %v9994, 2
      %v10061 = vrot.slane %v9996, 2
      %v10062 = vsel %vm4696, %v10060, %v10061
      %v10063 = vrot.slane %v9997, 2
      %v10064 = vrot.slane %v9999, 2
      %v10065 = vsel %vm4696, %v10063, %v10064
      %v10066 = vrot.slane %v9998, 2
      %v10067 = vrot.slane %v10000, 2
      %v10068 = vsel %vm4696, %v10066, %v10067
      %v10069 = vrot.slane %v10001, 2
      %v10070 = vrot.slane %v10003, 2
      %v10071 = vsel %vm4696, %v10069, %v10070
      %v10072 = vrot.slane %v10002, 2
      %v10073 = vrot.slane %v10004, 2
      %v10074 = vsel %vm4696, %v10072, %v10073
      %v10075 = vrot.slane %v10005, 2
      %v10076 = vrot.slane %v10007, 2
      %v10077 = vsel %vm4696, %v10075, %v10076
      %v10078 = vrot.slane %v10006, 2
      %v10079 = vrot.slane %v10008, 2
      %v10080 = vsel %vm4696, %v10078, %v10079
      %v10081 = vrot.slane %v10009, 2
      %v10082 = vrot.slane %v10011, 2
      %v10083 = vsel %vm4696, %v10081, %v10082
      %v10084 = vrot.slane %v10010, 2
      %v10085 = vrot.slane %v10012, 2
      %v10086 = vsel %vm4696, %v10084, %v10085
      %v10087 = vrot.slane %v10013, 2
      %v10088 = vrot.slane %v10015, 2
      %v10089 = vsel %vm4696, %v10087, %v10088
      %v10090 = vrot.slane %v10014, 2
      %v10091 = vrot.slane %v10016, 2
      %v10092 = vsel %vm4696, %v10090, %v10091
      %v10093 = vrot.slane %v10017, 2
      %v10094 = vrot.slane %v10019, 2
      %v10095 = vsel %vm4696, %v10093, %v10094
      %v10096 = vrot.slane %v10018, 2
      %v10097 = vrot.slane %v10020, 2
      %v10098 = vsel %vm4696, %v10096, %v10097
      %v10099 = vrot.slane %v10021, 2
      %v10100 = vrot.slane %v10023, 2
      %v10101 = vsel %vm4696, %v10099, %v10100
      %v10102 = vrot.slane %v10022, 2
      %v10103 = vrot.slane %v10024, 2
      %v10104 = vsel %vm4696, %v10102, %v10103
      %v10121 = vpack.c.bf16 %v10065, %v10059
      %v10122 = vpack.c.bf16 %v10068, %v10062
      %v10123 = vpack.c.bf16 %v10077, %v10071
      %v10124 = vpack.c.bf16 %v10080, %v10074
      %v10125 = vpack.c.bf16 %v10089, %v10083
      %v10126 = vpack.c.bf16 %v10092, %v10086
      %v10127 = vpack.c.bf16 %v10101, %v10095
      %v10128 = vpack.c.bf16 %v10104, %v10098
      %s10129 = scalar_lea.vmem %s17, 768
      %v10130 = vld [vmem:[%s10129] sm:$0xf]
      %v10131 = vld [vmem:[%s10129 + $0x4] sm:$0xf]
      %v10132 = vld [vmem:[%s10129 + $0x8] sm:$0xf]
      %v10133 = vld [vmem:[%s10129 + $0xc] sm:$0xf]
      %v10134 = vld [vmem:[%s10129 + $0x10] sm:$0xf]
      %v10135 = vld [vmem:[%s10129 + $0x14] sm:$0xf]
      %v10136 = vld [vmem:[%s10129 + $0x18] sm:$0xf]
      %v10137 = vld [vmem:[%s10129 + $0x1c] sm:$0xf]
      %v10138 = vld [vmem:[%s10129 + $0x20] sm:$0xf]
      %v10139 = vld [vmem:[%s10129 + $0x24] sm:$0xf]
      %v10140 = vld [vmem:[%s10129 + $0x28] sm:$0xf]
      %v10141 = vld [vmem:[%s10129 + $0x2c] sm:$0xf]
      %v10142 = vld [vmem:[%s10129 + $0x30] sm:$0xf]
      %v10143 = vld [vmem:[%s10129 + $0x34] sm:$0xf]
      %v10144 = vld [vmem:[%s10129 + $0x38] sm:$0xf]
      %v10145 = vld [vmem:[%s10129 + $0x3c] sm:$0xf]
      %v10146 = vld [vmem:[%s10129 + $0x40] sm:$0xf]
      %v10147 = vld [vmem:[%s10129 + $0x44] sm:$0xf]
      %v10148 = vld [vmem:[%s10129 + $0x48] sm:$0xf]
      %v10149 = vld [vmem:[%s10129 + $0x4c] sm:$0xf]
      %v10150 = vld [vmem:[%s10129 + $0x50] sm:$0xf]
      %v10151 = vld [vmem:[%s10129 + $0x54] sm:$0xf]
      %v10152 = vld [vmem:[%s10129 + $0x58] sm:$0xf]
      %v10153 = vld [vmem:[%s10129 + $0x5c] sm:$0xf]
      %v10178 = vunpack.c.l.b16 %v10130
      %v10179 = vunpack.c.l.b16 %v10131
      %v10180 = vunpack.c.l.b16 %v10132
      %v10181 = vunpack.c.l.b16 %v10133
      %v10182 = vunpack.c.l.b16 %v10134
      %v10183 = vunpack.c.l.b16 %v10135
      %v10184 = vunpack.c.l.b16 %v10136
      %v10185 = vunpack.c.l.b16 %v10137
      %v10186 = vunpack.c.l.b16 %v10138
      %v10187 = vunpack.c.l.b16 %v10139
      %v10188 = vunpack.c.l.b16 %v10140
      %v10189 = vunpack.c.l.b16 %v10141
      %v10190 = vunpack.c.l.b16 %v10142
      %v10191 = vunpack.c.l.b16 %v10143
      %v10192 = vunpack.c.l.b16 %v10144
      %v10193 = vunpack.c.l.b16 %v10145
      %v10194 = vunpack.c.l.b16 %v10146
      %v10195 = vunpack.c.l.b16 %v10147
      %v10196 = vunpack.c.l.b16 %v10148
      %v10197 = vunpack.c.l.b16 %v10149
      %v10198 = vunpack.c.l.b16 %v10150
      %v10199 = vunpack.c.l.b16 %v10151
      %v10200 = vunpack.c.l.b16 %v10152
      %v10201 = vunpack.c.l.b16 %v10153
      %v10202 = vpack.c.b16 %v10179, %v10178
      %v10203 = vpack.c.b16 %v10181, %v10180
      %v10204 = vpack.c.b16 %v10183, %v10182
      %v10205 = vpack.c.b16 %v10185, %v10184
      %v10206 = vpack.c.b16 %v10187, %v10186
      %v10207 = vpack.c.b16 %v10189, %v10188
      %v10208 = vpack.c.b16 %v10191, %v10190
      %v10209 = vpack.c.b16 %v10193, %v10192
      %v10210 = vpack.c.b16 %v10195, %v10194
      %v10211 = vpack.c.b16 %v10197, %v10196
      %v10212 = vpack.c.b16 %v10199, %v10198
      %v10213 = vpack.c.b16 %v10201, %v10200
      %v10227 = vsel %vm2864, %v10122, 0
      %v10230 = vsel %vm2864, %v10124, 0
      %v10233 = vsel %vm2864, %v10126, 0
      %v10236 = vsel %vm2864, %v10128, 0
      %10238 = vmatprep.subr.bf16.mxu0 0
      %10239 = vmatpush1.bf16.msra.mxu0 %v10202
      %10240 = vmatprep.subr.bf16.mxu0 0
      %10241 = vmatpush1.bf16.msra.mxu0 %v10203
      %10242 = vmatprep.subr.bf16.mxu0 0
      %10243 = vmatpush1.bf16.msra.mxu0 %v10204
      %10244 = vmatprep.subr.bf16.mxu0 0
      %10245 = vmatpush1.bf16.msra.mxu0 %v10205
      %10246 = vmatprep.subr.bf16.mxu0 0
      %10247 = vmatpush1.bf16.msra.mxu0 %v10206
      %10248 = vmatprep.subr.bf16.mxu0 0
      %10249 = vmatpush1.bf16.msra.mxu0 %v10207
      %10250 = vmatprep.subr.bf16.mxu0 0
      %10251 = vmatpush1.bf16.msra.mxu0 %v10208
      %10252 = vmatprep.subr.bf16.mxu0 0
      %10253 = vmatpush1.bf16.msra.mxu0 %v10209
      %10254 = vmatprep.subr.bf16.mxu0 0
      %10255 = vmatpush1.bf16.msra.mxu0 %v10210
      %10256 = vmatprep.subr.bf16.mxu0 0
      %10257 = vmatpush1.bf16.msra.mxu0 %v10211
      %10258 = vmatprep.subr.bf16.mxu0 0
      %10259 = vmatpush1.bf16.msra.mxu0 %v10212
      %10260 = vmatprep.subr.bf16.mxu0 0
      %10261 = vmatpush1.bf16.msra.mxu0 %v10213
      %10262 = vmatprep.subr.bf16.mxu0 0
      %10263 = vmatpush1.bf16.msra.mxu0 0
      %10264 = vmatprep.subr.bf16.mxu0 0
      %10265 = vmatpush1.bf16.msra.mxu0 0
      %10266 = vmatprep.subr.bf16.mxu0 0
      %10267 = vmatpush1.bf16.msra.mxu0 0
      %10268 = vmatprep.subr.bf16.mxu0 0
      %10269 = vmatpush1.bf16.msra.mxu0 0
      %10270 = vmatprep.mubr.bf16.mxu0 %v10227
      %10271 = vmatmul.mubr.bf16.gmra.mrb[0].mxu0 %v10121
      %v10272 = vpop.f32.mrb[0].mxu0
      %v10273 = vadd.f32 0.0, %v10272
      %v10274 = vpop.f32.mrb[0].mxu0
      %v10275 = vpop.f32.mrb[0].mxu0
      %v10276 = vadd.f32 0.0, %v10275
      %v10277 = vpop.f32.mrb[0].mxu0
      %10278 = vmatprep.mubr.bf16.mxu0 %v10230
      %10279 = vmatmul.mubr.bf16.gmra.mrb[0].mxu0 %v10123
      %v10280 = vpop.f32.mrb[0].mxu0
      %v10281 = vadd.f32 0.0, %v10280
      %v10282 = vpop.f32.mrb[0].mxu0
      %v10283 = vpop.f32.mrb[0].mxu0
      %v10284 = vadd.f32 0.0, %v10283
      %v10285 = vpop.f32.mrb[0].mxu0
      %10286 = vmatprep.mubr.bf16.mxu0 %v10233
      %10287 = vmatmul.mubr.bf16.gmra.mrb[0].mxu0 %v10125
      %v10288 = vpop.f32.mrb[0].mxu0
      %v10289 = vadd.f32 0.0, %v10288
      %v10290 = vpop.f32.mrb[0].mxu0
      %v10291 = vpop.f32.mrb[0].mxu0
      %v10292 = vadd.f32 0.0, %v10291
      %v10293 = vpop.f32.mrb[0].mxu0
      %10294 = vmatprep.mubr.bf16.mxu0 %v10236
      %10295 = vmatmul.mubr.bf16.gmra.mrb[0].mxu0 %v10127
      %v10296 = vpop.f32.mrb[0].mxu0
      %v10297 = vadd.f32 0.0, %v10296
      %v10298 = vpop.f32.mrb[0].mxu0
      %v10299 = vpop.f32.mrb[0].mxu0
      %v10300 = vadd.f32 0.0, %v10299
      %v10301 = vpop.f32.mrb[0].mxu0
      %10302 = vdwg.mxu0
      %v10303 = vadd.f32 %v9985, %v10273
      %v10304 = vadd.f32 %v9986, %v10276
      %v10305 = vadd.f32 %v9987, %v10281
      %v10306 = vadd.f32 %v9988, %v10284
      %v10307 = vadd.f32 %v9989, %v10289
      %v10308 = vadd.f32 %v9990, %v10292
      %v10309 = vadd.f32 %v9991, %v10297
      %v10310 = vadd.f32 %v9992, %v10300
      %10311 = vst [vmem:[%s580] sm:$0xff] %v10303
      %10312 = vst [vmem:[%s580 + $0x8] sm:$0xff] %v10304
      %10313 = vst [vmem:[%s580 + $0x10] sm:$0xff] %v10305
      %10314 = vst [vmem:[%s580 + $0x18] sm:$0xff] %v10306
      %10315 = vst [vmem:[%s580 + $0x20] sm:$0xff] %v10307
      %10316 = vst [vmem:[%s580 + $0x28] sm:$0xff] %v10308
      %10317 = vst [vmem:[%s580 + $0x30] sm:$0xff] %v10309
      %10318 = vst [vmem:[%s580 + $0x38] sm:$0xff] %v10310
      %p10319 = scmp.lt.s32.totalorder %s29, 1
      %s10320 = scalar_select %p10319, %s29, 1
      %s10321 = smul.addr %s10320, 8
      %s10322 = smul.addr %s10321, 8
      %s10323 = scalar_lea.vmem %s18, %s10322
      // Predicated region
      $region93: #{tiny_flownet_forward.1} parent=91 // pred_check
        %p10324 = pneg %p430
      $region94: #{tiny_flownet_forward.1} parent=91 // pred_check_branch
        %10326 = sbr.rel (%p10324) target = $region96
      $region95: #{tiny_flownet_forward.1} parent=91 // pred_region
        _
      $region96: #{tiny_flownet_forward.1} parent=91 // pred_fallthru
        _
    $region92: #{tiny_flownet_forward.1} parent=5 // pred_fallthru
      _
    %p10327 = scmp.le.s32.totalorder 2, %s24
    // Predicated region
    $region97: #{tiny_flownet_forward.1} parent=5 // pred_check
      %p10328 = pneg %p10327
    $region98: #{tiny_flownet_forward.1} parent=5 // pred_check_branch
      %10330 = sbr.rel (%p10328) target = $region100
    $region99: #{tiny_flownet_forward.1} parent=5 // pred_region
      %s10331 = ssub.s32 %s24, 2
      // Predicated region
      $region101: #{tiny_flownet_forward.1} parent=99 // pred_check
        %p10332 = pneg %p436
      $region102: #{tiny_flownet_forward.1} parent=99 // pred_check_branch
        %10334 = sbr.rel (%p10332) target = $region104
      $region103: #{tiny_flownet_forward.1} parent=99 // pred_region
        %p10335 = scmp.lt.s32.totalorder %s30, 1
        %s10336 = scalar_select %p10335, %s30, 1
        %s10337 = smul.addr %s10336, 8
        %s10338 = smul.addr %s10337, 8
        %s10339 = scalar_lea.vmem %s18, %s10338
      $region104: #{tiny_flownet_forward.1} parent=99 // pred_fallthru
        _
    $region100: #{tiny_flownet_forward.1} parent=5 // pred_fallthru
      _
  $region6: #{tiny_flownet_forward.1} parent=0 // loop_footer
    %s28 = sadd.s32 1, %s24
  $region7: #{tiny_flownet_forward.1} parent=0 // loop_footer_branch
    %23 = sbr.rel target = $region3
  $region8: #{tiny_flownet_forward.1} parent=0 // loop_exit
    _

</llo_original>
